<compile_context>
chip_gen: v7x
topology: tpu7x:2x2x1
jax: 0.10.0
libtpu: 0.0.40
codegen_flags: <defaults>
</compile_context>

<pallas_src>
import math

import jax
import jax.numpy as jnp
from jax import lax
from jax.experimental import pallas as pl
from jax.experimental.pallas import tpu as pltpu


KH = KW = 5            # conv kernel size
C1 = 32                # conv1 output channels
C2 = 64                # conv2 output channels
H1 = 14                # conv1 pooled spatial size (28 / 2)
H2 = 5                 # conv2 pooled spatial size (10 / 2)
FC1 = 128              # fc1 width
NCLS = 10              # logits
LANES = 128            # fc2 output padded to a full lane width
POS1 = H1 * H1         # 196 pooled conv1 positions
TAPS1 = 4 * KH * KW    # 100 = 4 pool offsets x 25 conv1 taps (lane-dense im2col)
K2 = KW * C1           # 160 = conv2 contraction per kh (kw folded into K)


# ----------------------------------------------------------------------------
# Fused forward kernel (one batch block per grid step; everything in VMEM)
# ----------------------------------------------------------------------------
def _make_kernel(bb):
    """bb = samples per batch block (multiple of 8, sublane aligned)."""
    m1 = POS1 * bb                        # rows of pooled conv1 map: (h1*14+w1)*bb + i
    rows_y = m1 + (KH - 1) * H1 * bb      # kw-folded scratch rows (252*bb)

    def kernel(p1_ref, w1_ref, b1_ref, w2_ref, b2_ref,
               fc1_ref, fc1b_ref, fc2_ref, fc2b_ref, out_ref, y1s_ref):
        # ---- conv1 + 2x2 max-pool + bias + ReLU ------------------------------
        # One matmul; the 4 pool offsets are the 4 32-lane output groups of the
        # block-diagonal weight.  Pool = max over groups (commutes with bias/ReLU).
        p1 = p1_ref[...].reshape(m1, TAPS1)                            # (m1,100) bf16
        z = jnp.dot(p1, w1_ref[...], preferred_element_type=jnp.float32)  # (m1,128)
        y1 = jnp.maximum(jnp.maximum(z[:, 0 * C1:1 * C1], z[:, 1 * C1:2 * C1]),
                         jnp.maximum(z[:, 2 * C1:3 * C1], z[:, 3 * C1:4 * C1]))
        y1 = jnp.maximum(y1 + b1_ref[...], 0.0).astype(jnp.bfloat16)   # (m1,32)

        # ---- build conv2 LHS in scratch: kw taps folded along lanes ----------
        # y1s[r, kw*32 + c] = y1[r + kw*bb, c]  (zero where r + kw*bb >= m1).
        # Only junk output rows ever read the zero tail.
        y1s_ref[m1 - (KW - 1) * bb: rows_y, :] = jnp.zeros(
            (rows_y - m1 + (KW - 1) * bb, K2), jnp.bfloat16)
        for kw in range(KW):
            y1s_ref[0: m1 - kw * bb, kw * C1:(kw + 1) * C1] = y1[kw * bb:, :]

        # ---- conv2 as 5 K=160 matmuls (one per kh); bias in the epilogue -----
        acc = jnp.dot(y1s_ref[0:m1, :], w2_ref[0],
                      preferred_element_type=jnp.float32)               # (m1,64)
        for kh in range(1, KH):
            off = kh * H1 * bb                                          # static
            acc = acc + jnp.dot(y1s_ref[off: off + m1, :], w2_ref[kh],
                                preferred_element_type=jnp.float32)
        # Rows with oh >= 10 or ow >= 10 hold junk but are never read below.

        # ---- 2x2 max-pool + bias + ReLU --------------------------------------
        t = acc.reshape(H1 // 2, 2, H1 * bb, C2)
        t = jnp.maximum(t[:, 0], t[:, 1])                    # pool over height
        t = t.reshape(H1 // 2, H1 // 2, 2, bb, C2)
        t = jnp.maximum(t[:, :, 0], t[:, :, 1])              # pool over width
        y2 = jnp.maximum(t + b2_ref[...], 0.0)               # (7,7,bb,64); [:5,:5] valid

        # ---- fc1: fold all 25 pooled positions into K -> one matmul ----------
        lhs = jnp.concatenate(
            [y2[ph, pw].astype(jnp.bfloat16)
             for ph in range(H2) for pw in range(H2)], axis=-1)         # (bb,1600)
        h = jnp.dot(lhs, fc1_ref[...],
                    preferred_element_type=jnp.float32) + fc1b_ref[...]
        h = jnp.maximum(h, 0.0).astype(jnp.bfloat16)

        # ---- fc2 (lane-dense 128-wide output; sliced to 10 in the wrapper) ---
        out_ref[...] = jnp.dot(h, fc2_ref[...],
                               preferred_element_type=jnp.float32) + fc2b_ref[...]

    return kernel


# ----------------------------------------------------------------------------
# Plain-JAX glue: lane-dense conv1 im2col grouped by 2x2-pool offset
# ----------------------------------------------------------------------------
def _conv1_patches(x, nb):
    """x: (nb, 32, 32) f32 -> (196, nb, 100).

    Row = h1*14 + w1 (pooled output position); lane = (a*2+b)*25 + kh*5 + kw
    holds x[i, 2*h1 + a + kh, 2*w1 + b + kw]."""
    groups = []
    for a in range(2):
        for b in range(2):
            taps = [x[:, a + kh: a + kh + 2 * H1: 2, b + kw: b + kw + 2 * H1: 2]
                    for kh in range(KH) for kw in range(KW)]            # (nb,14,14) x25
            groups.append(jnp.stack(taps, axis=-1))                     # (nb,14,14,25)
    p = jnp.concatenate(groups, axis=-1)                                # (nb,14,14,100)
    return p.transpose(1, 2, 0, 3).reshape(POS1, nb, TAPS1)


# ----------------------------------------------------------------------------
# Full forward pass (single pallas_call, gridded over batch blocks)
# ----------------------------------------------------------------------------
def lenet_forward(x_nchw, params, *, block_batch=32):
    n = x_nchw.shape[0]
    bb = min(block_batch, ((n + 7) // 8) * 8)       # samples per block, multiple of 8
    nb = ((n + bb - 1) // bb) * bb                  # padded batch
    x = jnp.pad(x_nchw[:, 0], ((0, nb - n), (0, 0), (0, 0)))   # Cin == 1
    p1 = _conv1_patches(x, nb).astype(jnp.bfloat16)            # (196, nb, 100)

    rows_total = POS1 * nb
    flops = 2 * (rows_total * TAPS1 * 4 * C1        # conv1 (block-diag weight)
                 + KH * rows_total * K2 * C2        # conv2 (kw folded into K)
                 + nb * (H2 * H2 * C2) * FC1        # fc1
                 + nb * FC1 * LANES)                # fc2
    args = (p1, params["conv1_w"], params["conv1_b"],
            params["conv2_w"], params["conv2_b"],
            params["fc1_w"], params["fc1_b"],
            params["fc2_w"], params["fc2_b"])
    bytes_accessed = sum(a.size * a.dtype.itemsize for a in args) + nb * LANES * 4

    c2 = lambda j: (0, 0)                            # constant index_map (2-D weights)
    c3 = lambda j: (0, 0, 0)                         # constant index_map (3-D weights)
    grid_spec = pltpu.PrefetchScalarGridSpec(
        num_scalar_prefetch=0,
        grid=(nb // bb,),
        in_specs=[
            pl.BlockSpec((POS1, bb, TAPS1), lambda j: (0, j, 0)),       # p1 batch tile
            pl.BlockSpec(params["conv1_w"].shape, c2),
            pl.BlockSpec(params["conv1_b"].shape, c2),
            pl.BlockSpec(params["conv2_w"].shape, c3),
            pl.BlockSpec(params["conv2_b"].shape, c2),
            pl.BlockSpec(params["fc1_w"].shape, c2),
            pl.BlockSpec(params["fc1_b"].shape, c2),
            pl.BlockSpec(params["fc2_w"].shape, c2),
            pl.BlockSpec(params["fc2_b"].shape, c2),
        ],
        out_specs=pl.BlockSpec((bb, LANES), lambda j: (j, 0)),
        scratch_shapes=[pltpu.VMEM(((POS1 + (KH - 1) * H1) * bb, K2), jnp.bfloat16)],
    )
    out = pl.pallas_call(
        _make_kernel(bb),
        out_shape=jax.ShapeDtypeStruct((nb, LANES), jnp.float32),
        grid_spec=grid_spec,
        compiler_params=pltpu.CompilerParams(
            dimension_semantics=("parallel",),              # megacore batch split
            vmem_limit_bytes=48 * 1024 * 1024),             # block fits v7x's 64 MiB
        cost_estimate=pl.CostEstimate(flops=flops, transcendentals=0,
                                      bytes_accessed=bytes_accessed),
    )(*args)
    return out[:n, :NCLS]


# ----------------------------------------------------------------------------
# Deterministic parameter init (PyTorch shapes) + conversion to kernel layouts
# ----------------------------------------------------------------------------
def init_params(key):
    ks = jax.random.split(key, 8)

    def u(k, shape, fan_in):
        bound = 1.0 / math.sqrt(fan_in)
        return jax.random.uniform(k, shape, jnp.float32, -bound, bound)

    raw = {
        "conv1_w": u(ks[0], (C1, 1, KH, KW), 1 * KH * KW),
        "conv1_b": u(ks[1], (C1,), 1 * KH * KW),
        "conv2_w": u(ks[2], (C2, C1, KH, KW), C1 * KH * KW),
        "conv2_b": u(ks[3], (C2,), C1 * KH * KW),
        "fc1_w": u(ks[4], (FC1, C2 * H2 * H2), C2 * H2 * H2),
        "fc1_b": u(ks[5], (FC1,), C2 * H2 * H2),
        "fc2_w": u(ks[6], (NCLS, FC1), FC1),
        "fc2_b": u(ks[7], (NCLS,), FC1),
    }

    # conv1: block-diagonal (100, 128); group g = pool offset, rows = 25 taps.
    tap = raw["conv1_w"][:, 0].reshape(C1, KH * KW).T                 # (25, 32)
    w1 = jnp.zeros((TAPS1, 4 * C1), jnp.float32)
    for g in range(4):
        w1 = w1.at[g * KH * KW:(g + 1) * KH * KW, g * C1:(g + 1) * C1].set(tap)
    # conv2: (kh, kw*32 + c, co) — kw folded into K.
    w2 = raw["conv2_w"].transpose(2, 3, 1, 0).reshape(KH, KW * C1, C2)
    # fc1: row = (ph*5 + pw)*64 + c — NCHW flatten permutation folded in.
    fc1 = (raw["fc1_w"].reshape(FC1, C2, H2, H2)
           .transpose(2, 3, 1, 0).reshape(H2 * H2 * C2, FC1))
    # fc2: 10 logits zero-padded to 128 lanes (lane-dense store).
    fc2 = jnp.zeros((FC1, LANES), jnp.float32).at[:, :NCLS].set(raw["fc2_w"].T)
    fc2b = jnp.zeros((1, LANES), jnp.float32).at[:, :NCLS].set(raw["fc2_b"][None])

    packed = {
        "conv1_w": w1.astype(jnp.bfloat16),          # (100, 128)
        "conv1_b": raw["conv1_b"].reshape(1, C1),
        "conv2_w": w2.astype(jnp.bfloat16),          # (5, 160, 64)
        "conv2_b": raw["conv2_b"].reshape(1, C2),
        "fc1_w": fc1.astype(jnp.bfloat16),           # (1600, 128)
        "fc1_b": raw["fc1_b"].reshape(1, FC1),
        "fc2_w": fc2.astype(jnp.bfloat16),           # (128, 128) zero-padded
        "fc2_b": fc2b,                               # (1, 128) zero-padded
    }
    return raw, packed


# ----------------------------------------------------------------------------
# Pure-JAX f32 reference (PyTorch semantics) for validation
# ----------------------------------------------------------------------------
def lenet_reference(x, raw):
    dn = ("NCHW", "OIHW", "NCHW")
    y = lax.conv_general_dilated(x, raw["conv1_w"], (1, 1), "VALID",
                                 dimension_numbers=dn)
    y = jnp.maximum(y + raw["conv1_b"][None, :, None, None], 0.0)
    y = lax.reduce_window(y, -jnp.inf, lax.max, (1, 1, 2, 2), (1, 1, 2, 2), "VALID")
    y = lax.conv_general_dilated(y, raw["conv2_w"], (1, 1), "VALID",
                                 dimension_numbers=dn)
    y = jnp.maximum(y + raw["conv2_b"][None, :, None, None], 0.0)
    y = lax.reduce_window(y, -jnp.inf, lax.max, (1, 1, 2, 2), (1, 1, 2, 2), "VALID")
    y = y.reshape(y.shape[0], -1)                    # (N, 1600), NCHW flatten
    y = jnp.maximum(y @ raw["fc1_w"].T + raw["fc1_b"], 0.0)
    return y @ raw["fc2_w"].T + raw["fc2_b"]


if __name__ == "__main__":
    key = jax.random.PRNGKey(0)
    k_x, k_p = jax.random.split(key)

    # 1600 = 64*5*5 in fc1 forces 32x32 single-channel inputs; batch kept small.
    x = jax.random.normal(k_x, (2, 1, 32, 32), jnp.float32)   # NCHW like PyTorch
    raw, packed = init_params(k_p)

    out = jax.jit(lenet_forward)(x, packed)
    out = jax.block_until_ready(out)
    assert out.shape == (2, NCLS) and out.dtype == jnp.float32
    assert bool(jnp.isfinite(out).all())

    # bf16-matmul / f32-accumulate kernel vs f32 XLA reference (loose tolerance).
    ref = lenet_reference(x, raw)
    assert bool(jnp.allclose(out, ref, atol=7e-2, rtol=7e-2))
    print("KERNEL_OK")
</pallas_src>

<mosaic_0001>
module attributes {stable_mosaic.version = 11 : i64} {
  func.func @kernel(%arg0: i32, %arg1: memref<196x8x100xbf16, #tpu.memory_space<vmem>>, %arg2: memref<100x128xbf16, #tpu.memory_space<vmem>>, %arg3: memref<1x32xf32, #tpu.memory_space<vmem>>, %arg4: memref<5x160x64xbf16, #tpu.memory_space<vmem>>, %arg5: memref<1x64xf32, #tpu.memory_space<vmem>>, %arg6: memref<1600x128xbf16, #tpu.memory_space<vmem>>, %arg7: memref<1x128xf32, #tpu.memory_space<vmem>>, %arg8: memref<128x128xbf16, #tpu.memory_space<vmem>>, %arg9: memref<1x128xf32, #tpu.memory_space<vmem>>, %arg10: memref<8x128xf32, #tpu.memory_space<vmem>>, %arg11: memref<2016x160xbf16, #tpu.memory_space<vmem>>) attributes {dimension_semantics = [#tpu.dimension_semantics<parallel>], iteration_bounds = array<i64: 1>, scalar_prefetch = 0 : i64, scratch_operands = 1 : i64, tpu.core_type = #tpu.core_type<tc>, window_params = [{transform_indices = @transform_0, window_bounds = array<i64: 196, 8, 100>}, {pipeline_mode = #tpu.pipeline_mode<synchronous>, transform_indices = @transform_1, window_bounds = array<i64: 100, 128>}, {pipeline_mode = #tpu.pipeline_mode<synchronous>, transform_indices = @transform_2, window_bounds = array<i64: 1, 32>}, {pipeline_mode = #tpu.pipeline_mode<synchronous>, transform_indices = @transform_3, window_bounds = array<i64: 5, 160, 64>}, {pipeline_mode = #tpu.pipeline_mode<synchronous>, transform_indices = @transform_4, window_bounds = array<i64: 1, 64>}, {pipeline_mode = #tpu.pipeline_mode<synchronous>, transform_indices = @transform_5, window_bounds = array<i64: 1600, 128>}, {pipeline_mode = #tpu.pipeline_mode<synchronous>, transform_indices = @transform_6, window_bounds = array<i64: 1, 128>}, {pipeline_mode = #tpu.pipeline_mode<synchronous>, transform_indices = @transform_7, window_bounds = array<i64: 128, 128>}, {pipeline_mode = #tpu.pipeline_mode<synchronous>, transform_indices = @transform_8, window_bounds = array<i64: 1, 128>}, {transform_indices = @transform_9, window_bounds = array<i64: 8, 128>}]} {
    %c0 = arith.constant 0 : index
    %c0_0 = arith.constant 0 : index
    %c0_1 = arith.constant 0 : index
    %0 = vector.load %arg1[%c0, %c0_0, %c0_1] : memref<196x8x100xbf16, #tpu.memory_space<vmem>>, vector<196x8x100xbf16>
    %1 = vector.shape_cast %0 : vector<196x8x100xbf16> to vector<1568x100xbf16>
    %c0_2 = arith.constant 0 : index
    %c0_3 = arith.constant 0 : index
    %2 = vector.load %arg2[%c0_2, %c0_3] : memref<100x128xbf16, #tpu.memory_space<vmem>>, vector<100x128xbf16>
    %cst = arith.constant dense<0.000000e+00> : vector<1568x128xf32>
    %3 = tpu.matmul %1, %2, %cst {dimension_numbers = #tpu.dot_dimension_numbers<[1], [0], [0], [1], [0, 0, 1, 1], [], []>} : vector<1568x100xbf16>, vector<100x128xbf16>, vector<1568x128xf32> -> vector<1568x128xf32>
    %4 = vector.extract_strided_slice %3 {offsets = [0, 0], sizes = [1568, 32], strides = [1, 1]} : vector<1568x128xf32> to vector<1568x32xf32>
    %5 = vector.extract_strided_slice %3 {offsets = [0, 32], sizes = [1568, 32], strides = [1, 1]} : vector<1568x128xf32> to vector<1568x32xf32>
    %6 = arith.maximumf %4, %5 : vector<1568x32xf32>
    %7 = vector.extract_strided_slice %3 {offsets = [0, 64], sizes = [1568, 32], strides = [1, 1]} : vector<1568x128xf32> to vector<1568x32xf32>
    %8 = vector.extract_strided_slice %3 {offsets = [0, 96], sizes = [1568, 32], strides = [1, 1]} : vector<1568x128xf32> to vector<1568x32xf32>
    %9 = arith.maximumf %7, %8 : vector<1568x32xf32>
    %10 = arith.maximumf %6, %9 : vector<1568x32xf32>
    %c0_4 = arith.constant 0 : index
    %c0_5 = arith.constant 0 : index
    %11 = vector.load %arg3[%c0_4, %c0_5] : memref<1x32xf32, #tpu.memory_space<vmem>>, vector<1x32xf32>
    %12 = vector.broadcast %11 : vector<1x32xf32> to vector<1568x32xf32>
    %13 = arith.addf %10, %12 : vector<1568x32xf32>
    %cst_6 = arith.constant 0.000000e+00 : f32
    %14 = vector.broadcast %cst_6 : f32 to vector<1568x32xf32>
    %15 = arith.maximumf %13, %14 : vector<1568x32xf32>
    %16 = arith.truncf %15 : vector<1568x32xf32> to vector<1568x32xbf16>
    %cst_7 = arith.constant 0.000000e+00 : bf16
    %17 = vector.broadcast %cst_7 : bf16 to vector<480x160xbf16>
    %c1536 = arith.constant 1536 : index
    %c0_8 = arith.constant 0 : index
    %18 = vector.load %arg11[%c1536, %c0_8] : memref<2016x160xbf16, #tpu.memory_space<vmem>>, vector<480x160xbf16>
    tpu.vector_store %arg11[%c1536, %c0_8], %17 {strides = array<i32>} : memref<2016x160xbf16, #tpu.memory_space<vmem>>, vector<480x160xbf16>,
    %c0_9 = arith.constant 0 : index
    %c0_10 = arith.constant 0 : index
    %19 = vector.load %arg11[%c0_9, %c0_10] : memref<2016x160xbf16, #tpu.memory_space<vmem>>, vector<1568x32xbf16>
    tpu.vector_store %arg11[%c0_9, %c0_10], %16 {strides = array<i32>} : memref<2016x160xbf16, #tpu.memory_space<vmem>>, vector<1568x32xbf16>,
    %20 = vector.extract_strided_slice %16 {offsets = [8, 0], sizes = [1560, 32], strides = [1, 1]} : vector<1568x32xbf16> to vector<1560x32xbf16>
    %c0_11 = arith.constant 0 : index
    %c32 = arith.constant 32 : index
    %21 = vector.load %arg11[%c0_11, %c32] : memref<2016x160xbf16, #tpu.memory_space<vmem>>, vector<1560x32xbf16>
    tpu.vector_store %arg11[%c0_11, %c32], %20 {strides = array<i32>} : memref<2016x160xbf16, #tpu.memory_space<vmem>>, vector<1560x32xbf16>,
    %22 = vector.extract_strided_slice %16 {offsets = [16, 0], sizes = [1552, 32], strides = [1, 1]} : vector<1568x32xbf16> to vector<1552x32xbf16>
    %c0_12 = arith.constant 0 : index
    %c64 = arith.constant 64 : index
    %23 = vector.load %arg11[%c0_12, %c64] : memref<2016x160xbf16, #tpu.memory_space<vmem>>, vector<1552x32xbf16>
    tpu.vector_store %arg11[%c0_12, %c64], %22 {strides = array<i32>} : memref<2016x160xbf16, #tpu.memory_space<vmem>>, vector<1552x32xbf16>,
    %24 = vector.extract_strided_slice %16 {offsets = [24, 0], sizes = [1544, 32], strides = [1, 1]} : vector<1568x32xbf16> to vector<1544x32xbf16>
    %c0_13 = arith.constant 0 : index
    %c96 = arith.constant 96 : index
    %25 = vector.load %arg11[%c0_13, %c96] : memref<2016x160xbf16, #tpu.memory_space<vmem>>, vector<1544x32xbf16>
    tpu.vector_store %arg11[%c0_13, %c96], %24 {strides = array<i32>} : memref<2016x160xbf16, #tpu.memory_space<vmem>>, vector<1544x32xbf16>,
    %26 = vector.extract_strided_slice %16 {offsets = [32, 0], sizes = [1536, 32], strides = [1, 1]} : vector<1568x32xbf16> to vector<1536x32xbf16>
    %c0_14 = arith.constant 0 : index
    %c128 = arith.constant 128 : index
    %27 = vector.load %arg11[%c0_14, %c128] : memref<2016x160xbf16, #tpu.memory_space<vmem>>, vector<1536x32xbf16>
    tpu.vector_store %arg11[%c0_14, %c128], %26 {strides = array<i32>} : memref<2016x160xbf16, #tpu.memory_space<vmem>>, vector<1536x32xbf16>,
    %c0_15 = arith.constant 0 : index
    %c0_16 = arith.constant 0 : index
    %28 = vector.load %arg11[%c0_15, %c0_16] : memref<2016x160xbf16, #tpu.memory_space<vmem>>, vector<1568x160xbf16>
    %c0_17 = arith.constant 0 : index
    %c0_18 = arith.constant 0 : index
    %c0_19 = arith.constant 0 : index
    %29 = vector.load %arg4[%c0_17, %c0_18, %c0_19] : memref<5x160x64xbf16, #tpu.memory_space<vmem>>, vector<1x160x64xbf16>
    %30 = vector.shape_cast %29 : vector<1x160x64xbf16> to vector<160x64xbf16>
    %cst_20 = arith.constant dense<0.000000e+00> : vector<1568x64xf32>
    %31 = tpu.matmul %28, %30, %cst_20 {dimension_numbers = #tpu.dot_dimension_numbers<[1], [0], [0], [1], [0, 0, 1, 1], [], []>} : vector<1568x160xbf16>, vector<160x64xbf16>, vector<1568x64xf32> -> vector<1568x64xf32>
    %c112 = arith.constant 112 : index
    %c0_21 = arith.constant 0 : index
    %32 = vector.load %arg11[%c112, %c0_21] : memref<2016x160xbf16, #tpu.memory_space<vmem>>, vector<1568x160xbf16>
    %c1 = arith.constant 1 : index
    %c0_22 = arith.constant 0 : index
    %c0_23 = arith.constant 0 : index
    %33 = vector.load %arg4[%c1, %c0_22, %c0_23] : memref<5x160x64xbf16, #tpu.memory_space<vmem>>, vector<1x160x64xbf16>
    %34 = vector.shape_cast %33 : vector<1x160x64xbf16> to vector<160x64xbf16>
    %cst_24 = arith.constant dense<0.000000e+00> : vector<1568x64xf32>
    %35 = tpu.matmul %32, %34, %cst_24 {dimension_numbers = #tpu.dot_dimension_numbers<[1], [0], [0], [1], [0, 0, 1, 1], [], []>} : vector<1568x160xbf16>, vector<160x64xbf16>, vector<1568x64xf32> -> vector<1568x64xf32>
    %36 = arith.addf %31, %35 : vector<1568x64xf32>
    %c224 = arith.constant 224 : index
    %c0_25 = arith.constant 0 : index
    %37 = vector.load %arg11[%c224, %c0_25] : memref<2016x160xbf16, #tpu.memory_space<vmem>>, vector<1568x160xbf16>
    %c2 = arith.constant 2 : index
    %c0_26 = arith.constant 0 : index
    %c0_27 = arith.constant 0 : index
    %38 = vector.load %arg4[%c2, %c0_26, %c0_27] : memref<5x160x64xbf16, #tpu.memory_space<vmem>>, vector<1x160x64xbf16>
    %39 = vector.shape_cast %38 : vector<1x160x64xbf16> to vector<160x64xbf16>
    %cst_28 = arith.constant dense<0.000000e+00> : vector<1568x64xf32>
    %40 = tpu.matmul %37, %39, %cst_28 {dimension_numbers = #tpu.dot_dimension_numbers<[1], [0], [0], [1], [0, 0, 1, 1], [], []>} : vector<1568x160xbf16>, vector<160x64xbf16>, vector<1568x64xf32> -> vector<1568x64xf32>
    %41 = arith.addf %36, %40 : vector<1568x64xf32>
    %c336 = arith.constant 336 : index
    %c0_29 = arith.constant 0 : index
    %42 = vector.load %arg11[%c336, %c0_29] : memref<2016x160xbf16, #tpu.memory_space<vmem>>, vector<1568x160xbf16>
    %c3 = arith.constant 3 : index
    %c0_30 = arith.constant 0 : index
    %c0_31 = arith.constant 0 : index
    %43 = vector.load %arg4[%c3, %c0_30, %c0_31] : memref<5x160x64xbf16, #tpu.memory_space<vmem>>, vector<1x160x64xbf16>
    %44 = vector.shape_cast %43 : vector<1x160x64xbf16> to vector<160x64xbf16>
    %cst_32 = arith.constant dense<0.000000e+00> : vector<1568x64xf32>
    %45 = tpu.matmul %42, %44, %cst_32 {dimension_numbers = #tpu.dot_dimension_numbers<[1], [0], [0], [1], [0, 0, 1, 1], [], []>} : vector<1568x160xbf16>, vector<160x64xbf16>, vector<1568x64xf32> -> vector<1568x64xf32>
    %46 = arith.addf %41, %45 : vector<1568x64xf32>
    %c448 = arith.constant 448 : index
    %c0_33 = arith.constant 0 : index
    %47 = vector.load %arg11[%c448, %c0_33] : memref<2016x160xbf16, #tpu.memory_space<vmem>>, vector<1568x160xbf16>
    %c4 = arith.constant 4 : index
    %c0_34 = arith.constant 0 : index
    %c0_35 = arith.constant 0 : index
    %48 = vector.load %arg4[%c4, %c0_34, %c0_35] : memref<5x160x64xbf16, #tpu.memory_space<vmem>>, vector<1x160x64xbf16>
    %49 = vector.shape_cast %48 : vector<1x160x64xbf16> to vector<160x64xbf16>
    %cst_36 = arith.constant dense<0.000000e+00> : vector<1568x64xf32>
    %50 = tpu.matmul %47, %49, %cst_36 {dimension_numbers = #tpu.dot_dimension_numbers<[1], [0], [0], [1], [0, 0, 1, 1], [], []>} : vector<1568x160xbf16>, vector<160x64xbf16>, vector<1568x64xf32> -> vector<1568x64xf32>
    %51 = arith.addf %46, %50 : vector<1568x64xf32>
    %52 = vector.shape_cast %51 : vector<1568x64xf32> to vector<7x2x112x64xf32>
    %53 = vector.extract_strided_slice %52 {offsets = [0, 0, 0, 0], sizes = [7, 1, 112, 64], strides = [1, 1, 1, 1]} : vector<7x2x112x64xf32> to vector<7x1x112x64xf32>
    %54 = vector.shape_cast %53 : vector<7x1x112x64xf32> to vector<7x112x64xf32>
    %55 = vector.extract_strided_slice %52 {offsets = [0, 1, 0, 0], sizes = [7, 1, 112, 64], strides = [1, 1, 1, 1]} : vector<7x2x112x64xf32> to vector<7x1x112x64xf32>
    %56 = vector.shape_cast %55 : vector<7x1x112x64xf32> to vector<7x112x64xf32>
    %57 = arith.maximumf %54, %56 : vector<7x112x64xf32>
    %58 = vector.shape_cast %57 : vector<7x112x64xf32> to vector<7x7x2x8x64xf32>
    %59 = vector.extract_strided_slice %58 {offsets = [0, 0, 0, 0, 0], sizes = [7, 7, 1, 8, 64], strides = [1, 1, 1, 1, 1]} : vector<7x7x2x8x64xf32> to vector<7x7x1x8x64xf32>
    %60 = vector.shape_cast %59 : vector<7x7x1x8x64xf32> to vector<7x7x8x64xf32>
    %61 = vector.extract_strided_slice %58 {offsets = [0, 0, 1, 0, 0], sizes = [7, 7, 1, 8, 64], strides = [1, 1, 1, 1, 1]} : vector<7x7x2x8x64xf32> to vector<7x7x1x8x64xf32>
    %62 = vector.shape_cast %61 : vector<7x7x1x8x64xf32> to vector<7x7x8x64xf32>
    %63 = arith.maximumf %60, %62 : vector<7x7x8x64xf32>
    %c0_37 = arith.constant 0 : index
    %c0_38 = arith.constant 0 : index
    %64 = vector.load %arg5[%c0_37, %c0_38] : memref<1x64xf32, #tpu.memory_space<vmem>>, vector<1x64xf32>
    %65 = vector.shape_cast %64 : vector<1x64xf32> to vector<1x1x1x64xf32>
    %66 = vector.broadcast %65 : vector<1x1x1x64xf32> to vector<7x7x8x64xf32>
    %67 = arith.addf %63, %66 : vector<7x7x8x64xf32>
    %cst_39 = arith.constant 0.000000e+00 : f32
    %68 = vector.broadcast %cst_39 : f32 to vector<7x7x8x64xf32>
    %69 = arith.maximumf %67, %68 : vector<7x7x8x64xf32>
    %70 = vector.extract_strided_slice %69 {offsets = [0, 0, 0, 0], sizes = [1, 1, 8, 64], strides = [1, 1, 1, 1]} : vector<7x7x8x64xf32> to vector<1x1x8x64xf32>
    %71 = vector.shape_cast %70 : vector<1x1x8x64xf32> to vector<8x64xf32>
    %72 = arith.truncf %71 : vector<8x64xf32> to vector<8x64xbf16>
    %73 = vector.extract_strided_slice %69 {offsets = [0, 1, 0, 0], sizes = [1, 1, 8, 64], strides = [1, 1, 1, 1]} : vector<7x7x8x64xf32> to vector<1x1x8x64xf32>
    %74 = vector.shape_cast %73 : vector<1x1x8x64xf32> to vector<8x64xf32>
    %75 = arith.truncf %74 : vector<8x64xf32> to vector<8x64xbf16>
    %76 = vector.extract_strided_slice %69 {offsets = [0, 2, 0, 0], sizes = [1, 1, 8, 64], strides = [1, 1, 1, 1]} : vector<7x7x8x64xf32> to vector<1x1x8x64xf32>
    %77 = vector.shape_cast %76 : vector<1x1x8x64xf32> to vector<8x64xf32>
    %78 = arith.truncf %77 : vector<8x64xf32> to vector<8x64xbf16>
    %79 = vector.extract_strided_slice %69 {offsets = [0, 3, 0, 0], sizes = [1, 1, 8, 64], strides = [1, 1, 1, 1]} : vector<7x7x8x64xf32> to vector<1x1x8x64xf32>
    %80 = vector.shape_cast %79 : vector<1x1x8x64xf32> to vector<8x64xf32>
    %81 = arith.truncf %80 : vector<8x64xf32> to vector<8x64xbf16>
    %82 = vector.extract_strided_slice %69 {offsets = [0, 4, 0, 0], sizes = [1, 1, 8, 64], strides = [1, 1, 1, 1]} : vector<7x7x8x64xf32> to vector<1x1x8x64xf32>
    %83 = vector.shape_cast %82 : vector<1x1x8x64xf32> to vector<8x64xf32>
    %84 = arith.truncf %83 : vector<8x64xf32> to vector<8x64xbf16>
    %85 = vector.extract_strided_slice %69 {offsets = [1, 0, 0, 0], sizes = [1, 1, 8, 64], strides = [1, 1, 1, 1]} : vector<7x7x8x64xf32> to vector<1x1x8x64xf32>
    %86 = vector.shape_cast %85 : vector<1x1x8x64xf32> to vector<8x64xf32>
    %87 = arith.truncf %86 : vector<8x64xf32> to vector<8x64xbf16>
    %88 = vector.extract_strided_slice %69 {offsets = [1, 1, 0, 0], sizes = [1, 1, 8, 64], strides = [1, 1, 1, 1]} : vector<7x7x8x64xf32> to vector<1x1x8x64xf32>
    %89 = vector.shape_cast %88 : vector<1x1x8x64xf32> to vector<8x64xf32>
    %90 = arith.truncf %89 : vector<8x64xf32> to vector<8x64xbf16>
    %91 = vector.extract_strided_slice %69 {offsets = [1, 2, 0, 0], sizes = [1, 1, 8, 64], strides = [1, 1, 1, 1]} : vector<7x7x8x64xf32> to vector<1x1x8x64xf32>
    %92 = vector.shape_cast %91 : vector<1x1x8x64xf32> to vector<8x64xf32>
    %93 = arith.truncf %92 : vector<8x64xf32> to vector<8x64xbf16>
    %94 = vector.extract_strided_slice %69 {offsets = [1, 3, 0, 0], sizes = [1, 1, 8, 64], strides = [1, 1, 1, 1]} : vector<7x7x8x64xf32> to vector<1x1x8x64xf32>
    %95 = vector.shape_cast %94 : vector<1x1x8x64xf32> to vector<8x64xf32>
    %96 = arith.truncf %95 : vector<8x64xf32> to vector<8x64xbf16>
    %97 = vector.extract_strided_slice %69 {offsets = [1, 4, 0, 0], sizes = [1, 1, 8, 64], strides = [1, 1, 1, 1]} : vector<7x7x8x64xf32> to vector<1x1x8x64xf32>
    %98 = vector.shape_cast %97 : vector<1x1x8x64xf32> to vector<8x64xf32>
    %99 = arith.truncf %98 : vector<8x64xf32> to vector<8x64xbf16>
    %100 = vector.extract_strided_slice %69 {offsets = [2, 0, 0, 0], sizes = [1, 1, 8, 64], strides = [1, 1, 1, 1]} : vector<7x7x8x64xf32> to vector<1x1x8x64xf32>
    %101 = vector.shape_cast %100 : vector<1x1x8x64xf32> to vector<8x64xf32>
    %102 = arith.truncf %101 : vector<8x64xf32> to vector<8x64xbf16>
    %103 = vector.extract_strided_slice %69 {offsets = [2, 1, 0, 0], sizes = [1, 1, 8, 64], strides = [1, 1, 1, 1]} : vector<7x7x8x64xf32> to vector<1x1x8x64xf32>
    %104 = vector.shape_cast %103 : vector<1x1x8x64xf32> to vector<8x64xf32>
    %105 = arith.truncf %104 : vector<8x64xf32> to vector<8x64xbf16>
    %106 = vector.extract_strided_slice %69 {offsets = [2, 2, 0, 0], sizes = [1, 1, 8, 64], strides = [1, 1, 1, 1]} : vector<7x7x8x64xf32> to vector<1x1x8x64xf32>
    %107 = vector.shape_cast %106 : vector<1x1x8x64xf32> to vector<8x64xf32>
    %108 = arith.truncf %107 : vector<8x64xf32> to vector<8x64xbf16>
    %109 = vector.extract_strided_slice %69 {offsets = [2, 3, 0, 0], sizes = [1, 1, 8, 64], strides = [1, 1, 1, 1]} : vector<7x7x8x64xf32> to vector<1x1x8x64xf32>
    %110 = vector.shape_cast %109 : vector<1x1x8x64xf32> to vector<8x64xf32>
    %111 = arith.truncf %110 : vector<8x64xf32> to vector<8x64xbf16>
    %112 = vector.extract_strided_slice %69 {offsets = [2, 4, 0, 0], sizes = [1, 1, 8, 64], strides = [1, 1, 1, 1]} : vector<7x7x8x64xf32> to vector<1x1x8x64xf32>
    %113 = vector.shape_cast %112 : vector<1x1x8x64xf32> to vector<8x64xf32>
    %114 = arith.truncf %113 : vector<8x64xf32> to vector<8x64xbf16>
    %115 = vector.extract_strided_slice %69 {offsets = [3, 0, 0, 0], sizes = [1, 1, 8, 64], strides = [1, 1, 1, 1]} : vector<7x7x8x64xf32> to vector<1x1x8x64xf32>
    %116 = vector.shape_cast %115 : vector<1x1x8x64xf32> to vector<8x64xf32>
    %117 = arith.truncf %116 : vector<8x64xf32> to vector<8x64xbf16>
    %118 = vector.extract_strided_slice %69 {offsets = [3, 1, 0, 0], sizes = [1, 1, 8, 64], strides = [1, 1, 1, 1]} : vector<7x7x8x64xf32> to vector<1x1x8x64xf32>
    %119 = vector.shape_cast %118 : vector<1x1x8x64xf32> to vector<8x64xf32>
    %120 = arith.truncf %119 : vector<8x64xf32> to vector<8x64xbf16>
    %121 = vector.extract_strided_slice %69 {offsets = [3, 2, 0, 0], sizes = [1, 1, 8, 64], strides = [1, 1, 1, 1]} : vector<7x7x8x64xf32> to vector<1x1x8x64xf32>
    %122 = vector.shape_cast %121 : vector<1x1x8x64xf32> to vector<8x64xf32>
    %123 = arith.truncf %122 : vector<8x64xf32> to vector<8x64xbf16>
    %124 = vector.extract_strided_slice %69 {offsets = [3, 3, 0, 0], sizes = [1, 1, 8, 64], strides = [1, 1, 1, 1]} : vector<7x7x8x64xf32> to vector<1x1x8x64xf32>
    %125 = vector.shape_cast %124 : vector<1x1x8x64xf32> to vector<8x64xf32>
    %126 = arith.truncf %125 : vector<8x64xf32> to vector<8x64xbf16>
    %127 = vector.extract_strided_slice %69 {offsets = [3, 4, 0, 0], sizes = [1, 1, 8, 64], strides = [1, 1, 1, 1]} : vector<7x7x8x64xf32> to vector<1x1x8x64xf32>
    %128 = vector.shape_cast %127 : vector<1x1x8x64xf32> to vector<8x64xf32>
    %129 = arith.truncf %128 : vector<8x64xf32> to vector<8x64xbf16>
    %130 = vector.extract_strided_slice %69 {offsets = [4, 0, 0, 0], sizes = [1, 1, 8, 64], strides = [1, 1, 1, 1]} : vector<7x7x8x64xf32> to vector<1x1x8x64xf32>
    %131 = vector.shape_cast %130 : vector<1x1x8x64xf32> to vector<8x64xf32>
    %132 = arith.truncf %131 : vector<8x64xf32> to vector<8x64xbf16>
    %133 = vector.extract_strided_slice %69 {offsets = [4, 1, 0, 0], sizes = [1, 1, 8, 64], strides = [1, 1, 1, 1]} : vector<7x7x8x64xf32> to vector<1x1x8x64xf32>
    %134 = vector.shape_cast %133 : vector<1x1x8x64xf32> to vector<8x64xf32>
    %135 = arith.truncf %134 : vector<8x64xf32> to vector<8x64xbf16>
    %136 = vector.extract_strided_slice %69 {offsets = [4, 2, 0, 0], sizes = [1, 1, 8, 64], strides = [1, 1, 1, 1]} : vector<7x7x8x64xf32> to vector<1x1x8x64xf32>
    %137 = vector.shape_cast %136 : vector<1x1x8x64xf32> to vector<8x64xf32>
    %138 = arith.truncf %137 : vector<8x64xf32> to vector<8x64xbf16>
    %139 = vector.extract_strided_slice %69 {offsets = [4, 3, 0, 0], sizes = [1, 1, 8, 64], strides = [1, 1, 1, 1]} : vector<7x7x8x64xf32> to vector<1x1x8x64xf32>
    %140 = vector.shape_cast %139 : vector<1x1x8x64xf32> to vector<8x64xf32>
    %141 = arith.truncf %140 : vector<8x64xf32> to vector<8x64xbf16>
    %142 = vector.extract_strided_slice %69 {offsets = [4, 4, 0, 0], sizes = [1, 1, 8, 64], strides = [1, 1, 1, 1]} : vector<7x7x8x64xf32> to vector<1x1x8x64xf32>
    %143 = vector.shape_cast %142 : vector<1x1x8x64xf32> to vector<8x64xf32>
    %144 = arith.truncf %143 : vector<8x64xf32> to vector<8x64xbf16>
    %145 = tpu.concatenate %72, %75, %78, %81, %84, %87, %90, %93, %96, %99, %102, %105, %108, %111, %114, %117 in 1 : vector<8x64xbf16>, vector<8x64xbf16>, vector<8x64xbf16>, vector<8x64xbf16>, vector<8x64xbf16>, vector<8x64xbf16>, vector<8x64xbf16>, vector<8x64xbf16>, vector<8x64xbf16>, vector<8x64xbf16>, vector<8x64xbf16>, vector<8x64xbf16>, vector<8x64xbf16>, vector<8x64xbf16>, vector<8x64xbf16>, vector<8x64xbf16> -> vector<8x1024xbf16>
    %146 = tpu.concatenate %120, %123, %126, %129, %132, %135, %138, %141, %144 in 1 : vector<8x64xbf16>, vector<8x64xbf16>, vector<8x64xbf16>, vector<8x64xbf16>, vector<8x64xbf16>, vector<8x64xbf16>, vector<8x64xbf16>, vector<8x64xbf16>, vector<8x64xbf16> -> vector<8x576xbf16>
    %147 = tpu.concatenate %145, %146 in 1 : vector<8x1024xbf16>, vector<8x576xbf16> -> vector<8x1600xbf16>
    %c0_40 = arith.constant 0 : index
    %c0_41 = arith.constant 0 : index
    %148 = vector.load %arg6[%c0_40, %c0_41] : memref<1600x128xbf16, #tpu.memory_space<vmem>>, vector<1600x128xbf16>
    %cst_42 = arith.constant dense<0.000000e+00> : vector<8x128xf32>
    %149 = tpu.matmul %147, %148, %cst_42 {dimension_numbers = #tpu.dot_dimension_numbers<[1], [0], [0], [1], [0, 0, 1, 1], [], []>} : vector<8x1600xbf16>, vector<1600x128xbf16>, vector<8x128xf32> -> vector<8x128xf32>
    %c0_43 = arith.constant 0 : index
    %c0_44 = arith.constant 0 : index
    %150 = vector.load %arg7[%c0_43, %c0_44] : memref<1x128xf32, #tpu.memory_space<vmem>>, vector<1x128xf32>
    %151 = vector.broadcast %150 : vector<1x128xf32> to vector<8x128xf32>
    %152 = arith.addf %149, %151 : vector<8x128xf32>
    %cst_45 = arith.constant 0.000000e+00 : f32
    %153 = vector.broadcast %cst_45 : f32 to vector<8x128xf32>
    %154 = arith.maximumf %152, %153 : vector<8x128xf32>
    %155 = arith.truncf %154 : vector<8x128xf32> to vector<8x128xbf16>
    %c0_46 = arith.constant 0 : index
    %c0_47 = arith.constant 0 : index
    %156 = vector.load %arg8[%c0_46, %c0_47] : memref<128x128xbf16, #tpu.memory_space<vmem>>, vector<128x128xbf16>
    %cst_48 = arith.constant dense<0.000000e+00> : vector<8x128xf32>
    %157 = tpu.matmul %155, %156, %cst_48 {dimension_numbers = #tpu.dot_dimension_numbers<[1], [0], [0], [1], [0, 0, 1, 1], [], []>} : vector<8x128xbf16>, vector<128x128xbf16>, vector<8x128xf32> -> vector<8x128xf32>
    %c0_49 = arith.constant 0 : index
    %c0_50 = arith.constant 0 : index
    %158 = vector.load %arg9[%c0_49, %c0_50] : memref<1x128xf32, #tpu.memory_space<vmem>>, vector<1x128xf32>
    %159 = vector.broadcast %158 : vector<1x128xf32> to vector<8x128xf32>
    %160 = arith.addf %157, %159 : vector<8x128xf32>
    %c0_51 = arith.constant 0 : index
    %c0_52 = arith.constant 0 : index
    %161 = vector.load %arg10[%c0_51, %c0_52] : memref<8x128xf32, #tpu.memory_space<vmem>>, vector<8x128xf32>
    tpu.vector_store %arg10[%c0_51, %c0_52], %160 {strides = array<i32>} : memref<8x128xf32, #tpu.memory_space<vmem>>, vector<8x128xf32>,
    return
  }
  func.func @transform_0(%arg0: i32) -> (i32, i32, i32) {
    %c0_i32 = arith.constant 0 : i32
    %c0_i32_0 = arith.constant 0 : i32
    %c0_i32_1 = arith.constant 0 : i32
    return %c0_i32, %arg0, %c0_i32_0 : i32, i32, i32
  }
  func.func @transform_1(%arg0: i32) -> (i32, i32) {
    %c0_i32 = arith.constant 0 : i32
    %c0_i32_0 = arith.constant 0 : i32
    %c0_i32_1 = arith.constant 0 : i32
    return %c0_i32, %c0_i32_0 : i32, i32
  }
  func.func @transform_2(%arg0: i32) -> (i32, i32) {
    %c0_i32 = arith.constant 0 : i32
    %c0_i32_0 = arith.constant 0 : i32
    %c0_i32_1 = arith.constant 0 : i32
    return %c0_i32, %c0_i32_0 : i32, i32
  }
  func.func @transform_3(%arg0: i32) -> (i32, i32, i32) {
    %c0_i32 = arith.constant 0 : i32
    %c0_i32_0 = arith.constant 0 : i32
    %c0_i32_1 = arith.constant 0 : i32
    %c0_i32_2 = arith.constant 0 : i32
    return %c0_i32, %c0_i32_0, %c0_i32_1 : i32, i32, i32
  }
  func.func @transform_4(%arg0: i32) -> (i32, i32) {
    %c0_i32 = arith.constant 0 : i32
    %c0_i32_0 = arith.constant 0 : i32
    %c0_i32_1 = arith.constant 0 : i32
    return %c0_i32, %c0_i32_0 : i32, i32
  }
  func.func @transform_5(%arg0: i32) -> (i32, i32) {
    %c0_i32 = arith.constant 0 : i32
    %c0_i32_0 = arith.constant 0 : i32
    %c0_i32_1 = arith.constant 0 : i32
    return %c0_i32, %c0_i32_0 : i32, i32
  }
  func.func @transform_6(%arg0: i32) -> (i32, i32) {
    %c0_i32 = arith.constant 0 : i32
    %c0_i32_0 = arith.constant 0 : i32
    %c0_i32_1 = arith.constant 0 : i32
    return %c0_i32, %c0_i32_0 : i32, i32
  }
  func.func @transform_7(%arg0: i32) -> (i32, i32) {
    %c0_i32 = arith.constant 0 : i32
    %c0_i32_0 = arith.constant 0 : i32
    %c0_i32_1 = arith.constant 0 : i32
    return %c0_i32, %c0_i32_0 : i32, i32
  }
  func.func @transform_8(%arg0: i32) -> (i32, i32) {
    %c0_i32 = arith.constant 0 : i32
    %c0_i32_0 = arith.constant 0 : i32
    %c0_i32_1 = arith.constant 0 : i32
    return %c0_i32, %c0_i32_0 : i32, i32
  }
  func.func @transform_9(%arg0: i32) -> (i32, i32) {
    %c0_i32 = arith.constant 0 : i32
    %c0_i32_0 = arith.constant 0 : i32
    return %arg0, %c0_i32 : i32, i32
  }
}

</mosaic_0001>

<llo_original>
// kernel: lenet_forward.1
$region0: #{lenet_forward.1}
  #allocation0 [shape = 'u32[]', space=smem, size = 0x4, offset = 0x4, fixed_abs, tag = 'smem constant byte address 0x4 - core index']
  #allocation1 [shape = 'u32[144,128]{1,0:T(1,128)}', space=vmem, size = 0x12000, scoped, tag = 'internal scratch']
  #allocation2 [shape = 'bf16[2016,160]{1,0:T(16,128)(2,1)}', space=vmem, size = 0xfc000, scoped, tag = 'scratch operand']
  %s0 = inlined_call_operand.vmem [shape: bf16[196,8,100], index: 0, kind: input, shape index: {}]
  %s1 = inlined_call_operand.vmem [shape: bf16[100,128], index: 1, kind: input, shape index: {}]
  %s2 = inlined_call_operand.vmem [shape: f32[1,32], index: 2, kind: input, shape index: {}]
  %s3 = inlined_call_operand.vmem [shape: bf16[5,160,64], index: 3, kind: input, shape index: {}]
  %s4 = inlined_call_operand.vmem [shape: f32[1,64], index: 4, kind: input, shape index: {}]
  %s5 = inlined_call_operand.vmem [shape: bf16[1600,128], index: 5, kind: input, shape index: {}]
  %s6 = inlined_call_operand.vmem [shape: f32[1,128], index: 6, kind: input, shape index: {}]
  %s7 = inlined_call_operand.vmem [shape: bf16[128,128], index: 7, kind: input, shape index: {}]
  %s8 = inlined_call_operand.vmem [shape: f32[1,128], index: 8, kind: input, shape index: {}]
  %s9 = inlined_call_operand.vmem [shape: f32[8,128], index: 9, kind: output, shape index: {}]
  %s10 = sld [smem:[#allocation0]]
  $region46: #{lenet_forward.1} parent=0
    _
  %s12 = ssub.s32 1, %s10
  %s13 = scalar_select 0, %s12, %s10
  // Predicated region
  $region2: #{lenet_forward.1} parent=0 // pred_check
    _
  $region3: #{lenet_forward.1} parent=0 // pred_check_branch
    %15 = sbr.rel (0) target = $region5
  $region4: #{lenet_forward.1} parent=0 // pred_region
    _
  $region5: #{lenet_forward.1} parent=0 // pred_fallthru
    _
  // Predicated region
  $region6: #{lenet_forward.1} parent=0 // pred_check
    _
  $region7: #{lenet_forward.1} parent=0 // pred_check_branch
    %17 = sbr.rel (0) target = $region9
  $region8: #{lenet_forward.1} parent=0 // pred_region
    _
  $region9: #{lenet_forward.1} parent=0 // pred_fallthru
    _
  // Predicated region
  $region10: #{lenet_forward.1} parent=0 // pred_check
    _
  $region11: #{lenet_forward.1} parent=0 // pred_check_branch
    %19 = sbr.rel (0) target = $region13
  $region12: #{lenet_forward.1} parent=0 // pred_region
    _
  $region13: #{lenet_forward.1} parent=0 // pred_fallthru
    _
  // Predicated region
  $region14: #{lenet_forward.1} parent=0 // pred_check
    _
  $region15: #{lenet_forward.1} parent=0 // pred_check_branch
    %21 = sbr.rel (0) target = $region17
  $region16: #{lenet_forward.1} parent=0 // pred_region
    _
  $region17: #{lenet_forward.1} parent=0 // pred_fallthru
    _
  // Predicated region
  $region18: #{lenet_forward.1} parent=0 // pred_check
    _
  $region19: #{lenet_forward.1} parent=0 // pred_check_branch
    %23 = sbr.rel (0) target = $region21
  $region20: #{lenet_forward.1} parent=0 // pred_region
    _
  $region21: #{lenet_forward.1} parent=0 // pred_fallthru
    _
  // Predicated region
  $region22: #{lenet_forward.1} parent=0 // pred_check
    _
  $region23: #{lenet_forward.1} parent=0 // pred_check_branch
    %25 = sbr.rel (0) target = $region25
  $region24: #{lenet_forward.1} parent=0 // pred_region
    _
  $region25: #{lenet_forward.1} parent=0 // pred_fallthru
    _
  // Predicated region
  $region26: #{lenet_forward.1} parent=0 // pred_check
    _
  $region27: #{lenet_forward.1} parent=0 // pred_check_branch
    %27 = sbr.rel (0) target = $region29
  $region28: #{lenet_forward.1} parent=0 // pred_region
    _
  $region29: #{lenet_forward.1} parent=0 // pred_fallthru
    _
  // Predicated region
  $region30: #{lenet_forward.1} parent=0 // pred_check
    _
  $region31: #{lenet_forward.1} parent=0 // pred_check_branch
    %29 = sbr.rel (0) target = $region33
  $region32: #{lenet_forward.1} parent=0 // pred_region
    _
  $region33: #{lenet_forward.1} parent=0 // pred_fallthru
    _
  // Predicated region
  $region34: #{lenet_forward.1} parent=0 // pred_check
    _
  $region35: #{lenet_forward.1} parent=0 // pred_check_branch
    %31 = sbr.rel (0) target = $region37
  $region36: #{lenet_forward.1} parent=0 // pred_region
    _
  $region37: #{lenet_forward.1} parent=0 // pred_fallthru
    _
  %v33 = vld [vmem:[%s0] sm:$0xf]
  %v34 = vld [vmem:[%s0 + $0x4] sm:$0xf]
  %v35 = vld [vmem:[%s0 + $0x8] sm:$0xf]
  %v36 = vld [vmem:[%s0 + $0xc] sm:$0xf]
  %v37 = vld [vmem:[%s0 + $0x10] sm:$0xf]
  %v38 = vld [vmem:[%s0 + $0x14] sm:$0xf]
  %v39 = vld [vmem:[%s0 + $0x18] sm:$0xf]
  %v40 = vld [vmem:[%s0 + $0x1c] sm:$0xf]
  %v41 = vld [vmem:[%s0 + $0x20] sm:$0xf]
  %v42 = vld [vmem:[%s0 + $0x24] sm:$0xf]
  %v43 = vld [vmem:[%s0 + $0x28] sm:$0xf]
  %v44 = vld [vmem:[%s0 + $0x2c] sm:$0xf]
  %v45 = vld [vmem:[%s0 + $0x30] sm:$0xf]
  %v46 = vld [vmem:[%s0 + $0x34] sm:$0xf]
  %v47 = vld [vmem:[%s0 + $0x38] sm:$0xf]
  %v48 = vld [vmem:[%s0 + $0x3c] sm:$0xf]
  %v49 = vld [vmem:[%s0 + $0x40] sm:$0xf]
  %v50 = vld [vmem:[%s0 + $0x44] sm:$0xf]
  %v51 = vld [vmem:[%s0 + $0x48] sm:$0xf]
  %v52 = vld [vmem:[%s0 + $0x4c] sm:$0xf]
  %v53 = vld [vmem:[%s0 + $0x50] sm:$0xf]
  %v54 = vld [vmem:[%s0 + $0x54] sm:$0xf]
  %v55 = vld [vmem:[%s0 + $0x58] sm:$0xf]
  %v56 = vld [vmem:[%s0 + $0x5c] sm:$0xf]
  %v57 = vld [vmem:[%s0 + $0x60] sm:$0xf]
  %v58 = vld [vmem:[%s0 + $0x64] sm:$0xf]
  %v59 = vld [vmem:[%s0 + $0x68] sm:$0xf]
  %v60 = vld [vmem:[%s0 + $0x6c] sm:$0xf]
  %v61 = vld [vmem:[%s0 + $0x70] sm:$0xf]
  %v62 = vld [vmem:[%s0 + $0x74] sm:$0xf]
  %v63 = vld [vmem:[%s0 + $0x78] sm:$0xf]
  %v64 = vld [vmem:[%s0 + $0x7c] sm:$0xf]
  %v65 = vld [vmem:[%s0 + $0x80] sm:$0xf]
  %v66 = vld [vmem:[%s0 + $0x84] sm:$0xf]
  %v67 = vld [vmem:[%s0 + $0x88] sm:$0xf]
  %v68 = vld [vmem:[%s0 + $0x8c] sm:$0xf]
  %v69 = vld [vmem:[%s0 + $0x90] sm:$0xf]
  %v70 = vld [vmem:[%s0 + $0x94] sm:$0xf]
  %v71 = vld [vmem:[%s0 + $0x98] sm:$0xf]
  %v72 = vld [vmem:[%s0 + $0x9c] sm:$0xf]
  %v73 = vld [vmem:[%s0 + $0xa0] sm:$0xf]
  %v74 = vld [vmem:[%s0 + $0xa4] sm:$0xf]
  %v75 = vld [vmem:[%s0 + $0xa8] sm:$0xf]
  %v76 = vld [vmem:[%s0 + $0xac] sm:$0xf]
  %v77 = vld [vmem:[%s0 + $0xb0] sm:$0xf]
  %v78 = vld [vmem:[%s0 + $0xb4] sm:$0xf]
  %v79 = vld [vmem:[%s0 + $0xb8] sm:$0xf]
  %v80 = vld [vmem:[%s0 + $0xbc] sm:$0xf]
  %v81 = vld [vmem:[%s0 + $0xc0] sm:$0xf]
  %v82 = vld [vmem:[%s0 + $0xc4] sm:$0xf]
  %v83 = vld [vmem:[%s0 + $0xc8] sm:$0xf]
  %v84 = vld [vmem:[%s0 + $0xcc] sm:$0xf]
  %v85 = vld [vmem:[%s0 + $0xd0] sm:$0xf]
  %v86 = vld [vmem:[%s0 + $0xd4] sm:$0xf]
  %v87 = vld [vmem:[%s0 + $0xd8] sm:$0xf]
  %v88 = vld [vmem:[%s0 + $0xdc] sm:$0xf]
  %v89 = vld [vmem:[%s0 + $0xe0] sm:$0xf]
  %v90 = vld [vmem:[%s0 + $0xe4] sm:$0xf]
  %v91 = vld [vmem:[%s0 + $0xe8] sm:$0xf]
  %v92 = vld [vmem:[%s0 + $0xec] sm:$0xf]
  %v93 = vld [vmem:[%s0 + $0xf0] sm:$0xf]
  %v94 = vld [vmem:[%s0 + $0xf4] sm:$0xf]
  %v95 = vld [vmem:[%s0 + $0xf8] sm:$0xf]
  %v96 = vld [vmem:[%s0 + $0xfc] sm:$0xf]
  %v97 = vld [vmem:[%s0 + $0x100] sm:$0xf]
  %v98 = vld [vmem:[%s0 + $0x104] sm:$0xf]
  %v99 = vld [vmem:[%s0 + $0x108] sm:$0xf]
  %v100 = vld [vmem:[%s0 + $0x10c] sm:$0xf]
  %v101 = vld [vmem:[%s0 + $0x110] sm:$0xf]
  %v102 = vld [vmem:[%s0 + $0x114] sm:$0xf]
  %v103 = vld [vmem:[%s0 + $0x118] sm:$0xf]
  %v104 = vld [vmem:[%s0 + $0x11c] sm:$0xf]
  %v105 = vld [vmem:[%s0 + $0x120] sm:$0xf]
  %v106 = vld [vmem:[%s0 + $0x124] sm:$0xf]
  %v107 = vld [vmem:[%s0 + $0x128] sm:$0xf]
  %v108 = vld [vmem:[%s0 + $0x12c] sm:$0xf]
  %v109 = vld [vmem:[%s0 + $0x130] sm:$0xf]
  %v110 = vld [vmem:[%s0 + $0x134] sm:$0xf]
  %v111 = vld [vmem:[%s0 + $0x138] sm:$0xf]
  %v112 = vld [vmem:[%s0 + $0x13c] sm:$0xf]
  %v113 = vld [vmem:[%s0 + $0x140] sm:$0xf]
  %v114 = vld [vmem:[%s0 + $0x144] sm:$0xf]
  %v115 = vld [vmem:[%s0 + $0x148] sm:$0xf]
  %v116 = vld [vmem:[%s0 + $0x14c] sm:$0xf]
  %v117 = vld [vmem:[%s0 + $0x150] sm:$0xf]
  %v118 = vld [vmem:[%s0 + $0x154] sm:$0xf]
  %v119 = vld [vmem:[%s0 + $0x158] sm:$0xf]
  %v120 = vld [vmem:[%s0 + $0x15c] sm:$0xf]
  %v121 = vld [vmem:[%s0 + $0x160] sm:$0xf]
  %v122 = vld [vmem:[%s0 + $0x164] sm:$0xf]
  %v123 = vld [vmem:[%s0 + $0x168] sm:$0xf]
  %v124 = vld [vmem:[%s0 + $0x16c] sm:$0xf]
  %v125 = vld [vmem:[%s0 + $0x170] sm:$0xf]
  %v126 = vld [vmem:[%s0 + $0x174] sm:$0xf]
  %v127 = vld [vmem:[%s0 + $0x178] sm:$0xf]
  %v128 = vld [vmem:[%s0 + $0x17c] sm:$0xf]
  %v129 = vld [vmem:[%s0 + $0x180] sm:$0xf]
  %v130 = vld [vmem:[%s0 + $0x184] sm:$0xf]
  %v131 = vld [vmem:[%s0 + $0x188] sm:$0xf]
  %v132 = vld [vmem:[%s0 + $0x18c] sm:$0xf]
  %v133 = vld [vmem:[%s0 + $0x190] sm:$0xf]
  %v134 = vld [vmem:[%s0 + $0x194] sm:$0xf]
  %v135 = vld [vmem:[%s0 + $0x198] sm:$0xf]
  %v136 = vld [vmem:[%s0 + $0x19c] sm:$0xf]
  %v137 = vld [vmem:[%s0 + $0x1a0] sm:$0xf]
  %v138 = vld [vmem:[%s0 + $0x1a4] sm:$0xf]
  %v139 = vld [vmem:[%s0 + $0x1a8] sm:$0xf]
  %v140 = vld [vmem:[%s0 + $0x1ac] sm:$0xf]
  %v141 = vld [vmem:[%s0 + $0x1b0] sm:$0xf]
  %v142 = vld [vmem:[%s0 + $0x1b4] sm:$0xf]
  %v143 = vld [vmem:[%s0 + $0x1b8] sm:$0xf]
  %v144 = vld [vmem:[%s0 + $0x1bc] sm:$0xf]
  %v145 = vld [vmem:[%s0 + $0x1c0] sm:$0xf]
  %v146 = vld [vmem:[%s0 + $0x1c4] sm:$0xf]
  %v147 = vld [vmem:[%s0 + $0x1c8] sm:$0xf]
  %v148 = vld [vmem:[%s0 + $0x1cc] sm:$0xf]
  %v149 = vld [vmem:[%s0 + $0x1d0] sm:$0xf]
  %v150 = vld [vmem:[%s0 + $0x1d4] sm:$0xf]
  %v151 = vld [vmem:[%s0 + $0x1d8] sm:$0xf]
  %v152 = vld [vmem:[%s0 + $0x1dc] sm:$0xf]
  %v153 = vld [vmem:[%s0 + $0x1e0] sm:$0xf]
  %v154 = vld [vmem:[%s0 + $0x1e4] sm:$0xf]
  %v155 = vld [vmem:[%s0 + $0x1e8] sm:$0xf]
  %v156 = vld [vmem:[%s0 + $0x1ec] sm:$0xf]
  %v157 = vld [vmem:[%s0 + $0x1f0] sm:$0xf]
  %v158 = vld [vmem:[%s0 + $0x1f4] sm:$0xf]
  %v159 = vld [vmem:[%s0 + $0x1f8] sm:$0xf]
  %v160 = vld [vmem:[%s0 + $0x1fc] sm:$0xf]
  %v161 = vld [vmem:[%s0 + $0x200] sm:$0xf]
  %v162 = vld [vmem:[%s0 + $0x204] sm:$0xf]
  %v163 = vld [vmem:[%s0 + $0x208] sm:$0xf]
  %v164 = vld [vmem:[%s0 + $0x20c] sm:$0xf]
  %v165 = vld [vmem:[%s0 + $0x210] sm:$0xf]
  %v166 = vld [vmem:[%s0 + $0x214] sm:$0xf]
  %v167 = vld [vmem:[%s0 + $0x218] sm:$0xf]
  %v168 = vld [vmem:[%s0 + $0x21c] sm:$0xf]
  %v169 = vld [vmem:[%s0 + $0x220] sm:$0xf]
  %v170 = vld [vmem:[%s0 + $0x224] sm:$0xf]
  %v171 = vld [vmem:[%s0 + $0x228] sm:$0xf]
  %v172 = vld [vmem:[%s0 + $0x22c] sm:$0xf]
  %v173 = vld [vmem:[%s0 + $0x230] sm:$0xf]
  %v174 = vld [vmem:[%s0 + $0x234] sm:$0xf]
  %v175 = vld [vmem:[%s0 + $0x238] sm:$0xf]
  %v176 = vld [vmem:[%s0 + $0x23c] sm:$0xf]
  %v177 = vld [vmem:[%s0 + $0x240] sm:$0xf]
  %v178 = vld [vmem:[%s0 + $0x244] sm:$0xf]
  %v179 = vld [vmem:[%s0 + $0x248] sm:$0xf]
  %v180 = vld [vmem:[%s0 + $0x24c] sm:$0xf]
  %v181 = vld [vmem:[%s0 + $0x250] sm:$0xf]
  %v182 = vld [vmem:[%s0 + $0x254] sm:$0xf]
  %v183 = vld [vmem:[%s0 + $0x258] sm:$0xf]
  %v184 = vld [vmem:[%s0 + $0x25c] sm:$0xf]
  %v185 = vld [vmem:[%s0 + $0x260] sm:$0xf]
  %v186 = vld [vmem:[%s0 + $0x264] sm:$0xf]
  %v187 = vld [vmem:[%s0 + $0x268] sm:$0xf]
  %v188 = vld [vmem:[%s0 + $0x26c] sm:$0xf]
  %v189 = vld [vmem:[%s0 + $0x270] sm:$0xf]
  %v190 = vld [vmem:[%s0 + $0x274] sm:$0xf]
  %v191 = vld [vmem:[%s0 + $0x278] sm:$0xf]
  %v192 = vld [vmem:[%s0 + $0x27c] sm:$0xf]
  %v193 = vld [vmem:[%s0 + $0x280] sm:$0xf]
  %v194 = vld [vmem:[%s0 + $0x284] sm:$0xf]
  %v195 = vld [vmem:[%s0 + $0x288] sm:$0xf]
  %v196 = vld [vmem:[%s0 + $0x28c] sm:$0xf]
  %v197 = vld [vmem:[%s0 + $0x290] sm:$0xf]
  %v198 = vld [vmem:[%s0 + $0x294] sm:$0xf]
  %v199 = vld [vmem:[%s0 + $0x298] sm:$0xf]
  %v200 = vld [vmem:[%s0 + $0x29c] sm:$0xf]
  %v201 = vld [vmem:[%s0 + $0x2a0] sm:$0xf]
  %v202 = vld [vmem:[%s0 + $0x2a4] sm:$0xf]
  %v203 = vld [vmem:[%s0 + $0x2a8] sm:$0xf]
  %v204 = vld [vmem:[%s0 + $0x2ac] sm:$0xf]
  %v205 = vld [vmem:[%s0 + $0x2b0] sm:$0xf]
  %v206 = vld [vmem:[%s0 + $0x2b4] sm:$0xf]
  %v207 = vld [vmem:[%s0 + $0x2b8] sm:$0xf]
  %v208 = vld [vmem:[%s0 + $0x2bc] sm:$0xf]
  %v209 = vld [vmem:[%s0 + $0x2c0] sm:$0xf]
  %v210 = vld [vmem:[%s0 + $0x2c4] sm:$0xf]
  %v211 = vld [vmem:[%s0 + $0x2c8] sm:$0xf]
  %v212 = vld [vmem:[%s0 + $0x2cc] sm:$0xf]
  %v213 = vld [vmem:[%s0 + $0x2d0] sm:$0xf]
  %v214 = vld [vmem:[%s0 + $0x2d4] sm:$0xf]
  %v215 = vld [vmem:[%s0 + $0x2d8] sm:$0xf]
  %v216 = vld [vmem:[%s0 + $0x2dc] sm:$0xf]
  %v217 = vld [vmem:[%s0 + $0x2e0] sm:$0xf]
  %v218 = vld [vmem:[%s0 + $0x2e4] sm:$0xf]
  %v219 = vld [vmem:[%s0 + $0x2e8] sm:$0xf]
  %v220 = vld [vmem:[%s0 + $0x2ec] sm:$0xf]
  %v221 = vld [vmem:[%s0 + $0x2f0] sm:$0xf]
  %v222 = vld [vmem:[%s0 + $0x2f4] sm:$0xf]
  %v223 = vld [vmem:[%s0 + $0x2f8] sm:$0xf]
  %v224 = vld [vmem:[%s0 + $0x2fc] sm:$0xf]
  %v225 = vld [vmem:[%s0 + $0x300] sm:$0xf]
  %v226 = vld [vmem:[%s0 + $0x304] sm:$0xf]
  %v227 = vld [vmem:[%s0 + $0x308] sm:$0xf]
  %v228 = vld [vmem:[%s0 + $0x30c] sm:$0xf]
  %v229 = vld [vmem:[%s1] sm:$0xf]
  %v230 = vld [vmem:[%s1 + $0x4] sm:$0xf]
  %v231 = vld [vmem:[%s1 + $0x8] sm:$0xf]
  %v232 = vld [vmem:[%s1 + $0xc] sm:$0xf]
  %v233 = vld [vmem:[%s1 + $0x10] sm:$0xf]
  %v234 = vld [vmem:[%s1 + $0x14] sm:$0xf]
  %v235 = vld [vmem:[%s1 + $0x18] sm:$0xf]
  %v236 = vld [vmem:[%s1 + $0x1c] sm:$0xf]
  %v237 = vld [vmem:[%s1 + $0x20] sm:$0xf]
  %v238 = vld [vmem:[%s1 + $0x24] sm:$0xf]
  %v239 = vld [vmem:[%s1 + $0x28] sm:$0xf]
  %v240 = vld [vmem:[%s1 + $0x2c] sm:$0xf]
  %v241 = vld [vmem:[%s1 + $0x30] sm:$0x3]
  %v438 = vunpack.c.l.b16 %v33
  %v439 = vunpack.c.l.b16 %v34
  %v440 = vunpack.c.l.b16 %v35
  %v441 = vunpack.c.l.b16 %v36
  %v442 = vunpack.c.l.b16 %v37
  %v443 = vunpack.c.l.b16 %v38
  %v444 = vunpack.c.l.b16 %v39
  %v445 = vunpack.c.l.b16 %v40
  %v446 = vunpack.c.l.b16 %v41
  %v447 = vunpack.c.l.b16 %v42
  %v448 = vunpack.c.l.b16 %v43
  %v449 = vunpack.c.l.b16 %v44
  %v450 = vunpack.c.l.b16 %v45
  %v451 = vunpack.c.l.b16 %v46
  %v452 = vunpack.c.l.b16 %v47
  %v453 = vunpack.c.l.b16 %v48
  %v454 = vunpack.c.l.b16 %v49
  %v455 = vunpack.c.l.b16 %v50
  %v456 = vunpack.c.l.b16 %v51
  %v457 = vunpack.c.l.b16 %v52
  %v458 = vunpack.c.l.b16 %v53
  %v459 = vunpack.c.l.b16 %v54
  %v460 = vunpack.c.l.b16 %v55
  %v461 = vunpack.c.l.b16 %v56
  %v462 = vunpack.c.l.b16 %v57
  %v463 = vunpack.c.l.b16 %v58
  %v464 = vunpack.c.l.b16 %v59
  %v465 = vunpack.c.l.b16 %v60
  %v466 = vunpack.c.l.b16 %v61
  %v467 = vunpack.c.l.b16 %v62
  %v468 = vunpack.c.l.b16 %v63
  %v469 = vunpack.c.l.b16 %v64
  %v470 = vunpack.c.l.b16 %v65
  %v471 = vunpack.c.l.b16 %v66
  %v472 = vunpack.c.l.b16 %v67
  %v473 = vunpack.c.l.b16 %v68
  %v474 = vunpack.c.l.b16 %v69
  %v475 = vunpack.c.l.b16 %v70
  %v476 = vunpack.c.l.b16 %v71
  %v477 = vunpack.c.l.b16 %v72
  %v478 = vunpack.c.l.b16 %v73
  %v479 = vunpack.c.l.b16 %v74
  %v480 = vunpack.c.l.b16 %v75
  %v481 = vunpack.c.l.b16 %v76
  %v482 = vunpack.c.l.b16 %v77
  %v483 = vunpack.c.l.b16 %v78
  %v484 = vunpack.c.l.b16 %v79
  %v485 = vunpack.c.l.b16 %v80
  %v486 = vunpack.c.l.b16 %v81
  %v487 = vunpack.c.l.b16 %v82
  %v488 = vunpack.c.l.b16 %v83
  %v489 = vunpack.c.l.b16 %v84
  %v490 = vunpack.c.l.b16 %v85
  %v491 = vunpack.c.l.b16 %v86
  %v492 = vunpack.c.l.b16 %v87
  %v493 = vunpack.c.l.b16 %v88
  %v494 = vunpack.c.l.b16 %v89
  %v495 = vunpack.c.l.b16 %v90
  %v496 = vunpack.c.l.b16 %v91
  %v497 = vunpack.c.l.b16 %v92
  %v498 = vunpack.c.l.b16 %v93
  %v499 = vunpack.c.l.b16 %v94
  %v500 = vunpack.c.l.b16 %v95
  %v501 = vunpack.c.l.b16 %v96
  %v502 = vunpack.c.l.b16 %v97
  %v503 = vunpack.c.l.b16 %v98
  %v504 = vunpack.c.l.b16 %v99
  %v505 = vunpack.c.l.b16 %v100
  %v506 = vunpack.c.l.b16 %v101
  %v507 = vunpack.c.l.b16 %v102
  %v508 = vunpack.c.l.b16 %v103
  %v509 = vunpack.c.l.b16 %v104
  %v510 = vunpack.c.l.b16 %v105
  %v511 = vunpack.c.l.b16 %v106
  %v512 = vunpack.c.l.b16 %v107
  %v513 = vunpack.c.l.b16 %v108
  %v514 = vunpack.c.l.b16 %v109
  %v515 = vunpack.c.l.b16 %v110
  %v516 = vunpack.c.l.b16 %v111
  %v517 = vunpack.c.l.b16 %v112
  %v518 = vunpack.c.l.b16 %v113
  %v519 = vunpack.c.l.b16 %v114
  %v520 = vunpack.c.l.b16 %v115
  %v521 = vunpack.c.l.b16 %v116
  %v522 = vunpack.c.l.b16 %v117
  %v523 = vunpack.c.l.b16 %v118
  %v524 = vunpack.c.l.b16 %v119
  %v525 = vunpack.c.l.b16 %v120
  %v526 = vunpack.c.l.b16 %v121
  %v527 = vunpack.c.l.b16 %v122
  %v528 = vunpack.c.l.b16 %v123
  %v529 = vunpack.c.l.b16 %v124
  %v530 = vunpack.c.l.b16 %v125
  %v531 = vunpack.c.l.b16 %v126
  %v532 = vunpack.c.l.b16 %v127
  %v533 = vunpack.c.l.b16 %v128
  %v534 = vunpack.c.l.b16 %v129
  %v535 = vunpack.c.l.b16 %v130
  %v536 = vunpack.c.l.b16 %v131
  %v537 = vunpack.c.l.b16 %v132
  %v538 = vunpack.c.l.b16 %v133
  %v539 = vunpack.c.l.b16 %v134
  %v540 = vunpack.c.l.b16 %v135
  %v541 = vunpack.c.l.b16 %v136
  %v542 = vunpack.c.l.b16 %v137
  %v543 = vunpack.c.l.b16 %v138
  %v544 = vunpack.c.l.b16 %v139
  %v545 = vunpack.c.l.b16 %v140
  %v546 = vunpack.c.l.b16 %v141
  %v547 = vunpack.c.l.b16 %v142
  %v548 = vunpack.c.l.b16 %v143
  %v549 = vunpack.c.l.b16 %v144
  %v550 = vunpack.c.l.b16 %v145
  %v551 = vunpack.c.l.b16 %v146
  %v552 = vunpack.c.l.b16 %v147
  %v553 = vunpack.c.l.b16 %v148
  %v554 = vunpack.c.l.b16 %v149
  %v555 = vunpack.c.l.b16 %v150
  %v556 = vunpack.c.l.b16 %v151
  %v557 = vunpack.c.l.b16 %v152
  %v558 = vunpack.c.l.b16 %v153
  %v559 = vunpack.c.l.b16 %v154
  %v560 = vunpack.c.l.b16 %v155
  %v561 = vunpack.c.l.b16 %v156
  %v562 = vunpack.c.l.b16 %v157
  %v563 = vunpack.c.l.b16 %v158
  %v564 = vunpack.c.l.b16 %v159
  %v565 = vunpack.c.l.b16 %v160
  %v566 = vunpack.c.l.b16 %v161
  %v567 = vunpack.c.l.b16 %v162
  %v568 = vunpack.c.l.b16 %v163
  %v569 = vunpack.c.l.b16 %v164
  %v570 = vunpack.c.l.b16 %v165
  %v571 = vunpack.c.l.b16 %v166
  %v572 = vunpack.c.l.b16 %v167
  %v573 = vunpack.c.l.b16 %v168
  %v574 = vunpack.c.l.b16 %v169
  %v575 = vunpack.c.l.b16 %v170
  %v576 = vunpack.c.l.b16 %v171
  %v577 = vunpack.c.l.b16 %v172
  %v578 = vunpack.c.l.b16 %v173
  %v579 = vunpack.c.l.b16 %v174
  %v580 = vunpack.c.l.b16 %v175
  %v581 = vunpack.c.l.b16 %v176
  %v582 = vunpack.c.l.b16 %v177
  %v583 = vunpack.c.l.b16 %v178
  %v584 = vunpack.c.l.b16 %v179
  %v585 = vunpack.c.l.b16 %v180
  %v586 = vunpack.c.l.b16 %v181
  %v587 = vunpack.c.l.b16 %v182
  %v588 = vunpack.c.l.b16 %v183
  %v589 = vunpack.c.l.b16 %v184
  %v590 = vunpack.c.l.b16 %v185
  %v591 = vunpack.c.l.b16 %v186
  %v592 = vunpack.c.l.b16 %v187
  %v593 = vunpack.c.l.b16 %v188
  %v594 = vunpack.c.l.b16 %v189
  %v595 = vunpack.c.l.b16 %v190
  %v596 = vunpack.c.l.b16 %v191
  %v597 = vunpack.c.l.b16 %v192
  %v598 = vunpack.c.l.b16 %v193
  %v599 = vunpack.c.l.b16 %v194
  %v600 = vunpack.c.l.b16 %v195
  %v601 = vunpack.c.l.b16 %v196
  %v602 = vunpack.c.l.b16 %v197
  %v603 = vunpack.c.l.b16 %v198
  %v604 = vunpack.c.l.b16 %v199
  %v605 = vunpack.c.l.b16 %v200
  %v606 = vunpack.c.l.b16 %v201
  %v607 = vunpack.c.l.b16 %v202
  %v608 = vunpack.c.l.b16 %v203
  %v609 = vunpack.c.l.b16 %v204
  %v610 = vunpack.c.l.b16 %v205
  %v611 = vunpack.c.l.b16 %v206
  %v612 = vunpack.c.l.b16 %v207
  %v613 = vunpack.c.l.b16 %v208
  %v614 = vunpack.c.l.b16 %v209
  %v615 = vunpack.c.l.b16 %v210
  %v616 = vunpack.c.l.b16 %v211
  %v617 = vunpack.c.l.b16 %v212
  %v618 = vunpack.c.l.b16 %v213
  %v619 = vunpack.c.l.b16 %v214
  %v620 = vunpack.c.l.b16 %v215
  %v621 = vunpack.c.l.b16 %v216
  %v622 = vunpack.c.l.b16 %v217
  %v623 = vunpack.c.l.b16 %v218
  %v624 = vunpack.c.l.b16 %v219
  %v625 = vunpack.c.l.b16 %v220
  %v626 = vunpack.c.l.b16 %v221
  %v627 = vunpack.c.l.b16 %v222
  %v628 = vunpack.c.l.b16 %v223
  %v629 = vunpack.c.l.b16 %v224
  %v630 = vunpack.c.l.b16 %v225
  %v631 = vunpack.c.l.b16 %v226
  %v632 = vunpack.c.l.b16 %v227
  %v633 = vunpack.c.l.b16 %v228
  %v634 = vpack.c.b16 %v439, %v438
  %v635 = vpack.c.b16 %v441, %v440
  %v636 = vpack.c.b16 %v443, %v442
  %v637 = vpack.c.b16 %v445, %v444
  %v638 = vpack.c.b16 %v447, %v446
  %v639 = vpack.c.b16 %v449, %v448
  %v640 = vpack.c.b16 %v451, %v450
  %v641 = vpack.c.b16 %v453, %v452
  %v642 = vpack.c.b16 %v455, %v454
  %v643 = vpack.c.b16 %v457, %v456
  %v644 = vpack.c.b16 %v459, %v458
  %v645 = vpack.c.b16 %v461, %v460
  %v646 = vpack.c.b16 %v463, %v462
  %v647 = vpack.c.b16 %v465, %v464
  %v648 = vpack.c.b16 %v467, %v466
  %v649 = vpack.c.b16 %v469, %v468
  %v650 = vpack.c.b16 %v471, %v470
  %v651 = vpack.c.b16 %v473, %v472
  %v652 = vpack.c.b16 %v475, %v474
  %v653 = vpack.c.b16 %v477, %v476
  %v654 = vpack.c.b16 %v479, %v478
  %v655 = vpack.c.b16 %v481, %v480
  %v656 = vpack.c.b16 %v483, %v482
  %v657 = vpack.c.b16 %v485, %v484
  %v658 = vpack.c.b16 %v487, %v486
  %v659 = vpack.c.b16 %v489, %v488
  %v660 = vpack.c.b16 %v491, %v490
  %v661 = vpack.c.b16 %v493, %v492
  %v662 = vpack.c.b16 %v495, %v494
  %v663 = vpack.c.b16 %v497, %v496
  %v664 = vpack.c.b16 %v499, %v498
  %v665 = vpack.c.b16 %v501, %v500
  %v666 = vpack.c.b16 %v503, %v502
  %v667 = vpack.c.b16 %v505, %v504
  %v668 = vpack.c.b16 %v507, %v506
  %v669 = vpack.c.b16 %v509, %v508
  %v670 = vpack.c.b16 %v511, %v510
  %v671 = vpack.c.b16 %v513, %v512
  %v672 = vpack.c.b16 %v515, %v514
  %v673 = vpack.c.b16 %v517, %v516
  %v674 = vpack.c.b16 %v519, %v518
  %v675 = vpack.c.b16 %v521, %v520
  %v676 = vpack.c.b16 %v523, %v522
  %v677 = vpack.c.b16 %v525, %v524
  %v678 = vpack.c.b16 %v527, %v526
  %v679 = vpack.c.b16 %v529, %v528
  %v680 = vpack.c.b16 %v531, %v530
  %v681 = vpack.c.b16 %v533, %v532
  %v682 = vpack.c.b16 %v535, %v534
  %v683 = vpack.c.b16 %v537, %v536
  %v684 = vpack.c.b16 %v539, %v538
  %v685 = vpack.c.b16 %v541, %v540
  %v686 = vpack.c.b16 %v543, %v542
  %v687 = vpack.c.b16 %v545, %v544
  %v688 = vpack.c.b16 %v547, %v546
  %v689 = vpack.c.b16 %v549, %v548
  %v690 = vpack.c.b16 %v551, %v550
  %v691 = vpack.c.b16 %v553, %v552
  %v692 = vpack.c.b16 %v555, %v554
  %v693 = vpack.c.b16 %v557, %v556
  %v694 = vpack.c.b16 %v559, %v558
  %v695 = vpack.c.b16 %v561, %v560
  %v696 = vpack.c.b16 %v563, %v562
  %v697 = vpack.c.b16 %v565, %v564
  %v698 = vpack.c.b16 %v567, %v566
  %v699 = vpack.c.b16 %v569, %v568
  %v700 = vpack.c.b16 %v571, %v570
  %v701 = vpack.c.b16 %v573, %v572
  %v702 = vpack.c.b16 %v575, %v574
  %v703 = vpack.c.b16 %v577, %v576
  %v704 = vpack.c.b16 %v579, %v578
  %v705 = vpack.c.b16 %v581, %v580
  %v706 = vpack.c.b16 %v583, %v582
  %v707 = vpack.c.b16 %v585, %v584
  %v708 = vpack.c.b16 %v587, %v586
  %v709 = vpack.c.b16 %v589, %v588
  %v710 = vpack.c.b16 %v591, %v590
  %v711 = vpack.c.b16 %v593, %v592
  %v712 = vpack.c.b16 %v595, %v594
  %v713 = vpack.c.b16 %v597, %v596
  %v714 = vpack.c.b16 %v599, %v598
  %v715 = vpack.c.b16 %v601, %v600
  %v716 = vpack.c.b16 %v603, %v602
  %v717 = vpack.c.b16 %v605, %v604
  %v718 = vpack.c.b16 %v607, %v606
  %v719 = vpack.c.b16 %v609, %v608
  %v720 = vpack.c.b16 %v611, %v610
  %v721 = vpack.c.b16 %v613, %v612
  %v722 = vpack.c.b16 %v615, %v614
  %v723 = vpack.c.b16 %v617, %v616
  %v724 = vpack.c.b16 %v619, %v618
  %v725 = vpack.c.b16 %v621, %v620
  %v726 = vpack.c.b16 %v623, %v622
  %v727 = vpack.c.b16 %v625, %v624
  %v728 = vpack.c.b16 %v627, %v626
  %v729 = vpack.c.b16 %v629, %v628
  %v730 = vpack.c.b16 %v631, %v630
  %v731 = vpack.c.b16 %v633, %v632
  %v745 = vunpack.c.l.b16 %v229
  %v746 = vunpack.c.l.b16 %v230
  %v747 = vunpack.c.l.b16 %v231
  %v748 = vunpack.c.l.b16 %v232
  %v749 = vunpack.c.l.b16 %v233
  %v750 = vunpack.c.l.b16 %v234
  %v751 = vunpack.c.l.b16 %v235
  %v752 = vunpack.c.l.b16 %v236
  %v753 = vunpack.c.l.b16 %v237
  %v754 = vunpack.c.l.b16 %v238
  %v755 = vunpack.c.l.b16 %v239
  %v756 = vunpack.c.l.b16 %v240
  %v757 = vunpack.c.l.b16 %v241
  %v758 = vpack.c.b16 %v746, %v745
  %v759 = vpack.c.b16 %v748, %v747
  %v760 = vpack.c.b16 %v750, %v749
  %v761 = vpack.c.b16 %v752, %v751
  %v762 = vpack.c.b16 %v754, %v753
  %v763 = vpack.c.b16 %v756, %v755
  %v764 = vpack.c.b16 %v757, %v757
  %vm771 = vcmask 818176
  %v773 = vsel %vm771, %v634, 0
  %v776 = vsel %vm771, %v635, 0
  %v779 = vsel %vm771, %v636, 0
  %v782 = vsel %vm771, %v637, 0
  %v785 = vsel %vm771, %v638, 0
  %v788 = vsel %vm771, %v639, 0
  %v791 = vsel %vm771, %v640, 0
  %v794 = vsel %vm771, %v641, 0
  %v797 = vsel %vm771, %v642, 0
  %v800 = vsel %vm771, %v643, 0
  %v803 = vsel %vm771, %v644, 0
  %v806 = vsel %vm771, %v645, 0
  %v809 = vsel %vm771, %v646, 0
  %v812 = vsel %vm771, %v647, 0
  %v815 = vsel %vm771, %v648, 0
  %v818 = vsel %vm771, %v649, 0
  %v821 = vsel %vm771, %v650, 0
  %v824 = vsel %vm771, %v651, 0
  %v827 = vsel %vm771, %v652, 0
  %v830 = vsel %vm771, %v653, 0
  %v833 = vsel %vm771, %v654, 0
  %v836 = vsel %vm771, %v655, 0
  %v839 = vsel %vm771, %v656, 0
  %v842 = vsel %vm771, %v657, 0
  %v845 = vsel %vm771, %v658, 0
  %v848 = vsel %vm771, %v659, 0
  %v851 = vsel %vm771, %v660, 0
  %v854 = vsel %vm771, %v661, 0
  %v857 = vsel %vm771, %v662, 0
  %v860 = vsel %vm771, %v663, 0
  %v863 = vsel %vm771, %v664, 0
  %v866 = vsel %vm771, %v665, 0
  %v869 = vsel %vm771, %v666, 0
  %v872 = vsel %vm771, %v667, 0
  %v875 = vsel %vm771, %v668, 0
  %v878 = vsel %vm771, %v669, 0
  %v881 = vsel %vm771, %v670, 0
  %v884 = vsel %vm771, %v671, 0
  %v887 = vsel %vm771, %v672, 0
  %v890 = vsel %vm771, %v673, 0
  %v893 = vsel %vm771, %v674, 0
  %v896 = vsel %vm771, %v675, 0
  %v899 = vsel %vm771, %v676, 0
  %v902 = vsel %vm771, %v677, 0
  %v905 = vsel %vm771, %v678, 0
  %v908 = vsel %vm771, %v679, 0
  %v911 = vsel %vm771, %v680, 0
  %v914 = vsel %vm771, %v681, 0
  %v917 = vsel %vm771, %v682, 0
  %v920 = vsel %vm771, %v683, 0
  %v923 = vsel %vm771, %v684, 0
  %v926 = vsel %vm771, %v685, 0
  %v929 = vsel %vm771, %v686, 0
  %v932 = vsel %vm771, %v687, 0
  %v935 = vsel %vm771, %v688, 0
  %v938 = vsel %vm771, %v689, 0
  %v941 = vsel %vm771, %v690, 0
  %v944 = vsel %vm771, %v691, 0
  %v947 = vsel %vm771, %v692, 0
  %v950 = vsel %vm771, %v693, 0
  %v953 = vsel %vm771, %v694, 0
  %v956 = vsel %vm771, %v695, 0
  %v959 = vsel %vm771, %v696, 0
  %v962 = vsel %vm771, %v697, 0
  %v965 = vsel %vm771, %v698, 0
  %v968 = vsel %vm771, %v699, 0
  %v971 = vsel %vm771, %v700, 0
  %v974 = vsel %vm771, %v701, 0
  %v977 = vsel %vm771, %v702, 0
  %v980 = vsel %vm771, %v703, 0
  %v983 = vsel %vm771, %v704, 0
  %v986 = vsel %vm771, %v705, 0
  %v989 = vsel %vm771, %v706, 0
  %v992 = vsel %vm771, %v707, 0
  %v995 = vsel %vm771, %v708, 0
  %v998 = vsel %vm771, %v709, 0
  %v1001 = vsel %vm771, %v710, 0
  %v1004 = vsel %vm771, %v711, 0
  %v1007 = vsel %vm771, %v712, 0
  %v1010 = vsel %vm771, %v713, 0
  %v1013 = vsel %vm771, %v714, 0
  %v1016 = vsel %vm771, %v715, 0
  %v1019 = vsel %vm771, %v716, 0
  %v1022 = vsel %vm771, %v717, 0
  %v1025 = vsel %vm771, %v718, 0
  %v1028 = vsel %vm771, %v719, 0
  %v1031 = vsel %vm771, %v720, 0
  %v1034 = vsel %vm771, %v721, 0
  %v1037 = vsel %vm771, %v722, 0
  %v1040 = vsel %vm771, %v723, 0
  %v1043 = vsel %vm771, %v724, 0
  %v1046 = vsel %vm771, %v725, 0
  %v1049 = vsel %vm771, %v726, 0
  %v1052 = vsel %vm771, %v727, 0
  %v1055 = vsel %vm771, %v728, 0
  %v1058 = vsel %vm771, %v729, 0
  %v1061 = vsel %vm771, %v730, 0
  %v1064 = vsel %vm771, %v731, 0
  %vm1066 = vcmask 1041408
  %v1068 = vsel %vm1066, %v764, 0
  %1070 = vmatprep.subr.bf16.mxu0 0
  %1071 = vmatpush1.bf16.msra.mxu0 %v758
  %1072 = vmatprep.subr.bf16.mxu0 0
  %1073 = vmatpush1.bf16.msra.mxu0 %v759
  %1074 = vmatprep.subr.bf16.mxu0 0
  %1075 = vmatpush1.bf16.msra.mxu0 %v760
  %1076 = vmatprep.subr.bf16.mxu0 0
  %1077 = vmatpush1.bf16.msra.mxu0 %v761
  %1078 = vmatprep.subr.bf16.mxu0 0
  %1079 = vmatpush1.bf16.msra.mxu0 %v762
  %1080 = vmatprep.subr.bf16.mxu0 0
  %1081 = vmatpush1.bf16.msra.mxu0 %v763
  %1082 = vmatprep.subr.bf16.mxu0 0
  %1083 = vmatpush1.bf16.msra.mxu0 %v1068
  %1084 = vmatprep.subr.bf16.mxu0 0
  %1085 = vmatpush1.bf16.msra.mxu0 0
  %1086 = vmatprep.subr.bf16.mxu0 0
  %1087 = vmatpush1.bf16.msra.mxu0 0
  %1088 = vmatprep.subr.bf16.mxu0 0
  %1089 = vmatpush1.bf16.msra.mxu0 0
  %1090 = vmatprep.subr.bf16.mxu0 0
  %1091 = vmatpush1.bf16.msra.mxu0 0
  %1092 = vmatprep.subr.bf16.mxu0 0
  %1093 = vmatpush1.bf16.msra.mxu0 0
  %1094 = vmatprep.subr.bf16.mxu0 0
  %1095 = vmatpush1.bf16.msra.mxu0 0
  %1096 = vmatprep.subr.bf16.mxu0 0
  %1097 = vmatpush1.bf16.msra.mxu0 0
  %1098 = vmatprep.subr.bf16.mxu0 0
  %1099 = vmatpush1.bf16.msra.mxu0 0
  %1100 = vmatprep.subr.bf16.mxu0 0
  %1101 = vmatpush1.bf16.msra.mxu0 0
  %1102 = vmatprep.mubr.bf16.mxu0 0
  %1103 = vmatmul.mubr.bf16.gmra.mrb[0].mxu0 %v773
  %v1104 = vpop.f32.mrb[0].mxu0
  %v1105 = vadd.f32 0.0, %v1104
  %v1106 = vpop.f32.mrb[0].mxu0
  %v1107 = vpop.f32.mrb[0].mxu0
  %v1108 = vadd.f32 0.0, %v1107
  %v1109 = vpop.f32.mrb[0].mxu0
  %1110 = vmatprep.mubr.bf16.mxu0 0
  %1111 = vmatmul.mubr.bf16.gmra.mrb[0].mxu0 %v776
  %v1112 = vpop.f32.mrb[0].mxu0
  %v1113 = vadd.f32 0.0, %v1112
  %v1114 = vpop.f32.mrb[0].mxu0
  %v1115 = vpop.f32.mrb[0].mxu0
  %v1116 = vadd.f32 0.0, %v1115
  %v1117 = vpop.f32.mrb[0].mxu0
  %1118 = vmatprep.mubr.bf16.mxu0 0
  %1119 = vmatmul.mubr.bf16.gmra.mrb[0].mxu0 %v779
  %v1120 = vpop.f32.mrb[0].mxu0
  %v1121 = vadd.f32 0.0, %v1120
  %v1122 = vpop.f32.mrb[0].mxu0
  %v1123 = vpop.f32.mrb[0].mxu0
  %v1124 = vadd.f32 0.0, %v1123
  %v1125 = vpop.f32.mrb[0].mxu0
  %1126 = vmatprep.mubr.bf16.mxu0 0
  %1127 = vmatmul.mubr.bf16.gmra.mrb[0].mxu0 %v782
  %v1128 = vpop.f32.mrb[0].mxu0
  %v1129 = vadd.f32 0.0, %v1128
  %v1130 = vpop.f32.mrb[0].mxu0
  %v1131 = vpop.f32.mrb[0].mxu0
  %v1132 = vadd.f32 0.0, %v1131
  %v1133 = vpop.f32.mrb[0].mxu0
  %1134 = vmatprep.mubr.bf16.mxu0 0
  %1135 = vmatmul.mubr.bf16.gmra.mrb[0].mxu0 %v785
  %v1136 = vpop.f32.mrb[0].mxu0
  %v1137 = vadd.f32 0.0, %v1136
  %v1138 = vpop.f32.mrb[0].mxu0
  %v1139 = vpop.f32.mrb[0].mxu0
  %v1140 = vadd.f32 0.0, %v1139
  %v1141 = vpop.f32.mrb[0].mxu0
  %1142 = vmatprep.mubr.bf16.mxu0 0
  %1143 = vmatmul.mubr.bf16.gmra.mrb[0].mxu0 %v788
  %v1144 = vpop.f32.mrb[0].mxu0
  %v1145 = vadd.f32 0.0, %v1144
  %v1146 = vpop.f32.mrb[0].mxu0
  %v1147 = vpop.f32.mrb[0].mxu0
  %v1148 = vadd.f32 0.0, %v1147
  %v1149 = vpop.f32.mrb[0].mxu0
  %1150 = vmatprep.mubr.bf16.mxu0 0
  %1151 = vmatmul.mubr.bf16.gmra.mrb[0].mxu0 %v791
  %v1152 = vpop.f32.mrb[0].mxu0
  %v1153 = vadd.f32 0.0, %v1152
  %v1154 = vpop.f32.mrb[0].mxu0
  %v1155 = vpop.f32.mrb[0].mxu0
  %v1156 = vadd.f32 0.0, %v1155
  %v1157 = vpop.f32.mrb[0].mxu0
  %1158 = vmatprep.mubr.bf16.mxu0 0
  %1159 = vmatmul.mubr.bf16.gmra.mrb[0].mxu0 %v794
  %v1160 = vpop.f32.mrb[0].mxu0
  %v1161 = vadd.f32 0.0, %v1160
  %v1162 = vpop.f32.mrb[0].mxu0
  %v1163 = vpop.f32.mrb[0].mxu0
  %v1164 = vadd.f32 0.0, %v1163
  %v1165 = vpop.f32.mrb[0].mxu0
  %1166 = vmatprep.mubr.bf16.mxu0 0
  %1167 = vmatmul.mubr.bf16.gmra.mrb[0].mxu0 %v797
  %v1168 = vpop.f32.mrb[0].mxu0
  %v1169 = vadd.f32 0.0, %v1168
  %v1170 = vpop.f32.mrb[0].mxu0
  %v1171 = vpop.f32.mrb[0].mxu0
  %v1172 = vadd.f32 0.0, %v1171
  %v1173 = vpop.f32.mrb[0].mxu0
  %1174 = vmatprep.mubr.bf16.mxu0 0
  %1175 = vmatmul.mubr.bf16.gmra.mrb[0].mxu0 %v800
  %v1176 = vpop.f32.mrb[0].mxu0
  %v1177 = vadd.f32 0.0, %v1176
  %v1178 = vpop.f32.mrb[0].mxu0
  %v1179 = vpop.f32.mrb[0].mxu0
  %v1180 = vadd.f32 0.0, %v1179
  %v1181 = vpop.f32.mrb[0].mxu0
  %1182 = vmatprep.mubr.bf16.mxu0 0
  %1183 = vmatmul.mubr.bf16.gmra.mrb[0].mxu0 %v803
  %v1184 = vpop.f32.mrb[0].mxu0
  %v1185 = vadd.f32 0.0, %v1184
  %v1186 = vpop.f32.mrb[0].mxu0
  %v1187 = vpop.f32.mrb[0].mxu0
  %v1188 = vadd.f32 0.0, %v1187
  %v1189 = vpop.f32.mrb[0].mxu0
  %1190 = vmatprep.mubr.bf16.mxu0 0
  %1191 = vmatmul.mubr.bf16.gmra.mrb[0].mxu0 %v806
  %v1192 = vpop.f32.mrb[0].mxu0
  %v1193 = vadd.f32 0.0, %v1192
  %v1194 = vpop.f32.mrb[0].mxu0
  %v1195 = vpop.f32.mrb[0].mxu0
  %v1196 = vadd.f32 0.0, %v1195
  %v1197 = vpop.f32.mrb[0].mxu0
  %1198 = vmatprep.mubr.bf16.mxu0 0
  %1199 = vmatmul.mubr.bf16.gmra.mrb[0].mxu0 %v809
  %v1200 = vpop.f32.mrb[0].mxu0
  %v1201 = vadd.f32 0.0, %v1200
  %v1202 = vpop.f32.mrb[0].mxu0
  %v1203 = vpop.f32.mrb[0].mxu0
  %v1204 = vadd.f32 0.0, %v1203
  %v1205 = vpop.f32.mrb[0].mxu0
  %1206 = vmatprep.mubr.bf16.mxu0 0
  %1207 = vmatmul.mubr.bf16.gmra.mrb[0].mxu0 %v812
  %v1208 = vpop.f32.mrb[0].mxu0
  %v1209 = vadd.f32 0.0, %v1208
  %v1210 = vpop.f32.mrb[0].mxu0
  %v1211 = vpop.f32.mrb[0].mxu0
  %v1212 = vadd.f32 0.0, %v1211
  %v1213 = vpop.f32.mrb[0].mxu0
  %1214 = vmatprep.mubr.bf16.mxu0 0
  %1215 = vmatmul.mubr.bf16.gmra.mrb[0].mxu0 %v815
  %v1216 = vpop.f32.mrb[0].mxu0
  %v1217 = vadd.f32 0.0, %v1216
  %v1218 = vpop.f32.mrb[0].mxu0
  %v1219 = vpop.f32.mrb[0].mxu0
  %v1220 = vadd.f32 0.0, %v1219
  %v1221 = vpop.f32.mrb[0].mxu0
  %1222 = vmatprep.mubr.bf16.mxu0 0
  %1223 = vmatmul.mubr.bf16.gmra.mrb[0].mxu0 %v818
  %v1224 = vpop.f32.mrb[0].mxu0
  %v1225 = vadd.f32 0.0, %v1224
  %v1226 = vpop.f32.mrb[0].mxu0
  %v1227 = vpop.f32.mrb[0].mxu0
  %v1228 = vadd.f32 0.0, %v1227
  %v1229 = vpop.f32.mrb[0].mxu0
  %1230 = vmatprep.mubr.bf16.mxu0 0
  %1231 = vmatmul.mubr.bf16.gmra.mrb[0].mxu0 %v821
  %v1232 = vpop.f32.mrb[0].mxu0
  %v1233 = vadd.f32 0.0, %v1232
  %v1234 = vpop.f32.mrb[0].mxu0
  %v1235 = vpop.f32.mrb[0].mxu0
  %v1236 = vadd.f32 0.0, %v1235
  %v1237 = vpop.f32.mrb[0].mxu0
  %1238 = vmatprep.mubr.bf16.mxu0 0
  %1239 = vmatmul.mubr.bf16.gmra.mrb[0].mxu0 %v824
  %v1240 = vpop.f32.mrb[0].mxu0
  %v1241 = vadd.f32 0.0, %v1240
  %v1242 = vpop.f32.mrb[0].mxu0
  %v1243 = vpop.f32.mrb[0].mxu0
  %v1244 = vadd.f32 0.0, %v1243
  %v1245 = vpop.f32.mrb[0].mxu0
  %1246 = vmatprep.mubr.bf16.mxu0 0
  %1247 = vmatmul.mubr.bf16.gmra.mrb[0].mxu0 %v827
  %v1248 = vpop.f32.mrb[0].mxu0
  %v1249 = vadd.f32 0.0, %v1248
  %v1250 = vpop.f32.mrb[0].mxu0
  %v1251 = vpop.f32.mrb[0].mxu0
  %v1252 = vadd.f32 0.0, %v1251
  %v1253 = vpop.f32.mrb[0].mxu0
  %1254 = vmatprep.mubr.bf16.mxu0 0
  %1255 = vmatmul.mubr.bf16.gmra.mrb[0].mxu0 %v830
  %v1256 = vpop.f32.mrb[0].mxu0
  %v1257 = vadd.f32 0.0, %v1256
  %v1258 = vpop.f32.mrb[0].mxu0
  %v1259 = vpop.f32.mrb[0].mxu0
  %v1260 = vadd.f32 0.0, %v1259
  %v1261 = vpop.f32.mrb[0].mxu0
  %1262 = vmatprep.mubr.bf16.mxu0 0
  %1263 = vmatmul.mubr.bf16.gmra.mrb[0].mxu0 %v833
  %v1264 = vpop.f32.mrb[0].mxu0
  %v1265 = vadd.f32 0.0, %v1264
  %v1266 = vpop.f32.mrb[0].mxu0
  %v1267 = vpop.f32.mrb[0].mxu0
  %v1268 = vadd.f32 0.0, %v1267
  %v1269 = vpop.f32.mrb[0].mxu0
  %1270 = vmatprep.mubr.bf16.mxu0 0
  %1271 = vmatmul.mubr.bf16.gmra.mrb[0].mxu0 %v836
  %v1272 = vpop.f32.mrb[0].mxu0
  %v1273 = vadd.f32 0.0, %v1272
  %v1274 = vpop.f32.mrb[0].mxu0
  %v1275 = vpop.f32.mrb[0].mxu0
  %v1276 = vadd.f32 0.0, %v1275
  %v1277 = vpop.f32.mrb[0].mxu0
  %1278 = vmatprep.mubr.bf16.mxu0 0
  %1279 = vmatmul.mubr.bf16.gmra.mrb[0].mxu0 %v839
  %v1280 = vpop.f32.mrb[0].mxu0
  %v1281 = vadd.f32 0.0, %v1280
  %v1282 = vpop.f32.mrb[0].mxu0
  %v1283 = vpop.f32.mrb[0].mxu0
  %v1284 = vadd.f32 0.0, %v1283
  %v1285 = vpop.f32.mrb[0].mxu0
  %1286 = vmatprep.mubr.bf16.mxu0 0
  %1287 = vmatmul.mubr.bf16.gmra.mrb[0].mxu0 %v842
  %v1288 = vpop.f32.mrb[0].mxu0
  %v1289 = vadd.f32 0.0, %v1288
  %v1290 = vpop.f32.mrb[0].mxu0
  %v1291 = vpop.f32.mrb[0].mxu0
  %v1292 = vadd.f32 0.0, %v1291
  %v1293 = vpop.f32.mrb[0].mxu0
  %1294 = vmatprep.mubr.bf16.mxu0 0
  %1295 = vmatmul.mubr.bf16.gmra.mrb[0].mxu0 %v845
  %v1296 = vpop.f32.mrb[0].mxu0
  %v1297 = vadd.f32 0.0, %v1296
  %v1298 = vpop.f32.mrb[0].mxu0
  %v1299 = vpop.f32.mrb[0].mxu0
  %v1300 = vadd.f32 0.0, %v1299
  %v1301 = vpop.f32.mrb[0].mxu0
  %1302 = vmatprep.mubr.bf16.mxu0 0
  %1303 = vmatmul.mubr.bf16.gmra.mrb[0].mxu0 %v848
  %v1304 = vpop.f32.mrb[0].mxu0
  %v1305 = vadd.f32 0.0, %v1304
  %v1306 = vpop.f32.mrb[0].mxu0
  %v1307 = vpop.f32.mrb[0].mxu0
  %v1308 = vadd.f32 0.0, %v1307
  %v1309 = vpop.f32.mrb[0].mxu0
  %1310 = vmatprep.mubr.bf16.mxu0 0
  %1311 = vmatmul.mubr.bf16.gmra.mrb[0].mxu0 %v851
  %v1312 = vpop.f32.mrb[0].mxu0
  %v1313 = vadd.f32 0.0, %v1312
  %v1314 = vpop.f32.mrb[0].mxu0
  %v1315 = vpop.f32.mrb[0].mxu0
  %v1316 = vadd.f32 0.0, %v1315
  %v1317 = vpop.f32.mrb[0].mxu0
  %1318 = vmatprep.mubr.bf16.mxu0 0
  %1319 = vmatmul.mubr.bf16.gmra.mrb[0].mxu0 %v854
  %v1320 = vpop.f32.mrb[0].mxu0
  %v1321 = vadd.f32 0.0, %v1320
  %v1322 = vpop.f32.mrb[0].mxu0
  %v1323 = vpop.f32.mrb[0].mxu0
  %v1324 = vadd.f32 0.0, %v1323
  %v1325 = vpop.f32.mrb[0].mxu0
  %1326 = vmatprep.mubr.bf16.mxu0 0
  %1327 = vmatmul.mubr.bf16.gmra.mrb[0].mxu0 %v857
  %v1328 = vpop.f32.mrb[0].mxu0
  %v1329 = vadd.f32 0.0, %v1328
  %v1330 = vpop.f32.mrb[0].mxu0
  %v1331 = vpop.f32.mrb[0].mxu0
  %v1332 = vadd.f32 0.0, %v1331
  %v1333 = vpop.f32.mrb[0].mxu0
  %1334 = vmatprep.mubr.bf16.mxu0 0
  %1335 = vmatmul.mubr.bf16.gmra.mrb[0].mxu0 %v860
  %v1336 = vpop.f32.mrb[0].mxu0
  %v1337 = vadd.f32 0.0, %v1336
  %v1338 = vpop.f32.mrb[0].mxu0
  %v1339 = vpop.f32.mrb[0].mxu0
  %v1340 = vadd.f32 0.0, %v1339
  %v1341 = vpop.f32.mrb[0].mxu0
  %1342 = vmatprep.mubr.bf16.mxu0 0
  %1343 = vmatmul.mubr.bf16.gmra.mrb[0].mxu0 %v863
  %v1344 = vpop.f32.mrb[0].mxu0
  %v1345 = vadd.f32 0.0, %v1344
  %v1346 = vpop.f32.mrb[0].mxu0
  %v1347 = vpop.f32.mrb[0].mxu0
  %v1348 = vadd.f32 0.0, %v1347
  %v1349 = vpop.f32.mrb[0].mxu0
  %1350 = vmatprep.mubr.bf16.mxu0 0
  %1351 = vmatmul.mubr.bf16.gmra.mrb[0].mxu0 %v866
  %v1352 = vpop.f32.mrb[0].mxu0
  %v1353 = vadd.f32 0.0, %v1352
  %v1354 = vpop.f32.mrb[0].mxu0
  %v1355 = vpop.f32.mrb[0].mxu0
  %v1356 = vadd.f32 0.0, %v1355
  %v1357 = vpop.f32.mrb[0].mxu0
  %1358 = vmatprep.mubr.bf16.mxu0 0
  %1359 = vmatmul.mubr.bf16.gmra.mrb[0].mxu0 %v869
  %v1360 = vpop.f32.mrb[0].mxu0
  %v1361 = vadd.f32 0.0, %v1360
  %v1362 = vpop.f32.mrb[0].mxu0
  %v1363 = vpop.f32.mrb[0].mxu0
  %v1364 = vadd.f32 0.0, %v1363
  %v1365 = vpop.f32.mrb[0].mxu0
  %1366 = vmatprep.mubr.bf16.mxu0 0
  %1367 = vmatmul.mubr.bf16.gmra.mrb[0].mxu0 %v872
  %v1368 = vpop.f32.mrb[0].mxu0
  %v1369 = vadd.f32 0.0, %v1368
  %v1370 = vpop.f32.mrb[0].mxu0
  %v1371 = vpop.f32.mrb[0].mxu0
  %v1372 = vadd.f32 0.0, %v1371
  %v1373 = vpop.f32.mrb[0].mxu0
  %1374 = vmatprep.mubr.bf16.mxu0 0
  %1375 = vmatmul.mubr.bf16.gmra.mrb[0].mxu0 %v875
  %v1376 = vpop.f32.mrb[0].mxu0
  %v1377 = vadd.f32 0.0, %v1376
  %v1378 = vpop.f32.mrb[0].mxu0
  %v1379 = vpop.f32.mrb[0].mxu0
  %v1380 = vadd.f32 0.0, %v1379
  %v1381 = vpop.f32.mrb[0].mxu0
  %1382 = vmatprep.mubr.bf16.mxu0 0
  %1383 = vmatmul.mubr.bf16.gmra.mrb[0].mxu0 %v878
  %v1384 = vpop.f32.mrb[0].mxu0
  %v1385 = vadd.f32 0.0, %v1384
  %v1386 = vpop.f32.mrb[0].mxu0
  %v1387 = vpop.f32.mrb[0].mxu0
  %v1388 = vadd.f32 0.0, %v1387
  %v1389 = vpop.f32.mrb[0].mxu0
  %1390 = vmatprep.mubr.bf16.mxu0 0
  %1391 = vmatmul.mubr.bf16.gmra.mrb[0].mxu0 %v881
  %v1392 = vpop.f32.mrb[0].mxu0
  %v1393 = vadd.f32 0.0, %v1392
  %v1394 = vpop.f32.mrb[0].mxu0
  %v1395 = vpop.f32.mrb[0].mxu0
  %v1396 = vadd.f32 0.0, %v1395
  %v1397 = vpop.f32.mrb[0].mxu0
  %1398 = vmatprep.mubr.bf16.mxu0 0
  %1399 = vmatmul.mubr.bf16.gmra.mrb[0].mxu0 %v884
  %v1400 = vpop.f32.mrb[0].mxu0
  %v1401 = vadd.f32 0.0, %v1400
  %v1402 = vpop.f32.mrb[0].mxu0
  %v1403 = vpop.f32.mrb[0].mxu0
  %v1404 = vadd.f32 0.0, %v1403
  %v1405 = vpop.f32.mrb[0].mxu0
  %1406 = vmatprep.mubr.bf16.mxu0 0
  %1407 = vmatmul.mubr.bf16.gmra.mrb[0].mxu0 %v887
  %v1408 = vpop.f32.mrb[0].mxu0
  %v1409 = vadd.f32 0.0, %v1408
  %v1410 = vpop.f32.mrb[0].mxu0
  %v1411 = vpop.f32.mrb[0].mxu0
  %v1412 = vadd.f32 0.0, %v1411
  %v1413 = vpop.f32.mrb[0].mxu0
  %1414 = vmatprep.mubr.bf16.mxu0 0
  %1415 = vmatmul.mubr.bf16.gmra.mrb[0].mxu0 %v890
  %v1416 = vpop.f32.mrb[0].mxu0
  %v1417 = vadd.f32 0.0, %v1416
  %v1418 = vpop.f32.mrb[0].mxu0
  %v1419 = vpop.f32.mrb[0].mxu0
  %v1420 = vadd.f32 0.0, %v1419
  %v1421 = vpop.f32.mrb[0].mxu0
  %1422 = vmatprep.mubr.bf16.mxu0 0
  %1423 = vmatmul.mubr.bf16.gmra.mrb[0].mxu0 %v893
  %v1424 = vpop.f32.mrb[0].mxu0
  %v1425 = vadd.f32 0.0, %v1424
  %v1426 = vpop.f32.mrb[0].mxu0
  %v1427 = vpop.f32.mrb[0].mxu0
  %v1428 = vadd.f32 0.0, %v1427
  %v1429 = vpop.f32.mrb[0].mxu0
  %1430 = vmatprep.mubr.bf16.mxu0 0
  %1431 = vmatmul.mubr.bf16.gmra.mrb[0].mxu0 %v896
  %v1432 = vpop.f32.mrb[0].mxu0
  %v1433 = vadd.f32 0.0, %v1432
  %v1434 = vpop.f32.mrb[0].mxu0
  %v1435 = vpop.f32.mrb[0].mxu0
  %v1436 = vadd.f32 0.0, %v1435
  %v1437 = vpop.f32.mrb[0].mxu0
  %1438 = vmatprep.mubr.bf16.mxu0 0
  %1439 = vmatmul.mubr.bf16.gmra.mrb[0].mxu0 %v899
  %v1440 = vpop.f32.mrb[0].mxu0
  %v1441 = vadd.f32 0.0, %v1440
  %v1442 = vpop.f32.mrb[0].mxu0
  %v1443 = vpop.f32.mrb[0].mxu0
  %v1444 = vadd.f32 0.0, %v1443
  %v1445 = vpop.f32.mrb[0].mxu0
  %1446 = vmatprep.mubr.bf16.mxu0 0
  %1447 = vmatmul.mubr.bf16.gmra.mrb[0].mxu0 %v902
  %v1448 = vpop.f32.mrb[0].mxu0
  %v1449 = vadd.f32 0.0, %v1448
  %v1450 = vpop.f32.mrb[0].mxu0
  %v1451 = vpop.f32.mrb[0].mxu0
  %v1452 = vadd.f32 0.0, %v1451
  %v1453 = vpop.f32.mrb[0].mxu0
  %1454 = vmatprep.mubr.bf16.mxu0 0
  %1455 = vmatmul.mubr.bf16.gmra.mrb[0].mxu0 %v905
  %v1456 = vpop.f32.mrb[0].mxu0
  %v1457 = vadd.f32 0.0, %v1456
  %v1458 = vpop.f32.mrb[0].mxu0
  %v1459 = vpop.f32.mrb[0].mxu0
  %v1460 = vadd.f32 0.0, %v1459
  %v1461 = vpop.f32.mrb[0].mxu0
  %1462 = vmatprep.mubr.bf16.mxu0 0
  %1463 = vmatmul.mubr.bf16.gmra.mrb[0].mxu0 %v908
  %v1464 = vpop.f32.mrb[0].mxu0
  %v1465 = vadd.f32 0.0, %v1464
  %v1466 = vpop.f32.mrb[0].mxu0
  %v1467 = vpop.f32.mrb[0].mxu0
  %v1468 = vadd.f32 0.0, %v1467
  %v1469 = vpop.f32.mrb[0].mxu0
  %1470 = vmatprep.mubr.bf16.mxu0 0
  %1471 = vmatmul.mubr.bf16.gmra.mrb[0].mxu0 %v911
  %v1472 = vpop.f32.mrb[0].mxu0
  %v1473 = vadd.f32 0.0, %v1472
  %v1474 = vpop.f32.mrb[0].mxu0
  %v1475 = vpop.f32.mrb[0].mxu0
  %v1476 = vadd.f32 0.0, %v1475
  %v1477 = vpop.f32.mrb[0].mxu0
  %1478 = vmatprep.mubr.bf16.mxu0 0
  %1479 = vmatmul.mubr.bf16.gmra.mrb[0].mxu0 %v914
  %v1480 = vpop.f32.mrb[0].mxu0
  %v1481 = vadd.f32 0.0, %v1480
  %v1482 = vpop.f32.mrb[0].mxu0
  %v1483 = vpop.f32.mrb[0].mxu0
  %v1484 = vadd.f32 0.0, %v1483
  %v1485 = vpop.f32.mrb[0].mxu0
  %1486 = vmatprep.mubr.bf16.mxu0 0
  %1487 = vmatmul.mubr.bf16.gmra.mrb[0].mxu0 %v917
  %v1488 = vpop.f32.mrb[0].mxu0
  %v1489 = vadd.f32 0.0, %v1488
  %v1490 = vpop.f32.mrb[0].mxu0
  %v1491 = vpop.f32.mrb[0].mxu0
  %v1492 = vadd.f32 0.0, %v1491
  %v1493 = vpop.f32.mrb[0].mxu0
  %1494 = vmatprep.mubr.bf16.mxu0 0
  %1495 = vmatmul.mubr.bf16.gmra.mrb[0].mxu0 %v920
  %v1496 = vpop.f32.mrb[0].mxu0
  %v1497 = vadd.f32 0.0, %v1496
  %v1498 = vpop.f32.mrb[0].mxu0
  %v1499 = vpop.f32.mrb[0].mxu0
  %v1500 = vadd.f32 0.0, %v1499
  %v1501 = vpop.f32.mrb[0].mxu0
  %1502 = vmatprep.mubr.bf16.mxu0 0
  %1503 = vmatmul.mubr.bf16.gmra.mrb[0].mxu0 %v923
  %v1504 = vpop.f32.mrb[0].mxu0
  %v1505 = vadd.f32 0.0, %v1504
  %v1506 = vpop.f32.mrb[0].mxu0
  %v1507 = vpop.f32.mrb[0].mxu0
  %v1508 = vadd.f32 0.0, %v1507
  %v1509 = vpop.f32.mrb[0].mxu0
  %1510 = vmatprep.mubr.bf16.mxu0 0
  %1511 = vmatmul.mubr.bf16.gmra.mrb[0].mxu0 %v926
  %v1512 = vpop.f32.mrb[0].mxu0
  %v1513 = vadd.f32 0.0, %v1512
  %v1514 = vpop.f32.mrb[0].mxu0
  %v1515 = vpop.f32.mrb[0].mxu0
  %v1516 = vadd.f32 0.0, %v1515
  %v1517 = vpop.f32.mrb[0].mxu0
  %1518 = vmatprep.mubr.bf16.mxu0 0
  %1519 = vmatmul.mubr.bf16.gmra.mrb[0].mxu0 %v929
  %v1520 = vpop.f32.mrb[0].mxu0
  %v1521 = vadd.f32 0.0, %v1520
  %v1522 = vpop.f32.mrb[0].mxu0
  %v1523 = vpop.f32.mrb[0].mxu0
  %v1524 = vadd.f32 0.0, %v1523
  %v1525 = vpop.f32.mrb[0].mxu0
  %1526 = vmatprep.mubr.bf16.mxu0 0
  %1527 = vmatmul.mubr.bf16.gmra.mrb[0].mxu0 %v932
  %v1528 = vpop.f32.mrb[0].mxu0
  %v1529 = vadd.f32 0.0, %v1528
  %v1530 = vpop.f32.mrb[0].mxu0
  %v1531 = vpop.f32.mrb[0].mxu0
  %v1532 = vadd.f32 0.0, %v1531
  %v1533 = vpop.f32.mrb[0].mxu0
  %1534 = vmatprep.mubr.bf16.mxu0 0
  %1535 = vmatmul.mubr.bf16.gmra.mrb[0].mxu0 %v935
  %v1536 = vpop.f32.mrb[0].mxu0
  %v1537 = vadd.f32 0.0, %v1536
  %v1538 = vpop.f32.mrb[0].mxu0
  %v1539 = vpop.f32.mrb[0].mxu0
  %v1540 = vadd.f32 0.0, %v1539
  %v1541 = vpop.f32.mrb[0].mxu0
  %1542 = vmatprep.mubr.bf16.mxu0 0
  %1543 = vmatmul.mubr.bf16.gmra.mrb[0].mxu0 %v938
  %v1544 = vpop.f32.mrb[0].mxu0
  %v1545 = vadd.f32 0.0, %v1544
  %v1546 = vpop.f32.mrb[0].mxu0
  %v1547 = vpop.f32.mrb[0].mxu0
  %v1548 = vadd.f32 0.0, %v1547
  %v1549 = vpop.f32.mrb[0].mxu0
  %1550 = vmatprep.mubr.bf16.mxu0 0
  %1551 = vmatmul.mubr.bf16.gmra.mrb[0].mxu0 %v941
  %v1552 = vpop.f32.mrb[0].mxu0
  %v1553 = vadd.f32 0.0, %v1552
  %v1554 = vpop.f32.mrb[0].mxu0
  %v1555 = vpop.f32.mrb[0].mxu0
  %v1556 = vadd.f32 0.0, %v1555
  %v1557 = vpop.f32.mrb[0].mxu0
  %1558 = vmatprep.mubr.bf16.mxu0 0
  %1559 = vmatmul.mubr.bf16.gmra.mrb[0].mxu0 %v944
  %v1560 = vpop.f32.mrb[0].mxu0
  %v1561 = vadd.f32 0.0, %v1560
  %v1562 = vpop.f32.mrb[0].mxu0
  %v1563 = vpop.f32.mrb[0].mxu0
  %v1564 = vadd.f32 0.0, %v1563
  %v1565 = vpop.f32.mrb[0].mxu0
  %1566 = vmatprep.mubr.bf16.mxu0 0
  %1567 = vmatmul.mubr.bf16.gmra.mrb[0].mxu0 %v947
  %v1568 = vpop.f32.mrb[0].mxu0
  %v1569 = vadd.f32 0.0, %v1568
  %v1570 = vpop.f32.mrb[0].mxu0
  %v1571 = vpop.f32.mrb[0].mxu0
  %v1572 = vadd.f32 0.0, %v1571
  %v1573 = vpop.f32.mrb[0].mxu0
  %1574 = vmatprep.mubr.bf16.mxu0 0
  %1575 = vmatmul.mubr.bf16.gmra.mrb[0].mxu0 %v950
  %v1576 = vpop.f32.mrb[0].mxu0
  %v1577 = vadd.f32 0.0, %v1576
  %v1578 = vpop.f32.mrb[0].mxu0
  %v1579 = vpop.f32.mrb[0].mxu0
  %v1580 = vadd.f32 0.0, %v1579
  %v1581 = vpop.f32.mrb[0].mxu0
  %1582 = vmatprep.mubr.bf16.mxu0 0
  %1583 = vmatmul.mubr.bf16.gmra.mrb[0].mxu0 %v953
  %v1584 = vpop.f32.mrb[0].mxu0
  %v1585 = vadd.f32 0.0, %v1584
  %v1586 = vpop.f32.mrb[0].mxu0
  %v1587 = vpop.f32.mrb[0].mxu0
  %v1588 = vadd.f32 0.0, %v1587
  %v1589 = vpop.f32.mrb[0].mxu0
  %1590 = vmatprep.mubr.bf16.mxu0 0
  %1591 = vmatmul.mubr.bf16.gmra.mrb[0].mxu0 %v956
  %v1592 = vpop.f32.mrb[0].mxu0
  %v1593 = vadd.f32 0.0, %v1592
  %v1594 = vpop.f32.mrb[0].mxu0
  %v1595 = vpop.f32.mrb[0].mxu0
  %v1596 = vadd.f32 0.0, %v1595
  %v1597 = vpop.f32.mrb[0].mxu0
  %1598 = vmatprep.mubr.bf16.mxu0 0
  %1599 = vmatmul.mubr.bf16.gmra.mrb[0].mxu0 %v959
  %v1600 = vpop.f32.mrb[0].mxu0
  %v1601 = vadd.f32 0.0, %v1600
  %v1602 = vpop.f32.mrb[0].mxu0
  %v1603 = vpop.f32.mrb[0].mxu0
  %v1604 = vadd.f32 0.0, %v1603
  %v1605 = vpop.f32.mrb[0].mxu0
  %1606 = vmatprep.mubr.bf16.mxu0 0
  %1607 = vmatmul.mubr.bf16.gmra.mrb[0].mxu0 %v962
  %v1608 = vpop.f32.mrb[0].mxu0
  %v1609 = vadd.f32 0.0, %v1608
  %v1610 = vpop.f32.mrb[0].mxu0
  %v1611 = vpop.f32.mrb[0].mxu0
  %v1612 = vadd.f32 0.0, %v1611
  %v1613 = vpop.f32.mrb[0].mxu0
  %1614 = vmatprep.mubr.bf16.mxu0 0
  %1615 = vmatmul.mubr.bf16.gmra.mrb[0].mxu0 %v965
  %v1616 = vpop.f32.mrb[0].mxu0
  %v1617 = vadd.f32 0.0, %v1616
  %v1618 = vpop.f32.mrb[0].mxu0
  %v1619 = vpop.f32.mrb[0].mxu0
  %v1620 = vadd.f32 0.0, %v1619
  %v1621 = vpop.f32.mrb[0].mxu0
  %1622 = vmatprep.mubr.bf16.mxu0 0
  %1623 = vmatmul.mubr.bf16.gmra.mrb[0].mxu0 %v968
  %v1624 = vpop.f32.mrb[0].mxu0
  %v1625 = vadd.f32 0.0, %v1624
  %v1626 = vpop.f32.mrb[0].mxu0
  %v1627 = vpop.f32.mrb[0].mxu0
  %v1628 = vadd.f32 0.0, %v1627
  %v1629 = vpop.f32.mrb[0].mxu0
  %1630 = vmatprep.mubr.bf16.mxu0 0
  %1631 = vmatmul.mubr.bf16.gmra.mrb[0].mxu0 %v971
  %v1632 = vpop.f32.mrb[0].mxu0
  %v1633 = vadd.f32 0.0, %v1632
  %v1634 = vpop.f32.mrb[0].mxu0
  %v1635 = vpop.f32.mrb[0].mxu0
  %v1636 = vadd.f32 0.0, %v1635
  %v1637 = vpop.f32.mrb[0].mxu0
  %1638 = vmatprep.mubr.bf16.mxu0 0
  %1639 = vmatmul.mubr.bf16.gmra.mrb[0].mxu0 %v974
  %v1640 = vpop.f32.mrb[0].mxu0
  %v1641 = vadd.f32 0.0, %v1640
  %v1642 = vpop.f32.mrb[0].mxu0
  %v1643 = vpop.f32.mrb[0].mxu0
  %v1644 = vadd.f32 0.0, %v1643
  %v1645 = vpop.f32.mrb[0].mxu0
  %1646 = vmatprep.mubr.bf16.mxu0 0
  %1647 = vmatmul.mubr.bf16.gmra.mrb[0].mxu0 %v977
  %v1648 = vpop.f32.mrb[0].mxu0
  %v1649 = vadd.f32 0.0, %v1648
  %v1650 = vpop.f32.mrb[0].mxu0
  %v1651 = vpop.f32.mrb[0].mxu0
  %v1652 = vadd.f32 0.0, %v1651
  %v1653 = vpop.f32.mrb[0].mxu0
  %1654 = vmatprep.mubr.bf16.mxu0 0
  %1655 = vmatmul.mubr.bf16.gmra.mrb[0].mxu0 %v980
  %v1656 = vpop.f32.mrb[0].mxu0
  %v1657 = vadd.f32 0.0, %v1656
  %v1658 = vpop.f32.mrb[0].mxu0
  %v1659 = vpop.f32.mrb[0].mxu0
  %v1660 = vadd.f32 0.0, %v1659
  %v1661 = vpop.f32.mrb[0].mxu0
  %1662 = vmatprep.mubr.bf16.mxu0 0
  %1663 = vmatmul.mubr.bf16.gmra.mrb[0].mxu0 %v983
  %v1664 = vpop.f32.mrb[0].mxu0
  %v1665 = vadd.f32 0.0, %v1664
  %v1666 = vpop.f32.mrb[0].mxu0
  %v1667 = vpop.f32.mrb[0].mxu0
  %v1668 = vadd.f32 0.0, %v1667
  %v1669 = vpop.f32.mrb[0].mxu0
  %1670 = vmatprep.mubr.bf16.mxu0 0
  %1671 = vmatmul.mubr.bf16.gmra.mrb[0].mxu0 %v986
  %v1672 = vpop.f32.mrb[0].mxu0
  %v1673 = vadd.f32 0.0, %v1672
  %v1674 = vpop.f32.mrb[0].mxu0
  %v1675 = vpop.f32.mrb[0].mxu0
  %v1676 = vadd.f32 0.0, %v1675
  %v1677 = vpop.f32.mrb[0].mxu0
  %1678 = vmatprep.mubr.bf16.mxu0 0
  %1679 = vmatmul.mubr.bf16.gmra.mrb[0].mxu0 %v989
  %v1680 = vpop.f32.mrb[0].mxu0
  %v1681 = vadd.f32 0.0, %v1680
  %v1682 = vpop.f32.mrb[0].mxu0
  %v1683 = vpop.f32.mrb[0].mxu0
  %v1684 = vadd.f32 0.0, %v1683
  %v1685 = vpop.f32.mrb[0].mxu0
  %1686 = vmatprep.mubr.bf16.mxu0 0
  %1687 = vmatmul.mubr.bf16.gmra.mrb[0].mxu0 %v992
  %v1688 = vpop.f32.mrb[0].mxu0
  %v1689 = vadd.f32 0.0, %v1688
  %v1690 = vpop.f32.mrb[0].mxu0
  %v1691 = vpop.f32.mrb[0].mxu0
  %v1692 = vadd.f32 0.0, %v1691
  %v1693 = vpop.f32.mrb[0].mxu0
  %1694 = vmatprep.mubr.bf16.mxu0 0
  %1695 = vmatmul.mubr.bf16.gmra.mrb[0].mxu0 %v995
  %v1696 = vpop.f32.mrb[0].mxu0
  %v1697 = vadd.f32 0.0, %v1696
  %v1698 = vpop.f32.mrb[0].mxu0
  %v1699 = vpop.f32.mrb[0].mxu0
  %v1700 = vadd.f32 0.0, %v1699
  %v1701 = vpop.f32.mrb[0].mxu0
  %1702 = vmatprep.mubr.bf16.mxu0 0
  %1703 = vmatmul.mubr.bf16.gmra.mrb[0].mxu0 %v998
  %v1704 = vpop.f32.mrb[0].mxu0
  %v1705 = vadd.f32 0.0, %v1704
  %v1706 = vpop.f32.mrb[0].mxu0
  %v1707 = vpop.f32.mrb[0].mxu0
  %v1708 = vadd.f32 0.0, %v1707
  %v1709 = vpop.f32.mrb[0].mxu0
  %1710 = vmatprep.mubr.bf16.mxu0 0
  %1711 = vmatmul.mubr.bf16.gmra.mrb[0].mxu0 %v1001
  %v1712 = vpop.f32.mrb[0].mxu0
  %v1713 = vadd.f32 0.0, %v1712
  %v1714 = vpop.f32.mrb[0].mxu0
  %v1715 = vpop.f32.mrb[0].mxu0
  %v1716 = vadd.f32 0.0, %v1715
  %v1717 = vpop.f32.mrb[0].mxu0
  %1718 = vmatprep.mubr.bf16.mxu0 0
  %1719 = vmatmul.mubr.bf16.gmra.mrb[0].mxu0 %v1004
  %v1720 = vpop.f32.mrb[0].mxu0
  %v1721 = vadd.f32 0.0, %v1720
  %v1722 = vpop.f32.mrb[0].mxu0
  %v1723 = vpop.f32.mrb[0].mxu0
  %v1724 = vadd.f32 0.0, %v1723
  %v1725 = vpop.f32.mrb[0].mxu0
  %1726 = vmatprep.mubr.bf16.mxu0 0
  %1727 = vmatmul.mubr.bf16.gmra.mrb[0].mxu0 %v1007
  %v1728 = vpop.f32.mrb[0].mxu0
  %v1729 = vadd.f32 0.0, %v1728
  %v1730 = vpop.f32.mrb[0].mxu0
  %v1731 = vpop.f32.mrb[0].mxu0
  %v1732 = vadd.f32 0.0, %v1731
  %v1733 = vpop.f32.mrb[0].mxu0
  %1734 = vmatprep.mubr.bf16.mxu0 0
  %1735 = vmatmul.mubr.bf16.gmra.mrb[0].mxu0 %v1010
  %v1736 = vpop.f32.mrb[0].mxu0
  %v1737 = vadd.f32 0.0, %v1736
  %v1738 = vpop.f32.mrb[0].mxu0
  %v1739 = vpop.f32.mrb[0].mxu0
  %v1740 = vadd.f32 0.0, %v1739
  %v1741 = vpop.f32.mrb[0].mxu0
  %1742 = vmatprep.mubr.bf16.mxu0 0
  %1743 = vmatmul.mubr.bf16.gmra.mrb[0].mxu0 %v1013
  %v1744 = vpop.f32.mrb[0].mxu0
  %v1745 = vadd.f32 0.0, %v1744
  %v1746 = vpop.f32.mrb[0].mxu0
  %v1747 = vpop.f32.mrb[0].mxu0
  %v1748 = vadd.f32 0.0, %v1747
  %v1749 = vpop.f32.mrb[0].mxu0
  %1750 = vmatprep.mubr.bf16.mxu0 0
  %1751 = vmatmul.mubr.bf16.gmra.mrb[0].mxu0 %v1016
  %v1752 = vpop.f32.mrb[0].mxu0
  %v1753 = vadd.f32 0.0, %v1752
  %v1754 = vpop.f32.mrb[0].mxu0
  %v1755 = vpop.f32.mrb[0].mxu0
  %v1756 = vadd.f32 0.0, %v1755
  %v1757 = vpop.f32.mrb[0].mxu0
  %1758 = vmatprep.mubr.bf16.mxu0 0
  %1759 = vmatmul.mubr.bf16.gmra.mrb[0].mxu0 %v1019
  %v1760 = vpop.f32.mrb[0].mxu0
  %v1761 = vadd.f32 0.0, %v1760
  %v1762 = vpop.f32.mrb[0].mxu0
  %v1763 = vpop.f32.mrb[0].mxu0
  %v1764 = vadd.f32 0.0, %v1763
  %v1765 = vpop.f32.mrb[0].mxu0
  %1766 = vmatprep.mubr.bf16.mxu0 0
  %1767 = vmatmul.mubr.bf16.gmra.mrb[0].mxu0 %v1022
  %v1768 = vpop.f32.mrb[0].mxu0
  %v1769 = vadd.f32 0.0, %v1768
  %v1770 = vpop.f32.mrb[0].mxu0
  %v1771 = vpop.f32.mrb[0].mxu0
  %v1772 = vadd.f32 0.0, %v1771
  %v1773 = vpop.f32.mrb[0].mxu0
  %1774 = vmatprep.mubr.bf16.mxu0 0
  %1775 = vmatmul.mubr.bf16.gmra.mrb[0].mxu0 %v1025
  %v1776 = vpop.f32.mrb[0].mxu0
  %v1777 = vadd.f32 0.0, %v1776
  %v1778 = vpop.f32.mrb[0].mxu0
  %v1779 = vpop.f32.mrb[0].mxu0
  %v1780 = vadd.f32 0.0, %v1779
  %v1781 = vpop.f32.mrb[0].mxu0
  %1782 = vmatprep.mubr.bf16.mxu0 0
  %1783 = vmatmul.mubr.bf16.gmra.mrb[0].mxu0 %v1028
  %v1784 = vpop.f32.mrb[0].mxu0
  %v1785 = vadd.f32 0.0, %v1784
  %v1786 = vpop.f32.mrb[0].mxu0
  %v1787 = vpop.f32.mrb[0].mxu0
  %v1788 = vadd.f32 0.0, %v1787
  %v1789 = vpop.f32.mrb[0].mxu0
  %1790 = vmatprep.mubr.bf16.mxu0 0
  %1791 = vmatmul.mubr.bf16.gmra.mrb[0].mxu0 %v1031
  %v1792 = vpop.f32.mrb[0].mxu0
  %v1793 = vadd.f32 0.0, %v1792
  %v1794 = vpop.f32.mrb[0].mxu0
  %v1795 = vpop.f32.mrb[0].mxu0
  %v1796 = vadd.f32 0.0, %v1795
  %v1797 = vpop.f32.mrb[0].mxu0
  %1798 = vmatprep.mubr.bf16.mxu0 0
  %1799 = vmatmul.mubr.bf16.gmra.mrb[0].mxu0 %v1034
  %v1800 = vpop.f32.mrb[0].mxu0
  %v1801 = vadd.f32 0.0, %v1800
  %v1802 = vpop.f32.mrb[0].mxu0
  %v1803 = vpop.f32.mrb[0].mxu0
  %v1804 = vadd.f32 0.0, %v1803
  %v1805 = vpop.f32.mrb[0].mxu0
  %1806 = vmatprep.mubr.bf16.mxu0 0
  %1807 = vmatmul.mubr.bf16.gmra.mrb[0].mxu0 %v1037
  %v1808 = vpop.f32.mrb[0].mxu0
  %v1809 = vadd.f32 0.0, %v1808
  %v1810 = vpop.f32.mrb[0].mxu0
  %v1811 = vpop.f32.mrb[0].mxu0
  %v1812 = vadd.f32 0.0, %v1811
  %v1813 = vpop.f32.mrb[0].mxu0
  %1814 = vmatprep.mubr.bf16.mxu0 0
  %1815 = vmatmul.mubr.bf16.gmra.mrb[0].mxu0 %v1040
  %v1816 = vpop.f32.mrb[0].mxu0
  %v1817 = vadd.f32 0.0, %v1816
  %v1818 = vpop.f32.mrb[0].mxu0
  %v1819 = vpop.f32.mrb[0].mxu0
  %v1820 = vadd.f32 0.0, %v1819
  %v1821 = vpop.f32.mrb[0].mxu0
  %1822 = vmatprep.mubr.bf16.mxu0 0
  %1823 = vmatmul.mubr.bf16.gmra.mrb[0].mxu0 %v1043
  %v1824 = vpop.f32.mrb[0].mxu0
  %v1825 = vadd.f32 0.0, %v1824
  %v1826 = vpop.f32.mrb[0].mxu0
  %v1827 = vpop.f32.mrb[0].mxu0
  %v1828 = vadd.f32 0.0, %v1827
  %v1829 = vpop.f32.mrb[0].mxu0
  %1830 = vmatprep.mubr.bf16.mxu0 0
  %1831 = vmatmul.mubr.bf16.gmra.mrb[0].mxu0 %v1046
  %v1832 = vpop.f32.mrb[0].mxu0
  %v1833 = vadd.f32 0.0, %v1832
  %v1834 = vpop.f32.mrb[0].mxu0
  %v1835 = vpop.f32.mrb[0].mxu0
  %v1836 = vadd.f32 0.0, %v1835
  %v1837 = vpop.f32.mrb[0].mxu0
  %1838 = vmatprep.mubr.bf16.mxu0 0
  %1839 = vmatmul.mubr.bf16.gmra.mrb[0].mxu0 %v1049
  %v1840 = vpop.f32.mrb[0].mxu0
  %v1841 = vadd.f32 0.0, %v1840
  %v1842 = vpop.f32.mrb[0].mxu0
  %v1843 = vpop.f32.mrb[0].mxu0
  %v1844 = vadd.f32 0.0, %v1843
  %v1845 = vpop.f32.mrb[0].mxu0
  %1846 = vmatprep.mubr.bf16.mxu0 0
  %1847 = vmatmul.mubr.bf16.gmra.mrb[0].mxu0 %v1052
  %v1848 = vpop.f32.mrb[0].mxu0
  %v1849 = vadd.f32 0.0, %v1848
  %v1850 = vpop.f32.mrb[0].mxu0
  %v1851 = vpop.f32.mrb[0].mxu0
  %v1852 = vadd.f32 0.0, %v1851
  %v1853 = vpop.f32.mrb[0].mxu0
  %1854 = vmatprep.mubr.bf16.mxu0 0
  %1855 = vmatmul.mubr.bf16.gmra.mrb[0].mxu0 %v1055
  %v1856 = vpop.f32.mrb[0].mxu0
  %v1857 = vadd.f32 0.0, %v1856
  %v1858 = vpop.f32.mrb[0].mxu0
  %v1859 = vpop.f32.mrb[0].mxu0
  %v1860 = vadd.f32 0.0, %v1859
  %v1861 = vpop.f32.mrb[0].mxu0
  %1862 = vmatprep.mubr.bf16.mxu0 0
  %1863 = vmatmul.mubr.bf16.gmra.mrb[0].mxu0 %v1058
  %v1864 = vpop.f32.mrb[0].mxu0
  %v1865 = vadd.f32 0.0, %v1864
  %v1866 = vpop.f32.mrb[0].mxu0
  %v1867 = vpop.f32.mrb[0].mxu0
  %v1868 = vadd.f32 0.0, %v1867
  %v1869 = vpop.f32.mrb[0].mxu0
  %1870 = vmatprep.mubr.bf16.mxu0 0
  %1871 = vmatmul.mubr.bf16.gmra.mrb[0].mxu0 %v1061
  %v1872 = vpop.f32.mrb[0].mxu0
  %v1873 = vadd.f32 0.0, %v1872
  %v1874 = vpop.f32.mrb[0].mxu0
  %v1875 = vpop.f32.mrb[0].mxu0
  %v1876 = vadd.f32 0.0, %v1875
  %v1877 = vpop.f32.mrb[0].mxu0
  %1878 = vmatprep.mubr.bf16.mxu0 0
  %1879 = vmatmul.mubr.bf16.gmra.mrb[0].mxu0 %v1064
  %v1880 = vpop.f32.mrb[0].mxu0
  %v1881 = vadd.f32 0.0, %v1880
  %v1882 = vpop.f32.mrb[0].mxu0
  %v1883 = vpop.f32.mrb[0].mxu0
  %v1884 = vadd.f32 0.0, %v1883
  %v1885 = vpop.f32.mrb[0].mxu0
  %1886 = vdwg.mxu0
  %2083 = vrot.lane.b32.xlu0 %v1105, 96
  %v2084 = vpop.permute.xlu0 %2083
  %2085 = vrot.lane.b32.xlu0 %v1108, 96
  %v2086 = vpop.permute.xlu0 %2085
  %2087 = vrot.lane.b32.xlu0 %v1113, 96
  %v2088 = vpop.permute.xlu0 %2087
  %2089 = vrot.lane.b32.xlu0 %v1116, 96
  %v2090 = vpop.permute.xlu0 %2089
  %2091 = vrot.lane.b32.xlu0 %v1121, 96
  %v2092 = vpop.permute.xlu0 %2091
  %2093 = vrot.lane.b32.xlu0 %v1124, 96
  %v2094 = vpop.permute.xlu0 %2093
  %2095 = vrot.lane.b32.xlu0 %v1129, 96
  %v2096 = vpop.permute.xlu0 %2095
  %2097 = vrot.lane.b32.xlu0 %v1132, 96
  %v2098 = vpop.permute.xlu0 %2097
  %2099 = vrot.lane.b32.xlu0 %v1137, 96
  %v2100 = vpop.permute.xlu0 %2099
  %2101 = vrot.lane.b32.xlu0 %v1140, 96
  %v2102 = vpop.permute.xlu0 %2101
  %2103 = vrot.lane.b32.xlu0 %v1145, 96
  %v2104 = vpop.permute.xlu0 %2103
  %2105 = vrot.lane.b32.xlu0 %v1148, 96
  %v2106 = vpop.permute.xlu0 %2105
  %2107 = vrot.lane.b32.xlu0 %v1153, 96
  %v2108 = vpop.permute.xlu0 %2107
  %2109 = vrot.lane.b32.xlu0 %v1156, 96
  %v2110 = vpop.permute.xlu0 %2109
  %2111 = vrot.lane.b32.xlu0 %v1161, 96
  %v2112 = vpop.permute.xlu0 %2111
  %2113 = vrot.lane.b32.xlu0 %v1164, 96
  %v2114 = vpop.permute.xlu0 %2113
  %2115 = vrot.lane.b32.xlu0 %v1169, 96
  %v2116 = vpop.permute.xlu0 %2115
  %2117 = vrot.lane.b32.xlu0 %v1172, 96
  %v2118 = vpop.permute.xlu0 %2117
  %2119 = vrot.lane.b32.xlu0 %v1177, 96
  %v2120 = vpop.permute.xlu0 %2119
  %2121 = vrot.lane.b32.xlu0 %v1180, 96
  %v2122 = vpop.permute.xlu0 %2121
  %2123 = vrot.lane.b32.xlu0 %v1185, 96
  %v2124 = vpop.permute.xlu0 %2123
  %2125 = vrot.lane.b32.xlu0 %v1188, 96
  %v2126 = vpop.permute.xlu0 %2125
  %2127 = vrot.lane.b32.xlu0 %v1193, 96
  %v2128 = vpop.permute.xlu0 %2127
  %2129 = vrot.lane.b32.xlu0 %v1196, 96
  %v2130 = vpop.permute.xlu0 %2129
  %2131 = vrot.lane.b32.xlu0 %v1201, 96
  %v2132 = vpop.permute.xlu0 %2131
  %2133 = vrot.lane.b32.xlu0 %v1204, 96
  %v2134 = vpop.permute.xlu0 %2133
  %2135 = vrot.lane.b32.xlu0 %v1209, 96
  %v2136 = vpop.permute.xlu0 %2135
  %2137 = vrot.lane.b32.xlu0 %v1212, 96
  %v2138 = vpop.permute.xlu0 %2137
  %2139 = vrot.lane.b32.xlu0 %v1217, 96
  %v2140 = vpop.permute.xlu0 %2139
  %2141 = vrot.lane.b32.xlu0 %v1220, 96
  %v2142 = vpop.permute.xlu0 %2141
  %2143 = vrot.lane.b32.xlu0 %v1225, 96
  %v2144 = vpop.permute.xlu0 %2143
  %2145 = vrot.lane.b32.xlu0 %v1228, 96
  %v2146 = vpop.permute.xlu0 %2145
  %2147 = vrot.lane.b32.xlu0 %v1233, 96
  %v2148 = vpop.permute.xlu0 %2147
  %2149 = vrot.lane.b32.xlu0 %v1236, 96
  %v2150 = vpop.permute.xlu0 %2149
  %2151 = vrot.lane.b32.xlu0 %v1241, 96
  %v2152 = vpop.permute.xlu0 %2151
  %2153 = vrot.lane.b32.xlu0 %v1244, 96
  %v2154 = vpop.permute.xlu0 %2153
  %2155 = vrot.lane.b32.xlu0 %v1249, 96
  %v2156 = vpop.permute.xlu0 %2155
  %2157 = vrot.lane.b32.xlu0 %v1252, 96
  %v2158 = vpop.permute.xlu0 %2157
  %2159 = vrot.lane.b32.xlu0 %v1257, 96
  %v2160 = vpop.permute.xlu0 %2159
  %2161 = vrot.lane.b32.xlu0 %v1260, 96
  %v2162 = vpop.permute.xlu0 %2161
  %2163 = vrot.lane.b32.xlu0 %v1265, 96
  %v2164 = vpop.permute.xlu0 %2163
  %2165 = vrot.lane.b32.xlu0 %v1268, 96
  %v2166 = vpop.permute.xlu0 %2165
  %2167 = vrot.lane.b32.xlu0 %v1273, 96
  %v2168 = vpop.permute.xlu0 %2167
  %2169 = vrot.lane.b32.xlu0 %v1276, 96
  %v2170 = vpop.permute.xlu0 %2169
  %2171 = vrot.lane.b32.xlu0 %v1281, 96
  %v2172 = vpop.permute.xlu0 %2171
  %2173 = vrot.lane.b32.xlu0 %v1284, 96
  %v2174 = vpop.permute.xlu0 %2173
  %2175 = vrot.lane.b32.xlu0 %v1289, 96
  %v2176 = vpop.permute.xlu0 %2175
  %2177 = vrot.lane.b32.xlu0 %v1292, 96
  %v2178 = vpop.permute.xlu0 %2177
  %2179 = vrot.lane.b32.xlu0 %v1297, 96
  %v2180 = vpop.permute.xlu0 %2179
  %2181 = vrot.lane.b32.xlu0 %v1300, 96
  %v2182 = vpop.permute.xlu0 %2181
  %2183 = vrot.lane.b32.xlu0 %v1305, 96
  %v2184 = vpop.permute.xlu0 %2183
  %2185 = vrot.lane.b32.xlu0 %v1308, 96
  %v2186 = vpop.permute.xlu0 %2185
  %2187 = vrot.lane.b32.xlu0 %v1313, 96
  %v2188 = vpop.permute.xlu0 %2187
  %2189 = vrot.lane.b32.xlu0 %v1316, 96
  %v2190 = vpop.permute.xlu0 %2189
  %2191 = vrot.lane.b32.xlu0 %v1321, 96
  %v2192 = vpop.permute.xlu0 %2191
  %2193 = vrot.lane.b32.xlu0 %v1324, 96
  %v2194 = vpop.permute.xlu0 %2193
  %2195 = vrot.lane.b32.xlu0 %v1329, 96
  %v2196 = vpop.permute.xlu0 %2195
  %2197 = vrot.lane.b32.xlu0 %v1332, 96
  %v2198 = vpop.permute.xlu0 %2197
  %2199 = vrot.lane.b32.xlu0 %v1337, 96
  %v2200 = vpop.permute.xlu0 %2199
  %2201 = vrot.lane.b32.xlu0 %v1340, 96
  %v2202 = vpop.permute.xlu0 %2201
  %2203 = vrot.lane.b32.xlu0 %v1345, 96
  %v2204 = vpop.permute.xlu0 %2203
  %2205 = vrot.lane.b32.xlu0 %v1348, 96
  %v2206 = vpop.permute.xlu0 %2205
  %2207 = vrot.lane.b32.xlu0 %v1353, 96
  %v2208 = vpop.permute.xlu0 %2207
  %2209 = vrot.lane.b32.xlu0 %v1356, 96
  %v2210 = vpop.permute.xlu0 %2209
  %2211 = vrot.lane.b32.xlu0 %v1361, 96
  %v2212 = vpop.permute.xlu0 %2211
  %2213 = vrot.lane.b32.xlu0 %v1364, 96
  %v2214 = vpop.permute.xlu0 %2213
  %2215 = vrot.lane.b32.xlu0 %v1369, 96
  %v2216 = vpop.permute.xlu0 %2215
  %2217 = vrot.lane.b32.xlu0 %v1372, 96
  %v2218 = vpop.permute.xlu0 %2217
  %2219 = vrot.lane.b32.xlu0 %v1377, 96
  %v2220 = vpop.permute.xlu0 %2219
  %2221 = vrot.lane.b32.xlu0 %v1380, 96
  %v2222 = vpop.permute.xlu0 %2221
  %2223 = vrot.lane.b32.xlu0 %v1385, 96
  %v2224 = vpop.permute.xlu0 %2223
  %2225 = vrot.lane.b32.xlu0 %v1388, 96
  %v2226 = vpop.permute.xlu0 %2225
  %2227 = vrot.lane.b32.xlu0 %v1393, 96
  %v2228 = vpop.permute.xlu0 %2227
  %2229 = vrot.lane.b32.xlu0 %v1396, 96
  %v2230 = vpop.permute.xlu0 %2229
  %2231 = vrot.lane.b32.xlu0 %v1401, 96
  %v2232 = vpop.permute.xlu0 %2231
  %2233 = vrot.lane.b32.xlu0 %v1404, 96
  %v2234 = vpop.permute.xlu0 %2233
  %2235 = vrot.lane.b32.xlu0 %v1409, 96
  %v2236 = vpop.permute.xlu0 %2235
  %2237 = vrot.lane.b32.xlu0 %v1412, 96
  %v2238 = vpop.permute.xlu0 %2237
  %2239 = vrot.lane.b32.xlu0 %v1417, 96
  %v2240 = vpop.permute.xlu0 %2239
  %2241 = vrot.lane.b32.xlu0 %v1420, 96
  %v2242 = vpop.permute.xlu0 %2241
  %2243 = vrot.lane.b32.xlu0 %v1425, 96
  %v2244 = vpop.permute.xlu0 %2243
  %2245 = vrot.lane.b32.xlu0 %v1428, 96
  %v2246 = vpop.permute.xlu0 %2245
  %2247 = vrot.lane.b32.xlu0 %v1433, 96
  %v2248 = vpop.permute.xlu0 %2247
  %2249 = vrot.lane.b32.xlu0 %v1436, 96
  %v2250 = vpop.permute.xlu0 %2249
  %2251 = vrot.lane.b32.xlu0 %v1441, 96
  %v2252 = vpop.permute.xlu0 %2251
  %2253 = vrot.lane.b32.xlu0 %v1444, 96
  %v2254 = vpop.permute.xlu0 %2253
  %2255 = vrot.lane.b32.xlu0 %v1449, 96
  %v2256 = vpop.permute.xlu0 %2255
  %2257 = vrot.lane.b32.xlu0 %v1452, 96
  %v2258 = vpop.permute.xlu0 %2257
  %2259 = vrot.lane.b32.xlu0 %v1457, 96
  %v2260 = vpop.permute.xlu0 %2259
  %2261 = vrot.lane.b32.xlu0 %v1460, 96
  %v2262 = vpop.permute.xlu0 %2261
  %2263 = vrot.lane.b32.xlu0 %v1465, 96
  %v2264 = vpop.permute.xlu0 %2263
  %2265 = vrot.lane.b32.xlu0 %v1468, 96
  %v2266 = vpop.permute.xlu0 %2265
  %2267 = vrot.lane.b32.xlu0 %v1473, 96
  %v2268 = vpop.permute.xlu0 %2267
  %2269 = vrot.lane.b32.xlu0 %v1476, 96
  %v2270 = vpop.permute.xlu0 %2269
  %2271 = vrot.lane.b32.xlu0 %v1481, 96
  %v2272 = vpop.permute.xlu0 %2271
  %2273 = vrot.lane.b32.xlu0 %v1484, 96
  %v2274 = vpop.permute.xlu0 %2273
  %2275 = vrot.lane.b32.xlu0 %v1489, 96
  %v2276 = vpop.permute.xlu0 %2275
  %2277 = vrot.lane.b32.xlu0 %v1492, 96
  %v2278 = vpop.permute.xlu0 %2277
  %2279 = vrot.lane.b32.xlu0 %v1497, 96
  %v2280 = vpop.permute.xlu0 %2279
  %2281 = vrot.lane.b32.xlu0 %v1500, 96
  %v2282 = vpop.permute.xlu0 %2281
  %2283 = vrot.lane.b32.xlu0 %v1505, 96
  %v2284 = vpop.permute.xlu0 %2283
  %2285 = vrot.lane.b32.xlu0 %v1508, 96
  %v2286 = vpop.permute.xlu0 %2285
  %2287 = vrot.lane.b32.xlu0 %v1513, 96
  %v2288 = vpop.permute.xlu0 %2287
  %2289 = vrot.lane.b32.xlu0 %v1516, 96
  %v2290 = vpop.permute.xlu0 %2289
  %2291 = vrot.lane.b32.xlu0 %v1521, 96
  %v2292 = vpop.permute.xlu0 %2291
  %2293 = vrot.lane.b32.xlu0 %v1524, 96
  %v2294 = vpop.permute.xlu0 %2293
  %2295 = vrot.lane.b32.xlu0 %v1529, 96
  %v2296 = vpop.permute.xlu0 %2295
  %2297 = vrot.lane.b32.xlu0 %v1532, 96
  %v2298 = vpop.permute.xlu0 %2297
  %2299 = vrot.lane.b32.xlu0 %v1537, 96
  %v2300 = vpop.permute.xlu0 %2299
  %2301 = vrot.lane.b32.xlu0 %v1540, 96
  %v2302 = vpop.permute.xlu0 %2301
  %2303 = vrot.lane.b32.xlu0 %v1545, 96
  %v2304 = vpop.permute.xlu0 %2303
  %2305 = vrot.lane.b32.xlu0 %v1548, 96
  %v2306 = vpop.permute.xlu0 %2305
  %2307 = vrot.lane.b32.xlu0 %v1553, 96
  %v2308 = vpop.permute.xlu0 %2307
  %2309 = vrot.lane.b32.xlu0 %v1556, 96
  %v2310 = vpop.permute.xlu0 %2309
  %2311 = vrot.lane.b32.xlu0 %v1561, 96
  %v2312 = vpop.permute.xlu0 %2311
  %2313 = vrot.lane.b32.xlu0 %v1564, 96
  %v2314 = vpop.permute.xlu0 %2313
  %2315 = vrot.lane.b32.xlu0 %v1569, 96
  %v2316 = vpop.permute.xlu0 %2315
  %2317 = vrot.lane.b32.xlu0 %v1572, 96
  %v2318 = vpop.permute.xlu0 %2317
  %2319 = vrot.lane.b32.xlu0 %v1577, 96
  %v2320 = vpop.permute.xlu0 %2319
  %2321 = vrot.lane.b32.xlu0 %v1580, 96
  %v2322 = vpop.permute.xlu0 %2321
  %2323 = vrot.lane.b32.xlu0 %v1585, 96
  %v2324 = vpop.permute.xlu0 %2323
  %2325 = vrot.lane.b32.xlu0 %v1588, 96
  %v2326 = vpop.permute.xlu0 %2325
  %2327 = vrot.lane.b32.xlu0 %v1593, 96
  %v2328 = vpop.permute.xlu0 %2327
  %2329 = vrot.lane.b32.xlu0 %v1596, 96
  %v2330 = vpop.permute.xlu0 %2329
  %2331 = vrot.lane.b32.xlu0 %v1601, 96
  %v2332 = vpop.permute.xlu0 %2331
  %2333 = vrot.lane.b32.xlu0 %v1604, 96
  %v2334 = vpop.permute.xlu0 %2333
  %2335 = vrot.lane.b32.xlu0 %v1609, 96
  %v2336 = vpop.permute.xlu0 %2335
  %2337 = vrot.lane.b32.xlu0 %v1612, 96
  %v2338 = vpop.permute.xlu0 %2337
  %2339 = vrot.lane.b32.xlu0 %v1617, 96
  %v2340 = vpop.permute.xlu0 %2339
  %2341 = vrot.lane.b32.xlu0 %v1620, 96
  %v2342 = vpop.permute.xlu0 %2341
  %2343 = vrot.lane.b32.xlu0 %v1625, 96
  %v2344 = vpop.permute.xlu0 %2343
  %2345 = vrot.lane.b32.xlu0 %v1628, 96
  %v2346 = vpop.permute.xlu0 %2345
  %2347 = vrot.lane.b32.xlu0 %v1633, 96
  %v2348 = vpop.permute.xlu0 %2347
  %2349 = vrot.lane.b32.xlu0 %v1636, 96
  %v2350 = vpop.permute.xlu0 %2349
  %2351 = vrot.lane.b32.xlu0 %v1641, 96
  %v2352 = vpop.permute.xlu0 %2351
  %2353 = vrot.lane.b32.xlu0 %v1644, 96
  %v2354 = vpop.permute.xlu0 %2353
  %2355 = vrot.lane.b32.xlu0 %v1649, 96
  %v2356 = vpop.permute.xlu0 %2355
  %2357 = vrot.lane.b32.xlu0 %v1652, 96
  %v2358 = vpop.permute.xlu0 %2357
  %2359 = vrot.lane.b32.xlu0 %v1657, 96
  %v2360 = vpop.permute.xlu0 %2359
  %2361 = vrot.lane.b32.xlu0 %v1660, 96
  %v2362 = vpop.permute.xlu0 %2361
  %2363 = vrot.lane.b32.xlu0 %v1665, 96
  %v2364 = vpop.permute.xlu0 %2363
  %2365 = vrot.lane.b32.xlu0 %v1668, 96
  %v2366 = vpop.permute.xlu0 %2365
  %2367 = vrot.lane.b32.xlu0 %v1673, 96
  %v2368 = vpop.permute.xlu0 %2367
  %2369 = vrot.lane.b32.xlu0 %v1676, 96
  %v2370 = vpop.permute.xlu0 %2369
  %2371 = vrot.lane.b32.xlu0 %v1681, 96
  %v2372 = vpop.permute.xlu0 %2371
  %2373 = vrot.lane.b32.xlu0 %v1684, 96
  %v2374 = vpop.permute.xlu0 %2373
  %2375 = vrot.lane.b32.xlu0 %v1689, 96
  %v2376 = vpop.permute.xlu0 %2375
  %2377 = vrot.lane.b32.xlu0 %v1692, 96
  %v2378 = vpop.permute.xlu0 %2377
  %2379 = vrot.lane.b32.xlu0 %v1697, 96
  %v2380 = vpop.permute.xlu0 %2379
  %2381 = vrot.lane.b32.xlu0 %v1700, 96
  %v2382 = vpop.permute.xlu0 %2381
  %2383 = vrot.lane.b32.xlu0 %v1705, 96
  %v2384 = vpop.permute.xlu0 %2383
  %2385 = vrot.lane.b32.xlu0 %v1708, 96
  %v2386 = vpop.permute.xlu0 %2385
  %2387 = vrot.lane.b32.xlu0 %v1713, 96
  %v2388 = vpop.permute.xlu0 %2387
  %2389 = vrot.lane.b32.xlu0 %v1716, 96
  %v2390 = vpop.permute.xlu0 %2389
  %2391 = vrot.lane.b32.xlu0 %v1721, 96
  %v2392 = vpop.permute.xlu0 %2391
  %2393 = vrot.lane.b32.xlu0 %v1724, 96
  %v2394 = vpop.permute.xlu0 %2393
  %2395 = vrot.lane.b32.xlu0 %v1729, 96
  %v2396 = vpop.permute.xlu0 %2395
  %2397 = vrot.lane.b32.xlu0 %v1732, 96
  %v2398 = vpop.permute.xlu0 %2397
  %2399 = vrot.lane.b32.xlu0 %v1737, 96
  %v2400 = vpop.permute.xlu0 %2399
  %2401 = vrot.lane.b32.xlu0 %v1740, 96
  %v2402 = vpop.permute.xlu0 %2401
  %2403 = vrot.lane.b32.xlu0 %v1745, 96
  %v2404 = vpop.permute.xlu0 %2403
  %2405 = vrot.lane.b32.xlu0 %v1748, 96
  %v2406 = vpop.permute.xlu0 %2405
  %2407 = vrot.lane.b32.xlu0 %v1753, 96
  %v2408 = vpop.permute.xlu0 %2407
  %2409 = vrot.lane.b32.xlu0 %v1756, 96
  %v2410 = vpop.permute.xlu0 %2409
  %2411 = vrot.lane.b32.xlu0 %v1761, 96
  %v2412 = vpop.permute.xlu0 %2411
  %2413 = vrot.lane.b32.xlu0 %v1764, 96
  %v2414 = vpop.permute.xlu0 %2413
  %2415 = vrot.lane.b32.xlu0 %v1769, 96
  %v2416 = vpop.permute.xlu0 %2415
  %2417 = vrot.lane.b32.xlu0 %v1772, 96
  %v2418 = vpop.permute.xlu0 %2417
  %2419 = vrot.lane.b32.xlu0 %v1777, 96
  %v2420 = vpop.permute.xlu0 %2419
  %2421 = vrot.lane.b32.xlu0 %v1780, 96
  %v2422 = vpop.permute.xlu0 %2421
  %2423 = vrot.lane.b32.xlu0 %v1785, 96
  %v2424 = vpop.permute.xlu0 %2423
  %2425 = vrot.lane.b32.xlu0 %v1788, 96
  %v2426 = vpop.permute.xlu0 %2425
  %2427 = vrot.lane.b32.xlu0 %v1793, 96
  %v2428 = vpop.permute.xlu0 %2427
  %2429 = vrot.lane.b32.xlu0 %v1796, 96
  %v2430 = vpop.permute.xlu0 %2429
  %2431 = vrot.lane.b32.xlu0 %v1801, 96
  %v2432 = vpop.permute.xlu0 %2431
  %2433 = vrot.lane.b32.xlu0 %v1804, 96
  %v2434 = vpop.permute.xlu0 %2433
  %2435 = vrot.lane.b32.xlu0 %v1809, 96
  %v2436 = vpop.permute.xlu0 %2435
  %2437 = vrot.lane.b32.xlu0 %v1812, 96
  %v2438 = vpop.permute.xlu0 %2437
  %2439 = vrot.lane.b32.xlu0 %v1817, 96
  %v2440 = vpop.permute.xlu0 %2439
  %2441 = vrot.lane.b32.xlu0 %v1820, 96
  %v2442 = vpop.permute.xlu0 %2441
  %2443 = vrot.lane.b32.xlu0 %v1825, 96
  %v2444 = vpop.permute.xlu0 %2443
  %2445 = vrot.lane.b32.xlu0 %v1828, 96
  %v2446 = vpop.permute.xlu0 %2445
  %2447 = vrot.lane.b32.xlu0 %v1833, 96
  %v2448 = vpop.permute.xlu0 %2447
  %2449 = vrot.lane.b32.xlu0 %v1836, 96
  %v2450 = vpop.permute.xlu0 %2449
  %2451 = vrot.lane.b32.xlu0 %v1841, 96
  %v2452 = vpop.permute.xlu0 %2451
  %2453 = vrot.lane.b32.xlu0 %v1844, 96
  %v2454 = vpop.permute.xlu0 %2453
  %2455 = vrot.lane.b32.xlu0 %v1849, 96
  %v2456 = vpop.permute.xlu0 %2455
  %2457 = vrot.lane.b32.xlu0 %v1852, 96
  %v2458 = vpop.permute.xlu0 %2457
  %2459 = vrot.lane.b32.xlu0 %v1857, 96
  %v2460 = vpop.permute.xlu0 %2459
  %2461 = vrot.lane.b32.xlu0 %v1860, 96
  %v2462 = vpop.permute.xlu0 %2461
  %2463 = vrot.lane.b32.xlu0 %v1865, 96
  %v2464 = vpop.permute.xlu0 %2463
  %2465 = vrot.lane.b32.xlu0 %v1868, 96
  %v2466 = vpop.permute.xlu0 %2465
  %2467 = vrot.lane.b32.xlu0 %v1873, 96
  %v2468 = vpop.permute.xlu0 %2467
  %2469 = vrot.lane.b32.xlu0 %v1876, 96
  %v2470 = vpop.permute.xlu0 %2469
  %2471 = vrot.lane.b32.xlu0 %v1881, 96
  %v2472 = vpop.permute.xlu0 %2471
  %2473 = vrot.lane.b32.xlu0 %v1884, 96
  %v2474 = vpop.permute.xlu0 %2473
  %v2671 = vmax.f32 %v1105, %v2084
  %v2672 = vmax.f32 %v1108, %v2086
  %v2673 = vmax.f32 %v1113, %v2088
  %v2674 = vmax.f32 %v1116, %v2090
  %v2675 = vmax.f32 %v1121, %v2092
  %v2676 = vmax.f32 %v1124, %v2094
  %v2677 = vmax.f32 %v1129, %v2096
  %v2678 = vmax.f32 %v1132, %v2098
  %v2679 = vmax.f32 %v1137, %v2100
  %v2680 = vmax.f32 %v1140, %v2102
  %v2681 = vmax.f32 %v1145, %v2104
  %v2682 = vmax.f32 %v1148, %v2106
  %v2683 = vmax.f32 %v1153, %v2108
  %v2684 = vmax.f32 %v1156, %v2110
  %v2685 = vmax.f32 %v1161, %v2112
  %v2686 = vmax.f32 %v1164, %v2114
  %v2687 = vmax.f32 %v1169, %v2116
  %v2688 = vmax.f32 %v1172, %v2118
  %v2689 = vmax.f32 %v1177, %v2120
  %v2690 = vmax.f32 %v1180, %v2122
  %v2691 = vmax.f32 %v1185, %v2124
  %v2692 = vmax.f32 %v1188, %v2126
  %v2693 = vmax.f32 %v1193, %v2128
  %v2694 = vmax.f32 %v1196, %v2130
  %v2695 = vmax.f32 %v1201, %v2132
  %v2696 = vmax.f32 %v1204, %v2134
  %v2697 = vmax.f32 %v1209, %v2136
  %v2698 = vmax.f32 %v1212, %v2138
  %v2699 = vmax.f32 %v1217, %v2140
  %v2700 = vmax.f32 %v1220, %v2142
  %v2701 = vmax.f32 %v1225, %v2144
  %v2702 = vmax.f32 %v1228, %v2146
  %v2703 = vmax.f32 %v1233, %v2148
  %v2704 = vmax.f32 %v1236, %v2150
  %v2705 = vmax.f32 %v1241, %v2152
  %v2706 = vmax.f32 %v1244, %v2154
  %v2707 = vmax.f32 %v1249, %v2156
  %v2708 = vmax.f32 %v1252, %v2158
  %v2709 = vmax.f32 %v1257, %v2160
  %v2710 = vmax.f32 %v1260, %v2162
  %v2711 = vmax.f32 %v1265, %v2164
  %v2712 = vmax.f32 %v1268, %v2166
  %v2713 = vmax.f32 %v1273, %v2168
  %v2714 = vmax.f32 %v1276, %v2170
  %v2715 = vmax.f32 %v1281, %v2172
  %v2716 = vmax.f32 %v1284, %v2174
  %v2717 = vmax.f32 %v1289, %v2176
  %v2718 = vmax.f32 %v1292, %v2178
  %v2719 = vmax.f32 %v1297, %v2180
  %v2720 = vmax.f32 %v1300, %v2182
  %v2721 = vmax.f32 %v1305, %v2184
  %v2722 = vmax.f32 %v1308, %v2186
  %v2723 = vmax.f32 %v1313, %v2188
  %v2724 = vmax.f32 %v1316, %v2190
  %v2725 = vmax.f32 %v1321, %v2192
  %v2726 = vmax.f32 %v1324, %v2194
  %v2727 = vmax.f32 %v1329, %v2196
  %v2728 = vmax.f32 %v1332, %v2198
  %v2729 = vmax.f32 %v1337, %v2200
  %v2730 = vmax.f32 %v1340, %v2202
  %v2731 = vmax.f32 %v1345, %v2204
  %v2732 = vmax.f32 %v1348, %v2206
  %v2733 = vmax.f32 %v1353, %v2208
  %v2734 = vmax.f32 %v1356, %v2210
  %v2735 = vmax.f32 %v1361, %v2212
  %v2736 = vmax.f32 %v1364, %v2214
  %v2737 = vmax.f32 %v1369, %v2216
  %v2738 = vmax.f32 %v1372, %v2218
  %v2739 = vmax.f32 %v1377, %v2220
  %v2740 = vmax.f32 %v1380, %v2222
  %v2741 = vmax.f32 %v1385, %v2224
  %v2742 = vmax.f32 %v1388, %v2226
  %v2743 = vmax.f32 %v1393, %v2228
  %v2744 = vmax.f32 %v1396, %v2230
  %v2745 = vmax.f32 %v1401, %v2232
  %v2746 = vmax.f32 %v1404, %v2234
  %v2747 = vmax.f32 %v1409, %v2236
  %v2748 = vmax.f32 %v1412, %v2238
  %v2749 = vmax.f32 %v1417, %v2240
  %v2750 = vmax.f32 %v1420, %v2242
  %v2751 = vmax.f32 %v1425, %v2244
  %v2752 = vmax.f32 %v1428, %v2246
  %v2753 = vmax.f32 %v1433, %v2248
  %v2754 = vmax.f32 %v1436, %v2250
  %v2755 = vmax.f32 %v1441, %v2252
  %v2756 = vmax.f32 %v1444, %v2254
  %v2757 = vmax.f32 %v1449, %v2256
  %v2758 = vmax.f32 %v1452, %v2258
  %v2759 = vmax.f32 %v1457, %v2260
  %v2760 = vmax.f32 %v1460, %v2262
  %v2761 = vmax.f32 %v1465, %v2264
  %v2762 = vmax.f32 %v1468, %v2266
  %v2763 = vmax.f32 %v1473, %v2268
  %v2764 = vmax.f32 %v1476, %v2270
  %v2765 = vmax.f32 %v1481, %v2272
  %v2766 = vmax.f32 %v1484, %v2274
  %v2767 = vmax.f32 %v1489, %v2276
  %v2768 = vmax.f32 %v1492, %v2278
  %v2769 = vmax.f32 %v1497, %v2280
  %v2770 = vmax.f32 %v1500, %v2282
  %v2771 = vmax.f32 %v1505, %v2284
  %v2772 = vmax.f32 %v1508, %v2286
  %v2773 = vmax.f32 %v1513, %v2288
  %v2774 = vmax.f32 %v1516, %v2290
  %v2775 = vmax.f32 %v1521, %v2292
  %v2776 = vmax.f32 %v1524, %v2294
  %v2777 = vmax.f32 %v1529, %v2296
  %v2778 = vmax.f32 %v1532, %v2298
  %v2779 = vmax.f32 %v1537, %v2300
  %v2780 = vmax.f32 %v1540, %v2302
  %v2781 = vmax.f32 %v1545, %v2304
  %v2782 = vmax.f32 %v1548, %v2306
  %v2783 = vmax.f32 %v1553, %v2308
  %v2784 = vmax.f32 %v1556, %v2310
  %v2785 = vmax.f32 %v1561, %v2312
  %v2786 = vmax.f32 %v1564, %v2314
  %v2787 = vmax.f32 %v1569, %v2316
  %v2788 = vmax.f32 %v1572, %v2318
  %v2789 = vmax.f32 %v1577, %v2320
  %v2790 = vmax.f32 %v1580, %v2322
  %v2791 = vmax.f32 %v1585, %v2324
  %v2792 = vmax.f32 %v1588, %v2326
  %v2793 = vmax.f32 %v1593, %v2328
  %v2794 = vmax.f32 %v1596, %v2330
  %v2795 = vmax.f32 %v1601, %v2332
  %v2796 = vmax.f32 %v1604, %v2334
  %v2797 = vmax.f32 %v1609, %v2336
  %v2798 = vmax.f32 %v1612, %v2338
  %v2799 = vmax.f32 %v1617, %v2340
  %v2800 = vmax.f32 %v1620, %v2342
  %v2801 = vmax.f32 %v1625, %v2344
  %v2802 = vmax.f32 %v1628, %v2346
  %v2803 = vmax.f32 %v1633, %v2348
  %v2804 = vmax.f32 %v1636, %v2350
  %v2805 = vmax.f32 %v1641, %v2352
  %v2806 = vmax.f32 %v1644, %v2354
  %v2807 = vmax.f32 %v1649, %v2356
  %v2808 = vmax.f32 %v1652, %v2358
  %v2809 = vmax.f32 %v1657, %v2360
  %v2810 = vmax.f32 %v1660, %v2362
  %v2811 = vmax.f32 %v1665, %v2364
  %v2812 = vmax.f32 %v1668, %v2366
  %v2813 = vmax.f32 %v1673, %v2368
  %v2814 = vmax.f32 %v1676, %v2370
  %v2815 = vmax.f32 %v1681, %v2372
  %v2816 = vmax.f32 %v1684, %v2374
  %v2817 = vmax.f32 %v1689, %v2376
  %v2818 = vmax.f32 %v1692, %v2378
  %v2819 = vmax.f32 %v1697, %v2380
  %v2820 = vmax.f32 %v1700, %v2382
  %v2821 = vmax.f32 %v1705, %v2384
  %v2822 = vmax.f32 %v1708, %v2386
  %v2823 = vmax.f32 %v1713, %v2388
  %v2824 = vmax.f32 %v1716, %v2390
  %v2825 = vmax.f32 %v1721, %v2392
  %v2826 = vmax.f32 %v1724, %v2394
  %v2827 = vmax.f32 %v1729, %v2396
  %v2828 = vmax.f32 %v1732, %v2398
  %v2829 = vmax.f32 %v1737, %v2400
  %v2830 = vmax.f32 %v1740, %v2402
  %v2831 = vmax.f32 %v1745, %v2404
  %v2832 = vmax.f32 %v1748, %v2406
  %v2833 = vmax.f32 %v1753, %v2408
  %v2834 = vmax.f32 %v1756, %v2410
  %v2835 = vmax.f32 %v1761, %v2412
  %v2836 = vmax.f32 %v1764, %v2414
  %v2837 = vmax.f32 %v1769, %v2416
  %v2838 = vmax.f32 %v1772, %v2418
  %v2839 = vmax.f32 %v1777, %v2420
  %v2840 = vmax.f32 %v1780, %v2422
  %v2841 = vmax.f32 %v1785, %v2424
  %v2842 = vmax.f32 %v1788, %v2426
  %v2843 = vmax.f32 %v1793, %v2428
  %v2844 = vmax.f32 %v1796, %v2430
  %v2845 = vmax.f32 %v1801, %v2432
  %v2846 = vmax.f32 %v1804, %v2434
  %v2847 = vmax.f32 %v1809, %v2436
  %v2848 = vmax.f32 %v1812, %v2438
  %v2849 = vmax.f32 %v1817, %v2440
  %v2850 = vmax.f32 %v1820, %v2442
  %v2851 = vmax.f32 %v1825, %v2444
  %v2852 = vmax.f32 %v1828, %v2446
  %v2853 = vmax.f32 %v1833, %v2448
  %v2854 = vmax.f32 %v1836, %v2450
  %v2855 = vmax.f32 %v1841, %v2452
  %v2856 = vmax.f32 %v1844, %v2454
  %v2857 = vmax.f32 %v1849, %v2456
  %v2858 = vmax.f32 %v1852, %v2458
  %v2859 = vmax.f32 %v1857, %v2460
  %v2860 = vmax.f32 %v1860, %v2462
  %v2861 = vmax.f32 %v1865, %v2464
  %v2862 = vmax.f32 %v1868, %v2466
  %v2863 = vmax.f32 %v1873, %v2468
  %v2864 = vmax.f32 %v1876, %v2470
  %v2865 = vmax.f32 %v1881, %v2472
  %v2866 = vmax.f32 %v1884, %v2474
  %3063 = vrot.lane.b32.xlu0 %v2671, 64
  %v3064 = vpop.permute.xlu0 %3063
  %3065 = vrot.lane.b32.xlu0 %v2672, 64
  %v3066 = vpop.permute.xlu0 %3065
  %3067 = vrot.lane.b32.xlu0 %v2673, 64
  %v3068 = vpop.permute.xlu0 %3067
  %3069 = vrot.lane.b32.xlu0 %v2674, 64
  %v3070 = vpop.permute.xlu0 %3069
  %3071 = vrot.lane.b32.xlu0 %v2675, 64
  %v3072 = vpop.permute.xlu0 %3071
  %3073 = vrot.lane.b32.xlu0 %v2676, 64
  %v3074 = vpop.permute.xlu0 %3073
  %3075 = vrot.lane.b32.xlu0 %v2677, 64
  %v3076 = vpop.permute.xlu0 %3075
  %3077 = vrot.lane.b32.xlu0 %v2678, 64
  %v3078 = vpop.permute.xlu0 %3077
  %3079 = vrot.lane.b32.xlu0 %v2679, 64
  %v3080 = vpop.permute.xlu0 %3079
  %3081 = vrot.lane.b32.xlu0 %v2680, 64
  %v3082 = vpop.permute.xlu0 %3081
  %3083 = vrot.lane.b32.xlu0 %v2681, 64
  %v3084 = vpop.permute.xlu0 %3083
  %3085 = vrot.lane.b32.xlu0 %v2682, 64
  %v3086 = vpop.permute.xlu0 %3085
  %3087 = vrot.lane.b32.xlu0 %v2683, 64
  %v3088 = vpop.permute.xlu0 %3087
  %3089 = vrot.lane.b32.xlu0 %v2684, 64
  %v3090 = vpop.permute.xlu0 %3089
  %3091 = vrot.lane.b32.xlu0 %v2685, 64
  %v3092 = vpop.permute.xlu0 %3091
  %3093 = vrot.lane.b32.xlu0 %v2686, 64
  %v3094 = vpop.permute.xlu0 %3093
  %3095 = vrot.lane.b32.xlu0 %v2687, 64
  %v3096 = vpop.permute.xlu0 %3095
  %3097 = vrot.lane.b32.xlu0 %v2688, 64
  %v3098 = vpop.permute.xlu0 %3097
  %3099 = vrot.lane.b32.xlu0 %v2689, 64
  %v3100 = vpop.permute.xlu0 %3099
  %3101 = vrot.lane.b32.xlu0 %v2690, 64
  %v3102 = vpop.permute.xlu0 %3101
  %3103 = vrot.lane.b32.xlu0 %v2691, 64
  %v3104 = vpop.permute.xlu0 %3103
  %3105 = vrot.lane.b32.xlu0 %v2692, 64
  %v3106 = vpop.permute.xlu0 %3105
  %3107 = vrot.lane.b32.xlu0 %v2693, 64
  %v3108 = vpop.permute.xlu0 %3107
  %3109 = vrot.lane.b32.xlu0 %v2694, 64
  %v3110 = vpop.permute.xlu0 %3109
  %3111 = vrot.lane.b32.xlu0 %v2695, 64
  %v3112 = vpop.permute.xlu0 %3111
  %3113 = vrot.lane.b32.xlu0 %v2696, 64
  %v3114 = vpop.permute.xlu0 %3113
  %3115 = vrot.lane.b32.xlu0 %v2697, 64
  %v3116 = vpop.permute.xlu0 %3115
  %3117 = vrot.lane.b32.xlu0 %v2698, 64
  %v3118 = vpop.permute.xlu0 %3117
  %3119 = vrot.lane.b32.xlu0 %v2699, 64
  %v3120 = vpop.permute.xlu0 %3119
  %3121 = vrot.lane.b32.xlu0 %v2700, 64
  %v3122 = vpop.permute.xlu0 %3121
  %3123 = vrot.lane.b32.xlu0 %v2701, 64
  %v3124 = vpop.permute.xlu0 %3123
  %3125 = vrot.lane.b32.xlu0 %v2702, 64
  %v3126 = vpop.permute.xlu0 %3125
  %3127 = vrot.lane.b32.xlu0 %v2703, 64
  %v3128 = vpop.permute.xlu0 %3127
  %3129 = vrot.lane.b32.xlu0 %v2704, 64
  %v3130 = vpop.permute.xlu0 %3129
  %3131 = vrot.lane.b32.xlu0 %v2705, 64
  %v3132 = vpop.permute.xlu0 %3131
  %3133 = vrot.lane.b32.xlu0 %v2706, 64
  %v3134 = vpop.permute.xlu0 %3133
  %3135 = vrot.lane.b32.xlu0 %v2707, 64
  %v3136 = vpop.permute.xlu0 %3135
  %3137 = vrot.lane.b32.xlu0 %v2708, 64
  %v3138 = vpop.permute.xlu0 %3137
  %3139 = vrot.lane.b32.xlu0 %v2709, 64
  %v3140 = vpop.permute.xlu0 %3139
  %3141 = vrot.lane.b32.xlu0 %v2710, 64
  %v3142 = vpop.permute.xlu0 %3141
  %3143 = vrot.lane.b32.xlu0 %v2711, 64
  %v3144 = vpop.permute.xlu0 %3143
  %3145 = vrot.lane.b32.xlu0 %v2712, 64
  %v3146 = vpop.permute.xlu0 %3145
  %3147 = vrot.lane.b32.xlu0 %v2713, 64
  %v3148 = vpop.permute.xlu0 %3147
  %3149 = vrot.lane.b32.xlu0 %v2714, 64
  %v3150 = vpop.permute.xlu0 %3149
  %3151 = vrot.lane.b32.xlu0 %v2715, 64
  %v3152 = vpop.permute.xlu0 %3151
  %3153 = vrot.lane.b32.xlu0 %v2716, 64
  %v3154 = vpop.permute.xlu0 %3153
  %3155 = vrot.lane.b32.xlu0 %v2717, 64
  %v3156 = vpop.permute.xlu0 %3155
  %3157 = vrot.lane.b32.xlu0 %v2718, 64
  %v3158 = vpop.permute.xlu0 %3157
  %3159 = vrot.lane.b32.xlu0 %v2719, 64
  %v3160 = vpop.permute.xlu0 %3159
  %3161 = vrot.lane.b32.xlu0 %v2720, 64
  %v3162 = vpop.permute.xlu0 %3161
  %3163 = vrot.lane.b32.xlu0 %v2721, 64
  %v3164 = vpop.permute.xlu0 %3163
  %3165 = vrot.lane.b32.xlu0 %v2722, 64
  %v3166 = vpop.permute.xlu0 %3165
  %3167 = vrot.lane.b32.xlu0 %v2723, 64
  %v3168 = vpop.permute.xlu0 %3167
  %3169 = vrot.lane.b32.xlu0 %v2724, 64
  %v3170 = vpop.permute.xlu0 %3169
  %3171 = vrot.lane.b32.xlu0 %v2725, 64
  %v3172 = vpop.permute.xlu0 %3171
  %3173 = vrot.lane.b32.xlu0 %v2726, 64
  %v3174 = vpop.permute.xlu0 %3173
  %3175 = vrot.lane.b32.xlu0 %v2727, 64
  %v3176 = vpop.permute.xlu0 %3175
  %3177 = vrot.lane.b32.xlu0 %v2728, 64
  %v3178 = vpop.permute.xlu0 %3177
  %3179 = vrot.lane.b32.xlu0 %v2729, 64
  %v3180 = vpop.permute.xlu0 %3179
  %3181 = vrot.lane.b32.xlu0 %v2730, 64
  %v3182 = vpop.permute.xlu0 %3181
  %3183 = vrot.lane.b32.xlu0 %v2731, 64
  %v3184 = vpop.permute.xlu0 %3183
  %3185 = vrot.lane.b32.xlu0 %v2732, 64
  %v3186 = vpop.permute.xlu0 %3185
  %3187 = vrot.lane.b32.xlu0 %v2733, 64
  %v3188 = vpop.permute.xlu0 %3187
  %3189 = vrot.lane.b32.xlu0 %v2734, 64
  %v3190 = vpop.permute.xlu0 %3189
  %3191 = vrot.lane.b32.xlu0 %v2735, 64
  %v3192 = vpop.permute.xlu0 %3191
  %3193 = vrot.lane.b32.xlu0 %v2736, 64
  %v3194 = vpop.permute.xlu0 %3193
  %3195 = vrot.lane.b32.xlu0 %v2737, 64
  %v3196 = vpop.permute.xlu0 %3195
  %3197 = vrot.lane.b32.xlu0 %v2738, 64
  %v3198 = vpop.permute.xlu0 %3197
  %3199 = vrot.lane.b32.xlu0 %v2739, 64
  %v3200 = vpop.permute.xlu0 %3199
  %3201 = vrot.lane.b32.xlu0 %v2740, 64
  %v3202 = vpop.permute.xlu0 %3201
  %3203 = vrot.lane.b32.xlu0 %v2741, 64
  %v3204 = vpop.permute.xlu0 %3203
  %3205 = vrot.lane.b32.xlu0 %v2742, 64
  %v3206 = vpop.permute.xlu0 %3205
  %3207 = vrot.lane.b32.xlu0 %v2743, 64
  %v3208 = vpop.permute.xlu0 %3207
  %3209 = vrot.lane.b32.xlu0 %v2744, 64
  %v3210 = vpop.permute.xlu0 %3209
  %3211 = vrot.lane.b32.xlu0 %v2745, 64
  %v3212 = vpop.permute.xlu0 %3211
  %3213 = vrot.lane.b32.xlu0 %v2746, 64
  %v3214 = vpop.permute.xlu0 %3213
  %3215 = vrot.lane.b32.xlu0 %v2747, 64
  %v3216 = vpop.permute.xlu0 %3215
  %3217 = vrot.lane.b32.xlu0 %v2748, 64
  %v3218 = vpop.permute.xlu0 %3217
  %3219 = vrot.lane.b32.xlu0 %v2749, 64
  %v3220 = vpop.permute.xlu0 %3219
  %3221 = vrot.lane.b32.xlu0 %v2750, 64
  %v3222 = vpop.permute.xlu0 %3221
  %3223 = vrot.lane.b32.xlu0 %v2751, 64
  %v3224 = vpop.permute.xlu0 %3223
  %3225 = vrot.lane.b32.xlu0 %v2752, 64
  %v3226 = vpop.permute.xlu0 %3225
  %3227 = vrot.lane.b32.xlu0 %v2753, 64
  %v3228 = vpop.permute.xlu0 %3227
  %3229 = vrot.lane.b32.xlu0 %v2754, 64
  %v3230 = vpop.permute.xlu0 %3229
  %3231 = vrot.lane.b32.xlu0 %v2755, 64
  %v3232 = vpop.permute.xlu0 %3231
  %3233 = vrot.lane.b32.xlu0 %v2756, 64
  %v3234 = vpop.permute.xlu0 %3233
  %3235 = vrot.lane.b32.xlu0 %v2757, 64
  %v3236 = vpop.permute.xlu0 %3235
  %3237 = vrot.lane.b32.xlu0 %v2758, 64
  %v3238 = vpop.permute.xlu0 %3237
  %3239 = vrot.lane.b32.xlu0 %v2759, 64
  %v3240 = vpop.permute.xlu0 %3239
  %3241 = vrot.lane.b32.xlu0 %v2760, 64
  %v3242 = vpop.permute.xlu0 %3241
  %3243 = vrot.lane.b32.xlu0 %v2761, 64
  %v3244 = vpop.permute.xlu0 %3243
  %3245 = vrot.lane.b32.xlu0 %v2762, 64
  %v3246 = vpop.permute.xlu0 %3245
  %3247 = vrot.lane.b32.xlu0 %v2763, 64
  %v3248 = vpop.permute.xlu0 %3247
  %3249 = vrot.lane.b32.xlu0 %v2764, 64
  %v3250 = vpop.permute.xlu0 %3249
  %3251 = vrot.lane.b32.xlu0 %v2765, 64
  %v3252 = vpop.permute.xlu0 %3251
  %3253 = vrot.lane.b32.xlu0 %v2766, 64
  %v3254 = vpop.permute.xlu0 %3253
  %3255 = vrot.lane.b32.xlu0 %v2767, 64
  %v3256 = vpop.permute.xlu0 %3255
  %3257 = vrot.lane.b32.xlu0 %v2768, 64
  %v3258 = vpop.permute.xlu0 %3257
  %3259 = vrot.lane.b32.xlu0 %v2769, 64
  %v3260 = vpop.permute.xlu0 %3259
  %3261 = vrot.lane.b32.xlu0 %v2770, 64
  %v3262 = vpop.permute.xlu0 %3261
  %3263 = vrot.lane.b32.xlu0 %v2771, 64
  %v3264 = vpop.permute.xlu0 %3263
  %3265 = vrot.lane.b32.xlu0 %v2772, 64
  %v3266 = vpop.permute.xlu0 %3265
  %3267 = vrot.lane.b32.xlu0 %v2773, 64
  %v3268 = vpop.permute.xlu0 %3267
  %3269 = vrot.lane.b32.xlu0 %v2774, 64
  %v3270 = vpop.permute.xlu0 %3269
  %3271 = vrot.lane.b32.xlu0 %v2775, 64
  %v3272 = vpop.permute.xlu0 %3271
  %3273 = vrot.lane.b32.xlu0 %v2776, 64
  %v3274 = vpop.permute.xlu0 %3273
  %3275 = vrot.lane.b32.xlu0 %v2777, 64
  %v3276 = vpop.permute.xlu0 %3275
  %3277 = vrot.lane.b32.xlu0 %v2778, 64
  %v3278 = vpop.permute.xlu0 %3277
  %3279 = vrot.lane.b32.xlu0 %v2779, 64
  %v3280 = vpop.permute.xlu0 %3279
  %3281 = vrot.lane.b32.xlu0 %v2780, 64
  %v3282 = vpop.permute.xlu0 %3281
  %3283 = vrot.lane.b32.xlu0 %v2781, 64
  %v3284 = vpop.permute.xlu0 %3283
  %3285 = vrot.lane.b32.xlu0 %v2782, 64
  %v3286 = vpop.permute.xlu0 %3285
  %3287 = vrot.lane.b32.xlu0 %v2783, 64
  %v3288 = vpop.permute.xlu0 %3287
  %3289 = vrot.lane.b32.xlu0 %v2784, 64
  %v3290 = vpop.permute.xlu0 %3289
  %3291 = vrot.lane.b32.xlu0 %v2785, 64
  %v3292 = vpop.permute.xlu0 %3291
  %3293 = vrot.lane.b32.xlu0 %v2786, 64
  %v3294 = vpop.permute.xlu0 %3293
  %3295 = vrot.lane.b32.xlu0 %v2787, 64
  %v3296 = vpop.permute.xlu0 %3295
  %3297 = vrot.lane.b32.xlu0 %v2788, 64
  %v3298 = vpop.permute.xlu0 %3297
  %3299 = vrot.lane.b32.xlu0 %v2789, 64
  %v3300 = vpop.permute.xlu0 %3299
  %3301 = vrot.lane.b32.xlu0 %v2790, 64
  %v3302 = vpop.permute.xlu0 %3301
  %3303 = vrot.lane.b32.xlu0 %v2791, 64
  %v3304 = vpop.permute.xlu0 %3303
  %3305 = vrot.lane.b32.xlu0 %v2792, 64
  %v3306 = vpop.permute.xlu0 %3305
  %3307 = vrot.lane.b32.xlu0 %v2793, 64
  %v3308 = vpop.permute.xlu0 %3307
  %3309 = vrot.lane.b32.xlu0 %v2794, 64
  %v3310 = vpop.permute.xlu0 %3309
  %3311 = vrot.lane.b32.xlu0 %v2795, 64
  %v3312 = vpop.permute.xlu0 %3311
  %3313 = vrot.lane.b32.xlu0 %v2796, 64
  %v3314 = vpop.permute.xlu0 %3313
  %3315 = vrot.lane.b32.xlu0 %v2797, 64
  %v3316 = vpop.permute.xlu0 %3315
  %3317 = vrot.lane.b32.xlu0 %v2798, 64
  %v3318 = vpop.permute.xlu0 %3317
  %3319 = vrot.lane.b32.xlu0 %v2799, 64
  %v3320 = vpop.permute.xlu0 %3319
  %3321 = vrot.lane.b32.xlu0 %v2800, 64
  %v3322 = vpop.permute.xlu0 %3321
  %3323 = vrot.lane.b32.xlu0 %v2801, 64
  %v3324 = vpop.permute.xlu0 %3323
  %3325 = vrot.lane.b32.xlu0 %v2802, 64
  %v3326 = vpop.permute.xlu0 %3325
  %3327 = vrot.lane.b32.xlu0 %v2803, 64
  %v3328 = vpop.permute.xlu0 %3327
  %3329 = vrot.lane.b32.xlu0 %v2804, 64
  %v3330 = vpop.permute.xlu0 %3329
  %3331 = vrot.lane.b32.xlu0 %v2805, 64
  %v3332 = vpop.permute.xlu0 %3331
  %3333 = vrot.lane.b32.xlu0 %v2806, 64
  %v3334 = vpop.permute.xlu0 %3333
  %3335 = vrot.lane.b32.xlu0 %v2807, 64
  %v3336 = vpop.permute.xlu0 %3335
  %3337 = vrot.lane.b32.xlu0 %v2808, 64
  %v3338 = vpop.permute.xlu0 %3337
  %3339 = vrot.lane.b32.xlu0 %v2809, 64
  %v3340 = vpop.permute.xlu0 %3339
  %3341 = vrot.lane.b32.xlu0 %v2810, 64
  %v3342 = vpop.permute.xlu0 %3341
  %3343 = vrot.lane.b32.xlu0 %v2811, 64
  %v3344 = vpop.permute.xlu0 %3343
  %3345 = vrot.lane.b32.xlu0 %v2812, 64
  %v3346 = vpop.permute.xlu0 %3345
  %3347 = vrot.lane.b32.xlu0 %v2813, 64
  %v3348 = vpop.permute.xlu0 %3347
  %3349 = vrot.lane.b32.xlu0 %v2814, 64
  %v3350 = vpop.permute.xlu0 %3349
  %3351 = vrot.lane.b32.xlu0 %v2815, 64
  %v3352 = vpop.permute.xlu0 %3351
  %3353 = vrot.lane.b32.xlu0 %v2816, 64
  %v3354 = vpop.permute.xlu0 %3353
  %3355 = vrot.lane.b32.xlu0 %v2817, 64
  %v3356 = vpop.permute.xlu0 %3355
  %3357 = vrot.lane.b32.xlu0 %v2818, 64
  %v3358 = vpop.permute.xlu0 %3357
  %3359 = vrot.lane.b32.xlu0 %v2819, 64
  %v3360 = vpop.permute.xlu0 %3359
  %3361 = vrot.lane.b32.xlu0 %v2820, 64
  %v3362 = vpop.permute.xlu0 %3361
  %3363 = vrot.lane.b32.xlu0 %v2821, 64
  %v3364 = vpop.permute.xlu0 %3363
  %3365 = vrot.lane.b32.xlu0 %v2822, 64
  %v3366 = vpop.permute.xlu0 %3365
  %3367 = vrot.lane.b32.xlu0 %v2823, 64
  %v3368 = vpop.permute.xlu0 %3367
  %3369 = vrot.lane.b32.xlu0 %v2824, 64
  %v3370 = vpop.permute.xlu0 %3369
  %3371 = vrot.lane.b32.xlu0 %v2825, 64
  %v3372 = vpop.permute.xlu0 %3371
  %3373 = vrot.lane.b32.xlu0 %v2826, 64
  %v3374 = vpop.permute.xlu0 %3373
  %3375 = vrot.lane.b32.xlu0 %v2827, 64
  %v3376 = vpop.permute.xlu0 %3375
  %3377 = vrot.lane.b32.xlu0 %v2828, 64
  %v3378 = vpop.permute.xlu0 %3377
  %3379 = vrot.lane.b32.xlu0 %v2829, 64
  %v3380 = vpop.permute.xlu0 %3379
  %3381 = vrot.lane.b32.xlu0 %v2830, 64
  %v3382 = vpop.permute.xlu0 %3381
  %3383 = vrot.lane.b32.xlu0 %v2831, 64
  %v3384 = vpop.permute.xlu0 %3383
  %3385 = vrot.lane.b32.xlu0 %v2832, 64
  %v3386 = vpop.permute.xlu0 %3385
  %3387 = vrot.lane.b32.xlu0 %v2833, 64
  %v3388 = vpop.permute.xlu0 %3387
  %3389 = vrot.lane.b32.xlu0 %v2834, 64
  %v3390 = vpop.permute.xlu0 %3389
  %3391 = vrot.lane.b32.xlu0 %v2835, 64
  %v3392 = vpop.permute.xlu0 %3391
  %3393 = vrot.lane.b32.xlu0 %v2836, 64
  %v3394 = vpop.permute.xlu0 %3393
  %3395 = vrot.lane.b32.xlu0 %v2837, 64
  %v3396 = vpop.permute.xlu0 %3395
  %3397 = vrot.lane.b32.xlu0 %v2838, 64
  %v3398 = vpop.permute.xlu0 %3397
  %3399 = vrot.lane.b32.xlu0 %v2839, 64
  %v3400 = vpop.permute.xlu0 %3399
  %3401 = vrot.lane.b32.xlu0 %v2840, 64
  %v3402 = vpop.permute.xlu0 %3401
  %3403 = vrot.lane.b32.xlu0 %v2841, 64
  %v3404 = vpop.permute.xlu0 %3403
  %3405 = vrot.lane.b32.xlu0 %v2842, 64
  %v3406 = vpop.permute.xlu0 %3405
  %3407 = vrot.lane.b32.xlu0 %v2843, 64
  %v3408 = vpop.permute.xlu0 %3407
  %3409 = vrot.lane.b32.xlu0 %v2844, 64
  %v3410 = vpop.permute.xlu0 %3409
  %3411 = vrot.lane.b32.xlu0 %v2845, 64
  %v3412 = vpop.permute.xlu0 %3411
  %3413 = vrot.lane.b32.xlu0 %v2846, 64
  %v3414 = vpop.permute.xlu0 %3413
  %3415 = vrot.lane.b32.xlu0 %v2847, 64
  %v3416 = vpop.permute.xlu0 %3415
  %3417 = vrot.lane.b32.xlu0 %v2848, 64
  %v3418 = vpop.permute.xlu0 %3417
  %3419 = vrot.lane.b32.xlu0 %v2849, 64
  %v3420 = vpop.permute.xlu0 %3419
  %3421 = vrot.lane.b32.xlu0 %v2850, 64
  %v3422 = vpop.permute.xlu0 %3421
  %3423 = vrot.lane.b32.xlu0 %v2851, 64
  %v3424 = vpop.permute.xlu0 %3423
  %3425 = vrot.lane.b32.xlu0 %v2852, 64
  %v3426 = vpop.permute.xlu0 %3425
  %3427 = vrot.lane.b32.xlu0 %v2853, 64
  %v3428 = vpop.permute.xlu0 %3427
  %3429 = vrot.lane.b32.xlu0 %v2854, 64
  %v3430 = vpop.permute.xlu0 %3429
  %3431 = vrot.lane.b32.xlu0 %v2855, 64
  %v3432 = vpop.permute.xlu0 %3431
  %3433 = vrot.lane.b32.xlu0 %v2856, 64
  %v3434 = vpop.permute.xlu0 %3433
  %3435 = vrot.lane.b32.xlu0 %v2857, 64
  %v3436 = vpop.permute.xlu0 %3435
  %3437 = vrot.lane.b32.xlu0 %v2858, 64
  %v3438 = vpop.permute.xlu0 %3437
  %3439 = vrot.lane.b32.xlu0 %v2859, 64
  %v3440 = vpop.permute.xlu0 %3439
  %3441 = vrot.lane.b32.xlu0 %v2860, 64
  %v3442 = vpop.permute.xlu0 %3441
  %3443 = vrot.lane.b32.xlu0 %v2861, 64
  %v3444 = vpop.permute.xlu0 %3443
  %3445 = vrot.lane.b32.xlu0 %v2862, 64
  %v3446 = vpop.permute.xlu0 %3445
  %3447 = vrot.lane.b32.xlu0 %v2863, 64
  %v3448 = vpop.permute.xlu0 %3447
  %3449 = vrot.lane.b32.xlu0 %v2864, 64
  %v3450 = vpop.permute.xlu0 %3449
  %3451 = vrot.lane.b32.xlu0 %v2865, 64
  %v3452 = vpop.permute.xlu0 %3451
  %3453 = vrot.lane.b32.xlu0 %v2866, 64
  %v3454 = vpop.permute.xlu0 %3453
  %v3651 = vmax.f32 %v2671, %v3064
  %v3652 = vmax.f32 %v2672, %v3066
  %v3653 = vmax.f32 %v2673, %v3068
  %v3654 = vmax.f32 %v2674, %v3070
  %v3655 = vmax.f32 %v2675, %v3072
  %v3656 = vmax.f32 %v2676, %v3074
  %v3657 = vmax.f32 %v2677, %v3076
  %v3658 = vmax.f32 %v2678, %v3078
  %v3659 = vmax.f32 %v2679, %v3080
  %v3660 = vmax.f32 %v2680, %v3082
  %v3661 = vmax.f32 %v2681, %v3084
  %v3662 = vmax.f32 %v2682, %v3086
  %v3663 = vmax.f32 %v2683, %v3088
  %v3664 = vmax.f32 %v2684, %v3090
  %v3665 = vmax.f32 %v2685, %v3092
  %v3666 = vmax.f32 %v2686, %v3094
  %v3667 = vmax.f32 %v2687, %v3096
  %v3668 = vmax.f32 %v2688, %v3098
  %v3669 = vmax.f32 %v2689, %v3100
  %v3670 = vmax.f32 %v2690, %v3102
  %v3671 = vmax.f32 %v2691, %v3104
  %v3672 = vmax.f32 %v2692, %v3106
  %v3673 = vmax.f32 %v2693, %v3108
  %v3674 = vmax.f32 %v2694, %v3110
  %v3675 = vmax.f32 %v2695, %v3112
  %v3676 = vmax.f32 %v2696, %v3114
  %v3677 = vmax.f32 %v2697, %v3116
  %v3678 = vmax.f32 %v2698, %v3118
  %v3679 = vmax.f32 %v2699, %v3120
  %v3680 = vmax.f32 %v2700, %v3122
  %v3681 = vmax.f32 %v2701, %v3124
  %v3682 = vmax.f32 %v2702, %v3126
  %v3683 = vmax.f32 %v2703, %v3128
  %v3684 = vmax.f32 %v2704, %v3130
  %v3685 = vmax.f32 %v2705, %v3132
  %v3686 = vmax.f32 %v2706, %v3134
  %v3687 = vmax.f32 %v2707, %v3136
  %v3688 = vmax.f32 %v2708, %v3138
  %v3689 = vmax.f32 %v2709, %v3140
  %v3690 = vmax.f32 %v2710, %v3142
  %v3691 = vmax.f32 %v2711, %v3144
  %v3692 = vmax.f32 %v2712, %v3146
  %v3693 = vmax.f32 %v2713, %v3148
  %v3694 = vmax.f32 %v2714, %v3150
  %v3695 = vmax.f32 %v2715, %v3152
  %v3696 = vmax.f32 %v2716, %v3154
  %v3697 = vmax.f32 %v2717, %v3156
  %v3698 = vmax.f32 %v2718, %v3158
  %v3699 = vmax.f32 %v2719, %v3160
  %v3700 = vmax.f32 %v2720, %v3162
  %v3701 = vmax.f32 %v2721, %v3164
  %v3702 = vmax.f32 %v2722, %v3166
  %v3703 = vmax.f32 %v2723, %v3168
  %v3704 = vmax.f32 %v2724, %v3170
  %v3705 = vmax.f32 %v2725, %v3172
  %v3706 = vmax.f32 %v2726, %v3174
  %v3707 = vmax.f32 %v2727, %v3176
  %v3708 = vmax.f32 %v2728, %v3178
  %v3709 = vmax.f32 %v2729, %v3180
  %v3710 = vmax.f32 %v2730, %v3182
  %v3711 = vmax.f32 %v2731, %v3184
  %v3712 = vmax.f32 %v2732, %v3186
  %v3713 = vmax.f32 %v2733, %v3188
  %v3714 = vmax.f32 %v2734, %v3190
  %v3715 = vmax.f32 %v2735, %v3192
  %v3716 = vmax.f32 %v2736, %v3194
  %v3717 = vmax.f32 %v2737, %v3196
  %v3718 = vmax.f32 %v2738, %v3198
  %v3719 = vmax.f32 %v2739, %v3200
  %v3720 = vmax.f32 %v2740, %v3202
  %v3721 = vmax.f32 %v2741, %v3204
  %v3722 = vmax.f32 %v2742, %v3206
  %v3723 = vmax.f32 %v2743, %v3208
  %v3724 = vmax.f32 %v2744, %v3210
  %v3725 = vmax.f32 %v2745, %v3212
  %v3726 = vmax.f32 %v2746, %v3214
  %v3727 = vmax.f32 %v2747, %v3216
  %v3728 = vmax.f32 %v2748, %v3218
  %v3729 = vmax.f32 %v2749, %v3220
  %v3730 = vmax.f32 %v2750, %v3222
  %v3731 = vmax.f32 %v2751, %v3224
  %v3732 = vmax.f32 %v2752, %v3226
  %v3733 = vmax.f32 %v2753, %v3228
  %v3734 = vmax.f32 %v2754, %v3230
  %v3735 = vmax.f32 %v2755, %v3232
  %v3736 = vmax.f32 %v2756, %v3234
  %v3737 = vmax.f32 %v2757, %v3236
  %v3738 = vmax.f32 %v2758, %v3238
  %v3739 = vmax.f32 %v2759, %v3240
  %v3740 = vmax.f32 %v2760, %v3242
  %v3741 = vmax.f32 %v2761, %v3244
  %v3742 = vmax.f32 %v2762, %v3246
  %v3743 = vmax.f32 %v2763, %v3248
  %v3744 = vmax.f32 %v2764, %v3250
  %v3745 = vmax.f32 %v2765, %v3252
  %v3746 = vmax.f32 %v2766, %v3254
  %v3747 = vmax.f32 %v2767, %v3256
  %v3748 = vmax.f32 %v2768, %v3258
  %v3749 = vmax.f32 %v2769, %v3260
  %v3750 = vmax.f32 %v2770, %v3262
  %v3751 = vmax.f32 %v2771, %v3264
  %v3752 = vmax.f32 %v2772, %v3266
  %v3753 = vmax.f32 %v2773, %v3268
  %v3754 = vmax.f32 %v2774, %v3270
  %v3755 = vmax.f32 %v2775, %v3272
  %v3756 = vmax.f32 %v2776, %v3274
  %v3757 = vmax.f32 %v2777, %v3276
  %v3758 = vmax.f32 %v2778, %v3278
  %v3759 = vmax.f32 %v2779, %v3280
  %v3760 = vmax.f32 %v2780, %v3282
  %v3761 = vmax.f32 %v2781, %v3284
  %v3762 = vmax.f32 %v2782, %v3286
  %v3763 = vmax.f32 %v2783, %v3288
  %v3764 = vmax.f32 %v2784, %v3290
  %v3765 = vmax.f32 %v2785, %v3292
  %v3766 = vmax.f32 %v2786, %v3294
  %v3767 = vmax.f32 %v2787, %v3296
  %v3768 = vmax.f32 %v2788, %v3298
  %v3769 = vmax.f32 %v2789, %v3300
  %v3770 = vmax.f32 %v2790, %v3302
  %v3771 = vmax.f32 %v2791, %v3304
  %v3772 = vmax.f32 %v2792, %v3306
  %v3773 = vmax.f32 %v2793, %v3308
  %v3774 = vmax.f32 %v2794, %v3310
  %v3775 = vmax.f32 %v2795, %v3312
  %v3776 = vmax.f32 %v2796, %v3314
  %v3777 = vmax.f32 %v2797, %v3316
  %v3778 = vmax.f32 %v2798, %v3318
  %v3779 = vmax.f32 %v2799, %v3320
  %v3780 = vmax.f32 %v2800, %v3322
  %v3781 = vmax.f32 %v2801, %v3324
  %v3782 = vmax.f32 %v2802, %v3326
  %v3783 = vmax.f32 %v2803, %v3328
  %v3784 = vmax.f32 %v2804, %v3330
  %v3785 = vmax.f32 %v2805, %v3332
  %v3786 = vmax.f32 %v2806, %v3334
  %v3787 = vmax.f32 %v2807, %v3336
  %v3788 = vmax.f32 %v2808, %v3338
  %v3789 = vmax.f32 %v2809, %v3340
  %v3790 = vmax.f32 %v2810, %v3342
  %v3791 = vmax.f32 %v2811, %v3344
  %v3792 = vmax.f32 %v2812, %v3346
  %v3793 = vmax.f32 %v2813, %v3348
  %v3794 = vmax.f32 %v2814, %v3350
  %v3795 = vmax.f32 %v2815, %v3352
  %v3796 = vmax.f32 %v2816, %v3354
  %v3797 = vmax.f32 %v2817, %v3356
  %v3798 = vmax.f32 %v2818, %v3358
  %v3799 = vmax.f32 %v2819, %v3360
  %v3800 = vmax.f32 %v2820, %v3362
  %v3801 = vmax.f32 %v2821, %v3364
  %v3802 = vmax.f32 %v2822, %v3366
  %v3803 = vmax.f32 %v2823, %v3368
  %v3804 = vmax.f32 %v2824, %v3370
  %v3805 = vmax.f32 %v2825, %v3372
  %v3806 = vmax.f32 %v2826, %v3374
  %v3807 = vmax.f32 %v2827, %v3376
  %v3808 = vmax.f32 %v2828, %v3378
  %v3809 = vmax.f32 %v2829, %v3380
  %v3810 = vmax.f32 %v2830, %v3382
  %v3811 = vmax.f32 %v2831, %v3384
  %v3812 = vmax.f32 %v2832, %v3386
  %v3813 = vmax.f32 %v2833, %v3388
  %v3814 = vmax.f32 %v2834, %v3390
  %v3815 = vmax.f32 %v2835, %v3392
  %v3816 = vmax.f32 %v2836, %v3394
  %v3817 = vmax.f32 %v2837, %v3396
  %v3818 = vmax.f32 %v2838, %v3398
  %v3819 = vmax.f32 %v2839, %v3400
  %v3820 = vmax.f32 %v2840, %v3402
  %v3821 = vmax.f32 %v2841, %v3404
  %v3822 = vmax.f32 %v2842, %v3406
  %v3823 = vmax.f32 %v2843, %v3408
  %v3824 = vmax.f32 %v2844, %v3410
  %v3825 = vmax.f32 %v2845, %v3412
  %v3826 = vmax.f32 %v2846, %v3414
  %v3827 = vmax.f32 %v2847, %v3416
  %v3828 = vmax.f32 %v2848, %v3418
  %v3829 = vmax.f32 %v2849, %v3420
  %v3830 = vmax.f32 %v2850, %v3422
  %v3831 = vmax.f32 %v2851, %v3424
  %v3832 = vmax.f32 %v2852, %v3426
  %v3833 = vmax.f32 %v2853, %v3428
  %v3834 = vmax.f32 %v2854, %v3430
  %v3835 = vmax.f32 %v2855, %v3432
  %v3836 = vmax.f32 %v2856, %v3434
  %v3837 = vmax.f32 %v2857, %v3436
  %v3838 = vmax.f32 %v2858, %v3438
  %v3839 = vmax.f32 %v2859, %v3440
  %v3840 = vmax.f32 %v2860, %v3442
  %v3841 = vmax.f32 %v2861, %v3444
  %v3842 = vmax.f32 %v2862, %v3446
  %v3843 = vmax.f32 %v2863, %v3448
  %v3844 = vmax.f32 %v2864, %v3450
  %v3845 = vmax.f32 %v2865, %v3452
  %v3846 = vmax.f32 %v2866, %v3454
  %v3847 = vld [vmem:[%s2] sm:$0x1]
  %v3849 = vlaneseq
  %v3850 = vshrl.u32 %v3849, 7
  %v3851 = vsub.s32 0, %v3850
  %v3852 = vrot.slane %v3847, %v3851
  %v3854 = vadd.f32 %v3651, %v3852
  %v3855 = vadd.f32 %v3652, %v3852
  %v3856 = vadd.f32 %v3653, %v3852
  %v3857 = vadd.f32 %v3654, %v3852
  %v3858 = vadd.f32 %v3655, %v3852
  %v3859 = vadd.f32 %v3656, %v3852
  %v3860 = vadd.f32 %v3657, %v3852
  %v3861 = vadd.f32 %v3658, %v3852
  %v3862 = vadd.f32 %v3659, %v3852
  %v3863 = vadd.f32 %v3660, %v3852
  %v3864 = vadd.f32 %v3661, %v3852
  %v3865 = vadd.f32 %v3662, %v3852
  %v3866 = vadd.f32 %v3663, %v3852
  %v3867 = vadd.f32 %v3664, %v3852
  %v3868 = vadd.f32 %v3665, %v3852
  %v3869 = vadd.f32 %v3666, %v3852
  %v3870 = vadd.f32 %v3667, %v3852
  %v3871 = vadd.f32 %v3668, %v3852
  %v3872 = vadd.f32 %v3669, %v3852
  %v3873 = vadd.f32 %v3670, %v3852
  %v3874 = vadd.f32 %v3671, %v3852
  %v3875 = vadd.f32 %v3672, %v3852
  %v3876 = vadd.f32 %v3673, %v3852
  %v3877 = vadd.f32 %v3674, %v3852
  %v3878 = vadd.f32 %v3675, %v3852
  %v3879 = vadd.f32 %v3676, %v3852
  %v3880 = vadd.f32 %v3677, %v3852
  %v3881 = vadd.f32 %v3678, %v3852
  %v3882 = vadd.f32 %v3679, %v3852
  %v3883 = vadd.f32 %v3680, %v3852
  %v3884 = vadd.f32 %v3681, %v3852
  %v3885 = vadd.f32 %v3682, %v3852
  %v3886 = vadd.f32 %v3683, %v3852
  %v3887 = vadd.f32 %v3684, %v3852
  %v3888 = vadd.f32 %v3685, %v3852
  %v3889 = vadd.f32 %v3686, %v3852
  %v3890 = vadd.f32 %v3687, %v3852
  %v3891 = vadd.f32 %v3688, %v3852
  %v3892 = vadd.f32 %v3689, %v3852
  %v3893 = vadd.f32 %v3690, %v3852
  %v3894 = vadd.f32 %v3691, %v3852
  %v3895 = vadd.f32 %v3692, %v3852
  %v3896 = vadd.f32 %v3693, %v3852
  %v3897 = vadd.f32 %v3694, %v3852
  %v3898 = vadd.f32 %v3695, %v3852
  %v3899 = vadd.f32 %v3696, %v3852
  %v3900 = vadd.f32 %v3697, %v3852
  %v3901 = vadd.f32 %v3698, %v3852
  %v3902 = vadd.f32 %v3699, %v3852
  %v3903 = vadd.f32 %v3700, %v3852
  %v3904 = vadd.f32 %v3701, %v3852
  %v3905 = vadd.f32 %v3702, %v3852
  %v3906 = vadd.f32 %v3703, %v3852
  %v3907 = vadd.f32 %v3704, %v3852
  %v3908 = vadd.f32 %v3705, %v3852
  %v3909 = vadd.f32 %v3706, %v3852
  %v3910 = vadd.f32 %v3707, %v3852
  %v3911 = vadd.f32 %v3708, %v3852
  %v3912 = vadd.f32 %v3709, %v3852
  %v3913 = vadd.f32 %v3710, %v3852
  %v3914 = vadd.f32 %v3711, %v3852
  %v3915 = vadd.f32 %v3712, %v3852
  %v3916 = vadd.f32 %v3713, %v3852
  %v3917 = vadd.f32 %v3714, %v3852
  %v3918 = vadd.f32 %v3715, %v3852
  %v3919 = vadd.f32 %v3716, %v3852
  %v3920 = vadd.f32 %v3717, %v3852
  %v3921 = vadd.f32 %v3718, %v3852
  %v3922 = vadd.f32 %v3719, %v3852
  %v3923 = vadd.f32 %v3720, %v3852
  %v3924 = vadd.f32 %v3721, %v3852
  %v3925 = vadd.f32 %v3722, %v3852
  %v3926 = vadd.f32 %v3723, %v3852
  %v3927 = vadd.f32 %v3724, %v3852
  %v3928 = vadd.f32 %v3725, %v3852
  %v3929 = vadd.f32 %v3726, %v3852
  %v3930 = vadd.f32 %v3727, %v3852
  %v3931 = vadd.f32 %v3728, %v3852
  %v3932 = vadd.f32 %v3729, %v3852
  %v3933 = vadd.f32 %v3730, %v3852
  %v3934 = vadd.f32 %v3731, %v3852
  %v3935 = vadd.f32 %v3732, %v3852
  %v3936 = vadd.f32 %v3733, %v3852
  %v3937 = vadd.f32 %v3734, %v3852
  %v3938 = vadd.f32 %v3735, %v3852
  %v3939 = vadd.f32 %v3736, %v3852
  %v3940 = vadd.f32 %v3737, %v3852
  %v3941 = vadd.f32 %v3738, %v3852
  %v3942 = vadd.f32 %v3739, %v3852
  %v3943 = vadd.f32 %v3740, %v3852
  %v3944 = vadd.f32 %v3741, %v3852
  %v3945 = vadd.f32 %v3742, %v3852
  %v3946 = vadd.f32 %v3743, %v3852
  %v3947 = vadd.f32 %v3744, %v3852
  %v3948 = vadd.f32 %v3745, %v3852
  %v3949 = vadd.f32 %v3746, %v3852
  %v3950 = vadd.f32 %v3747, %v3852
  %v3951 = vadd.f32 %v3748, %v3852
  %v3952 = vadd.f32 %v3749, %v3852
  %v3953 = vadd.f32 %v3750, %v3852
  %v3954 = vadd.f32 %v3751, %v3852
  %v3955 = vadd.f32 %v3752, %v3852
  %v3956 = vadd.f32 %v3753, %v3852
  %v3957 = vadd.f32 %v3754, %v3852
  %v3958 = vadd.f32 %v3755, %v3852
  %v3959 = vadd.f32 %v3756, %v3852
  %v3960 = vadd.f32 %v3757, %v3852
  %v3961 = vadd.f32 %v3758, %v3852
  %v3962 = vadd.f32 %v3759, %v3852
  %v3963 = vadd.f32 %v3760, %v3852
  %v3964 = vadd.f32 %v3761, %v3852
  %v3965 = vadd.f32 %v3762, %v3852
  %v3966 = vadd.f32 %v3763, %v3852
  %v3967 = vadd.f32 %v3764, %v3852
  %v3968 = vadd.f32 %v3765, %v3852
  %v3969 = vadd.f32 %v3766, %v3852
  %v3970 = vadd.f32 %v3767, %v3852
  %v3971 = vadd.f32 %v3768, %v3852
  %v3972 = vadd.f32 %v3769, %v3852
  %v3973 = vadd.f32 %v3770, %v3852
  %v3974 = vadd.f32 %v3771, %v3852
  %v3975 = vadd.f32 %v3772, %v3852
  %v3976 = vadd.f32 %v3773, %v3852
  %v3977 = vadd.f32 %v3774, %v3852
  %v3978 = vadd.f32 %v3775, %v3852
  %v3979 = vadd.f32 %v3776, %v3852
  %v3980 = vadd.f32 %v3777, %v3852
  %v3981 = vadd.f32 %v3778, %v3852
  %v3982 = vadd.f32 %v3779, %v3852
  %v3983 = vadd.f32 %v3780, %v3852
  %v3984 = vadd.f32 %v3781, %v3852
  %v3985 = vadd.f32 %v3782, %v3852
  %v3986 = vadd.f32 %v3783, %v3852
  %v3987 = vadd.f32 %v3784, %v3852
  %v3988 = vadd.f32 %v3785, %v3852
  %v3989 = vadd.f32 %v3786, %v3852
  %v3990 = vadd.f32 %v3787, %v3852
  %v3991 = vadd.f32 %v3788, %v3852
  %v3992 = vadd.f32 %v3789, %v3852
  %v3993 = vadd.f32 %v3790, %v3852
  %v3994 = vadd.f32 %v3791, %v3852
  %v3995 = vadd.f32 %v3792, %v3852
  %v3996 = vadd.f32 %v3793, %v3852
  %v3997 = vadd.f32 %v3794, %v3852
  %v3998 = vadd.f32 %v3795, %v3852
  %v3999 = vadd.f32 %v3796, %v3852
  %v4000 = vadd.f32 %v3797, %v3852
  %v4001 = vadd.f32 %v3798, %v3852
  %v4002 = vadd.f32 %v3799, %v3852
  %v4003 = vadd.f32 %v3800, %v3852
  %v4004 = vadd.f32 %v3801, %v3852
  %v4005 = vadd.f32 %v3802, %v3852
  %v4006 = vadd.f32 %v3803, %v3852
  %v4007 = vadd.f32 %v3804, %v3852
  %v4008 = vadd.f32 %v3805, %v3852
  %v4009 = vadd.f32 %v3806, %v3852
  %v4010 = vadd.f32 %v3807, %v3852
  %v4011 = vadd.f32 %v3808, %v3852
  %v4012 = vadd.f32 %v3809, %v3852
  %v4013 = vadd.f32 %v3810, %v3852
  %v4014 = vadd.f32 %v3811, %v3852
  %v4015 = vadd.f32 %v3812, %v3852
  %v4016 = vadd.f32 %v3813, %v3852
  %v4017 = vadd.f32 %v3814, %v3852
  %v4018 = vadd.f32 %v3815, %v3852
  %v4019 = vadd.f32 %v3816, %v3852
  %v4020 = vadd.f32 %v3817, %v3852
  %v4021 = vadd.f32 %v3818, %v3852
  %v4022 = vadd.f32 %v3819, %v3852
  %v4023 = vadd.f32 %v3820, %v3852
  %v4024 = vadd.f32 %v3821, %v3852
  %v4025 = vadd.f32 %v3822, %v3852
  %v4026 = vadd.f32 %v3823, %v3852
  %v4027 = vadd.f32 %v3824, %v3852
  %v4028 = vadd.f32 %v3825, %v3852
  %v4029 = vadd.f32 %v3826, %v3852
  %v4030 = vadd.f32 %v3827, %v3852
  %v4031 = vadd.f32 %v3828, %v3852
  %v4032 = vadd.f32 %v3829, %v3852
  %v4033 = vadd.f32 %v3830, %v3852
  %v4034 = vadd.f32 %v3831, %v3852
  %v4035 = vadd.f32 %v3832, %v3852
  %v4036 = vadd.f32 %v3833, %v3852
  %v4037 = vadd.f32 %v3834, %v3852
  %v4038 = vadd.f32 %v3835, %v3852
  %v4039 = vadd.f32 %v3836, %v3852
  %v4040 = vadd.f32 %v3837, %v3852
  %v4041 = vadd.f32 %v3838, %v3852
  %v4042 = vadd.f32 %v3839, %v3852
  %v4043 = vadd.f32 %v3840, %v3852
  %v4044 = vadd.f32 %v3841, %v3852
  %v4045 = vadd.f32 %v3842, %v3852
  %v4046 = vadd.f32 %v3843, %v3852
  %v4047 = vadd.f32 %v3844, %v3852
  %v4048 = vadd.f32 %v3845, %v3852
  %v4049 = vadd.f32 %v3846, %v3852
  %v4050 = vmax.f32 %v3854, 0.0
  %v4051 = vmax.f32 %v3855, 0.0
  %v4052 = vmax.f32 %v3856, 0.0
  %v4053 = vmax.f32 %v3857, 0.0
  %v4054 = vmax.f32 %v3858, 0.0
  %v4055 = vmax.f32 %v3859, 0.0
  %v4056 = vmax.f32 %v3860, 0.0
  %v4057 = vmax.f32 %v3861, 0.0
  %v4058 = vmax.f32 %v3862, 0.0
  %v4059 = vmax.f32 %v3863, 0.0
  %v4060 = vmax.f32 %v3864, 0.0
  %v4061 = vmax.f32 %v3865, 0.0
  %v4062 = vmax.f32 %v3866, 0.0
  %v4063 = vmax.f32 %v3867, 0.0
  %v4064 = vmax.f32 %v3868, 0.0
  %v4065 = vmax.f32 %v3869, 0.0
  %v4066 = vmax.f32 %v3870, 0.0
  %v4067 = vmax.f32 %v3871, 0.0
  %v4068 = vmax.f32 %v3872, 0.0
  %v4069 = vmax.f32 %v3873, 0.0
  %v4070 = vmax.f32 %v3874, 0.0
  %v4071 = vmax.f32 %v3875, 0.0
  %v4072 = vmax.f32 %v3876, 0.0
  %v4073 = vmax.f32 %v3877, 0.0
  %v4074 = vmax.f32 %v3878, 0.0
  %v4075 = vmax.f32 %v3879, 0.0
  %v4076 = vmax.f32 %v3880, 0.0
  %v4077 = vmax.f32 %v3881, 0.0
  %v4078 = vmax.f32 %v3882, 0.0
  %v4079 = vmax.f32 %v3883, 0.0
  %v4080 = vmax.f32 %v3884, 0.0
  %v4081 = vmax.f32 %v3885, 0.0
  %v4082 = vmax.f32 %v3886, 0.0
  %v4083 = vmax.f32 %v3887, 0.0
  %v4084 = vmax.f32 %v3888, 0.0
  %v4085 = vmax.f32 %v3889, 0.0
  %v4086 = vmax.f32 %v3890, 0.0
  %v4087 = vmax.f32 %v3891, 0.0
  %v4088 = vmax.f32 %v3892, 0.0
  %v4089 = vmax.f32 %v3893, 0.0
  %v4090 = vmax.f32 %v3894, 0.0
  %v4091 = vmax.f32 %v3895, 0.0
  %v4092 = vmax.f32 %v3896, 0.0
  %v4093 = vmax.f32 %v3897, 0.0
  %v4094 = vmax.f32 %v3898, 0.0
  %v4095 = vmax.f32 %v3899, 0.0
  %v4096 = vmax.f32 %v3900, 0.0
  %v4097 = vmax.f32 %v3901, 0.0
  %v4098 = vmax.f32 %v3902, 0.0
  %v4099 = vmax.f32 %v3903, 0.0
  %v4100 = vmax.f32 %v3904, 0.0
  %v4101 = vmax.f32 %v3905, 0.0
  %v4102 = vmax.f32 %v3906, 0.0
  %v4103 = vmax.f32 %v3907, 0.0
  %v4104 = vmax.f32 %v3908, 0.0
  %v4105 = vmax.f32 %v3909, 0.0
  %v4106 = vmax.f32 %v3910, 0.0
  %v4107 = vmax.f32 %v3911, 0.0
  %v4108 = vmax.f32 %v3912, 0.0
  %v4109 = vmax.f32 %v3913, 0.0
  %v4110 = vmax.f32 %v3914, 0.0
  %v4111 = vmax.f32 %v3915, 0.0
  %v4112 = vmax.f32 %v3916, 0.0
  %v4113 = vmax.f32 %v3917, 0.0
  %v4114 = vmax.f32 %v3918, 0.0
  %v4115 = vmax.f32 %v3919, 0.0
  %v4116 = vmax.f32 %v3920, 0.0
  %v4117 = vmax.f32 %v3921, 0.0
  %v4118 = vmax.f32 %v3922, 0.0
  %v4119 = vmax.f32 %v3923, 0.0
  %v4120 = vmax.f32 %v3924, 0.0
  %v4121 = vmax.f32 %v3925, 0.0
  %v4122 = vmax.f32 %v3926, 0.0
  %v4123 = vmax.f32 %v3927, 0.0
  %v4124 = vmax.f32 %v3928, 0.0
  %v4125 = vmax.f32 %v3929, 0.0
  %v4126 = vmax.f32 %v3930, 0.0
  %v4127 = vmax.f32 %v3931, 0.0
  %v4128 = vmax.f32 %v3932, 0.0
  %v4129 = vmax.f32 %v3933, 0.0
  %v4130 = vmax.f32 %v3934, 0.0
  %v4131 = vmax.f32 %v3935, 0.0
  %v4132 = vmax.f32 %v3936, 0.0
  %v4133 = vmax.f32 %v3937, 0.0
  %v4134 = vmax.f32 %v3938, 0.0
  %v4135 = vmax.f32 %v3939, 0.0
  %v4136 = vmax.f32 %v3940, 0.0
  %v4137 = vmax.f32 %v3941, 0.0
  %v4138 = vmax.f32 %v3942, 0.0
  %v4139 = vmax.f32 %v3943, 0.0
  %v4140 = vmax.f32 %v3944, 0.0
  %v4141 = vmax.f32 %v3945, 0.0
  %v4142 = vmax.f32 %v3946, 0.0
  %v4143 = vmax.f32 %v3947, 0.0
  %v4144 = vmax.f32 %v3948, 0.0
  %v4145 = vmax.f32 %v3949, 0.0
  %v4146 = vmax.f32 %v3950, 0.0
  %v4147 = vmax.f32 %v3951, 0.0
  %v4148 = vmax.f32 %v3952, 0.0
  %v4149 = vmax.f32 %v3953, 0.0
  %v4150 = vmax.f32 %v3954, 0.0
  %v4151 = vmax.f32 %v3955, 0.0
  %v4152 = vmax.f32 %v3956, 0.0
  %v4153 = vmax.f32 %v3957, 0.0
  %v4154 = vmax.f32 %v3958, 0.0
  %v4155 = vmax.f32 %v3959, 0.0
  %v4156 = vmax.f32 %v3960, 0.0
  %v4157 = vmax.f32 %v3961, 0.0
  %v4158 = vmax.f32 %v3962, 0.0
  %v4159 = vmax.f32 %v3963, 0.0
  %v4160 = vmax.f32 %v3964, 0.0
  %v4161 = vmax.f32 %v3965, 0.0
  %v4162 = vmax.f32 %v3966, 0.0
  %v4163 = vmax.f32 %v3967, 0.0
  %v4164 = vmax.f32 %v3968, 0.0
  %v4165 = vmax.f32 %v3969, 0.0
  %v4166 = vmax.f32 %v3970, 0.0
  %v4167 = vmax.f32 %v3971, 0.0
  %v4168 = vmax.f32 %v3972, 0.0
  %v4169 = vmax.f32 %v3973, 0.0
  %v4170 = vmax.f32 %v3974, 0.0
  %v4171 = vmax.f32 %v3975, 0.0
  %v4172 = vmax.f32 %v3976, 0.0
  %v4173 = vmax.f32 %v3977, 0.0
  %v4174 = vmax.f32 %v3978, 0.0
  %v4175 = vmax.f32 %v3979, 0.0
  %v4176 = vmax.f32 %v3980, 0.0
  %v4177 = vmax.f32 %v3981, 0.0
  %v4178 = vmax.f32 %v3982, 0.0
  %v4179 = vmax.f32 %v3983, 0.0
  %v4180 = vmax.f32 %v3984, 0.0
  %v4181 = vmax.f32 %v3985, 0.0
  %v4182 = vmax.f32 %v3986, 0.0
  %v4183 = vmax.f32 %v3987, 0.0
  %v4184 = vmax.f32 %v3988, 0.0
  %v4185 = vmax.f32 %v3989, 0.0
  %v4186 = vmax.f32 %v3990, 0.0
  %v4187 = vmax.f32 %v3991, 0.0
  %v4188 = vmax.f32 %v3992, 0.0
  %v4189 = vmax.f32 %v3993, 0.0
  %v4190 = vmax.f32 %v3994, 0.0
  %v4191 = vmax.f32 %v3995, 0.0
  %v4192 = vmax.f32 %v3996, 0.0
  %v4193 = vmax.f32 %v3997, 0.0
  %v4194 = vmax.f32 %v3998, 0.0
  %v4195 = vmax.f32 %v3999, 0.0
  %v4196 = vmax.f32 %v4000, 0.0
  %v4197 = vmax.f32 %v4001, 0.0
  %v4198 = vmax.f32 %v4002, 0.0
  %v4199 = vmax.f32 %v4003, 0.0
  %v4200 = vmax.f32 %v4004, 0.0
  %v4201 = vmax.f32 %v4005, 0.0
  %v4202 = vmax.f32 %v4006, 0.0
  %v4203 = vmax.f32 %v4007, 0.0
  %v4204 = vmax.f32 %v4008, 0.0
  %v4205 = vmax.f32 %v4009, 0.0
  %v4206 = vmax.f32 %v4010, 0.0
  %v4207 = vmax.f32 %v4011, 0.0
  %v4208 = vmax.f32 %v4012, 0.0
  %v4209 = vmax.f32 %v4013, 0.0
  %v4210 = vmax.f32 %v4014, 0.0
  %v4211 = vmax.f32 %v4015, 0.0
  %v4212 = vmax.f32 %v4016, 0.0
  %v4213 = vmax.f32 %v4017, 0.0
  %v4214 = vmax.f32 %v4018, 0.0
  %v4215 = vmax.f32 %v4019, 0.0
  %v4216 = vmax.f32 %v4020, 0.0
  %v4217 = vmax.f32 %v4021, 0.0
  %v4218 = vmax.f32 %v4022, 0.0
  %v4219 = vmax.f32 %v4023, 0.0
  %v4220 = vmax.f32 %v4024, 0.0
  %v4221 = vmax.f32 %v4025, 0.0
  %v4222 = vmax.f32 %v4026, 0.0
  %v4223 = vmax.f32 %v4027, 0.0
  %v4224 = vmax.f32 %v4028, 0.0
  %v4225 = vmax.f32 %v4029, 0.0
  %v4226 = vmax.f32 %v4030, 0.0
  %v4227 = vmax.f32 %v4031, 0.0
  %v4228 = vmax.f32 %v4032, 0.0
  %v4229 = vmax.f32 %v4033, 0.0
  %v4230 = vmax.f32 %v4034, 0.0
  %v4231 = vmax.f32 %v4035, 0.0
  %v4232 = vmax.f32 %v4036, 0.0
  %v4233 = vmax.f32 %v4037, 0.0
  %v4234 = vmax.f32 %v4038, 0.0
  %v4235 = vmax.f32 %v4039, 0.0
  %v4236 = vmax.f32 %v4040, 0.0
  %v4237 = vmax.f32 %v4041, 0.0
  %v4238 = vmax.f32 %v4042, 0.0
  %v4239 = vmax.f32 %v4043, 0.0
  %v4240 = vmax.f32 %v4044, 0.0
  %v4241 = vmax.f32 %v4045, 0.0
  %v4242 = vmax.f32 %v4046, 0.0
  %v4243 = vmax.f32 %v4047, 0.0
  %v4244 = vmax.f32 %v4048, 0.0
  %v4245 = vmax.f32 %v4049, 0.0
  %v4246 = vpack.c.bf16 %v4051, %v4050
  %v4247 = vpack.c.bf16 %v4053, %v4052
  %v4248 = vpack.c.bf16 %v4055, %v4054
  %v4249 = vpack.c.bf16 %v4057, %v4056
  %v4250 = vpack.c.bf16 %v4059, %v4058
  %v4251 = vpack.c.bf16 %v4061, %v4060
  %v4252 = vpack.c.bf16 %v4063, %v4062
  %v4253 = vpack.c.bf16 %v4065, %v4064
  %v4254 = vpack.c.bf16 %v4067, %v4066
  %v4255 = vpack.c.bf16 %v4069, %v4068
  %v4256 = vpack.c.bf16 %v4071, %v4070
  %v4257 = vpack.c.bf16 %v4073, %v4072
  %v4258 = vpack.c.bf16 %v4075, %v4074
  %v4259 = vpack.c.bf16 %v4077, %v4076
  %v4260 = vpack.c.bf16 %v4079, %v4078
  %v4261 = vpack.c.bf16 %v4081, %v4080
  %v4262 = vpack.c.bf16 %v4083, %v4082
  %v4263 = vpack.c.bf16 %v4085, %v4084
  %v4264 = vpack.c.bf16 %v4087, %v4086
  %v4265 = vpack.c.bf16 %v4089, %v4088
  %v4266 = vpack.c.bf16 %v4091, %v4090
  %v4267 = vpack.c.bf16 %v4093, %v4092
  %v4268 = vpack.c.bf16 %v4095, %v4094
  %v4269 = vpack.c.bf16 %v4097, %v4096
  %v4270 = vpack.c.bf16 %v4099, %v4098
  %v4271 = vpack.c.bf16 %v4101, %v4100
  %v4272 = vpack.c.bf16 %v4103, %v4102
  %v4273 = vpack.c.bf16 %v4105, %v4104
  %v4274 = vpack.c.bf16 %v4107, %v4106
  %v4275 = vpack.c.bf16 %v4109, %v4108
  %v4276 = vpack.c.bf16 %v4111, %v4110
  %v4277 = vpack.c.bf16 %v4113, %v4112
  %v4278 = vpack.c.bf16 %v4115, %v4114
  %v4279 = vpack.c.bf16 %v4117, %v4116
  %v4280 = vpack.c.bf16 %v4119, %v4118
  %v4281 = vpack.c.bf16 %v4121, %v4120
  %v4282 = vpack.c.bf16 %v4123, %v4122
  %v4283 = vpack.c.bf16 %v4125, %v4124
  %v4284 = vpack.c.bf16 %v4127, %v4126
  %v4285 = vpack.c.bf16 %v4129, %v4128
  %v4286 = vpack.c.bf16 %v4131, %v4130
  %v4287 = vpack.c.bf16 %v4133, %v4132
  %v4288 = vpack.c.bf16 %v4135, %v4134
  %v4289 = vpack.c.bf16 %v4137, %v4136
  %v4290 = vpack.c.bf16 %v4139, %v4138
  %v4291 = vpack.c.bf16 %v4141, %v4140
  %v4292 = vpack.c.bf16 %v4143, %v4142
  %v4293 = vpack.c.bf16 %v4145, %v4144
  %v4294 = vpack.c.bf16 %v4147, %v4146
  %v4295 = vpack.c.bf16 %v4149, %v4148
  %v4296 = vpack.c.bf16 %v4151, %v4150
  %v4297 = vpack.c.bf16 %v4153, %v4152
  %v4298 = vpack.c.bf16 %v4155, %v4154
  %v4299 = vpack.c.bf16 %v4157, %v4156
  %v4300 = vpack.c.bf16 %v4159, %v4158
  %v4301 = vpack.c.bf16 %v4161, %v4160
  %v4302 = vpack.c.bf16 %v4163, %v4162
  %v4303 = vpack.c.bf16 %v4165, %v4164
  %v4304 = vpack.c.bf16 %v4167, %v4166
  %v4305 = vpack.c.bf16 %v4169, %v4168
  %v4306 = vpack.c.bf16 %v4171, %v4170
  %v4307 = vpack.c.bf16 %v4173, %v4172
  %v4308 = vpack.c.bf16 %v4175, %v4174
  %v4309 = vpack.c.bf16 %v4177, %v4176
  %v4310 = vpack.c.bf16 %v4179, %v4178
  %v4311 = vpack.c.bf16 %v4181, %v4180
  %v4312 = vpack.c.bf16 %v4183, %v4182
  %v4313 = vpack.c.bf16 %v4185, %v4184
  %v4314 = vpack.c.bf16 %v4187, %v4186
  %v4315 = vpack.c.bf16 %v4189, %v4188
  %v4316 = vpack.c.bf16 %v4191, %v4190
  %v4317 = vpack.c.bf16 %v4193, %v4192
  %v4318 = vpack.c.bf16 %v4195, %v4194
  %v4319 = vpack.c.bf16 %v4197, %v4196
  %v4320 = vpack.c.bf16 %v4199, %v4198
  %v4321 = vpack.c.bf16 %v4201, %v4200
  %v4322 = vpack.c.bf16 %v4203, %v4202
  %v4323 = vpack.c.bf16 %v4205, %v4204
  %v4324 = vpack.c.bf16 %v4207, %v4206
  %v4325 = vpack.c.bf16 %v4209, %v4208
  %v4326 = vpack.c.bf16 %v4211, %v4210
  %v4327 = vpack.c.bf16 %v4213, %v4212
  %v4328 = vpack.c.bf16 %v4215, %v4214
  %v4329 = vpack.c.bf16 %v4217, %v4216
  %v4330 = vpack.c.bf16 %v4219, %v4218
  %v4331 = vpack.c.bf16 %v4221, %v4220
  %v4332 = vpack.c.bf16 %v4223, %v4222
  %v4333 = vpack.c.bf16 %v4225, %v4224
  %v4334 = vpack.c.bf16 %v4227, %v4226
  %v4335 = vpack.c.bf16 %v4229, %v4228
  %v4336 = vpack.c.bf16 %v4231, %v4230
  %v4337 = vpack.c.bf16 %v4233, %v4232
  %v4338 = vpack.c.bf16 %v4235, %v4234
  %v4339 = vpack.c.bf16 %v4237, %v4236
  %v4340 = vpack.c.bf16 %v4239, %v4238
  %v4341 = vpack.c.bf16 %v4241, %v4240
  %v4342 = vpack.c.bf16 %v4243, %v4242
  %v4343 = vpack.c.bf16 %v4245, %v4244
  %4344 = vst [vmem:[#allocation2 + $0x600] sm:$0xff] 0
  %vm4345 = vcmask 261120
  %4346 = vst.msk [vmem:[#allocation2 + $0x608] sm:$0xff] %vm4345, 0
  %4347 = vst [vmem:[#allocation2 + $0x610] sm:$0xff] 0
  %4348 = vst.msk [vmem:[#allocation2 + $0x618] sm:$0xff] %vm4345, 0
  %4349 = vst [vmem:[#allocation2 + $0x620] sm:$0xff] 0
  %4350 = vst.msk [vmem:[#allocation2 + $0x628] sm:$0xff] %vm4345, 0
  %4351 = vst [vmem:[#allocation2 + $0x630] sm:$0xff] 0
  %4352 = vst.msk [vmem:[#allocation2 + $0x638] sm:$0xff] %vm4345, 0
  %4353 = vst [vmem:[#allocation2 + $0x640] sm:$0xff] 0
  %4354 = vst.msk [vmem:[#allocation2 + $0x648] sm:$0xff] %vm4345, 0
  %4355 = vst [vmem:[#allocation2 + $0x650] sm:$0xff] 0
  %4356 = vst.msk [vmem:[#allocation2 + $0x658] sm:$0xff] %vm4345, 0
  %4357 = vst [vmem:[#allocation2 + $0x660] sm:$0xff] 0
  %4358 = vst.msk [vmem:[#allocation2 + $0x668] sm:$0xff] %vm4345, 0
  %4359 = vst [vmem:[#allocation2 + $0x670] sm:$0xff] 0
  %4360 = vst.msk [vmem:[#allocation2 + $0x678] sm:$0xff] %vm4345, 0
  %4361 = vst [vmem:[#allocation2 + $0x680] sm:$0xff] 0
  %4362 = vst.msk [vmem:[#allocation2 + $0x688] sm:$0xff] %vm4345, 0
  %4363 = vst [vmem:[#allocation2 + $0x690] sm:$0xff] 0
  %4364 = vst.msk [vmem:[#allocation2 + $0x698] sm:$0xff] %vm4345, 0
  %4365 = vst [vmem:[#allocation2 + $0x6a0] sm:$0xff] 0
  %4366 = vst.msk [vmem:[#allocation2 + $0x6a8] sm:$0xff] %vm4345, 0
  %4367 = vst [vmem:[#allocation2 + $0x6b0] sm:$0xff] 0
  %4368 = vst.msk [vmem:[#allocation2 + $0x6b8] sm:$0xff] %vm4345, 0
  %4369 = vst [vmem:[#allocation2 + $0x6c0] sm:$0xff] 0
  %4370 = vst.msk [vmem:[#allocation2 + $0x6c8] sm:$0xff] %vm4345, 0
  %4371 = vst [vmem:[#allocation2 + $0x6d0] sm:$0xff] 0
  %4372 = vst.msk [vmem:[#allocation2 + $0x6d8] sm:$0xff] %vm4345, 0
  %4373 = vst [vmem:[#allocation2 + $0x6e0] sm:$0xff] 0
  %4374 = vst.msk [vmem:[#allocation2 + $0x6e8] sm:$0xff] %vm4345, 0
  %4375 = vst [vmem:[#allocation2 + $0x6f0] sm:$0xff] 0
  %4376 = vst.msk [vmem:[#allocation2 + $0x6f8] sm:$0xff] %vm4345, 0
  %4377 = vst [vmem:[#allocation2 + $0x700] sm:$0xff] 0
  %4378 = vst.msk [vmem:[#allocation2 + $0x708] sm:$0xff] %vm4345, 0
  %4379 = vst [vmem:[#allocation2 + $0x710] sm:$0xff] 0
  %4380 = vst.msk [vmem:[#allocation2 + $0x718] sm:$0xff] %vm4345, 0
  %4381 = vst [vmem:[#allocation2 + $0x720] sm:$0xff] 0
  %4382 = vst.msk [vmem:[#allocation2 + $0x728] sm:$0xff] %vm4345, 0
  %4383 = vst [vmem:[#allocation2 + $0x730] sm:$0xff] 0
  %4384 = vst.msk [vmem:[#allocation2 + $0x738] sm:$0xff] %vm4345, 0
  %4385 = vst [vmem:[#allocation2 + $0x740] sm:$0xff] 0
  %4386 = vst.msk [vmem:[#allocation2 + $0x748] sm:$0xff] %vm4345, 0
  %4387 = vst [vmem:[#allocation2 + $0x750] sm:$0xff] 0
  %4388 = vst.msk [vmem:[#allocation2 + $0x758] sm:$0xff] %vm4345, 0
  %4389 = vst [vmem:[#allocation2 + $0x760] sm:$0xff] 0
  %4390 = vst.msk [vmem:[#allocation2 + $0x768] sm:$0xff] %vm4345, 0
  %4391 = vst [vmem:[#allocation2 + $0x770] sm:$0xff] 0
  %4392 = vst.msk [vmem:[#allocation2 + $0x778] sm:$0xff] %vm4345, 0
  %4393 = vst [vmem:[#allocation2 + $0x780] sm:$0xff] 0
  %4394 = vst.msk [vmem:[#allocation2 + $0x788] sm:$0xff] %vm4345, 0
  %4395 = vst [vmem:[#allocation2 + $0x790] sm:$0xff] 0
  %4396 = vst.msk [vmem:[#allocation2 + $0x798] sm:$0xff] %vm4345, 0
  %4397 = vst [vmem:[#allocation2 + $0x7a0] sm:$0xff] 0
  %4398 = vst.msk [vmem:[#allocation2 + $0x7a8] sm:$0xff] %vm4345, 0
  %4399 = vst [vmem:[#allocation2 + $0x7b0] sm:$0xff] 0
  %4400 = vst.msk [vmem:[#allocation2 + $0x7b8] sm:$0xff] %vm4345, 0
  %4401 = vst [vmem:[#allocation2 + $0x7c0] sm:$0xff] 0
  %4402 = vst.msk [vmem:[#allocation2 + $0x7c8] sm:$0xff] %vm4345, 0
  %4403 = vst [vmem:[#allocation2 + $0x7d0] sm:$0xff] 0
  %4404 = vst.msk [vmem:[#allocation2 + $0x7d8] sm:$0xff] %vm4345, 0
  %4405 = vst.msk [vmem:[#allocation2] sm:$0xff] %vm4345, %v4246
  %4406 = vst.msk [vmem:[#allocation2 + $0x10] sm:$0xff] %vm4345, %v4247
  %4407 = vst.msk [vmem:[#allocation2 + $0x20] sm:$0xff] %vm4345, %v4248
  %4408 = vst.msk [vmem:[#allocation2 + $0x30] sm:$0xff] %vm4345, %v4249
  %4409 = vst.msk [vmem:[#allocation2 + $0x40] sm:$0xff] %vm4345, %v4250
  %4410 = vst.msk [vmem:[#allocation2 + $0x50] sm:$0xff] %vm4345, %v4251
  %4411 = vst.msk [vmem:[#allocation2 + $0x60] sm:$0xff] %vm4345, %v4252
  %4412 = vst.msk [vmem:[#allocation2 + $0x70] sm:$0xff] %vm4345, %v4253
  %4413 = vst.msk [vmem:[#allocation2 + $0x80] sm:$0xff] %vm4345, %v4254
  %4414 = vst.msk [vmem:[#allocation2 + $0x90] sm:$0xff] %vm4345, %v4255
  %4415 = vst.msk [vmem:[#allocation2 + $0xa0] sm:$0xff] %vm4345, %v4256
  %4416 = vst.msk [vmem:[#allocation2 + $0xb0] sm:$0xff] %vm4345, %v4257
  %4417 = vst.msk [vmem:[#allocation2 + $0xc0] sm:$0xff] %vm4345, %v4258
  %4418 = vst.msk [vmem:[#allocation2 + $0xd0] sm:$0xff] %vm4345, %v4259
  %4419 = vst.msk [vmem:[#allocation2 + $0xe0] sm:$0xff] %vm4345, %v4260
  %4420 = vst.msk [vmem:[#allocation2 + $0xf0] sm:$0xff] %vm4345, %v4261
  %4421 = vst.msk [vmem:[#allocation2 + $0x100] sm:$0xff] %vm4345, %v4262
  %4422 = vst.msk [vmem:[#allocation2 + $0x110] sm:$0xff] %vm4345, %v4263
  %4423 = vst.msk [vmem:[#allocation2 + $0x120] sm:$0xff] %vm4345, %v4264
  %4424 = vst.msk [vmem:[#allocation2 + $0x130] sm:$0xff] %vm4345, %v4265
  %4425 = vst.msk [vmem:[#allocation2 + $0x140] sm:$0xff] %vm4345, %v4266
  %4426 = vst.msk [vmem:[#allocation2 + $0x150] sm:$0xff] %vm4345, %v4267
  %4427 = vst.msk [vmem:[#allocation2 + $0x160] sm:$0xff] %vm4345, %v4268
  %4428 = vst.msk [vmem:[#allocation2 + $0x170] sm:$0xff] %vm4345, %v4269
  %4429 = vst.msk [vmem:[#allocation2 + $0x180] sm:$0xff] %vm4345, %v4270
  %4430 = vst.msk [vmem:[#allocation2 + $0x190] sm:$0xff] %vm4345, %v4271
  %4431 = vst.msk [vmem:[#allocation2 + $0x1a0] sm:$0xff] %vm4345, %v4272
  %4432 = vst.msk [vmem:[#allocation2 + $0x1b0] sm:$0xff] %vm4345, %v4273
  %4433 = vst.msk [vmem:[#allocation2 + $0x1c0] sm:$0xff] %vm4345, %v4274
  %4434 = vst.msk [vmem:[#allocation2 + $0x1d0] sm:$0xff] %vm4345, %v4275
  %4435 = vst.msk [vmem:[#allocation2 + $0x1e0] sm:$0xff] %vm4345, %v4276
  %4436 = vst.msk [vmem:[#allocation2 + $0x1f0] sm:$0xff] %vm4345, %v4277
  %4437 = vst.msk [vmem:[#allocation2 + $0x200] sm:$0xff] %vm4345, %v4278
  %4438 = vst.msk [vmem:[#allocation2 + $0x210] sm:$0xff] %vm4345, %v4279
  %4439 = vst.msk [vmem:[#allocation2 + $0x220] sm:$0xff] %vm4345, %v4280
  %4440 = vst.msk [vmem:[#allocation2 + $0x230] sm:$0xff] %vm4345, %v4281
  %4441 = vst.msk [vmem:[#allocation2 + $0x240] sm:$0xff] %vm4345, %v4282
  %4442 = vst.msk [vmem:[#allocation2 + $0x250] sm:$0xff] %vm4345, %v4283
  %4443 = vst.msk [vmem:[#allocation2 + $0x260] sm:$0xff] %vm4345, %v4284
  %4444 = vst.msk [vmem:[#allocation2 + $0x270] sm:$0xff] %vm4345, %v4285
  %4445 = vst.msk [vmem:[#allocation2 + $0x280] sm:$0xff] %vm4345, %v4286
  %4446 = vst.msk [vmem:[#allocation2 + $0x290] sm:$0xff] %vm4345, %v4287
  %4447 = vst.msk [vmem:[#allocation2 + $0x2a0] sm:$0xff] %vm4345, %v4288
  %4448 = vst.msk [vmem:[#allocation2 + $0x2b0] sm:$0xff] %vm4345, %v4289
  %4449 = vst.msk [vmem:[#allocation2 + $0x2c0] sm:$0xff] %vm4345, %v4290
  %4450 = vst.msk [vmem:[#allocation2 + $0x2d0] sm:$0xff] %vm4345, %v4291
  %4451 = vst.msk [vmem:[#allocation2 + $0x2e0] sm:$0xff] %vm4345, %v4292
  %4452 = vst.msk [vmem:[#allocation2 + $0x2f0] sm:$0xff] %vm4345, %v4293
  %4453 = vst.msk [vmem:[#allocation2 + $0x300] sm:$0xff] %vm4345, %v4294
  %4454 = vst.msk [vmem:[#allocation2 + $0x310] sm:$0xff] %vm4345, %v4295
  %4455 = vst.msk [vmem:[#allocation2 + $0x320] sm:$0xff] %vm4345, %v4296
  %4456 = vst.msk [vmem:[#allocation2 + $0x330] sm:$0xff] %vm4345, %v4297
  %4457 = vst.msk [vmem:[#allocation2 + $0x340] sm:$0xff] %vm4345, %v4298
  %4458 = vst.msk [vmem:[#allocation2 + $0x350] sm:$0xff] %vm4345, %v4299
  %4459 = vst.msk [vmem:[#allocation2 + $0x360] sm:$0xff] %vm4345, %v4300
  %4460 = vst.msk [vmem:[#allocation2 + $0x370] sm:$0xff] %vm4345, %v4301
  %4461 = vst.msk [vmem:[#allocation2 + $0x380] sm:$0xff] %vm4345, %v4302
  %4462 = vst.msk [vmem:[#allocation2 + $0x390] sm:$0xff] %vm4345, %v4303
  %4463 = vst.msk [vmem:[#allocation2 + $0x3a0] sm:$0xff] %vm4345, %v4304
  %4464 = vst.msk [vmem:[#allocation2 + $0x3b0] sm:$0xff] %vm4345, %v4305
  %4465 = vst.msk [vmem:[#allocation2 + $0x3c0] sm:$0xff] %vm4345, %v4306
  %4466 = vst.msk [vmem:[#allocation2 + $0x3d0] sm:$0xff] %vm4345, %v4307
  %4467 = vst.msk [vmem:[#allocation2 + $0x3e0] sm:$0xff] %vm4345, %v4308
  %4468 = vst.msk [vmem:[#allocation2 + $0x3f0] sm:$0xff] %vm4345, %v4309
  %4469 = vst.msk [vmem:[#allocation2 + $0x400] sm:$0xff] %vm4345, %v4310
  %4470 = vst.msk [vmem:[#allocation2 + $0x410] sm:$0xff] %vm4345, %v4311
  %4471 = vst.msk [vmem:[#allocation2 + $0x420] sm:$0xff] %vm4345, %v4312
  %4472 = vst.msk [vmem:[#allocation2 + $0x430] sm:$0xff] %vm4345, %v4313
  %4473 = vst.msk [vmem:[#allocation2 + $0x440] sm:$0xff] %vm4345, %v4314
  %4474 = vst.msk [vmem:[#allocation2 + $0x450] sm:$0xff] %vm4345, %v4315
  %4475 = vst.msk [vmem:[#allocation2 + $0x460] sm:$0xff] %vm4345, %v4316
  %4476 = vst.msk [vmem:[#allocation2 + $0x470] sm:$0xff] %vm4345, %v4317
  %4477 = vst.msk [vmem:[#allocation2 + $0x480] sm:$0xff] %vm4345, %v4318
  %4478 = vst.msk [vmem:[#allocation2 + $0x490] sm:$0xff] %vm4345, %v4319
  %4479 = vst.msk [vmem:[#allocation2 + $0x4a0] sm:$0xff] %vm4345, %v4320
  %4480 = vst.msk [vmem:[#allocation2 + $0x4b0] sm:$0xff] %vm4345, %v4321
  %4481 = vst.msk [vmem:[#allocation2 + $0x4c0] sm:$0xff] %vm4345, %v4322
  %4482 = vst.msk [vmem:[#allocation2 + $0x4d0] sm:$0xff] %vm4345, %v4323
  %4483 = vst.msk [vmem:[#allocation2 + $0x4e0] sm:$0xff] %vm4345, %v4324
  %4484 = vst.msk [vmem:[#allocation2 + $0x4f0] sm:$0xff] %vm4345, %v4325
  %4485 = vst.msk [vmem:[#allocation2 + $0x500] sm:$0xff] %vm4345, %v4326
  %4486 = vst.msk [vmem:[#allocation2 + $0x510] sm:$0xff] %vm4345, %v4327
  %4487 = vst.msk [vmem:[#allocation2 + $0x520] sm:$0xff] %vm4345, %v4328
  %4488 = vst.msk [vmem:[#allocation2 + $0x530] sm:$0xff] %vm4345, %v4329
  %4489 = vst.msk [vmem:[#allocation2 + $0x540] sm:$0xff] %vm4345, %v4330
  %4490 = vst.msk [vmem:[#allocation2 + $0x550] sm:$0xff] %vm4345, %v4331
  %4491 = vst.msk [vmem:[#allocation2 + $0x560] sm:$0xff] %vm4345, %v4332
  %4492 = vst.msk [vmem:[#allocation2 + $0x570] sm:$0xff] %vm4345, %v4333
  %4493 = vst.msk [vmem:[#allocation2 + $0x580] sm:$0xff] %vm4345, %v4334
  %4494 = vst.msk [vmem:[#allocation2 + $0x590] sm:$0xff] %vm4345, %v4335
  %4495 = vst.msk [vmem:[#allocation2 + $0x5a0] sm:$0xff] %vm4345, %v4336
  %4496 = vst.msk [vmem:[#allocation2 + $0x5b0] sm:$0xff] %vm4345, %v4337
  %4497 = vst.msk [vmem:[#allocation2 + $0x5c0] sm:$0xff] %vm4345, %v4338
  %4498 = vst.msk [vmem:[#allocation2 + $0x5d0] sm:$0xff] %vm4345, %v4339
  %4499 = vst.msk [vmem:[#allocation2 + $0x5e0] sm:$0xff] %vm4345, %v4340
  %4500 = vst.msk [vmem:[#allocation2 + $0x5f0] sm:$0xff] %vm4345, %v4341
  %4501 = vst.msk [vmem:[#allocation2 + $0x600] sm:$0xff] %vm4345, %v4342
  %4502 = vst.msk [vmem:[#allocation2 + $0x610] sm:$0xff] %vm4345, %v4343
  %vm4601 = vcmask 1043456
  %v4602 = vrot.slane %v4246, 4
  %v4603 = vrot.slane %v4247, 4
  %v4604 = vsel %vm4601, %v4602, %v4603
  %v4605 = vrot.slane %v4248, 4
  %v4606 = vsel %vm4601, %v4603, %v4605
  %v4607 = vrot.slane %v4249, 4
  %v4608 = vsel %vm4601, %v4605, %v4607
  %v4609 = vrot.slane %v4250, 4
  %v4610 = vsel %vm4601, %v4607, %v4609
  %v4611 = vrot.slane %v4251, 4
  %v4612 = vsel %vm4601, %v4609, %v4611
  %v4613 = vrot.slane %v4252, 4
  %v4614 = vsel %vm4601, %v4611, %v4613
  %v4615 = vrot.slane %v4253, 4
  %v4616 = vsel %vm4601, %v4613, %v4615
  %v4617 = vrot.slane %v4254, 4
  %v4618 = vsel %vm4601, %v4615, %v4617
  %v4619 = vrot.slane %v4255, 4
  %v4620 = vsel %vm4601, %v4617, %v4619
  %v4621 = vrot.slane %v4256, 4
  %v4622 = vsel %vm4601, %v4619, %v4621
  %v4623 = vrot.slane %v4257, 4
  %v4624 = vsel %vm4601, %v4621, %v4623
  %v4625 = vrot.slane %v4258, 4
  %v4626 = vsel %vm4601, %v4623, %v4625
  %v4627 = vrot.slane %v4259, 4
  %v4628 = vsel %vm4601, %v4625, %v4627
  %v4629 = vrot.slane %v4260, 4
  %v4630 = vsel %vm4601, %v4627, %v4629
  %v4631 = vrot.slane %v4261, 4
  %v4632 = vsel %vm4601, %v4629, %v4631
  %v4633 = vrot.slane %v4262, 4
  %v4634 = vsel %vm4601, %v4631, %v4633
  %v4635 = vrot.slane %v4263, 4
  %v4636 = vsel %vm4601, %v4633, %v4635
  %v4637 = vrot.slane %v4264, 4
  %v4638 = vsel %vm4601, %v4635, %v4637
  %v4639 = vrot.slane %v4265, 4
  %v4640 = vsel %vm4601, %v4637, %v4639
  %v4641 = vrot.slane %v4266, 4
  %v4642 = vsel %vm4601, %v4639, %v4641
  %v4643 = vrot.slane %v4267, 4
  %v4644 = vsel %vm4601, %v4641, %v4643
  %v4645 = vrot.slane %v4268, 4
  %v4646 = vsel %vm4601, %v4643, %v4645
  %v4647 = vrot.slane %v4269, 4
  %v4648 = vsel %vm4601, %v4645, %v4647
  %v4649 = vrot.slane %v4270, 4
  %v4650 = vsel %vm4601, %v4647, %v4649
  %v4651 = vrot.slane %v4271, 4
  %v4652 = vsel %vm4601, %v4649, %v4651
  %v4653 = vrot.slane %v4272, 4
  %v4654 = vsel %vm4601, %v4651, %v4653
  %v4655 = vrot.slane %v4273, 4
  %v4656 = vsel %vm4601, %v4653, %v4655
  %v4657 = vrot.slane %v4274, 4
  %v4658 = vsel %vm4601, %v4655, %v4657
  %v4659 = vrot.slane %v4275, 4
  %v4660 = vsel %vm4601, %v4657, %v4659
  %v4661 = vrot.slane %v4276, 4
  %v4662 = vsel %vm4601, %v4659, %v4661
  %v4663 = vrot.slane %v4277, 4
  %v4664 = vsel %vm4601, %v4661, %v4663
  %v4665 = vrot.slane %v4278, 4
  %v4666 = vsel %vm4601, %v4663, %v4665
  %v4667 = vrot.slane %v4279, 4
  %v4668 = vsel %vm4601, %v4665, %v4667
  %v4669 = vrot.slane %v4280, 4
  %v4670 = vsel %vm4601, %v4667, %v4669
  %v4671 = vrot.slane %v4281, 4
  %v4672 = vsel %vm4601, %v4669, %v4671
  %v4673 = vrot.slane %v4282, 4
  %v4674 = vsel %vm4601, %v4671, %v4673
  %v4675 = vrot.slane %v4283, 4
  %v4676 = vsel %vm4601, %v4673, %v4675
  %v4677 = vrot.slane %v4284, 4
  %v4678 = vsel %vm4601, %v4675, %v4677
  %v4679 = vrot.slane %v4285, 4
  %v4680 = vsel %vm4601, %v4677, %v4679
  %v4681 = vrot.slane %v4286, 4
  %v4682 = vsel %vm4601, %v4679, %v4681
  %v4683 = vrot.slane %v4287, 4
  %v4684 = vsel %vm4601, %v4681, %v4683
  %v4685 = vrot.slane %v4288, 4
  %v4686 = vsel %vm4601, %v4683, %v4685
  %v4687 = vrot.slane %v4289, 4
  %v4688 = vsel %vm4601, %v4685, %v4687
  %v4689 = vrot.slane %v4290, 4
  %v4690 = vsel %vm4601, %v4687, %v4689
  %v4691 = vrot.slane %v4291, 4
  %v4692 = vsel %vm4601, %v4689, %v4691
  %v4693 = vrot.slane %v4292, 4
  %v4694 = vsel %vm4601, %v4691, %v4693
  %v4695 = vrot.slane %v4293, 4
  %v4696 = vsel %vm4601, %v4693, %v4695
  %v4697 = vrot.slane %v4294, 4
  %v4698 = vsel %vm4601, %v4695, %v4697
  %v4699 = vrot.slane %v4295, 4
  %v4700 = vsel %vm4601, %v4697, %v4699
  %v4701 = vrot.slane %v4296, 4
  %v4702 = vsel %vm4601, %v4699, %v4701
  %v4703 = vrot.slane %v4297, 4
  %v4704 = vsel %vm4601, %v4701, %v4703
  %v4705 = vrot.slane %v4298, 4
  %v4706 = vsel %vm4601, %v4703, %v4705
  %v4707 = vrot.slane %v4299, 4
  %v4708 = vsel %vm4601, %v4705, %v4707
  %v4709 = vrot.slane %v4300, 4
  %v4710 = vsel %vm4601, %v4707, %v4709
  %v4711 = vrot.slane %v4301, 4
  %v4712 = vsel %vm4601, %v4709, %v4711
  %v4713 = vrot.slane %v4302, 4
  %v4714 = vsel %vm4601, %v4711, %v4713
  %v4715 = vrot.slane %v4303, 4
  %v4716 = vsel %vm4601, %v4713, %v4715
  %v4717 = vrot.slane %v4304, 4
  %v4718 = vsel %vm4601, %v4715, %v4717
  %v4719 = vrot.slane %v4305, 4
  %v4720 = vsel %vm4601, %v4717, %v4719
  %v4721 = vrot.slane %v4306, 4
  %v4722 = vsel %vm4601, %v4719, %v4721
  %v4723 = vrot.slane %v4307, 4
  %v4724 = vsel %vm4601, %v4721, %v4723
  %v4725 = vrot.slane %v4308, 4
  %v4726 = vsel %vm4601, %v4723, %v4725
  %v4727 = vrot.slane %v4309, 4
  %v4728 = vsel %vm4601, %v4725, %v4727
  %v4729 = vrot.slane %v4310, 4
  %v4730 = vsel %vm4601, %v4727, %v4729
  %v4731 = vrot.slane %v4311, 4
  %v4732 = vsel %vm4601, %v4729, %v4731
  %v4733 = vrot.slane %v4312, 4
  %v4734 = vsel %vm4601, %v4731, %v4733
  %v4735 = vrot.slane %v4313, 4
  %v4736 = vsel %vm4601, %v4733, %v4735
  %v4737 = vrot.slane %v4314, 4
  %v4738 = vsel %vm4601, %v4735, %v4737
  %v4739 = vrot.slane %v4315, 4
  %v4740 = vsel %vm4601, %v4737, %v4739
  %v4741 = vrot.slane %v4316, 4
  %v4742 = vsel %vm4601, %v4739, %v4741
  %v4743 = vrot.slane %v4317, 4
  %v4744 = vsel %vm4601, %v4741, %v4743
  %v4745 = vrot.slane %v4318, 4
  %v4746 = vsel %vm4601, %v4743, %v4745
  %v4747 = vrot.slane %v4319, 4
  %v4748 = vsel %vm4601, %v4745, %v4747
  %v4749 = vrot.slane %v4320, 4
  %v4750 = vsel %vm4601, %v4747, %v4749
  %v4751 = vrot.slane %v4321, 4
  %v4752 = vsel %vm4601, %v4749, %v4751
  %v4753 = vrot.slane %v4322, 4
  %v4754 = vsel %vm4601, %v4751, %v4753
  %v4755 = vrot.slane %v4323, 4
  %v4756 = vsel %vm4601, %v4753, %v4755
  %v4757 = vrot.slane %v4324, 4
  %v4758 = vsel %vm4601, %v4755, %v4757
  %v4759 = vrot.slane %v4325, 4
  %v4760 = vsel %vm4601, %v4757, %v4759
  %v4761 = vrot.slane %v4326, 4
  %v4762 = vsel %vm4601, %v4759, %v4761
  %v4763 = vrot.slane %v4327, 4
  %v4764 = vsel %vm4601, %v4761, %v4763
  %v4765 = vrot.slane %v4328, 4
  %v4766 = vsel %vm4601, %v4763, %v4765
  %v4767 = vrot.slane %v4329, 4
  %v4768 = vsel %vm4601, %v4765, %v4767
  %v4769 = vrot.slane %v4330, 4
  %v4770 = vsel %vm4601, %v4767, %v4769
  %v4771 = vrot.slane %v4331, 4
  %v4772 = vsel %vm4601, %v4769, %v4771
  %v4773 = vrot.slane %v4332, 4
  %v4774 = vsel %vm4601, %v4771, %v4773
  %v4775 = vrot.slane %v4333, 4
  %v4776 = vsel %vm4601, %v4773, %v4775
  %v4777 = vrot.slane %v4334, 4
  %v4778 = vsel %vm4601, %v4775, %v4777
  %v4779 = vrot.slane %v4335, 4
  %v4780 = vsel %vm4601, %v4777, %v4779
  %v4781 = vrot.slane %v4336, 4
  %v4782 = vsel %vm4601, %v4779, %v4781
  %v4783 = vrot.slane %v4337, 4
  %v4784 = vsel %vm4601, %v4781, %v4783
  %v4785 = vrot.slane %v4338, 4
  %v4786 = vsel %vm4601, %v4783, %v4785
  %v4787 = vrot.slane %v4339, 4
  %v4788 = vsel %vm4601, %v4785, %v4787
  %v4789 = vrot.slane %v4340, 4
  %v4790 = vsel %vm4601, %v4787, %v4789
  %v4791 = vrot.slane %v4341, 4
  %v4792 = vsel %vm4601, %v4789, %v4791
  %v4793 = vrot.slane %v4342, 4
  %v4794 = vsel %vm4601, %v4791, %v4793
  %v4795 = vrot.slane %v4343, 4
  %v4796 = vsel %vm4601, %v4793, %v4795
  %4797 = vrot.lane.b32.xlu0 %v4604, 32
  %v4798 = vpop.permute.xlu0 %4797
  %4799 = vrot.lane.b32.xlu0 %v4606, 32
  %v4800 = vpop.permute.xlu0 %4799
  %4801 = vrot.lane.b32.xlu0 %v4608, 32
  %v4802 = vpop.permute.xlu0 %4801
  %4803 = vrot.lane.b32.xlu0 %v4610, 32
  %v4804 = vpop.permute.xlu0 %4803
  %4805 = vrot.lane.b32.xlu0 %v4612, 32
  %v4806 = vpop.permute.xlu0 %4805
  %4807 = vrot.lane.b32.xlu0 %v4614, 32
  %v4808 = vpop.permute.xlu0 %4807
  %4809 = vrot.lane.b32.xlu0 %v4616, 32
  %v4810 = vpop.permute.xlu0 %4809
  %4811 = vrot.lane.b32.xlu0 %v4618, 32
  %v4812 = vpop.permute.xlu0 %4811
  %4813 = vrot.lane.b32.xlu0 %v4620, 32
  %v4814 = vpop.permute.xlu0 %4813
  %4815 = vrot.lane.b32.xlu0 %v4622, 32
  %v4816 = vpop.permute.xlu0 %4815
  %4817 = vrot.lane.b32.xlu0 %v4624, 32
  %v4818 = vpop.permute.xlu0 %4817
  %4819 = vrot.lane.b32.xlu0 %v4626, 32
  %v4820 = vpop.permute.xlu0 %4819
  %4821 = vrot.lane.b32.xlu0 %v4628, 32
  %v4822 = vpop.permute.xlu0 %4821
  %4823 = vrot.lane.b32.xlu0 %v4630, 32
  %v4824 = vpop.permute.xlu0 %4823
  %4825 = vrot.lane.b32.xlu0 %v4632, 32
  %v4826 = vpop.permute.xlu0 %4825
  %4827 = vrot.lane.b32.xlu0 %v4634, 32
  %v4828 = vpop.permute.xlu0 %4827
  %4829 = vrot.lane.b32.xlu0 %v4636, 32
  %v4830 = vpop.permute.xlu0 %4829
  %4831 = vrot.lane.b32.xlu0 %v4638, 32
  %v4832 = vpop.permute.xlu0 %4831
  %4833 = vrot.lane.b32.xlu0 %v4640, 32
  %v4834 = vpop.permute.xlu0 %4833
  %4835 = vrot.lane.b32.xlu0 %v4642, 32
  %v4836 = vpop.permute.xlu0 %4835
  %4837 = vrot.lane.b32.xlu0 %v4644, 32
  %v4838 = vpop.permute.xlu0 %4837
  %4839 = vrot.lane.b32.xlu0 %v4646, 32
  %v4840 = vpop.permute.xlu0 %4839
  %4841 = vrot.lane.b32.xlu0 %v4648, 32
  %v4842 = vpop.permute.xlu0 %4841
  %4843 = vrot.lane.b32.xlu0 %v4650, 32
  %v4844 = vpop.permute.xlu0 %4843
  %4845 = vrot.lane.b32.xlu0 %v4652, 32
  %v4846 = vpop.permute.xlu0 %4845
  %4847 = vrot.lane.b32.xlu0 %v4654, 32
  %v4848 = vpop.permute.xlu0 %4847
  %4849 = vrot.lane.b32.xlu0 %v4656, 32
  %v4850 = vpop.permute.xlu0 %4849
  %4851 = vrot.lane.b32.xlu0 %v4658, 32
  %v4852 = vpop.permute.xlu0 %4851
  %4853 = vrot.lane.b32.xlu0 %v4660, 32
  %v4854 = vpop.permute.xlu0 %4853
  %4855 = vrot.lane.b32.xlu0 %v4662, 32
  %v4856 = vpop.permute.xlu0 %4855
  %4857 = vrot.lane.b32.xlu0 %v4664, 32
  %v4858 = vpop.permute.xlu0 %4857
  %4859 = vrot.lane.b32.xlu0 %v4666, 32
  %v4860 = vpop.permute.xlu0 %4859
  %4861 = vrot.lane.b32.xlu0 %v4668, 32
  %v4862 = vpop.permute.xlu0 %4861
  %4863 = vrot.lane.b32.xlu0 %v4670, 32
  %v4864 = vpop.permute.xlu0 %4863
  %4865 = vrot.lane.b32.xlu0 %v4672, 32
  %v4866 = vpop.permute.xlu0 %4865
  %4867 = vrot.lane.b32.xlu0 %v4674, 32
  %v4868 = vpop.permute.xlu0 %4867
  %4869 = vrot.lane.b32.xlu0 %v4676, 32
  %v4870 = vpop.permute.xlu0 %4869
  %4871 = vrot.lane.b32.xlu0 %v4678, 32
  %v4872 = vpop.permute.xlu0 %4871
  %4873 = vrot.lane.b32.xlu0 %v4680, 32
  %v4874 = vpop.permute.xlu0 %4873
  %4875 = vrot.lane.b32.xlu0 %v4682, 32
  %v4876 = vpop.permute.xlu0 %4875
  %4877 = vrot.lane.b32.xlu0 %v4684, 32
  %v4878 = vpop.permute.xlu0 %4877
  %4879 = vrot.lane.b32.xlu0 %v4686, 32
  %v4880 = vpop.permute.xlu0 %4879
  %4881 = vrot.lane.b32.xlu0 %v4688, 32
  %v4882 = vpop.permute.xlu0 %4881
  %4883 = vrot.lane.b32.xlu0 %v4690, 32
  %v4884 = vpop.permute.xlu0 %4883
  %4885 = vrot.lane.b32.xlu0 %v4692, 32
  %v4886 = vpop.permute.xlu0 %4885
  %4887 = vrot.lane.b32.xlu0 %v4694, 32
  %v4888 = vpop.permute.xlu0 %4887
  %4889 = vrot.lane.b32.xlu0 %v4696, 32
  %v4890 = vpop.permute.xlu0 %4889
  %4891 = vrot.lane.b32.xlu0 %v4698, 32
  %v4892 = vpop.permute.xlu0 %4891
  %4893 = vrot.lane.b32.xlu0 %v4700, 32
  %v4894 = vpop.permute.xlu0 %4893
  %4895 = vrot.lane.b32.xlu0 %v4702, 32
  %v4896 = vpop.permute.xlu0 %4895
  %4897 = vrot.lane.b32.xlu0 %v4704, 32
  %v4898 = vpop.permute.xlu0 %4897
  %4899 = vrot.lane.b32.xlu0 %v4706, 32
  %v4900 = vpop.permute.xlu0 %4899
  %4901 = vrot.lane.b32.xlu0 %v4708, 32
  %v4902 = vpop.permute.xlu0 %4901
  %4903 = vrot.lane.b32.xlu0 %v4710, 32
  %v4904 = vpop.permute.xlu0 %4903
  %4905 = vrot.lane.b32.xlu0 %v4712, 32
  %v4906 = vpop.permute.xlu0 %4905
  %4907 = vrot.lane.b32.xlu0 %v4714, 32
  %v4908 = vpop.permute.xlu0 %4907
  %4909 = vrot.lane.b32.xlu0 %v4716, 32
  %v4910 = vpop.permute.xlu0 %4909
  %4911 = vrot.lane.b32.xlu0 %v4718, 32
  %v4912 = vpop.permute.xlu0 %4911
  %4913 = vrot.lane.b32.xlu0 %v4720, 32
  %v4914 = vpop.permute.xlu0 %4913
  %4915 = vrot.lane.b32.xlu0 %v4722, 32
  %v4916 = vpop.permute.xlu0 %4915
  %4917 = vrot.lane.b32.xlu0 %v4724, 32
  %v4918 = vpop.permute.xlu0 %4917
  %4919 = vrot.lane.b32.xlu0 %v4726, 32
  %v4920 = vpop.permute.xlu0 %4919
  %4921 = vrot.lane.b32.xlu0 %v4728, 32
  %v4922 = vpop.permute.xlu0 %4921
  %4923 = vrot.lane.b32.xlu0 %v4730, 32
  %v4924 = vpop.permute.xlu0 %4923
  %4925 = vrot.lane.b32.xlu0 %v4732, 32
  %v4926 = vpop.permute.xlu0 %4925
  %4927 = vrot.lane.b32.xlu0 %v4734, 32
  %v4928 = vpop.permute.xlu0 %4927
  %4929 = vrot.lane.b32.xlu0 %v4736, 32
  %v4930 = vpop.permute.xlu0 %4929
  %4931 = vrot.lane.b32.xlu0 %v4738, 32
  %v4932 = vpop.permute.xlu0 %4931
  %4933 = vrot.lane.b32.xlu0 %v4740, 32
  %v4934 = vpop.permute.xlu0 %4933
  %4935 = vrot.lane.b32.xlu0 %v4742, 32
  %v4936 = vpop.permute.xlu0 %4935
  %4937 = vrot.lane.b32.xlu0 %v4744, 32
  %v4938 = vpop.permute.xlu0 %4937
  %4939 = vrot.lane.b32.xlu0 %v4746, 32
  %v4940 = vpop.permute.xlu0 %4939
  %4941 = vrot.lane.b32.xlu0 %v4748, 32
  %v4942 = vpop.permute.xlu0 %4941
  %4943 = vrot.lane.b32.xlu0 %v4750, 32
  %v4944 = vpop.permute.xlu0 %4943
  %4945 = vrot.lane.b32.xlu0 %v4752, 32
  %v4946 = vpop.permute.xlu0 %4945
  %4947 = vrot.lane.b32.xlu0 %v4754, 32
  %v4948 = vpop.permute.xlu0 %4947
  %4949 = vrot.lane.b32.xlu0 %v4756, 32
  %v4950 = vpop.permute.xlu0 %4949
  %4951 = vrot.lane.b32.xlu0 %v4758, 32
  %v4952 = vpop.permute.xlu0 %4951
  %4953 = vrot.lane.b32.xlu0 %v4760, 32
  %v4954 = vpop.permute.xlu0 %4953
  %4955 = vrot.lane.b32.xlu0 %v4762, 32
  %v4956 = vpop.permute.xlu0 %4955
  %4957 = vrot.lane.b32.xlu0 %v4764, 32
  %v4958 = vpop.permute.xlu0 %4957
  %4959 = vrot.lane.b32.xlu0 %v4766, 32
  %v4960 = vpop.permute.xlu0 %4959
  %4961 = vrot.lane.b32.xlu0 %v4768, 32
  %v4962 = vpop.permute.xlu0 %4961
  %4963 = vrot.lane.b32.xlu0 %v4770, 32
  %v4964 = vpop.permute.xlu0 %4963
  %4965 = vrot.lane.b32.xlu0 %v4772, 32
  %v4966 = vpop.permute.xlu0 %4965
  %4967 = vrot.lane.b32.xlu0 %v4774, 32
  %v4968 = vpop.permute.xlu0 %4967
  %4969 = vrot.lane.b32.xlu0 %v4776, 32
  %v4970 = vpop.permute.xlu0 %4969
  %4971 = vrot.lane.b32.xlu0 %v4778, 32
  %v4972 = vpop.permute.xlu0 %4971
  %4973 = vrot.lane.b32.xlu0 %v4780, 32
  %v4974 = vpop.permute.xlu0 %4973
  %4975 = vrot.lane.b32.xlu0 %v4782, 32
  %v4976 = vpop.permute.xlu0 %4975
  %4977 = vrot.lane.b32.xlu0 %v4784, 32
  %v4978 = vpop.permute.xlu0 %4977
  %4979 = vrot.lane.b32.xlu0 %v4786, 32
  %v4980 = vpop.permute.xlu0 %4979
  %4981 = vrot.lane.b32.xlu0 %v4788, 32
  %v4982 = vpop.permute.xlu0 %4981
  %4983 = vrot.lane.b32.xlu0 %v4790, 32
  %v4984 = vpop.permute.xlu0 %4983
  %4985 = vrot.lane.b32.xlu0 %v4792, 32
  %v4986 = vpop.permute.xlu0 %4985
  %4987 = vrot.lane.b32.xlu0 %v4794, 32
  %v4988 = vpop.permute.xlu0 %4987
  %4989 = vrot.lane.b32.xlu0 %v4796, 32
  %v4990 = vpop.permute.xlu0 %4989
  %4991 = vrot.lane.b32.xlu0 %v4795, 32
  %v4992 = vpop.permute.xlu0 %4991
  %vm5091 = vcmask 523520
  %5092 = vst.msk [vmem:[#allocation2] sm:$0xff] %vm5091, %v4798
  %5093 = vst.msk [vmem:[#allocation2 + $0x10] sm:$0xff] %vm5091, %v4800
  %5094 = vst.msk [vmem:[#allocation2 + $0x20] sm:$0xff] %vm5091, %v4802
  %5095 = vst.msk [vmem:[#allocation2 + $0x30] sm:$0xff] %vm5091, %v4804
  %5096 = vst.msk [vmem:[#allocation2 + $0x40] sm:$0xff] %vm5091, %v4806
  %5097 = vst.msk [vmem:[#allocation2 + $0x50] sm:$0xff] %vm5091, %v4808
  %5098 = vst.msk [vmem:[#allocation2 + $0x60] sm:$0xff] %vm5091, %v4810
  %5099 = vst.msk [vmem:[#allocation2 + $0x70] sm:$0xff] %vm5091, %v4812
  %5100 = vst.msk [vmem:[#allocation2 + $0x80] sm:$0xff] %vm5091, %v4814
  %5101 = vst.msk [vmem:[#allocation2 + $0x90] sm:$0xff] %vm5091, %v4816
  %5102 = vst.msk [vmem:[#allocation2 + $0xa0] sm:$0xff] %vm5091, %v4818
  %5103 = vst.msk [vmem:[#allocation2 + $0xb0] sm:$0xff] %vm5091, %v4820
  %5104 = vst.msk [vmem:[#allocation2 + $0xc0] sm:$0xff] %vm5091, %v4822
  %5105 = vst.msk [vmem:[#allocation2 + $0xd0] sm:$0xff] %vm5091, %v4824
  %5106 = vst.msk [vmem:[#allocation2 + $0xe0] sm:$0xff] %vm5091, %v4826
  %5107 = vst.msk [vmem:[#allocation2 + $0xf0] sm:$0xff] %vm5091, %v4828
  %5108 = vst.msk [vmem:[#allocation2 + $0x100] sm:$0xff] %vm5091, %v4830
  %5109 = vst.msk [vmem:[#allocation2 + $0x110] sm:$0xff] %vm5091, %v4832
  %5110 = vst.msk [vmem:[#allocation2 + $0x120] sm:$0xff] %vm5091, %v4834
  %5111 = vst.msk [vmem:[#allocation2 + $0x130] sm:$0xff] %vm5091, %v4836
  %5112 = vst.msk [vmem:[#allocation2 + $0x140] sm:$0xff] %vm5091, %v4838
  %5113 = vst.msk [vmem:[#allocation2 + $0x150] sm:$0xff] %vm5091, %v4840
  %5114 = vst.msk [vmem:[#allocation2 + $0x160] sm:$0xff] %vm5091, %v4842
  %5115 = vst.msk [vmem:[#allocation2 + $0x170] sm:$0xff] %vm5091, %v4844
  %5116 = vst.msk [vmem:[#allocation2 + $0x180] sm:$0xff] %vm5091, %v4846
  %5117 = vst.msk [vmem:[#allocation2 + $0x190] sm:$0xff] %vm5091, %v4848
  %5118 = vst.msk [vmem:[#allocation2 + $0x1a0] sm:$0xff] %vm5091, %v4850
  %5119 = vst.msk [vmem:[#allocation2 + $0x1b0] sm:$0xff] %vm5091, %v4852
  %5120 = vst.msk [vmem:[#allocation2 + $0x1c0] sm:$0xff] %vm5091, %v4854
  %5121 = vst.msk [vmem:[#allocation2 + $0x1d0] sm:$0xff] %vm5091, %v4856
  %5122 = vst.msk [vmem:[#allocation2 + $0x1e0] sm:$0xff] %vm5091, %v4858
  %5123 = vst.msk [vmem:[#allocation2 + $0x1f0] sm:$0xff] %vm5091, %v4860
  %5124 = vst.msk [vmem:[#allocation2 + $0x200] sm:$0xff] %vm5091, %v4862
  %5125 = vst.msk [vmem:[#allocation2 + $0x210] sm:$0xff] %vm5091, %v4864
  %5126 = vst.msk [vmem:[#allocation2 + $0x220] sm:$0xff] %vm5091, %v4866
  %5127 = vst.msk [vmem:[#allocation2 + $0x230] sm:$0xff] %vm5091, %v4868
  %5128 = vst.msk [vmem:[#allocation2 + $0x240] sm:$0xff] %vm5091, %v4870
  %5129 = vst.msk [vmem:[#allocation2 + $0x250] sm:$0xff] %vm5091, %v4872
  %5130 = vst.msk [vmem:[#allocation2 + $0x260] sm:$0xff] %vm5091, %v4874
  %5131 = vst.msk [vmem:[#allocation2 + $0x270] sm:$0xff] %vm5091, %v4876
  %5132 = vst.msk [vmem:[#allocation2 + $0x280] sm:$0xff] %vm5091, %v4878
  %5133 = vst.msk [vmem:[#allocation2 + $0x290] sm:$0xff] %vm5091, %v4880
  %5134 = vst.msk [vmem:[#allocation2 + $0x2a0] sm:$0xff] %vm5091, %v4882
  %5135 = vst.msk [vmem:[#allocation2 + $0x2b0] sm:$0xff] %vm5091, %v4884
  %5136 = vst.msk [vmem:[#allocation2 + $0x2c0] sm:$0xff] %vm5091, %v4886
  %5137 = vst.msk [vmem:[#allocation2 + $0x2d0] sm:$0xff] %vm5091, %v4888
  %5138 = vst.msk [vmem:[#allocation2 + $0x2e0] sm:$0xff] %vm5091, %v4890
  %5139 = vst.msk [vmem:[#allocation2 + $0x2f0] sm:$0xff] %vm5091, %v4892
  %5140 = vst.msk [vmem:[#allocation2 + $0x300] sm:$0xff] %vm5091, %v4894
  %5141 = vst.msk [vmem:[#allocation2 + $0x310] sm:$0xff] %vm5091, %v4896
  %5142 = vst.msk [vmem:[#allocation2 + $0x320] sm:$0xff] %vm5091, %v4898
  %5143 = vst.msk [vmem:[#allocation2 + $0x330] sm:$0xff] %vm5091, %v4900
  %5144 = vst.msk [vmem:[#allocation2 + $0x340] sm:$0xff] %vm5091, %v4902
  %5145 = vst.msk [vmem:[#allocation2 + $0x350] sm:$0xff] %vm5091, %v4904
  %5146 = vst.msk [vmem:[#allocation2 + $0x360] sm:$0xff] %vm5091, %v4906
  %5147 = vst.msk [vmem:[#allocation2 + $0x370] sm:$0xff] %vm5091, %v4908
  %5148 = vst.msk [vmem:[#allocation2 + $0x380] sm:$0xff] %vm5091, %v4910
  %5149 = vst.msk [vmem:[#allocation2 + $0x390] sm:$0xff] %vm5091, %v4912
  %5150 = vst.msk [vmem:[#allocation2 + $0x3a0] sm:$0xff] %vm5091, %v4914
  %5151 = vst.msk [vmem:[#allocation2 + $0x3b0] sm:$0xff] %vm5091, %v4916
  %5152 = vst.msk [vmem:[#allocation2 + $0x3c0] sm:$0xff] %vm5091, %v4918
  %5153 = vst.msk [vmem:[#allocation2 + $0x3d0] sm:$0xff] %vm5091, %v4920
  %5154 = vst.msk [vmem:[#allocation2 + $0x3e0] sm:$0xff] %vm5091, %v4922
  %5155 = vst.msk [vmem:[#allocation2 + $0x3f0] sm:$0xff] %vm5091, %v4924
  %5156 = vst.msk [vmem:[#allocation2 + $0x400] sm:$0xff] %vm5091, %v4926
  %5157 = vst.msk [vmem:[#allocation2 + $0x410] sm:$0xff] %vm5091, %v4928
  %5158 = vst.msk [vmem:[#allocation2 + $0x420] sm:$0xff] %vm5091, %v4930
  %5159 = vst.msk [vmem:[#allocation2 + $0x430] sm:$0xff] %vm5091, %v4932
  %5160 = vst.msk [vmem:[#allocation2 + $0x440] sm:$0xff] %vm5091, %v4934
  %5161 = vst.msk [vmem:[#allocation2 + $0x450] sm:$0xff] %vm5091, %v4936
  %5162 = vst.msk [vmem:[#allocation2 + $0x460] sm:$0xff] %vm5091, %v4938
  %5163 = vst.msk [vmem:[#allocation2 + $0x470] sm:$0xff] %vm5091, %v4940
  %5164 = vst.msk [vmem:[#allocation2 + $0x480] sm:$0xff] %vm5091, %v4942
  %5165 = vst.msk [vmem:[#allocation2 + $0x490] sm:$0xff] %vm5091, %v4944
  %5166 = vst.msk [vmem:[#allocation2 + $0x4a0] sm:$0xff] %vm5091, %v4946
  %5167 = vst.msk [vmem:[#allocation2 + $0x4b0] sm:$0xff] %vm5091, %v4948
  %5168 = vst.msk [vmem:[#allocation2 + $0x4c0] sm:$0xff] %vm5091, %v4950
  %5169 = vst.msk [vmem:[#allocation2 + $0x4d0] sm:$0xff] %vm5091, %v4952
  %5170 = vst.msk [vmem:[#allocation2 + $0x4e0] sm:$0xff] %vm5091, %v4954
  %5171 = vst.msk [vmem:[#allocation2 + $0x4f0] sm:$0xff] %vm5091, %v4956
  %5172 = vst.msk [vmem:[#allocation2 + $0x500] sm:$0xff] %vm5091, %v4958
  %5173 = vst.msk [vmem:[#allocation2 + $0x510] sm:$0xff] %vm5091, %v4960
  %5174 = vst.msk [vmem:[#allocation2 + $0x520] sm:$0xff] %vm5091, %v4962
  %5175 = vst.msk [vmem:[#allocation2 + $0x530] sm:$0xff] %vm5091, %v4964
  %5176 = vst.msk [vmem:[#allocation2 + $0x540] sm:$0xff] %vm5091, %v4966
  %5177 = vst.msk [vmem:[#allocation2 + $0x550] sm:$0xff] %vm5091, %v4968
  %5178 = vst.msk [vmem:[#allocation2 + $0x560] sm:$0xff] %vm5091, %v4970
  %5179 = vst.msk [vmem:[#allocation2 + $0x570] sm:$0xff] %vm5091, %v4972
  %5180 = vst.msk [vmem:[#allocation2 + $0x580] sm:$0xff] %vm5091, %v4974
  %5181 = vst.msk [vmem:[#allocation2 + $0x590] sm:$0xff] %vm5091, %v4976
  %5182 = vst.msk [vmem:[#allocation2 + $0x5a0] sm:$0xff] %vm5091, %v4978
  %5183 = vst.msk [vmem:[#allocation2 + $0x5b0] sm:$0xff] %vm5091, %v4980
  %5184 = vst.msk [vmem:[#allocation2 + $0x5c0] sm:$0xff] %vm5091, %v4982
  %5185 = vst.msk [vmem:[#allocation2 + $0x5d0] sm:$0xff] %vm5091, %v4984
  %5186 = vst.msk [vmem:[#allocation2 + $0x5e0] sm:$0xff] %vm5091, %v4986
  %5187 = vst.msk [vmem:[#allocation2 + $0x5f0] sm:$0xff] %vm5091, %v4988
  %5188 = vst.msk [vmem:[#allocation2 + $0x600] sm:$0xff] %vm5091, %v4990
  %vm5189 = vcmask 519424
  %5190 = vst.msk [vmem:[#allocation2 + $0x610] sm:$0xf] %vm5189, %v4992
  %5191 = vrot.lane.b32.xlu0 %v4247, 64
  %v5192 = vpop.permute.xlu0 %5191
  %5193 = vrot.lane.b32.xlu0 %v4248, 64
  %v5194 = vpop.permute.xlu0 %5193
  %5195 = vrot.lane.b32.xlu0 %v4249, 64
  %v5196 = vpop.permute.xlu0 %5195
  %5197 = vrot.lane.b32.xlu0 %v4250, 64
  %v5198 = vpop.permute.xlu0 %5197
  %5199 = vrot.lane.b32.xlu0 %v4251, 64
  %v5200 = vpop.permute.xlu0 %5199
  %5201 = vrot.lane.b32.xlu0 %v4252, 64
  %v5202 = vpop.permute.xlu0 %5201
  %5203 = vrot.lane.b32.xlu0 %v4253, 64
  %v5204 = vpop.permute.xlu0 %5203
  %5205 = vrot.lane.b32.xlu0 %v4254, 64
  %v5206 = vpop.permute.xlu0 %5205
  %5207 = vrot.lane.b32.xlu0 %v4255, 64
  %v5208 = vpop.permute.xlu0 %5207
  %5209 = vrot.lane.b32.xlu0 %v4256, 64
  %v5210 = vpop.permute.xlu0 %5209
  %5211 = vrot.lane.b32.xlu0 %v4257, 64
  %v5212 = vpop.permute.xlu0 %5211
  %5213 = vrot.lane.b32.xlu0 %v4258, 64
  %v5214 = vpop.permute.xlu0 %5213
  %5215 = vrot.lane.b32.xlu0 %v4259, 64
  %v5216 = vpop.permute.xlu0 %5215
  %5217 = vrot.lane.b32.xlu0 %v4260, 64
  %v5218 = vpop.permute.xlu0 %5217
  %5219 = vrot.lane.b32.xlu0 %v4261, 64
  %v5220 = vpop.permute.xlu0 %5219
  %5221 = vrot.lane.b32.xlu0 %v4262, 64
  %v5222 = vpop.permute.xlu0 %5221
  %5223 = vrot.lane.b32.xlu0 %v4263, 64
  %v5224 = vpop.permute.xlu0 %5223
  %5225 = vrot.lane.b32.xlu0 %v4264, 64
  %v5226 = vpop.permute.xlu0 %5225
  %5227 = vrot.lane.b32.xlu0 %v4265, 64
  %v5228 = vpop.permute.xlu0 %5227
  %5229 = vrot.lane.b32.xlu0 %v4266, 64
  %v5230 = vpop.permute.xlu0 %5229
  %5231 = vrot.lane.b32.xlu0 %v4267, 64
  %v5232 = vpop.permute.xlu0 %5231
  %5233 = vrot.lane.b32.xlu0 %v4268, 64
  %v5234 = vpop.permute.xlu0 %5233
  %5235 = vrot.lane.b32.xlu0 %v4269, 64
  %v5236 = vpop.permute.xlu0 %5235
  %5237 = vrot.lane.b32.xlu0 %v4270, 64
  %v5238 = vpop.permute.xlu0 %5237
  %5239 = vrot.lane.b32.xlu0 %v4271, 64
  %v5240 = vpop.permute.xlu0 %5239
  %5241 = vrot.lane.b32.xlu0 %v4272, 64
  %v5242 = vpop.permute.xlu0 %5241
  %5243 = vrot.lane.b32.xlu0 %v4273, 64
  %v5244 = vpop.permute.xlu0 %5243
  %5245 = vrot.lane.b32.xlu0 %v4274, 64
  %v5246 = vpop.permute.xlu0 %5245
  %5247 = vrot.lane.b32.xlu0 %v4275, 64
  %v5248 = vpop.permute.xlu0 %5247
  %5249 = vrot.lane.b32.xlu0 %v4276, 64
  %v5250 = vpop.permute.xlu0 %5249
  %5251 = vrot.lane.b32.xlu0 %v4277, 64
  %v5252 = vpop.permute.xlu0 %5251
  %5253 = vrot.lane.b32.xlu0 %v4278, 64
  %v5254 = vpop.permute.xlu0 %5253
  %5255 = vrot.lane.b32.xlu0 %v4279, 64
  %v5256 = vpop.permute.xlu0 %5255
  %5257 = vrot.lane.b32.xlu0 %v4280, 64
  %v5258 = vpop.permute.xlu0 %5257
  %5259 = vrot.lane.b32.xlu0 %v4281, 64
  %v5260 = vpop.permute.xlu0 %5259
  %5261 = vrot.lane.b32.xlu0 %v4282, 64
  %v5262 = vpop.permute.xlu0 %5261
  %5263 = vrot.lane.b32.xlu0 %v4283, 64
  %v5264 = vpop.permute.xlu0 %5263
  %5265 = vrot.lane.b32.xlu0 %v4284, 64
  %v5266 = vpop.permute.xlu0 %5265
  %5267 = vrot.lane.b32.xlu0 %v4285, 64
  %v5268 = vpop.permute.xlu0 %5267
  %5269 = vrot.lane.b32.xlu0 %v4286, 64
  %v5270 = vpop.permute.xlu0 %5269
  %5271 = vrot.lane.b32.xlu0 %v4287, 64
  %v5272 = vpop.permute.xlu0 %5271
  %5273 = vrot.lane.b32.xlu0 %v4288, 64
  %v5274 = vpop.permute.xlu0 %5273
  %5275 = vrot.lane.b32.xlu0 %v4289, 64
  %v5276 = vpop.permute.xlu0 %5275
  %5277 = vrot.lane.b32.xlu0 %v4290, 64
  %v5278 = vpop.permute.xlu0 %5277
  %5279 = vrot.lane.b32.xlu0 %v4291, 64
  %v5280 = vpop.permute.xlu0 %5279
  %5281 = vrot.lane.b32.xlu0 %v4292, 64
  %v5282 = vpop.permute.xlu0 %5281
  %5283 = vrot.lane.b32.xlu0 %v4293, 64
  %v5284 = vpop.permute.xlu0 %5283
  %5285 = vrot.lane.b32.xlu0 %v4294, 64
  %v5286 = vpop.permute.xlu0 %5285
  %5287 = vrot.lane.b32.xlu0 %v4295, 64
  %v5288 = vpop.permute.xlu0 %5287
  %5289 = vrot.lane.b32.xlu0 %v4296, 64
  %v5290 = vpop.permute.xlu0 %5289
  %5291 = vrot.lane.b32.xlu0 %v4297, 64
  %v5292 = vpop.permute.xlu0 %5291
  %5293 = vrot.lane.b32.xlu0 %v4298, 64
  %v5294 = vpop.permute.xlu0 %5293
  %5295 = vrot.lane.b32.xlu0 %v4299, 64
  %v5296 = vpop.permute.xlu0 %5295
  %5297 = vrot.lane.b32.xlu0 %v4300, 64
  %v5298 = vpop.permute.xlu0 %5297
  %5299 = vrot.lane.b32.xlu0 %v4301, 64
  %v5300 = vpop.permute.xlu0 %5299
  %5301 = vrot.lane.b32.xlu0 %v4302, 64
  %v5302 = vpop.permute.xlu0 %5301
  %5303 = vrot.lane.b32.xlu0 %v4303, 64
  %v5304 = vpop.permute.xlu0 %5303
  %5305 = vrot.lane.b32.xlu0 %v4304, 64
  %v5306 = vpop.permute.xlu0 %5305
  %5307 = vrot.lane.b32.xlu0 %v4305, 64
  %v5308 = vpop.permute.xlu0 %5307
  %5309 = vrot.lane.b32.xlu0 %v4306, 64
  %v5310 = vpop.permute.xlu0 %5309
  %5311 = vrot.lane.b32.xlu0 %v4307, 64
  %v5312 = vpop.permute.xlu0 %5311
  %5313 = vrot.lane.b32.xlu0 %v4308, 64
  %v5314 = vpop.permute.xlu0 %5313
  %5315 = vrot.lane.b32.xlu0 %v4309, 64
  %v5316 = vpop.permute.xlu0 %5315
  %5317 = vrot.lane.b32.xlu0 %v4310, 64
  %v5318 = vpop.permute.xlu0 %5317
  %5319 = vrot.lane.b32.xlu0 %v4311, 64
  %v5320 = vpop.permute.xlu0 %5319
  %5321 = vrot.lane.b32.xlu0 %v4312, 64
  %v5322 = vpop.permute.xlu0 %5321
  %5323 = vrot.lane.b32.xlu0 %v4313, 64
  %v5324 = vpop.permute.xlu0 %5323
  %5325 = vrot.lane.b32.xlu0 %v4314, 64
  %v5326 = vpop.permute.xlu0 %5325
  %5327 = vrot.lane.b32.xlu0 %v4315, 64
  %v5328 = vpop.permute.xlu0 %5327
  %5329 = vrot.lane.b32.xlu0 %v4316, 64
  %v5330 = vpop.permute.xlu0 %5329
  %5331 = vrot.lane.b32.xlu0 %v4317, 64
  %v5332 = vpop.permute.xlu0 %5331
  %5333 = vrot.lane.b32.xlu0 %v4318, 64
  %v5334 = vpop.permute.xlu0 %5333
  %5335 = vrot.lane.b32.xlu0 %v4319, 64
  %v5336 = vpop.permute.xlu0 %5335
  %5337 = vrot.lane.b32.xlu0 %v4320, 64
  %v5338 = vpop.permute.xlu0 %5337
  %5339 = vrot.lane.b32.xlu0 %v4321, 64
  %v5340 = vpop.permute.xlu0 %5339
  %5341 = vrot.lane.b32.xlu0 %v4322, 64
  %v5342 = vpop.permute.xlu0 %5341
  %5343 = vrot.lane.b32.xlu0 %v4323, 64
  %v5344 = vpop.permute.xlu0 %5343
  %5345 = vrot.lane.b32.xlu0 %v4324, 64
  %v5346 = vpop.permute.xlu0 %5345
  %5347 = vrot.lane.b32.xlu0 %v4325, 64
  %v5348 = vpop.permute.xlu0 %5347
  %5349 = vrot.lane.b32.xlu0 %v4326, 64
  %v5350 = vpop.permute.xlu0 %5349
  %5351 = vrot.lane.b32.xlu0 %v4327, 64
  %v5352 = vpop.permute.xlu0 %5351
  %5353 = vrot.lane.b32.xlu0 %v4328, 64
  %v5354 = vpop.permute.xlu0 %5353
  %5355 = vrot.lane.b32.xlu0 %v4329, 64
  %v5356 = vpop.permute.xlu0 %5355
  %5357 = vrot.lane.b32.xlu0 %v4330, 64
  %v5358 = vpop.permute.xlu0 %5357
  %5359 = vrot.lane.b32.xlu0 %v4331, 64
  %v5360 = vpop.permute.xlu0 %5359
  %5361 = vrot.lane.b32.xlu0 %v4332, 64
  %v5362 = vpop.permute.xlu0 %5361
  %5363 = vrot.lane.b32.xlu0 %v4333, 64
  %v5364 = vpop.permute.xlu0 %5363
  %5365 = vrot.lane.b32.xlu0 %v4334, 64
  %v5366 = vpop.permute.xlu0 %5365
  %5367 = vrot.lane.b32.xlu0 %v4335, 64
  %v5368 = vpop.permute.xlu0 %5367
  %5369 = vrot.lane.b32.xlu0 %v4336, 64
  %v5370 = vpop.permute.xlu0 %5369
  %5371 = vrot.lane.b32.xlu0 %v4337, 64
  %v5372 = vpop.permute.xlu0 %5371
  %5373 = vrot.lane.b32.xlu0 %v4338, 64
  %v5374 = vpop.permute.xlu0 %5373
  %5375 = vrot.lane.b32.xlu0 %v4339, 64
  %v5376 = vpop.permute.xlu0 %5375
  %5377 = vrot.lane.b32.xlu0 %v4340, 64
  %v5378 = vpop.permute.xlu0 %5377
  %5379 = vrot.lane.b32.xlu0 %v4341, 64
  %v5380 = vpop.permute.xlu0 %5379
  %5381 = vrot.lane.b32.xlu0 %v4342, 64
  %v5382 = vpop.permute.xlu0 %5381
  %5383 = vrot.lane.b32.xlu0 %v4343, 64
  %v5384 = vpop.permute.xlu0 %5383
  %vm5482 = vcmask 785920
  %5483 = vst.msk [vmem:[#allocation2] sm:$0xff] %vm5482, %v5192
  %5484 = vst.msk [vmem:[#allocation2 + $0x10] sm:$0xff] %vm5482, %v5194
  %5485 = vst.msk [vmem:[#allocation2 + $0x20] sm:$0xff] %vm5482, %v5196
  %5486 = vst.msk [vmem:[#allocation2 + $0x30] sm:$0xff] %vm5482, %v5198
  %5487 = vst.msk [vmem:[#allocation2 + $0x40] sm:$0xff] %vm5482, %v5200
  %5488 = vst.msk [vmem:[#allocation2 + $0x50] sm:$0xff] %vm5482, %v5202
  %5489 = vst.msk [vmem:[#allocation2 + $0x60] sm:$0xff] %vm5482, %v5204
  %5490 = vst.msk [vmem:[#allocation2 + $0x70] sm:$0xff] %vm5482, %v5206
  %5491 = vst.msk [vmem:[#allocation2 + $0x80] sm:$0xff] %vm5482, %v5208
  %5492 = vst.msk [vmem:[#allocation2 + $0x90] sm:$0xff] %vm5482, %v5210
  %5493 = vst.msk [vmem:[#allocation2 + $0xa0] sm:$0xff] %vm5482, %v5212
  %5494 = vst.msk [vmem:[#allocation2 + $0xb0] sm:$0xff] %vm5482, %v5214
  %5495 = vst.msk [vmem:[#allocation2 + $0xc0] sm:$0xff] %vm5482, %v5216
  %5496 = vst.msk [vmem:[#allocation2 + $0xd0] sm:$0xff] %vm5482, %v5218
  %5497 = vst.msk [vmem:[#allocation2 + $0xe0] sm:$0xff] %vm5482, %v5220
  %5498 = vst.msk [vmem:[#allocation2 + $0xf0] sm:$0xff] %vm5482, %v5222
  %5499 = vst.msk [vmem:[#allocation2 + $0x100] sm:$0xff] %vm5482, %v5224
  %5500 = vst.msk [vmem:[#allocation2 + $0x110] sm:$0xff] %vm5482, %v5226
  %5501 = vst.msk [vmem:[#allocation2 + $0x120] sm:$0xff] %vm5482, %v5228
  %5502 = vst.msk [vmem:[#allocation2 + $0x130] sm:$0xff] %vm5482, %v5230
  %5503 = vst.msk [vmem:[#allocation2 + $0x140] sm:$0xff] %vm5482, %v5232
  %5504 = vst.msk [vmem:[#allocation2 + $0x150] sm:$0xff] %vm5482, %v5234
  %5505 = vst.msk [vmem:[#allocation2 + $0x160] sm:$0xff] %vm5482, %v5236
  %5506 = vst.msk [vmem:[#allocation2 + $0x170] sm:$0xff] %vm5482, %v5238
  %5507 = vst.msk [vmem:[#allocation2 + $0x180] sm:$0xff] %vm5482, %v5240
  %5508 = vst.msk [vmem:[#allocation2 + $0x190] sm:$0xff] %vm5482, %v5242
  %5509 = vst.msk [vmem:[#allocation2 + $0x1a0] sm:$0xff] %vm5482, %v5244
  %5510 = vst.msk [vmem:[#allocation2 + $0x1b0] sm:$0xff] %vm5482, %v5246
  %5511 = vst.msk [vmem:[#allocation2 + $0x1c0] sm:$0xff] %vm5482, %v5248
  %5512 = vst.msk [vmem:[#allocation2 + $0x1d0] sm:$0xff] %vm5482, %v5250
  %5513 = vst.msk [vmem:[#allocation2 + $0x1e0] sm:$0xff] %vm5482, %v5252
  %5514 = vst.msk [vmem:[#allocation2 + $0x1f0] sm:$0xff] %vm5482, %v5254
  %5515 = vst.msk [vmem:[#allocation2 + $0x200] sm:$0xff] %vm5482, %v5256
  %5516 = vst.msk [vmem:[#allocation2 + $0x210] sm:$0xff] %vm5482, %v5258
  %5517 = vst.msk [vmem:[#allocation2 + $0x220] sm:$0xff] %vm5482, %v5260
  %5518 = vst.msk [vmem:[#allocation2 + $0x230] sm:$0xff] %vm5482, %v5262
  %5519 = vst.msk [vmem:[#allocation2 + $0x240] sm:$0xff] %vm5482, %v5264
  %5520 = vst.msk [vmem:[#allocation2 + $0x250] sm:$0xff] %vm5482, %v5266
  %5521 = vst.msk [vmem:[#allocation2 + $0x260] sm:$0xff] %vm5482, %v5268
  %5522 = vst.msk [vmem:[#allocation2 + $0x270] sm:$0xff] %vm5482, %v5270
  %5523 = vst.msk [vmem:[#allocation2 + $0x280] sm:$0xff] %vm5482, %v5272
  %5524 = vst.msk [vmem:[#allocation2 + $0x290] sm:$0xff] %vm5482, %v5274
  %5525 = vst.msk [vmem:[#allocation2 + $0x2a0] sm:$0xff] %vm5482, %v5276
  %5526 = vst.msk [vmem:[#allocation2 + $0x2b0] sm:$0xff] %vm5482, %v5278
  %5527 = vst.msk [vmem:[#allocation2 + $0x2c0] sm:$0xff] %vm5482, %v5280
  %5528 = vst.msk [vmem:[#allocation2 + $0x2d0] sm:$0xff] %vm5482, %v5282
  %5529 = vst.msk [vmem:[#allocation2 + $0x2e0] sm:$0xff] %vm5482, %v5284
  %5530 = vst.msk [vmem:[#allocation2 + $0x2f0] sm:$0xff] %vm5482, %v5286
  %5531 = vst.msk [vmem:[#allocation2 + $0x300] sm:$0xff] %vm5482, %v5288
  %5532 = vst.msk [vmem:[#allocation2 + $0x310] sm:$0xff] %vm5482, %v5290
  %5533 = vst.msk [vmem:[#allocation2 + $0x320] sm:$0xff] %vm5482, %v5292
  %5534 = vst.msk [vmem:[#allocation2 + $0x330] sm:$0xff] %vm5482, %v5294
  %5535 = vst.msk [vmem:[#allocation2 + $0x340] sm:$0xff] %vm5482, %v5296
  %5536 = vst.msk [vmem:[#allocation2 + $0x350] sm:$0xff] %vm5482, %v5298
  %5537 = vst.msk [vmem:[#allocation2 + $0x360] sm:$0xff] %vm5482, %v5300
  %5538 = vst.msk [vmem:[#allocation2 + $0x370] sm:$0xff] %vm5482, %v5302
  %5539 = vst.msk [vmem:[#allocation2 + $0x380] sm:$0xff] %vm5482, %v5304
  %5540 = vst.msk [vmem:[#allocation2 + $0x390] sm:$0xff] %vm5482, %v5306
  %5541 = vst.msk [vmem:[#allocation2 + $0x3a0] sm:$0xff] %vm5482, %v5308
  %5542 = vst.msk [vmem:[#allocation2 + $0x3b0] sm:$0xff] %vm5482, %v5310
  %5543 = vst.msk [vmem:[#allocation2 + $0x3c0] sm:$0xff] %vm5482, %v5312
  %5544 = vst.msk [vmem:[#allocation2 + $0x3d0] sm:$0xff] %vm5482, %v5314
  %5545 = vst.msk [vmem:[#allocation2 + $0x3e0] sm:$0xff] %vm5482, %v5316
  %5546 = vst.msk [vmem:[#allocation2 + $0x3f0] sm:$0xff] %vm5482, %v5318
  %5547 = vst.msk [vmem:[#allocation2 + $0x400] sm:$0xff] %vm5482, %v5320
  %5548 = vst.msk [vmem:[#allocation2 + $0x410] sm:$0xff] %vm5482, %v5322
  %5549 = vst.msk [vmem:[#allocation2 + $0x420] sm:$0xff] %vm5482, %v5324
  %5550 = vst.msk [vmem:[#allocation2 + $0x430] sm:$0xff] %vm5482, %v5326
  %5551 = vst.msk [vmem:[#allocation2 + $0x440] sm:$0xff] %vm5482, %v5328
  %5552 = vst.msk [vmem:[#allocation2 + $0x450] sm:$0xff] %vm5482, %v5330
  %5553 = vst.msk [vmem:[#allocation2 + $0x460] sm:$0xff] %vm5482, %v5332
  %5554 = vst.msk [vmem:[#allocation2 + $0x470] sm:$0xff] %vm5482, %v5334
  %5555 = vst.msk [vmem:[#allocation2 + $0x480] sm:$0xff] %vm5482, %v5336
  %5556 = vst.msk [vmem:[#allocation2 + $0x490] sm:$0xff] %vm5482, %v5338
  %5557 = vst.msk [vmem:[#allocation2 + $0x4a0] sm:$0xff] %vm5482, %v5340
  %5558 = vst.msk [vmem:[#allocation2 + $0x4b0] sm:$0xff] %vm5482, %v5342
  %5559 = vst.msk [vmem:[#allocation2 + $0x4c0] sm:$0xff] %vm5482, %v5344
  %5560 = vst.msk [vmem:[#allocation2 + $0x4d0] sm:$0xff] %vm5482, %v5346
  %5561 = vst.msk [vmem:[#allocation2 + $0x4e0] sm:$0xff] %vm5482, %v5348
  %5562 = vst.msk [vmem:[#allocation2 + $0x4f0] sm:$0xff] %vm5482, %v5350
  %5563 = vst.msk [vmem:[#allocation2 + $0x500] sm:$0xff] %vm5482, %v5352
  %5564 = vst.msk [vmem:[#allocation2 + $0x510] sm:$0xff] %vm5482, %v5354
  %5565 = vst.msk [vmem:[#allocation2 + $0x520] sm:$0xff] %vm5482, %v5356
  %5566 = vst.msk [vmem:[#allocation2 + $0x530] sm:$0xff] %vm5482, %v5358
  %5567 = vst.msk [vmem:[#allocation2 + $0x540] sm:$0xff] %vm5482, %v5360
  %5568 = vst.msk [vmem:[#allocation2 + $0x550] sm:$0xff] %vm5482, %v5362
  %5569 = vst.msk [vmem:[#allocation2 + $0x560] sm:$0xff] %vm5482, %v5364
  %5570 = vst.msk [vmem:[#allocation2 + $0x570] sm:$0xff] %vm5482, %v5366
  %5571 = vst.msk [vmem:[#allocation2 + $0x580] sm:$0xff] %vm5482, %v5368
  %5572 = vst.msk [vmem:[#allocation2 + $0x590] sm:$0xff] %vm5482, %v5370
  %5573 = vst.msk [vmem:[#allocation2 + $0x5a0] sm:$0xff] %vm5482, %v5372
  %5574 = vst.msk [vmem:[#allocation2 + $0x5b0] sm:$0xff] %vm5482, %v5374
  %5575 = vst.msk [vmem:[#allocation2 + $0x5c0] sm:$0xff] %vm5482, %v5376
  %5576 = vst.msk [vmem:[#allocation2 + $0x5d0] sm:$0xff] %vm5482, %v5378
  %5577 = vst.msk [vmem:[#allocation2 + $0x5e0] sm:$0xff] %vm5482, %v5380
  %5578 = vst.msk [vmem:[#allocation2 + $0x5f0] sm:$0xff] %vm5482, %v5382
  %5579 = vst.msk [vmem:[#allocation2 + $0x600] sm:$0xff] %vm5482, %v5384
  %5580 = vrot.lane.b32.xlu0 %v4606, 96
  %v5581 = vpop.permute.xlu0 %5580
  %5582 = vrot.lane.b32.xlu0 %v4608, 96
  %v5583 = vpop.permute.xlu0 %5582
  %5584 = vrot.lane.b32.xlu0 %v4610, 96
  %v5585 = vpop.permute.xlu0 %5584
  %5586 = vrot.lane.b32.xlu0 %v4612, 96
  %v5587 = vpop.permute.xlu0 %5586
  %5588 = vrot.lane.b32.xlu0 %v4614, 96
  %v5589 = vpop.permute.xlu0 %5588
  %5590 = vrot.lane.b32.xlu0 %v4616, 96
  %v5591 = vpop.permute.xlu0 %5590
  %5592 = vrot.lane.b32.xlu0 %v4618, 96
  %v5593 = vpop.permute.xlu0 %5592
  %5594 = vrot.lane.b32.xlu0 %v4620, 96
  %v5595 = vpop.permute.xlu0 %5594
  %5596 = vrot.lane.b32.xlu0 %v4622, 96
  %v5597 = vpop.permute.xlu0 %5596
  %5598 = vrot.lane.b32.xlu0 %v4624, 96
  %v5599 = vpop.permute.xlu0 %5598
  %5600 = vrot.lane.b32.xlu0 %v4626, 96
  %v5601 = vpop.permute.xlu0 %5600
  %5602 = vrot.lane.b32.xlu0 %v4628, 96
  %v5603 = vpop.permute.xlu0 %5602
  %5604 = vrot.lane.b32.xlu0 %v4630, 96
  %v5605 = vpop.permute.xlu0 %5604
  %5606 = vrot.lane.b32.xlu0 %v4632, 96
  %v5607 = vpop.permute.xlu0 %5606
  %5608 = vrot.lane.b32.xlu0 %v4634, 96
  %v5609 = vpop.permute.xlu0 %5608
  %5610 = vrot.lane.b32.xlu0 %v4636, 96
  %v5611 = vpop.permute.xlu0 %5610
  %5612 = vrot.lane.b32.xlu0 %v4638, 96
  %v5613 = vpop.permute.xlu0 %5612
  %5614 = vrot.lane.b32.xlu0 %v4640, 96
  %v5615 = vpop.permute.xlu0 %5614
  %5616 = vrot.lane.b32.xlu0 %v4642, 96
  %v5617 = vpop.permute.xlu0 %5616
  %5618 = vrot.lane.b32.xlu0 %v4644, 96
  %v5619 = vpop.permute.xlu0 %5618
  %5620 = vrot.lane.b32.xlu0 %v4646, 96
  %v5621 = vpop.permute.xlu0 %5620
  %5622 = vrot.lane.b32.xlu0 %v4648, 96
  %v5623 = vpop.permute.xlu0 %5622
  %5624 = vrot.lane.b32.xlu0 %v4650, 96
  %v5625 = vpop.permute.xlu0 %5624
  %5626 = vrot.lane.b32.xlu0 %v4652, 96
  %v5627 = vpop.permute.xlu0 %5626
  %5628 = vrot.lane.b32.xlu0 %v4654, 96
  %v5629 = vpop.permute.xlu0 %5628
  %5630 = vrot.lane.b32.xlu0 %v4656, 96
  %v5631 = vpop.permute.xlu0 %5630
  %5632 = vrot.lane.b32.xlu0 %v4658, 96
  %v5633 = vpop.permute.xlu0 %5632
  %5634 = vrot.lane.b32.xlu0 %v4660, 96
  %v5635 = vpop.permute.xlu0 %5634
  %5636 = vrot.lane.b32.xlu0 %v4662, 96
  %v5637 = vpop.permute.xlu0 %5636
  %5638 = vrot.lane.b32.xlu0 %v4664, 96
  %v5639 = vpop.permute.xlu0 %5638
  %5640 = vrot.lane.b32.xlu0 %v4666, 96
  %v5641 = vpop.permute.xlu0 %5640
  %5642 = vrot.lane.b32.xlu0 %v4668, 96
  %v5643 = vpop.permute.xlu0 %5642
  %5644 = vrot.lane.b32.xlu0 %v4670, 96
  %v5645 = vpop.permute.xlu0 %5644
  %5646 = vrot.lane.b32.xlu0 %v4672, 96
  %v5647 = vpop.permute.xlu0 %5646
  %5648 = vrot.lane.b32.xlu0 %v4674, 96
  %v5649 = vpop.permute.xlu0 %5648
  %5650 = vrot.lane.b32.xlu0 %v4676, 96
  %v5651 = vpop.permute.xlu0 %5650
  %5652 = vrot.lane.b32.xlu0 %v4678, 96
  %v5653 = vpop.permute.xlu0 %5652
  %5654 = vrot.lane.b32.xlu0 %v4680, 96
  %v5655 = vpop.permute.xlu0 %5654
  %5656 = vrot.lane.b32.xlu0 %v4682, 96
  %v5657 = vpop.permute.xlu0 %5656
  %5658 = vrot.lane.b32.xlu0 %v4684, 96
  %v5659 = vpop.permute.xlu0 %5658
  %5660 = vrot.lane.b32.xlu0 %v4686, 96
  %v5661 = vpop.permute.xlu0 %5660
  %5662 = vrot.lane.b32.xlu0 %v4688, 96
  %v5663 = vpop.permute.xlu0 %5662
  %5664 = vrot.lane.b32.xlu0 %v4690, 96
  %v5665 = vpop.permute.xlu0 %5664
  %5666 = vrot.lane.b32.xlu0 %v4692, 96
  %v5667 = vpop.permute.xlu0 %5666
  %5668 = vrot.lane.b32.xlu0 %v4694, 96
  %v5669 = vpop.permute.xlu0 %5668
  %5670 = vrot.lane.b32.xlu0 %v4696, 96
  %v5671 = vpop.permute.xlu0 %5670
  %5672 = vrot.lane.b32.xlu0 %v4698, 96
  %v5673 = vpop.permute.xlu0 %5672
  %5674 = vrot.lane.b32.xlu0 %v4700, 96
  %v5675 = vpop.permute.xlu0 %5674
  %5676 = vrot.lane.b32.xlu0 %v4702, 96
  %v5677 = vpop.permute.xlu0 %5676
  %5678 = vrot.lane.b32.xlu0 %v4704, 96
  %v5679 = vpop.permute.xlu0 %5678
  %5680 = vrot.lane.b32.xlu0 %v4706, 96
  %v5681 = vpop.permute.xlu0 %5680
  %5682 = vrot.lane.b32.xlu0 %v4708, 96
  %v5683 = vpop.permute.xlu0 %5682
  %5684 = vrot.lane.b32.xlu0 %v4710, 96
  %v5685 = vpop.permute.xlu0 %5684
  %5686 = vrot.lane.b32.xlu0 %v4712, 96
  %v5687 = vpop.permute.xlu0 %5686
  %5688 = vrot.lane.b32.xlu0 %v4714, 96
  %v5689 = vpop.permute.xlu0 %5688
  %5690 = vrot.lane.b32.xlu0 %v4716, 96
  %v5691 = vpop.permute.xlu0 %5690
  %5692 = vrot.lane.b32.xlu0 %v4718, 96
  %v5693 = vpop.permute.xlu0 %5692
  %5694 = vrot.lane.b32.xlu0 %v4720, 96
  %v5695 = vpop.permute.xlu0 %5694
  %5696 = vrot.lane.b32.xlu0 %v4722, 96
  %v5697 = vpop.permute.xlu0 %5696
  %5698 = vrot.lane.b32.xlu0 %v4724, 96
  %v5699 = vpop.permute.xlu0 %5698
  %5700 = vrot.lane.b32.xlu0 %v4726, 96
  %v5701 = vpop.permute.xlu0 %5700
  %5702 = vrot.lane.b32.xlu0 %v4728, 96
  %v5703 = vpop.permute.xlu0 %5702
  %5704 = vrot.lane.b32.xlu0 %v4730, 96
  %v5705 = vpop.permute.xlu0 %5704
  %5706 = vrot.lane.b32.xlu0 %v4732, 96
  %v5707 = vpop.permute.xlu0 %5706
  %5708 = vrot.lane.b32.xlu0 %v4734, 96
  %v5709 = vpop.permute.xlu0 %5708
  %5710 = vrot.lane.b32.xlu0 %v4736, 96
  %v5711 = vpop.permute.xlu0 %5710
  %5712 = vrot.lane.b32.xlu0 %v4738, 96
  %v5713 = vpop.permute.xlu0 %5712
  %5714 = vrot.lane.b32.xlu0 %v4740, 96
  %v5715 = vpop.permute.xlu0 %5714
  %5716 = vrot.lane.b32.xlu0 %v4742, 96
  %v5717 = vpop.permute.xlu0 %5716
  %5718 = vrot.lane.b32.xlu0 %v4744, 96
  %v5719 = vpop.permute.xlu0 %5718
  %5720 = vrot.lane.b32.xlu0 %v4746, 96
  %v5721 = vpop.permute.xlu0 %5720
  %5722 = vrot.lane.b32.xlu0 %v4748, 96
  %v5723 = vpop.permute.xlu0 %5722
  %5724 = vrot.lane.b32.xlu0 %v4750, 96
  %v5725 = vpop.permute.xlu0 %5724
  %5726 = vrot.lane.b32.xlu0 %v4752, 96
  %v5727 = vpop.permute.xlu0 %5726
  %5728 = vrot.lane.b32.xlu0 %v4754, 96
  %v5729 = vpop.permute.xlu0 %5728
  %5730 = vrot.lane.b32.xlu0 %v4756, 96
  %v5731 = vpop.permute.xlu0 %5730
  %5732 = vrot.lane.b32.xlu0 %v4758, 96
  %v5733 = vpop.permute.xlu0 %5732
  %5734 = vrot.lane.b32.xlu0 %v4760, 96
  %v5735 = vpop.permute.xlu0 %5734
  %5736 = vrot.lane.b32.xlu0 %v4762, 96
  %v5737 = vpop.permute.xlu0 %5736
  %5738 = vrot.lane.b32.xlu0 %v4764, 96
  %v5739 = vpop.permute.xlu0 %5738
  %5740 = vrot.lane.b32.xlu0 %v4766, 96
  %v5741 = vpop.permute.xlu0 %5740
  %5742 = vrot.lane.b32.xlu0 %v4768, 96
  %v5743 = vpop.permute.xlu0 %5742
  %5744 = vrot.lane.b32.xlu0 %v4770, 96
  %v5745 = vpop.permute.xlu0 %5744
  %5746 = vrot.lane.b32.xlu0 %v4772, 96
  %v5747 = vpop.permute.xlu0 %5746
  %5748 = vrot.lane.b32.xlu0 %v4774, 96
  %v5749 = vpop.permute.xlu0 %5748
  %5750 = vrot.lane.b32.xlu0 %v4776, 96
  %v5751 = vpop.permute.xlu0 %5750
  %5752 = vrot.lane.b32.xlu0 %v4778, 96
  %v5753 = vpop.permute.xlu0 %5752
  %5754 = vrot.lane.b32.xlu0 %v4780, 96
  %v5755 = vpop.permute.xlu0 %5754
  %5756 = vrot.lane.b32.xlu0 %v4782, 96
  %v5757 = vpop.permute.xlu0 %5756
  %5758 = vrot.lane.b32.xlu0 %v4784, 96
  %v5759 = vpop.permute.xlu0 %5758
  %5760 = vrot.lane.b32.xlu0 %v4786, 96
  %v5761 = vpop.permute.xlu0 %5760
  %5762 = vrot.lane.b32.xlu0 %v4788, 96
  %v5763 = vpop.permute.xlu0 %5762
  %5764 = vrot.lane.b32.xlu0 %v4790, 96
  %v5765 = vpop.permute.xlu0 %5764
  %5766 = vrot.lane.b32.xlu0 %v4792, 96
  %v5767 = vpop.permute.xlu0 %5766
  %5768 = vrot.lane.b32.xlu0 %v4794, 96
  %v5769 = vpop.permute.xlu0 %5768
  %5770 = vrot.lane.b32.xlu0 %v4796, 96
  %v5771 = vpop.permute.xlu0 %5770
  %5772 = vrot.lane.b32.xlu0 %v4795, 96
  %v5773 = vpop.permute.xlu0 %5772
  %vm5871 = vcmask 1048320
  %5872 = vst.msk [vmem:[#allocation2] sm:$0xff] %vm5871, %v5581
  %5873 = vst.msk [vmem:[#allocation2 + $0x10] sm:$0xff] %vm5871, %v5583
  %5874 = vst.msk [vmem:[#allocation2 + $0x20] sm:$0xff] %vm5871, %v5585
  %5875 = vst.msk [vmem:[#allocation2 + $0x30] sm:$0xff] %vm5871, %v5587
  %5876 = vst.msk [vmem:[#allocation2 + $0x40] sm:$0xff] %vm5871, %v5589
  %5877 = vst.msk [vmem:[#allocation2 + $0x50] sm:$0xff] %vm5871, %v5591
  %5878 = vst.msk [vmem:[#allocation2 + $0x60] sm:$0xff] %vm5871, %v5593
  %5879 = vst.msk [vmem:[#allocation2 + $0x70] sm:$0xff] %vm5871, %v5595
  %5880 = vst.msk [vmem:[#allocation2 + $0x80] sm:$0xff] %vm5871, %v5597
  %5881 = vst.msk [vmem:[#allocation2 + $0x90] sm:$0xff] %vm5871, %v5599
  %5882 = vst.msk [vmem:[#allocation2 + $0xa0] sm:$0xff] %vm5871, %v5601
  %5883 = vst.msk [vmem:[#allocation2 + $0xb0] sm:$0xff] %vm5871, %v5603
  %5884 = vst.msk [vmem:[#allocation2 + $0xc0] sm:$0xff] %vm5871, %v5605
  %5885 = vst.msk [vmem:[#allocation2 + $0xd0] sm:$0xff] %vm5871, %v5607
  %5886 = vst.msk [vmem:[#allocation2 + $0xe0] sm:$0xff] %vm5871, %v5609
  %5887 = vst.msk [vmem:[#allocation2 + $0xf0] sm:$0xff] %vm5871, %v5611
  %5888 = vst.msk [vmem:[#allocation2 + $0x100] sm:$0xff] %vm5871, %v5613
  %5889 = vst.msk [vmem:[#allocation2 + $0x110] sm:$0xff] %vm5871, %v5615
  %5890 = vst.msk [vmem:[#allocation2 + $0x120] sm:$0xff] %vm5871, %v5617
  %5891 = vst.msk [vmem:[#allocation2 + $0x130] sm:$0xff] %vm5871, %v5619
  %5892 = vst.msk [vmem:[#allocation2 + $0x140] sm:$0xff] %vm5871, %v5621
  %5893 = vst.msk [vmem:[#allocation2 + $0x150] sm:$0xff] %vm5871, %v5623
  %5894 = vst.msk [vmem:[#allocation2 + $0x160] sm:$0xff] %vm5871, %v5625
  %5895 = vst.msk [vmem:[#allocation2 + $0x170] sm:$0xff] %vm5871, %v5627
  %5896 = vst.msk [vmem:[#allocation2 + $0x180] sm:$0xff] %vm5871, %v5629
  %5897 = vst.msk [vmem:[#allocation2 + $0x190] sm:$0xff] %vm5871, %v5631
  %5898 = vst.msk [vmem:[#allocation2 + $0x1a0] sm:$0xff] %vm5871, %v5633
  %5899 = vst.msk [vmem:[#allocation2 + $0x1b0] sm:$0xff] %vm5871, %v5635
  %5900 = vst.msk [vmem:[#allocation2 + $0x1c0] sm:$0xff] %vm5871, %v5637
  %5901 = vst.msk [vmem:[#allocation2 + $0x1d0] sm:$0xff] %vm5871, %v5639
  %5902 = vst.msk [vmem:[#allocation2 + $0x1e0] sm:$0xff] %vm5871, %v5641
  %5903 = vst.msk [vmem:[#allocation2 + $0x1f0] sm:$0xff] %vm5871, %v5643
  %5904 = vst.msk [vmem:[#allocation2 + $0x200] sm:$0xff] %vm5871, %v5645
  %5905 = vst.msk [vmem:[#allocation2 + $0x210] sm:$0xff] %vm5871, %v5647
  %5906 = vst.msk [vmem:[#allocation2 + $0x220] sm:$0xff] %vm5871, %v5649
  %5907 = vst.msk [vmem:[#allocation2 + $0x230] sm:$0xff] %vm5871, %v5651
  %5908 = vst.msk [vmem:[#allocation2 + $0x240] sm:$0xff] %vm5871, %v5653
  %5909 = vst.msk [vmem:[#allocation2 + $0x250] sm:$0xff] %vm5871, %v5655
  %5910 = vst.msk [vmem:[#allocation2 + $0x260] sm:$0xff] %vm5871, %v5657
  %5911 = vst.msk [vmem:[#allocation2 + $0x270] sm:$0xff] %vm5871, %v5659
  %5912 = vst.msk [vmem:[#allocation2 + $0x280] sm:$0xff] %vm5871, %v5661
  %5913 = vst.msk [vmem:[#allocation2 + $0x290] sm:$0xff] %vm5871, %v5663
  %5914 = vst.msk [vmem:[#allocation2 + $0x2a0] sm:$0xff] %vm5871, %v5665
  %5915 = vst.msk [vmem:[#allocation2 + $0x2b0] sm:$0xff] %vm5871, %v5667
  %5916 = vst.msk [vmem:[#allocation2 + $0x2c0] sm:$0xff] %vm5871, %v5669
  %5917 = vst.msk [vmem:[#allocation2 + $0x2d0] sm:$0xff] %vm5871, %v5671
  %5918 = vst.msk [vmem:[#allocation2 + $0x2e0] sm:$0xff] %vm5871, %v5673
  %5919 = vst.msk [vmem:[#allocation2 + $0x2f0] sm:$0xff] %vm5871, %v5675
  %5920 = vst.msk [vmem:[#allocation2 + $0x300] sm:$0xff] %vm5871, %v5677
  %5921 = vst.msk [vmem:[#allocation2 + $0x310] sm:$0xff] %vm5871, %v5679
  %5922 = vst.msk [vmem:[#allocation2 + $0x320] sm:$0xff] %vm5871, %v5681
  %5923 = vst.msk [vmem:[#allocation2 + $0x330] sm:$0xff] %vm5871, %v5683
  %5924 = vst.msk [vmem:[#allocation2 + $0x340] sm:$0xff] %vm5871, %v5685
  %5925 = vst.msk [vmem:[#allocation2 + $0x350] sm:$0xff] %vm5871, %v5687
  %5926 = vst.msk [vmem:[#allocation2 + $0x360] sm:$0xff] %vm5871, %v5689
  %5927 = vst.msk [vmem:[#allocation2 + $0x370] sm:$0xff] %vm5871, %v5691
  %5928 = vst.msk [vmem:[#allocation2 + $0x380] sm:$0xff] %vm5871, %v5693
  %5929 = vst.msk [vmem:[#allocation2 + $0x390] sm:$0xff] %vm5871, %v5695
  %5930 = vst.msk [vmem:[#allocation2 + $0x3a0] sm:$0xff] %vm5871, %v5697
  %5931 = vst.msk [vmem:[#allocation2 + $0x3b0] sm:$0xff] %vm5871, %v5699
  %5932 = vst.msk [vmem:[#allocation2 + $0x3c0] sm:$0xff] %vm5871, %v5701
  %5933 = vst.msk [vmem:[#allocation2 + $0x3d0] sm:$0xff] %vm5871, %v5703
  %5934 = vst.msk [vmem:[#allocation2 + $0x3e0] sm:$0xff] %vm5871, %v5705
  %5935 = vst.msk [vmem:[#allocation2 + $0x3f0] sm:$0xff] %vm5871, %v5707
  %5936 = vst.msk [vmem:[#allocation2 + $0x400] sm:$0xff] %vm5871, %v5709
  %5937 = vst.msk [vmem:[#allocation2 + $0x410] sm:$0xff] %vm5871, %v5711
  %5938 = vst.msk [vmem:[#allocation2 + $0x420] sm:$0xff] %vm5871, %v5713
  %5939 = vst.msk [vmem:[#allocation2 + $0x430] sm:$0xff] %vm5871, %v5715
  %5940 = vst.msk [vmem:[#allocation2 + $0x440] sm:$0xff] %vm5871, %v5717
  %5941 = vst.msk [vmem:[#allocation2 + $0x450] sm:$0xff] %vm5871, %v5719
  %5942 = vst.msk [vmem:[#allocation2 + $0x460] sm:$0xff] %vm5871, %v5721
  %5943 = vst.msk [vmem:[#allocation2 + $0x470] sm:$0xff] %vm5871, %v5723
  %5944 = vst.msk [vmem:[#allocation2 + $0x480] sm:$0xff] %vm5871, %v5725
  %5945 = vst.msk [vmem:[#allocation2 + $0x490] sm:$0xff] %vm5871, %v5727
  %5946 = vst.msk [vmem:[#allocation2 + $0x4a0] sm:$0xff] %vm5871, %v5729
  %5947 = vst.msk [vmem:[#allocation2 + $0x4b0] sm:$0xff] %vm5871, %v5731
  %5948 = vst.msk [vmem:[#allocation2 + $0x4c0] sm:$0xff] %vm5871, %v5733
  %5949 = vst.msk [vmem:[#allocation2 + $0x4d0] sm:$0xff] %vm5871, %v5735
  %5950 = vst.msk [vmem:[#allocation2 + $0x4e0] sm:$0xff] %vm5871, %v5737
  %5951 = vst.msk [vmem:[#allocation2 + $0x4f0] sm:$0xff] %vm5871, %v5739
  %5952 = vst.msk [vmem:[#allocation2 + $0x500] sm:$0xff] %vm5871, %v5741
  %5953 = vst.msk [vmem:[#allocation2 + $0x510] sm:$0xff] %vm5871, %v5743
  %5954 = vst.msk [vmem:[#allocation2 + $0x520] sm:$0xff] %vm5871, %v5745
  %5955 = vst.msk [vmem:[#allocation2 + $0x530] sm:$0xff] %vm5871, %v5747
  %5956 = vst.msk [vmem:[#allocation2 + $0x540] sm:$0xff] %vm5871, %v5749
  %5957 = vst.msk [vmem:[#allocation2 + $0x550] sm:$0xff] %vm5871, %v5751
  %5958 = vst.msk [vmem:[#allocation2 + $0x560] sm:$0xff] %vm5871, %v5753
  %5959 = vst.msk [vmem:[#allocation2 + $0x570] sm:$0xff] %vm5871, %v5755
  %5960 = vst.msk [vmem:[#allocation2 + $0x580] sm:$0xff] %vm5871, %v5757
  %5961 = vst.msk [vmem:[#allocation2 + $0x590] sm:$0xff] %vm5871, %v5759
  %5962 = vst.msk [vmem:[#allocation2 + $0x5a0] sm:$0xff] %vm5871, %v5761
  %5963 = vst.msk [vmem:[#allocation2 + $0x5b0] sm:$0xff] %vm5871, %v5763
  %5964 = vst.msk [vmem:[#allocation2 + $0x5c0] sm:$0xff] %vm5871, %v5765
  %5965 = vst.msk [vmem:[#allocation2 + $0x5d0] sm:$0xff] %vm5871, %v5767
  %5966 = vst.msk [vmem:[#allocation2 + $0x5e0] sm:$0xff] %vm5871, %v5769
  %5967 = vst.msk [vmem:[#allocation2 + $0x5f0] sm:$0xff] %vm5871, %v5771
  %vm5968 = vcmask 1044224
  %5969 = vst.msk [vmem:[#allocation2 + $0x600] sm:$0xf] %vm5968, %v5773
  %5970 = vst.msk [vmem:[#allocation2 + $0x8] sm:$0xff] %vm4345, %v4248
  %5971 = vst.msk [vmem:[#allocation2 + $0x18] sm:$0xff] %vm4345, %v4249
  %5972 = vst.msk [vmem:[#allocation2 + $0x28] sm:$0xff] %vm4345, %v4250
  %5973 = vst.msk [vmem:[#allocation2 + $0x38] sm:$0xff] %vm4345, %v4251
  %5974 = vst.msk [vmem:[#allocation2 + $0x48] sm:$0xff] %vm4345, %v4252
  %5975 = vst.msk [vmem:[#allocation2 + $0x58] sm:$0xff] %vm4345, %v4253
  %5976 = vst.msk [vmem:[#allocation2 + $0x68] sm:$0xff] %vm4345, %v4254
  %5977 = vst.msk [vmem:[#allocation2 + $0x78] sm:$0xff] %vm4345, %v4255
  %5978 = vst.msk [vmem:[#allocation2 + $0x88] sm:$0xff] %vm4345, %v4256
  %5979 = vst.msk [vmem:[#allocation2 + $0x98] sm:$0xff] %vm4345, %v4257
  %5980 = vst.msk [vmem:[#allocation2 + $0xa8] sm:$0xff] %vm4345, %v4258
  %5981 = vst.msk [vmem:[#allocation2 + $0xb8] sm:$0xff] %vm4345, %v4259
  %5982 = vst.msk [vmem:[#allocation2 + $0xc8] sm:$0xff] %vm4345, %v4260
  %5983 = vst.msk [vmem:[#allocation2 + $0xd8] sm:$0xff] %vm4345, %v4261
  %5984 = vst.msk [vmem:[#allocation2 + $0xe8] sm:$0xff] %vm4345, %v4262
  %5985 = vst.msk [vmem:[#allocation2 + $0xf8] sm:$0xff] %vm4345, %v4263
  %5986 = vst.msk [vmem:[#allocation2 + $0x108] sm:$0xff] %vm4345, %v4264
  %5987 = vst.msk [vmem:[#allocation2 + $0x118] sm:$0xff] %vm4345, %v4265
  %5988 = vst.msk [vmem:[#allocation2 + $0x128] sm:$0xff] %vm4345, %v4266
  %5989 = vst.msk [vmem:[#allocation2 + $0x138] sm:$0xff] %vm4345, %v4267
  %5990 = vst.msk [vmem:[#allocation2 + $0x148] sm:$0xff] %vm4345, %v4268
  %5991 = vst.msk [vmem:[#allocation2 + $0x158] sm:$0xff] %vm4345, %v4269
  %5992 = vst.msk [vmem:[#allocation2 + $0x168] sm:$0xff] %vm4345, %v4270
  %5993 = vst.msk [vmem:[#allocation2 + $0x178] sm:$0xff] %vm4345, %v4271
  %5994 = vst.msk [vmem:[#allocation2 + $0x188] sm:$0xff] %vm4345, %v4272
  %5995 = vst.msk [vmem:[#allocation2 + $0x198] sm:$0xff] %vm4345, %v4273
  %5996 = vst.msk [vmem:[#allocation2 + $0x1a8] sm:$0xff] %vm4345, %v4274
  %5997 = vst.msk [vmem:[#allocation2 + $0x1b8] sm:$0xff] %vm4345, %v4275
  %5998 = vst.msk [vmem:[#allocation2 + $0x1c8] sm:$0xff] %vm4345, %v4276
  %5999 = vst.msk [vmem:[#allocation2 + $0x1d8] sm:$0xff] %vm4345, %v4277
  %6000 = vst.msk [vmem:[#allocation2 + $0x1e8] sm:$0xff] %vm4345, %v4278
  %6001 = vst.msk [vmem:[#allocation2 + $0x1f8] sm:$0xff] %vm4345, %v4279
  %6002 = vst.msk [vmem:[#allocation2 + $0x208] sm:$0xff] %vm4345, %v4280
  %6003 = vst.msk [vmem:[#allocation2 + $0x218] sm:$0xff] %vm4345, %v4281
  %6004 = vst.msk [vmem:[#allocation2 + $0x228] sm:$0xff] %vm4345, %v4282
  %6005 = vst.msk [vmem:[#allocation2 + $0x238] sm:$0xff] %vm4345, %v4283
  %6006 = vst.msk [vmem:[#allocation2 + $0x248] sm:$0xff] %vm4345, %v4284
  %6007 = vst.msk [vmem:[#allocation2 + $0x258] sm:$0xff] %vm4345, %v4285
  %6008 = vst.msk [vmem:[#allocation2 + $0x268] sm:$0xff] %vm4345, %v4286
  %6009 = vst.msk [vmem:[#allocation2 + $0x278] sm:$0xff] %vm4345, %v4287
  %6010 = vst.msk [vmem:[#allocation2 + $0x288] sm:$0xff] %vm4345, %v4288
  %6011 = vst.msk [vmem:[#allocation2 + $0x298] sm:$0xff] %vm4345, %v4289
  %6012 = vst.msk [vmem:[#allocation2 + $0x2a8] sm:$0xff] %vm4345, %v4290
  %6013 = vst.msk [vmem:[#allocation2 + $0x2b8] sm:$0xff] %vm4345, %v4291
  %6014 = vst.msk [vmem:[#allocation2 + $0x2c8] sm:$0xff] %vm4345, %v4292
  %6015 = vst.msk [vmem:[#allocation2 + $0x2d8] sm:$0xff] %vm4345, %v4293
  %6016 = vst.msk [vmem:[#allocation2 + $0x2e8] sm:$0xff] %vm4345, %v4294
  %6017 = vst.msk [vmem:[#allocation2 + $0x2f8] sm:$0xff] %vm4345, %v4295
  %6018 = vst.msk [vmem:[#allocation2 + $0x308] sm:$0xff] %vm4345, %v4296
  %6019 = vst.msk [vmem:[#allocation2 + $0x318] sm:$0xff] %vm4345, %v4297
  %6020 = vst.msk [vmem:[#allocation2 + $0x328] sm:$0xff] %vm4345, %v4298
  %6021 = vst.msk [vmem:[#allocation2 + $0x338] sm:$0xff] %vm4345, %v4299
  %6022 = vst.msk [vmem:[#allocation2 + $0x348] sm:$0xff] %vm4345, %v4300
  %6023 = vst.msk [vmem:[#allocation2 + $0x358] sm:$0xff] %vm4345, %v4301
  %6024 = vst.msk [vmem:[#allocation2 + $0x368] sm:$0xff] %vm4345, %v4302
  %6025 = vst.msk [vmem:[#allocation2 + $0x378] sm:$0xff] %vm4345, %v4303
  %6026 = vst.msk [vmem:[#allocation2 + $0x388] sm:$0xff] %vm4345, %v4304
  %6027 = vst.msk [vmem:[#allocation2 + $0x398] sm:$0xff] %vm4345, %v4305
  %6028 = vst.msk [vmem:[#allocation2 + $0x3a8] sm:$0xff] %vm4345, %v4306
  %6029 = vst.msk [vmem:[#allocation2 + $0x3b8] sm:$0xff] %vm4345, %v4307
  %6030 = vst.msk [vmem:[#allocation2 + $0x3c8] sm:$0xff] %vm4345, %v4308
  %6031 = vst.msk [vmem:[#allocation2 + $0x3d8] sm:$0xff] %vm4345, %v4309
  %6032 = vst.msk [vmem:[#allocation2 + $0x3e8] sm:$0xff] %vm4345, %v4310
  %6033 = vst.msk [vmem:[#allocation2 + $0x3f8] sm:$0xff] %vm4345, %v4311
  %6034 = vst.msk [vmem:[#allocation2 + $0x408] sm:$0xff] %vm4345, %v4312
  %6035 = vst.msk [vmem:[#allocation2 + $0x418] sm:$0xff] %vm4345, %v4313
  %6036 = vst.msk [vmem:[#allocation2 + $0x428] sm:$0xff] %vm4345, %v4314
  %6037 = vst.msk [vmem:[#allocation2 + $0x438] sm:$0xff] %vm4345, %v4315
  %6038 = vst.msk [vmem:[#allocation2 + $0x448] sm:$0xff] %vm4345, %v4316
  %6039 = vst.msk [vmem:[#allocation2 + $0x458] sm:$0xff] %vm4345, %v4317
  %6040 = vst.msk [vmem:[#allocation2 + $0x468] sm:$0xff] %vm4345, %v4318
  %6041 = vst.msk [vmem:[#allocation2 + $0x478] sm:$0xff] %vm4345, %v4319
  %6042 = vst.msk [vmem:[#allocation2 + $0x488] sm:$0xff] %vm4345, %v4320
  %6043 = vst.msk [vmem:[#allocation2 + $0x498] sm:$0xff] %vm4345, %v4321
  %6044 = vst.msk [vmem:[#allocation2 + $0x4a8] sm:$0xff] %vm4345, %v4322
  %6045 = vst.msk [vmem:[#allocation2 + $0x4b8] sm:$0xff] %vm4345, %v4323
  %6046 = vst.msk [vmem:[#allocation2 + $0x4c8] sm:$0xff] %vm4345, %v4324
  %6047 = vst.msk [vmem:[#allocation2 + $0x4d8] sm:$0xff] %vm4345, %v4325
  %6048 = vst.msk [vmem:[#allocation2 + $0x4e8] sm:$0xff] %vm4345, %v4326
  %6049 = vst.msk [vmem:[#allocation2 + $0x4f8] sm:$0xff] %vm4345, %v4327
  %6050 = vst.msk [vmem:[#allocation2 + $0x508] sm:$0xff] %vm4345, %v4328
  %6051 = vst.msk [vmem:[#allocation2 + $0x518] sm:$0xff] %vm4345, %v4329
  %6052 = vst.msk [vmem:[#allocation2 + $0x528] sm:$0xff] %vm4345, %v4330
  %6053 = vst.msk [vmem:[#allocation2 + $0x538] sm:$0xff] %vm4345, %v4331
  %6054 = vst.msk [vmem:[#allocation2 + $0x548] sm:$0xff] %vm4345, %v4332
  %6055 = vst.msk [vmem:[#allocation2 + $0x558] sm:$0xff] %vm4345, %v4333
  %6056 = vst.msk [vmem:[#allocation2 + $0x568] sm:$0xff] %vm4345, %v4334
  %6057 = vst.msk [vmem:[#allocation2 + $0x578] sm:$0xff] %vm4345, %v4335
  %6058 = vst.msk [vmem:[#allocation2 + $0x588] sm:$0xff] %vm4345, %v4336
  %6059 = vst.msk [vmem:[#allocation2 + $0x598] sm:$0xff] %vm4345, %v4337
  %6060 = vst.msk [vmem:[#allocation2 + $0x5a8] sm:$0xff] %vm4345, %v4338
  %6061 = vst.msk [vmem:[#allocation2 + $0x5b8] sm:$0xff] %vm4345, %v4339
  %6062 = vst.msk [vmem:[#allocation2 + $0x5c8] sm:$0xff] %vm4345, %v4340
  %6063 = vst.msk [vmem:[#allocation2 + $0x5d8] sm:$0xff] %vm4345, %v4341
  %6064 = vst.msk [vmem:[#allocation2 + $0x5e8] sm:$0xff] %vm4345, %v4342
  %6065 = vst.msk [vmem:[#allocation2 + $0x5f8] sm:$0xff] %vm4345, %v4343
  %v6066 = vld [vmem:[#allocation2] sm:$0xff]
  %v6067 = vld [vmem:[#allocation2 + $0x8] sm:$0xff]
  %v6068 = vld [vmem:[#allocation2 + $0x10] sm:$0xff]
  %v6069 = vld [vmem:[#allocation2 + $0x18] sm:$0xff]
  %v6070 = vld [vmem:[#allocation2 + $0x20] sm:$0xff]
  %v6071 = vld [vmem:[#allocation2 + $0x28] sm:$0xff]
  %v6072 = vld [vmem:[#allocation2 + $0x30] sm:$0xff]
  %v6073 = vld [vmem:[#allocation2 + $0x38] sm:$0xff]
  %v6074 = vld [vmem:[#allocation2 + $0x40] sm:$0xff]
  %v6075 = vld [vmem:[#allocation2 + $0x48] sm:$0xff]
  %v6076 = vld [vmem:[#allocation2 + $0x50] sm:$0xff]
  %v6077 = vld [vmem:[#allocation2 + $0x58] sm:$0xff]
  %v6078 = vld [vmem:[#allocation2 + $0x60] sm:$0xff]
  %v6079 = vld [vmem:[#allocation2 + $0x68] sm:$0xff]
  %v6080 = vld [vmem:[#allocation2 + $0x70] sm:$0xff]
  %v6081 = vld [vmem:[#allocation2 + $0x78] sm:$0xff]
  %v6082 = vld [vmem:[#allocation2 + $0x80] sm:$0xff]
  %v6083 = vld [vmem:[#allocation2 + $0x88] sm:$0xff]
  %v6084 = vld [vmem:[#allocation2 + $0x90] sm:$0xff]
  %v6085 = vld [vmem:[#allocation2 + $0x98] sm:$0xff]
  %v6086 = vld [vmem:[#allocation2 + $0xa0] sm:$0xff]
  %v6087 = vld [vmem:[#allocation2 + $0xa8] sm:$0xff]
  %v6088 = vld [vmem:[#allocation2 + $0xb0] sm:$0xff]
  %v6089 = vld [vmem:[#allocation2 + $0xb8] sm:$0xff]
  %v6090 = vld [vmem:[#allocation2 + $0xc0] sm:$0xff]
  %v6091 = vld [vmem:[#allocation2 + $0xc8] sm:$0xff]
  %v6092 = vld [vmem:[#allocation2 + $0xd0] sm:$0xff]
  %v6093 = vld [vmem:[#allocation2 + $0xd8] sm:$0xff]
  %v6094 = vld [vmem:[#allocation2 + $0xe0] sm:$0xff]
  %v6095 = vld [vmem:[#allocation2 + $0xe8] sm:$0xff]
  %v6096 = vld [vmem:[#allocation2 + $0xf0] sm:$0xff]
  %v6097 = vld [vmem:[#allocation2 + $0xf8] sm:$0xff]
  %v6098 = vld [vmem:[#allocation2 + $0x100] sm:$0xff]
  %v6099 = vld [vmem:[#allocation2 + $0x108] sm:$0xff]
  %v6100 = vld [vmem:[#allocation2 + $0x110] sm:$0xff]
  %v6101 = vld [vmem:[#allocation2 + $0x118] sm:$0xff]
  %v6102 = vld [vmem:[#allocation2 + $0x120] sm:$0xff]
  %v6103 = vld [vmem:[#allocation2 + $0x128] sm:$0xff]
  %v6104 = vld [vmem:[#allocation2 + $0x130] sm:$0xff]
  %v6105 = vld [vmem:[#allocation2 + $0x138] sm:$0xff]
  %v6106 = vld [vmem:[#allocation2 + $0x140] sm:$0xff]
  %v6107 = vld [vmem:[#allocation2 + $0x148] sm:$0xff]
  %v6108 = vld [vmem:[#allocation2 + $0x150] sm:$0xff]
  %v6109 = vld [vmem:[#allocation2 + $0x158] sm:$0xff]
  %v6110 = vld [vmem:[#allocation2 + $0x160] sm:$0xff]
  %v6111 = vld [vmem:[#allocation2 + $0x168] sm:$0xff]
  %v6112 = vld [vmem:[#allocation2 + $0x170] sm:$0xff]
  %v6113 = vld [vmem:[#allocation2 + $0x178] sm:$0xff]
  %v6114 = vld [vmem:[#allocation2 + $0x180] sm:$0xff]
  %v6115 = vld [vmem:[#allocation2 + $0x188] sm:$0xff]
  %v6116 = vld [vmem:[#allocation2 + $0x190] sm:$0xff]
  %v6117 = vld [vmem:[#allocation2 + $0x198] sm:$0xff]
  %v6118 = vld [vmem:[#allocation2 + $0x1a0] sm:$0xff]
  %v6119 = vld [vmem:[#allocation2 + $0x1a8] sm:$0xff]
  %v6120 = vld [vmem:[#allocation2 + $0x1b0] sm:$0xff]
  %v6121 = vld [vmem:[#allocation2 + $0x1b8] sm:$0xff]
  %v6122 = vld [vmem:[#allocation2 + $0x1c0] sm:$0xff]
  %v6123 = vld [vmem:[#allocation2 + $0x1c8] sm:$0xff]
  %v6124 = vld [vmem:[#allocation2 + $0x1d0] sm:$0xff]
  %v6125 = vld [vmem:[#allocation2 + $0x1d8] sm:$0xff]
  %v6126 = vld [vmem:[#allocation2 + $0x1e0] sm:$0xff]
  %v6127 = vld [vmem:[#allocation2 + $0x1e8] sm:$0xff]
  %v6128 = vld [vmem:[#allocation2 + $0x1f0] sm:$0xff]
  %v6129 = vld [vmem:[#allocation2 + $0x1f8] sm:$0xff]
  %v6130 = vld [vmem:[#allocation2 + $0x200] sm:$0xff]
  %v6131 = vld [vmem:[#allocation2 + $0x208] sm:$0xff]
  %v6132 = vld [vmem:[#allocation2 + $0x210] sm:$0xff]
  %v6133 = vld [vmem:[#allocation2 + $0x218] sm:$0xff]
  %v6134 = vld [vmem:[#allocation2 + $0x220] sm:$0xff]
  %v6135 = vld [vmem:[#allocation2 + $0x228] sm:$0xff]
  %v6136 = vld [vmem:[#allocation2 + $0x230] sm:$0xff]
  %v6137 = vld [vmem:[#allocation2 + $0x238] sm:$0xff]
  %v6138 = vld [vmem:[#allocation2 + $0x240] sm:$0xff]
  %v6139 = vld [vmem:[#allocation2 + $0x248] sm:$0xff]
  %v6140 = vld [vmem:[#allocation2 + $0x250] sm:$0xff]
  %v6141 = vld [vmem:[#allocation2 + $0x258] sm:$0xff]
  %v6142 = vld [vmem:[#allocation2 + $0x260] sm:$0xff]
  %v6143 = vld [vmem:[#allocation2 + $0x268] sm:$0xff]
  %v6144 = vld [vmem:[#allocation2 + $0x270] sm:$0xff]
  %v6145 = vld [vmem:[#allocation2 + $0x278] sm:$0xff]
  %v6146 = vld [vmem:[#allocation2 + $0x280] sm:$0xff]
  %v6147 = vld [vmem:[#allocation2 + $0x288] sm:$0xff]
  %v6148 = vld [vmem:[#allocation2 + $0x290] sm:$0xff]
  %v6149 = vld [vmem:[#allocation2 + $0x298] sm:$0xff]
  %v6150 = vld [vmem:[#allocation2 + $0x2a0] sm:$0xff]
  %v6151 = vld [vmem:[#allocation2 + $0x2a8] sm:$0xff]
  %v6152 = vld [vmem:[#allocation2 + $0x2b0] sm:$0xff]
  %v6153 = vld [vmem:[#allocation2 + $0x2b8] sm:$0xff]
  %v6154 = vld [vmem:[#allocation2 + $0x2c0] sm:$0xff]
  %v6155 = vld [vmem:[#allocation2 + $0x2c8] sm:$0xff]
  %v6156 = vld [vmem:[#allocation2 + $0x2d0] sm:$0xff]
  %v6157 = vld [vmem:[#allocation2 + $0x2d8] sm:$0xff]
  %v6158 = vld [vmem:[#allocation2 + $0x2e0] sm:$0xff]
  %v6159 = vld [vmem:[#allocation2 + $0x2e8] sm:$0xff]
  %v6160 = vld [vmem:[#allocation2 + $0x2f0] sm:$0xff]
  %v6161 = vld [vmem:[#allocation2 + $0x2f8] sm:$0xff]
  %v6162 = vld [vmem:[#allocation2 + $0x300] sm:$0xff]
  %v6163 = vld [vmem:[#allocation2 + $0x308] sm:$0xff]
  %v6164 = vld [vmem:[#allocation2 + $0x310] sm:$0xff]
  %v6165 = vld [vmem:[#allocation2 + $0x318] sm:$0xff]
  %v6166 = vld [vmem:[#allocation2 + $0x320] sm:$0xff]
  %v6167 = vld [vmem:[#allocation2 + $0x328] sm:$0xff]
  %v6168 = vld [vmem:[#allocation2 + $0x330] sm:$0xff]
  %v6169 = vld [vmem:[#allocation2 + $0x338] sm:$0xff]
  %v6170 = vld [vmem:[#allocation2 + $0x340] sm:$0xff]
  %v6171 = vld [vmem:[#allocation2 + $0x348] sm:$0xff]
  %v6172 = vld [vmem:[#allocation2 + $0x350] sm:$0xff]
  %v6173 = vld [vmem:[#allocation2 + $0x358] sm:$0xff]
  %v6174 = vld [vmem:[#allocation2 + $0x360] sm:$0xff]
  %v6175 = vld [vmem:[#allocation2 + $0x368] sm:$0xff]
  %v6176 = vld [vmem:[#allocation2 + $0x370] sm:$0xff]
  %v6177 = vld [vmem:[#allocation2 + $0x378] sm:$0xff]
  %v6178 = vld [vmem:[#allocation2 + $0x380] sm:$0xff]
  %v6179 = vld [vmem:[#allocation2 + $0x388] sm:$0xff]
  %v6180 = vld [vmem:[#allocation2 + $0x390] sm:$0xff]
  %v6181 = vld [vmem:[#allocation2 + $0x398] sm:$0xff]
  %v6182 = vld [vmem:[#allocation2 + $0x3a0] sm:$0xff]
  %v6183 = vld [vmem:[#allocation2 + $0x3a8] sm:$0xff]
  %v6184 = vld [vmem:[#allocation2 + $0x3b0] sm:$0xff]
  %v6185 = vld [vmem:[#allocation2 + $0x3b8] sm:$0xff]
  %v6186 = vld [vmem:[#allocation2 + $0x3c0] sm:$0xff]
  %v6187 = vld [vmem:[#allocation2 + $0x3c8] sm:$0xff]
  %v6188 = vld [vmem:[#allocation2 + $0x3d0] sm:$0xff]
  %v6189 = vld [vmem:[#allocation2 + $0x3d8] sm:$0xff]
  %v6190 = vld [vmem:[#allocation2 + $0x3e0] sm:$0xff]
  %v6191 = vld [vmem:[#allocation2 + $0x3e8] sm:$0xff]
  %v6192 = vld [vmem:[#allocation2 + $0x3f0] sm:$0xff]
  %v6193 = vld [vmem:[#allocation2 + $0x3f8] sm:$0xff]
  %v6194 = vld [vmem:[#allocation2 + $0x400] sm:$0xff]
  %v6195 = vld [vmem:[#allocation2 + $0x408] sm:$0xff]
  %v6196 = vld [vmem:[#allocation2 + $0x410] sm:$0xff]
  %v6197 = vld [vmem:[#allocation2 + $0x418] sm:$0xff]
  %v6198 = vld [vmem:[#allocation2 + $0x420] sm:$0xff]
  %v6199 = vld [vmem:[#allocation2 + $0x428] sm:$0xff]
  %v6200 = vld [vmem:[#allocation2 + $0x430] sm:$0xff]
  %v6201 = vld [vmem:[#allocation2 + $0x438] sm:$0xff]
  %v6202 = vld [vmem:[#allocation2 + $0x440] sm:$0xff]
  %v6203 = vld [vmem:[#allocation2 + $0x448] sm:$0xff]
  %v6204 = vld [vmem:[#allocation2 + $0x450] sm:$0xff]
  %v6205 = vld [vmem:[#allocation2 + $0x458] sm:$0xff]
  %v6206 = vld [vmem:[#allocation2 + $0x460] sm:$0xff]
  %v6207 = vld [vmem:[#allocation2 + $0x468] sm:$0xff]
  %v6208 = vld [vmem:[#allocation2 + $0x470] sm:$0xff]
  %v6209 = vld [vmem:[#allocation2 + $0x478] sm:$0xff]
  %v6210 = vld [vmem:[#allocation2 + $0x480] sm:$0xff]
  %v6211 = vld [vmem:[#allocation2 + $0x488] sm:$0xff]
  %v6212 = vld [vmem:[#allocation2 + $0x490] sm:$0xff]
  %v6213 = vld [vmem:[#allocation2 + $0x498] sm:$0xff]
  %v6214 = vld [vmem:[#allocation2 + $0x4a0] sm:$0xff]
  %v6215 = vld [vmem:[#allocation2 + $0x4a8] sm:$0xff]
  %v6216 = vld [vmem:[#allocation2 + $0x4b0] sm:$0xff]
  %v6217 = vld [vmem:[#allocation2 + $0x4b8] sm:$0xff]
  %v6218 = vld [vmem:[#allocation2 + $0x4c0] sm:$0xff]
  %v6219 = vld [vmem:[#allocation2 + $0x4c8] sm:$0xff]
  %v6220 = vld [vmem:[#allocation2 + $0x4d0] sm:$0xff]
  %v6221 = vld [vmem:[#allocation2 + $0x4d8] sm:$0xff]
  %v6222 = vld [vmem:[#allocation2 + $0x4e0] sm:$0xff]
  %v6223 = vld [vmem:[#allocation2 + $0x4e8] sm:$0xff]
  %v6224 = vld [vmem:[#allocation2 + $0x4f0] sm:$0xff]
  %v6225 = vld [vmem:[#allocation2 + $0x4f8] sm:$0xff]
  %v6226 = vld [vmem:[#allocation2 + $0x500] sm:$0xff]
  %v6227 = vld [vmem:[#allocation2 + $0x508] sm:$0xff]
  %v6228 = vld [vmem:[#allocation2 + $0x510] sm:$0xff]
  %v6229 = vld [vmem:[#allocation2 + $0x518] sm:$0xff]
  %v6230 = vld [vmem:[#allocation2 + $0x520] sm:$0xff]
  %v6231 = vld [vmem:[#allocation2 + $0x528] sm:$0xff]
  %v6232 = vld [vmem:[#allocation2 + $0x530] sm:$0xff]
  %v6233 = vld [vmem:[#allocation2 + $0x538] sm:$0xff]
  %v6234 = vld [vmem:[#allocation2 + $0x540] sm:$0xff]
  %v6235 = vld [vmem:[#allocation2 + $0x548] sm:$0xff]
  %v6236 = vld [vmem:[#allocation2 + $0x550] sm:$0xff]
  %v6237 = vld [vmem:[#allocation2 + $0x558] sm:$0xff]
  %v6238 = vld [vmem:[#allocation2 + $0x560] sm:$0xff]
  %v6239 = vld [vmem:[#allocation2 + $0x568] sm:$0xff]
  %v6240 = vld [vmem:[#allocation2 + $0x570] sm:$0xff]
  %v6241 = vld [vmem:[#allocation2 + $0x578] sm:$0xff]
  %v6242 = vld [vmem:[#allocation2 + $0x580] sm:$0xff]
  %v6243 = vld [vmem:[#allocation2 + $0x588] sm:$0xff]
  %v6244 = vld [vmem:[#allocation2 + $0x590] sm:$0xff]
  %v6245 = vld [vmem:[#allocation2 + $0x598] sm:$0xff]
  %v6246 = vld [vmem:[#allocation2 + $0x5a0] sm:$0xff]
  %v6247 = vld [vmem:[#allocation2 + $0x5a8] sm:$0xff]
  %v6248 = vld [vmem:[#allocation2 + $0x5b0] sm:$0xff]
  %v6249 = vld [vmem:[#allocation2 + $0x5b8] sm:$0xff]
  %v6250 = vld [vmem:[#allocation2 + $0x5c0] sm:$0xff]
  %v6251 = vld [vmem:[#allocation2 + $0x5c8] sm:$0xff]
  %v6252 = vld [vmem:[#allocation2 + $0x5d0] sm:$0xff]
  %v6253 = vld [vmem:[#allocation2 + $0x5d8] sm:$0xff]
  %v6254 = vld [vmem:[#allocation2 + $0x5e0] sm:$0xff]
  %v6255 = vld [vmem:[#allocation2 + $0x5e8] sm:$0xff]
  %v6256 = vld [vmem:[#allocation2 + $0x5f0] sm:$0xff]
  %v6257 = vld [vmem:[#allocation2 + $0x5f8] sm:$0xff]
  %v6258 = vld [vmem:[#allocation2 + $0x600] sm:$0xff]
  %v6259 = vld [vmem:[#allocation2 + $0x608] sm:$0xff]
  %v6260 = vld [vmem:[#allocation2 + $0x610] sm:$0xff]
  %v6261 = vld [vmem:[#allocation2 + $0x618] sm:$0xff]
  %v6262 = vld [vmem:[%s3] sm:$0xf]
  %v6263 = vld [vmem:[%s3 + $0x4] sm:$0xf]
  %v6264 = vld [vmem:[%s3 + $0x8] sm:$0xf]
  %v6265 = vld [vmem:[%s3 + $0xc] sm:$0xf]
  %v6266 = vld [vmem:[%s3 + $0x10] sm:$0xf]
  %v6267 = vld [vmem:[%s3 + $0x14] sm:$0xf]
  %v6268 = vld [vmem:[%s3 + $0x18] sm:$0xf]
  %v6269 = vld [vmem:[%s3 + $0x1c] sm:$0xf]
  %v6270 = vld [vmem:[%s3 + $0x20] sm:$0xf]
  %v6271 = vld [vmem:[%s3 + $0x24] sm:$0xf]
  %v6272 = vld [vmem:[%s3 + $0x28] sm:$0xf]
  %v6273 = vld [vmem:[%s3 + $0x2c] sm:$0xf]
  %v6274 = vld [vmem:[%s3 + $0x30] sm:$0xf]
  %v6275 = vld [vmem:[%s3 + $0x34] sm:$0xf]
  %v6276 = vld [vmem:[%s3 + $0x38] sm:$0xf]
  %v6277 = vld [vmem:[%s3 + $0x3c] sm:$0xf]
  %v6278 = vld [vmem:[%s3 + $0x40] sm:$0xf]
  %v6279 = vld [vmem:[%s3 + $0x44] sm:$0xf]
  %v6280 = vld [vmem:[%s3 + $0x48] sm:$0xf]
  %v6281 = vld [vmem:[%s3 + $0x4c] sm:$0xf]
  %v6282 = vld [vmem:[#allocation2 + $0x620] sm:$0xff]
  %v6283 = vld [vmem:[#allocation2 + $0x628] sm:$0xff]
  %v6284 = vld [vmem:[#allocation2 + $0x630] sm:$0xff]
  %v6285 = vld [vmem:[#allocation2 + $0x638] sm:$0xff]
  %v6286 = vld [vmem:[#allocation2 + $0x640] sm:$0xff]
  %v6287 = vld [vmem:[#allocation2 + $0x648] sm:$0xff]
  %v6288 = vld [vmem:[#allocation2 + $0x650] sm:$0xff]
  %v6289 = vld [vmem:[#allocation2 + $0x658] sm:$0xff]
  %v6290 = vld [vmem:[#allocation2 + $0x660] sm:$0xff]
  %v6291 = vld [vmem:[#allocation2 + $0x668] sm:$0xff]
  %v6292 = vld [vmem:[#allocation2 + $0x670] sm:$0xff]
  %v6293 = vld [vmem:[#allocation2 + $0x678] sm:$0xff]
  %v6294 = vld [vmem:[#allocation2 + $0x680] sm:$0xff]
  %v6295 = vld [vmem:[#allocation2 + $0x688] sm:$0xff]
  %s6296 = scalar_lea.vmem %s3, 80
  %v6297 = vld [vmem:[%s6296] sm:$0xf]
  %v6298 = vld [vmem:[%s6296 + $0x4] sm:$0xf]
  %v6299 = vld [vmem:[%s6296 + $0x8] sm:$0xf]
  %v6300 = vld [vmem:[%s6296 + $0xc] sm:$0xf]
  %v6301 = vld [vmem:[%s6296 + $0x10] sm:$0xf]
  %v6302 = vld [vmem:[%s6296 + $0x14] sm:$0xf]
  %v6303 = vld [vmem:[%s6296 + $0x18] sm:$0xf]
  %v6304 = vld [vmem:[%s6296 + $0x1c] sm:$0xf]
  %v6305 = vld [vmem:[%s6296 + $0x20] sm:$0xf]
  %v6306 = vld [vmem:[%s6296 + $0x24] sm:$0xf]
  %v6307 = vld [vmem:[%s6296 + $0x28] sm:$0xf]
  %v6308 = vld [vmem:[%s6296 + $0x2c] sm:$0xf]
  %v6309 = vld [vmem:[%s6296 + $0x30] sm:$0xf]
  %v6310 = vld [vmem:[%s6296 + $0x34] sm:$0xf]
  %v6311 = vld [vmem:[%s6296 + $0x38] sm:$0xf]
  %v6312 = vld [vmem:[%s6296 + $0x3c] sm:$0xf]
  %v6313 = vld [vmem:[%s6296 + $0x40] sm:$0xf]
  %v6314 = vld [vmem:[%s6296 + $0x44] sm:$0xf]
  %v6315 = vld [vmem:[%s6296 + $0x48] sm:$0xf]
  %v6316 = vld [vmem:[%s6296 + $0x4c] sm:$0xf]
  %v6337 = vunpack.c.l.b16 %v6297
  %v6338 = vunpack.c.l.b16 %v6298
  %v6339 = vunpack.c.l.b16 %v6299
  %v6340 = vunpack.c.l.b16 %v6300
  %v6341 = vunpack.c.l.b16 %v6301
  %v6342 = vunpack.c.l.b16 %v6302
  %v6343 = vunpack.c.l.b16 %v6303
  %v6344 = vunpack.c.l.b16 %v6304
  %v6345 = vunpack.c.l.b16 %v6305
  %v6346 = vunpack.c.l.b16 %v6306
  %v6347 = vunpack.c.l.b16 %v6307
  %v6348 = vunpack.c.l.b16 %v6308
  %v6349 = vunpack.c.l.b16 %v6309
  %v6350 = vunpack.c.l.b16 %v6310
  %v6351 = vunpack.c.l.b16 %v6311
  %v6352 = vunpack.c.l.b16 %v6312
  %v6353 = vunpack.c.l.b16 %v6313
  %v6354 = vunpack.c.l.b16 %v6314
  %v6355 = vunpack.c.l.b16 %v6315
  %v6356 = vunpack.c.l.b16 %v6316
  %v6357 = vpack.c.b16 %v6338, %v6337
  %v6358 = vpack.c.b16 %v6340, %v6339
  %v6359 = vpack.c.b16 %v6342, %v6341
  %v6360 = vpack.c.b16 %v6344, %v6343
  %v6361 = vpack.c.b16 %v6346, %v6345
  %v6362 = vpack.c.b16 %v6348, %v6347
  %v6363 = vpack.c.b16 %v6350, %v6349
  %v6364 = vpack.c.b16 %v6352, %v6351
  %v6365 = vpack.c.b16 %v6354, %v6353
  %v6366 = vpack.c.b16 %v6356, %v6355
  %v6378 = vsel %vm4345, %v6081, 0
  %v6381 = vsel %vm4345, %v6083, 0
  %v6384 = vsel %vm4345, %v6085, 0
  %v6387 = vsel %vm4345, %v6087, 0
  %v6390 = vsel %vm4345, %v6089, 0
  %v6393 = vsel %vm4345, %v6091, 0
  %v6396 = vsel %vm4345, %v6093, 0
  %v6399 = vsel %vm4345, %v6095, 0
  %v6402 = vsel %vm4345, %v6097, 0
  %v6405 = vsel %vm4345, %v6099, 0
  %v6408 = vsel %vm4345, %v6101, 0
  %v6411 = vsel %vm4345, %v6103, 0
  %v6414 = vsel %vm4345, %v6105, 0
  %v6417 = vsel %vm4345, %v6107, 0
  %v6420 = vsel %vm4345, %v6109, 0
  %v6423 = vsel %vm4345, %v6111, 0
  %v6426 = vsel %vm4345, %v6113, 0
  %v6429 = vsel %vm4345, %v6115, 0
  %v6432 = vsel %vm4345, %v6117, 0
  %v6435 = vsel %vm4345, %v6119, 0
  %v6438 = vsel %vm4345, %v6121, 0
  %v6441 = vsel %vm4345, %v6123, 0
  %v6444 = vsel %vm4345, %v6125, 0
  %v6447 = vsel %vm4345, %v6127, 0
  %v6450 = vsel %vm4345, %v6129, 0
  %v6453 = vsel %vm4345, %v6131, 0
  %v6456 = vsel %vm4345, %v6133, 0
  %v6459 = vsel %vm4345, %v6135, 0
  %v6462 = vsel %vm4345, %v6137, 0
  %v6465 = vsel %vm4345, %v6139, 0
  %v6468 = vsel %vm4345, %v6141, 0
  %v6471 = vsel %vm4345, %v6143, 0
  %v6474 = vsel %vm4345, %v6145, 0
  %v6477 = vsel %vm4345, %v6147, 0
  %v6480 = vsel %vm4345, %v6149, 0
  %v6483 = vsel %vm4345, %v6151, 0
  %v6486 = vsel %vm4345, %v6153, 0
  %v6489 = vsel %vm4345, %v6155, 0
  %v6492 = vsel %vm4345, %v6157, 0
  %v6495 = vsel %vm4345, %v6159, 0
  %v6498 = vsel %vm4345, %v6161, 0
  %v6501 = vsel %vm4345, %v6163, 0
  %v6504 = vsel %vm4345, %v6165, 0
  %v6507 = vsel %vm4345, %v6167, 0
  %v6510 = vsel %vm4345, %v6169, 0
  %v6513 = vsel %vm4345, %v6171, 0
  %v6516 = vsel %vm4345, %v6173, 0
  %v6519 = vsel %vm4345, %v6175, 0
  %v6522 = vsel %vm4345, %v6177, 0
  %v6525 = vsel %vm4345, %v6179, 0
  %v6528 = vsel %vm4345, %v6181, 0
  %v6531 = vsel %vm4345, %v6183, 0
  %v6534 = vsel %vm4345, %v6185, 0
  %v6537 = vsel %vm4345, %v6187, 0
  %v6540 = vsel %vm4345, %v6189, 0
  %v6543 = vsel %vm4345, %v6191, 0
  %v6546 = vsel %vm4345, %v6193, 0
  %v6549 = vsel %vm4345, %v6195, 0
  %v6552 = vsel %vm4345, %v6197, 0
  %v6555 = vsel %vm4345, %v6199, 0
  %v6558 = vsel %vm4345, %v6201, 0
  %v6561 = vsel %vm4345, %v6203, 0
  %v6564 = vsel %vm4345, %v6205, 0
  %v6567 = vsel %vm4345, %v6207, 0
  %v6570 = vsel %vm4345, %v6209, 0
  %v6573 = vsel %vm4345, %v6211, 0
  %v6576 = vsel %vm4345, %v6213, 0
  %v6579 = vsel %vm4345, %v6215, 0
  %v6582 = vsel %vm4345, %v6217, 0
  %v6585 = vsel %vm4345, %v6219, 0
  %v6588 = vsel %vm4345, %v6221, 0
  %v6591 = vsel %vm4345, %v6223, 0
  %v6594 = vsel %vm4345, %v6225, 0
  %v6597 = vsel %vm4345, %v6227, 0
  %v6600 = vsel %vm4345, %v6229, 0
  %v6603 = vsel %vm4345, %v6231, 0
  %v6606 = vsel %vm4345, %v6233, 0
  %v6609 = vsel %vm4345, %v6235, 0
  %v6612 = vsel %vm4345, %v6237, 0
  %v6615 = vsel %vm4345, %v6239, 0
  %v6618 = vsel %vm4345, %v6241, 0
  %v6621 = vsel %vm4345, %v6243, 0
  %v6624 = vsel %vm4345, %v6245, 0
  %v6627 = vsel %vm4345, %v6247, 0
  %v6630 = vsel %vm4345, %v6249, 0
  %v6633 = vsel %vm4345, %v6251, 0
  %v6636 = vsel %vm4345, %v6253, 0
  %v6639 = vsel %vm4345, %v6255, 0
  %v6642 = vsel %vm4345, %v6257, 0
  %v6645 = vsel %vm4345, %v6259, 0
  %v6648 = vsel %vm4345, %v6261, 0
  %v6651 = vsel %vm4345, %v6283, 0
  %v6654 = vsel %vm4345, %v6285, 0
  %v6657 = vsel %vm4345, %v6287, 0
  %v6660 = vsel %vm4345, %v6289, 0
  %v6663 = vsel %vm4345, %v6291, 0
  %v6666 = vsel %vm4345, %v6293, 0
  %v6669 = vsel %vm4345, %v6295, 0
  %6671 = vmatprep.subr.bf16.mxu0 0
  %6672 = vmatpush1.bf16.msra.mxu0 %v6357
  %6673 = vmatprep.subr.bf16.mxu0 0
  %6674 = vmatpush1.bf16.msra.mxu0 %v6358
  %6675 = vmatprep.subr.bf16.mxu0 0
  %6676 = vmatpush1.bf16.msra.mxu0 %v6359
  %6677 = vmatprep.subr.bf16.mxu0 0
  %6678 = vmatpush1.bf16.msra.mxu0 %v6360
  %6679 = vmatprep.subr.bf16.mxu0 0
  %6680 = vmatpush1.bf16.msra.mxu0 %v6361
  %6681 = vmatprep.subr.bf16.mxu0 0
  %6682 = vmatpush1.bf16.msra.mxu0 %v6362
  %6683 = vmatprep.subr.bf16.mxu0 0
  %6684 = vmatpush1.bf16.msra.mxu0 %v6363
  %6685 = vmatprep.subr.bf16.mxu0 0
  %6686 = vmatpush1.bf16.msra.mxu0 %v6364
  %6687 = vmatprep.subr.bf16.mxu0 0
  %6688 = vmatpush1.bf16.msra.mxu0 %v6365
  %6689 = vmatprep.subr.bf16.mxu0 0
  %6690 = vmatpush1.bf16.msra.mxu0 %v6366
  %6691 = vmatprep.subr.bf16.mxu0 0
  %6692 = vmatpush1.bf16.msra.mxu0 0
  %6693 = vmatprep.subr.bf16.mxu0 0
  %6694 = vmatpush1.bf16.msra.mxu0 0
  %6695 = vmatprep.subr.bf16.mxu0 0
  %6696 = vmatpush1.bf16.msra.mxu0 0
  %6697 = vmatprep.subr.bf16.mxu0 0
  %6698 = vmatpush1.bf16.msra.mxu0 0
  %6699 = vmatprep.subr.bf16.mxu0 0
  %6700 = vmatpush1.bf16.msra.mxu0 0
  %6701 = vmatprep.subr.bf16.mxu0 0
  %6702 = vmatpush1.bf16.msra.mxu0 0
  %6703 = vmatprep.mubr.bf16.mxu0 %v6378
  %6704 = vmatmul.mubr.bf16.gmra.mrb[0].mxu0 %v6080
  %v6705 = vpop.f32.mrb[0].mxu0
  %v6706 = vadd.f32 0.0, %v6705
  %v6707 = vpop.f32.mrb[0].mxu0
  %v6708 = vpop.f32.mrb[0].mxu0
  %v6709 = vadd.f32 0.0, %v6708
  %v6710 = vpop.f32.mrb[0].mxu0
  %6711 = vmatprep.mubr.bf16.mxu0 %v6381
  %6712 = vmatmul.mubr.bf16.gmra.mrb[0].mxu0 %v6082
  %v6713 = vpop.f32.mrb[0].mxu0
  %v6714 = vadd.f32 0.0, %v6713
  %v6715 = vpop.f32.mrb[0].mxu0
  %v6716 = vpop.f32.mrb[0].mxu0
  %v6717 = vadd.f32 0.0, %v6716
  %v6718 = vpop.f32.mrb[0].mxu0
  %6719 = vmatprep.mubr.bf16.mxu0 %v6384
  %6720 = vmatmul.mubr.bf16.gmra.mrb[0].mxu0 %v6084
  %v6721 = vpop.f32.mrb[0].mxu0
  %v6722 = vadd.f32 0.0, %v6721
  %v6723 = vpop.f32.mrb[0].mxu0
  %v6724 = vpop.f32.mrb[0].mxu0
  %v6725 = vadd.f32 0.0, %v6724
  %v6726 = vpop.f32.mrb[0].mxu0
  %6727 = vmatprep.mubr.bf16.mxu0 %v6387
  %6728 = vmatmul.mubr.bf16.gmra.mrb[0].mxu0 %v6086
  %v6729 = vpop.f32.mrb[0].mxu0
  %v6730 = vadd.f32 0.0, %v6729
  %v6731 = vpop.f32.mrb[0].mxu0
  %v6732 = vpop.f32.mrb[0].mxu0
  %v6733 = vadd.f32 0.0, %v6732
  %v6734 = vpop.f32.mrb[0].mxu0
  %6735 = vmatprep.mubr.bf16.mxu0 %v6390
  %6736 = vmatmul.mubr.bf16.gmra.mrb[0].mxu0 %v6088
  %v6737 = vpop.f32.mrb[0].mxu0
  %v6738 = vadd.f32 0.0, %v6737
  %v6739 = vpop.f32.mrb[0].mxu0
  %v6740 = vpop.f32.mrb[0].mxu0
  %v6741 = vadd.f32 0.0, %v6740
  %v6742 = vpop.f32.mrb[0].mxu0
  %6743 = vmatprep.mubr.bf16.mxu0 %v6393
  %6744 = vmatmul.mubr.bf16.gmra.mrb[0].mxu0 %v6090
  %v6745 = vpop.f32.mrb[0].mxu0
  %v6746 = vpop.f32.mrb[0].mxu0
  %v6747 = vpop.f32.mrb[0].mxu0
  %v6748 = vpop.f32.mrb[0].mxu0
  %6749 = vmatprep.mubr.bf16.mxu0 %v6396
  %6750 = vmatmul.mubr.bf16.gmra.mrb[0].mxu0 %v6092
  %v6751 = vpop.f32.mrb[0].mxu0
  %v6752 = vpop.f32.mrb[0].mxu0
  %v6753 = vpop.f32.mrb[0].mxu0
  %v6754 = vpop.f32.mrb[0].mxu0
  %6755 = vmatprep.mubr.bf16.mxu0 %v6399
  %6756 = vmatmul.mubr.bf16.gmra.mrb[0].mxu0 %v6094
  %v6757 = vpop.f32.mrb[0].mxu0
  %v6758 = vadd.f32 0.0, %v6757
  %v6759 = vpop.f32.mrb[0].mxu0
  %v6760 = vpop.f32.mrb[0].mxu0
  %v6761 = vadd.f32 0.0, %v6760
  %v6762 = vpop.f32.mrb[0].mxu0
  %6763 = vmatprep.mubr.bf16.mxu0 %v6402
  %6764 = vmatmul.mubr.bf16.gmra.mrb[0].mxu0 %v6096
  %v6765 = vpop.f32.mrb[0].mxu0
  %v6766 = vadd.f32 0.0, %v6765
  %v6767 = vpop.f32.mrb[0].mxu0
  %v6768 = vpop.f32.mrb[0].mxu0
  %v6769 = vadd.f32 0.0, %v6768
  %v6770 = vpop.f32.mrb[0].mxu0
  %6771 = vmatprep.mubr.bf16.mxu0 %v6405
  %6772 = vmatmul.mubr.bf16.gmra.mrb[0].mxu0 %v6098
  %v6773 = vpop.f32.mrb[0].mxu0
  %v6774 = vadd.f32 0.0, %v6773
  %v6775 = vpop.f32.mrb[0].mxu0
  %v6776 = vpop.f32.mrb[0].mxu0
  %v6777 = vadd.f32 0.0, %v6776
  %v6778 = vpop.f32.mrb[0].mxu0
  %6779 = vmatprep.mubr.bf16.mxu0 %v6408
  %6780 = vmatmul.mubr.bf16.gmra.mrb[0].mxu0 %v6100
  %v6781 = vpop.f32.mrb[0].mxu0
  %v6782 = vadd.f32 0.0, %v6781
  %v6783 = vpop.f32.mrb[0].mxu0
  %v6784 = vpop.f32.mrb[0].mxu0
  %v6785 = vadd.f32 0.0, %v6784
  %v6786 = vpop.f32.mrb[0].mxu0
  %6787 = vmatprep.mubr.bf16.mxu0 %v6411
  %6788 = vmatmul.mubr.bf16.gmra.mrb[0].mxu0 %v6102
  %v6789 = vpop.f32.mrb[0].mxu0
  %v6790 = vadd.f32 0.0, %v6789
  %v6791 = vpop.f32.mrb[0].mxu0
  %v6792 = vpop.f32.mrb[0].mxu0
  %v6793 = vadd.f32 0.0, %v6792
  %v6794 = vpop.f32.mrb[0].mxu0
  %6795 = vmatprep.mubr.bf16.mxu0 %v6414
  %6796 = vmatmul.mubr.bf16.gmra.mrb[0].mxu0 %v6104
  %v6797 = vpop.f32.mrb[0].mxu0
  %v6798 = vpop.f32.mrb[0].mxu0
  %v6799 = vpop.f32.mrb[0].mxu0
  %v6800 = vpop.f32.mrb[0].mxu0
  %6801 = vmatprep.mubr.bf16.mxu0 %v6417
  %6802 = vmatmul.mubr.bf16.gmra.mrb[0].mxu0 %v6106
  %v6803 = vpop.f32.mrb[0].mxu0
  %v6804 = vpop.f32.mrb[0].mxu0
  %v6805 = vpop.f32.mrb[0].mxu0
  %v6806 = vpop.f32.mrb[0].mxu0
  %6807 = vmatprep.mubr.bf16.mxu0 %v6420
  %6808 = vmatmul.mubr.bf16.gmra.mrb[0].mxu0 %v6108
  %v6809 = vpop.f32.mrb[0].mxu0
  %v6810 = vadd.f32 0.0, %v6809
  %v6811 = vpop.f32.mrb[0].mxu0
  %v6812 = vpop.f32.mrb[0].mxu0
  %v6813 = vadd.f32 0.0, %v6812
  %v6814 = vpop.f32.mrb[0].mxu0
  %6815 = vmatprep.mubr.bf16.mxu0 %v6423
  %6816 = vmatmul.mubr.bf16.gmra.mrb[0].mxu0 %v6110
  %v6817 = vpop.f32.mrb[0].mxu0
  %v6818 = vadd.f32 0.0, %v6817
  %v6819 = vpop.f32.mrb[0].mxu0
  %v6820 = vpop.f32.mrb[0].mxu0
  %v6821 = vadd.f32 0.0, %v6820
  %v6822 = vpop.f32.mrb[0].mxu0
  %6823 = vmatprep.mubr.bf16.mxu0 %v6426
  %6824 = vmatmul.mubr.bf16.gmra.mrb[0].mxu0 %v6112
  %v6825 = vpop.f32.mrb[0].mxu0
  %v6826 = vadd.f32 0.0, %v6825
  %v6827 = vpop.f32.mrb[0].mxu0
  %v6828 = vpop.f32.mrb[0].mxu0
  %v6829 = vadd.f32 0.0, %v6828
  %v6830 = vpop.f32.mrb[0].mxu0
  %6831 = vmatprep.mubr.bf16.mxu0 %v6429
  %6832 = vmatmul.mubr.bf16.gmra.mrb[0].mxu0 %v6114
  %v6833 = vpop.f32.mrb[0].mxu0
  %v6834 = vadd.f32 0.0, %v6833
  %v6835 = vpop.f32.mrb[0].mxu0
  %v6836 = vpop.f32.mrb[0].mxu0
  %v6837 = vadd.f32 0.0, %v6836
  %v6838 = vpop.f32.mrb[0].mxu0
  %6839 = vmatprep.mubr.bf16.mxu0 %v6432
  %6840 = vmatmul.mubr.bf16.gmra.mrb[0].mxu0 %v6116
  %v6841 = vpop.f32.mrb[0].mxu0
  %v6842 = vadd.f32 0.0, %v6841
  %v6843 = vpop.f32.mrb[0].mxu0
  %v6844 = vpop.f32.mrb[0].mxu0
  %v6845 = vadd.f32 0.0, %v6844
  %v6846 = vpop.f32.mrb[0].mxu0
  %6847 = vmatprep.mubr.bf16.mxu0 %v6435
  %6848 = vmatmul.mubr.bf16.gmra.mrb[0].mxu0 %v6118
  %v6849 = vpop.f32.mrb[0].mxu0
  %v6850 = vpop.f32.mrb[0].mxu0
  %v6851 = vpop.f32.mrb[0].mxu0
  %v6852 = vpop.f32.mrb[0].mxu0
  %6853 = vmatprep.mubr.bf16.mxu0 %v6438
  %6854 = vmatmul.mubr.bf16.gmra.mrb[0].mxu0 %v6120
  %v6855 = vpop.f32.mrb[0].mxu0
  %v6856 = vpop.f32.mrb[0].mxu0
  %v6857 = vpop.f32.mrb[0].mxu0
  %v6858 = vpop.f32.mrb[0].mxu0
  %6859 = vmatprep.mubr.bf16.mxu0 %v6441
  %6860 = vmatmul.mubr.bf16.gmra.mrb[0].mxu0 %v6122
  %v6861 = vpop.f32.mrb[0].mxu0
  %v6862 = vadd.f32 0.0, %v6861
  %v6863 = vpop.f32.mrb[0].mxu0
  %v6864 = vpop.f32.mrb[0].mxu0
  %v6865 = vadd.f32 0.0, %v6864
  %v6866 = vpop.f32.mrb[0].mxu0
  %6867 = vmatprep.mubr.bf16.mxu0 %v6444
  %6868 = vmatmul.mubr.bf16.gmra.mrb[0].mxu0 %v6124
  %v6869 = vpop.f32.mrb[0].mxu0
  %v6870 = vadd.f32 0.0, %v6869
  %v6871 = vpop.f32.mrb[0].mxu0
  %v6872 = vpop.f32.mrb[0].mxu0
  %v6873 = vadd.f32 0.0, %v6872
  %v6874 = vpop.f32.mrb[0].mxu0
  %6875 = vmatprep.mubr.bf16.mxu0 %v6447
  %6876 = vmatmul.mubr.bf16.gmra.mrb[0].mxu0 %v6126
  %v6877 = vpop.f32.mrb[0].mxu0
  %v6878 = vadd.f32 0.0, %v6877
  %v6879 = vpop.f32.mrb[0].mxu0
  %v6880 = vpop.f32.mrb[0].mxu0
  %v6881 = vadd.f32 0.0, %v6880
  %v6882 = vpop.f32.mrb[0].mxu0
  %6883 = vmatprep.mubr.bf16.mxu0 %v6450
  %6884 = vmatmul.mubr.bf16.gmra.mrb[0].mxu0 %v6128
  %v6885 = vpop.f32.mrb[0].mxu0
  %v6886 = vadd.f32 0.0, %v6885
  %v6887 = vpop.f32.mrb[0].mxu0
  %v6888 = vpop.f32.mrb[0].mxu0
  %v6889 = vadd.f32 0.0, %v6888
  %v6890 = vpop.f32.mrb[0].mxu0
  %6891 = vmatprep.mubr.bf16.mxu0 %v6453
  %6892 = vmatmul.mubr.bf16.gmra.mrb[0].mxu0 %v6130
  %v6893 = vpop.f32.mrb[0].mxu0
  %v6894 = vadd.f32 0.0, %v6893
  %v6895 = vpop.f32.mrb[0].mxu0
  %v6896 = vpop.f32.mrb[0].mxu0
  %v6897 = vadd.f32 0.0, %v6896
  %v6898 = vpop.f32.mrb[0].mxu0
  %6899 = vmatprep.mubr.bf16.mxu0 %v6456
  %6900 = vmatmul.mubr.bf16.gmra.mrb[0].mxu0 %v6132
  %v6901 = vpop.f32.mrb[0].mxu0
  %v6902 = vpop.f32.mrb[0].mxu0
  %v6903 = vpop.f32.mrb[0].mxu0
  %v6904 = vpop.f32.mrb[0].mxu0
  %6905 = vmatprep.mubr.bf16.mxu0 %v6459
  %6906 = vmatmul.mubr.bf16.gmra.mrb[0].mxu0 %v6134
  %v6907 = vpop.f32.mrb[0].mxu0
  %v6908 = vpop.f32.mrb[0].mxu0
  %v6909 = vpop.f32.mrb[0].mxu0
  %v6910 = vpop.f32.mrb[0].mxu0
  %6911 = vmatprep.mubr.bf16.mxu0 %v6462
  %6912 = vmatmul.mubr.bf16.gmra.mrb[0].mxu0 %v6136
  %v6913 = vpop.f32.mrb[0].mxu0
  %v6914 = vadd.f32 0.0, %v6913
  %v6915 = vpop.f32.mrb[0].mxu0
  %v6916 = vpop.f32.mrb[0].mxu0
  %v6917 = vadd.f32 0.0, %v6916
  %v6918 = vpop.f32.mrb[0].mxu0
  %6919 = vmatprep.mubr.bf16.mxu0 %v6465
  %6920 = vmatmul.mubr.bf16.gmra.mrb[0].mxu0 %v6138
  %v6921 = vpop.f32.mrb[0].mxu0
  %v6922 = vadd.f32 0.0, %v6921
  %v6923 = vpop.f32.mrb[0].mxu0
  %v6924 = vpop.f32.mrb[0].mxu0
  %v6925 = vadd.f32 0.0, %v6924
  %v6926 = vpop.f32.mrb[0].mxu0
  %6927 = vmatprep.mubr.bf16.mxu0 %v6468
  %6928 = vmatmul.mubr.bf16.gmra.mrb[0].mxu0 %v6140
  %v6929 = vpop.f32.mrb[0].mxu0
  %v6930 = vadd.f32 0.0, %v6929
  %v6931 = vpop.f32.mrb[0].mxu0
  %v6932 = vpop.f32.mrb[0].mxu0
  %v6933 = vadd.f32 0.0, %v6932
  %v6934 = vpop.f32.mrb[0].mxu0
  %6935 = vmatprep.mubr.bf16.mxu0 %v6471
  %6936 = vmatmul.mubr.bf16.gmra.mrb[0].mxu0 %v6142
  %v6937 = vpop.f32.mrb[0].mxu0
  %v6938 = vadd.f32 0.0, %v6937
  %v6939 = vpop.f32.mrb[0].mxu0
  %v6940 = vpop.f32.mrb[0].mxu0
  %v6941 = vadd.f32 0.0, %v6940
  %v6942 = vpop.f32.mrb[0].mxu0
  %6943 = vmatprep.mubr.bf16.mxu0 %v6474
  %6944 = vmatmul.mubr.bf16.gmra.mrb[0].mxu0 %v6144
  %v6945 = vpop.f32.mrb[0].mxu0
  %v6946 = vadd.f32 0.0, %v6945
  %v6947 = vpop.f32.mrb[0].mxu0
  %v6948 = vpop.f32.mrb[0].mxu0
  %v6949 = vadd.f32 0.0, %v6948
  %v6950 = vpop.f32.mrb[0].mxu0
  %6951 = vmatprep.mubr.bf16.mxu0 %v6477
  %6952 = vmatmul.mubr.bf16.gmra.mrb[0].mxu0 %v6146
  %v6953 = vpop.f32.mrb[0].mxu0
  %v6954 = vpop.f32.mrb[0].mxu0
  %v6955 = vpop.f32.mrb[0].mxu0
  %v6956 = vpop.f32.mrb[0].mxu0
  %6957 = vmatprep.mubr.bf16.mxu0 %v6480
  %6958 = vmatmul.mubr.bf16.gmra.mrb[0].mxu0 %v6148
  %v6959 = vpop.f32.mrb[0].mxu0
  %v6960 = vpop.f32.mrb[0].mxu0
  %v6961 = vpop.f32.mrb[0].mxu0
  %v6962 = vpop.f32.mrb[0].mxu0
  %6963 = vmatprep.mubr.bf16.mxu0 %v6483
  %6964 = vmatmul.mubr.bf16.gmra.mrb[0].mxu0 %v6150
  %v6965 = vpop.f32.mrb[0].mxu0
  %v6966 = vadd.f32 0.0, %v6965
  %v6967 = vpop.f32.mrb[0].mxu0
  %v6968 = vpop.f32.mrb[0].mxu0
  %v6969 = vadd.f32 0.0, %v6968
  %v6970 = vpop.f32.mrb[0].mxu0
  %6971 = vmatprep.mubr.bf16.mxu0 %v6486
  %6972 = vmatmul.mubr.bf16.gmra.mrb[0].mxu0 %v6152
  %v6973 = vpop.f32.mrb[0].mxu0
  %v6974 = vadd.f32 0.0, %v6973
  %v6975 = vpop.f32.mrb[0].mxu0
  %v6976 = vpop.f32.mrb[0].mxu0
  %v6977 = vadd.f32 0.0, %v6976
  %v6978 = vpop.f32.mrb[0].mxu0
  %6979 = vmatprep.mubr.bf16.mxu0 %v6489
  %6980 = vmatmul.mubr.bf16.gmra.mrb[0].mxu0 %v6154
  %v6981 = vpop.f32.mrb[0].mxu0
  %v6982 = vadd.f32 0.0, %v6981
  %v6983 = vpop.f32.mrb[0].mxu0
  %v6984 = vpop.f32.mrb[0].mxu0
  %v6985 = vadd.f32 0.0, %v6984
  %v6986 = vpop.f32.mrb[0].mxu0
  %6987 = vmatprep.mubr.bf16.mxu0 %v6492
  %6988 = vmatmul.mubr.bf16.gmra.mrb[0].mxu0 %v6156
  %v6989 = vpop.f32.mrb[0].mxu0
  %v6990 = vadd.f32 0.0, %v6989
  %v6991 = vpop.f32.mrb[0].mxu0
  %v6992 = vpop.f32.mrb[0].mxu0
  %v6993 = vadd.f32 0.0, %v6992
  %v6994 = vpop.f32.mrb[0].mxu0
  %6995 = vmatprep.mubr.bf16.mxu0 %v6495
  %6996 = vmatmul.mubr.bf16.gmra.mrb[0].mxu0 %v6158
  %v6997 = vpop.f32.mrb[0].mxu0
  %v6998 = vadd.f32 0.0, %v6997
  %v6999 = vpop.f32.mrb[0].mxu0
  %v7000 = vpop.f32.mrb[0].mxu0
  %v7001 = vadd.f32 0.0, %v7000
  %v7002 = vpop.f32.mrb[0].mxu0
  %7003 = vmatprep.mubr.bf16.mxu0 %v6498
  %7004 = vmatmul.mubr.bf16.gmra.mrb[0].mxu0 %v6160
  %v7005 = vpop.f32.mrb[0].mxu0
  %v7006 = vpop.f32.mrb[0].mxu0
  %v7007 = vpop.f32.mrb[0].mxu0
  %v7008 = vpop.f32.mrb[0].mxu0
  %7009 = vmatprep.mubr.bf16.mxu0 %v6501
  %7010 = vmatmul.mubr.bf16.gmra.mrb[0].mxu0 %v6162
  %v7011 = vpop.f32.mrb[0].mxu0
  %v7012 = vpop.f32.mrb[0].mxu0
  %v7013 = vpop.f32.mrb[0].mxu0
  %v7014 = vpop.f32.mrb[0].mxu0
  %7015 = vmatprep.mubr.bf16.mxu0 %v6504
  %7016 = vmatmul.mubr.bf16.gmra.mrb[0].mxu0 %v6164
  %v7017 = vpop.f32.mrb[0].mxu0
  %v7018 = vadd.f32 0.0, %v7017
  %v7019 = vpop.f32.mrb[0].mxu0
  %v7020 = vpop.f32.mrb[0].mxu0
  %v7021 = vadd.f32 0.0, %v7020
  %v7022 = vpop.f32.mrb[0].mxu0
  %7023 = vmatprep.mubr.bf16.mxu0 %v6507
  %7024 = vmatmul.mubr.bf16.gmra.mrb[0].mxu0 %v6166
  %v7025 = vpop.f32.mrb[0].mxu0
  %v7026 = vadd.f32 0.0, %v7025
  %v7027 = vpop.f32.mrb[0].mxu0
  %v7028 = vpop.f32.mrb[0].mxu0
  %v7029 = vadd.f32 0.0, %v7028
  %v7030 = vpop.f32.mrb[0].mxu0
  %7031 = vmatprep.mubr.bf16.mxu0 %v6510
  %7032 = vmatmul.mubr.bf16.gmra.mrb[0].mxu0 %v6168
  %v7033 = vpop.f32.mrb[0].mxu0
  %v7034 = vadd.f32 0.0, %v7033
  %v7035 = vpop.f32.mrb[0].mxu0
  %v7036 = vpop.f32.mrb[0].mxu0
  %v7037 = vadd.f32 0.0, %v7036
  %v7038 = vpop.f32.mrb[0].mxu0
  %7039 = vmatprep.mubr.bf16.mxu0 %v6513
  %7040 = vmatmul.mubr.bf16.gmra.mrb[0].mxu0 %v6170
  %v7041 = vpop.f32.mrb[0].mxu0
  %v7042 = vadd.f32 0.0, %v7041
  %v7043 = vpop.f32.mrb[0].mxu0
  %v7044 = vpop.f32.mrb[0].mxu0
  %v7045 = vadd.f32 0.0, %v7044
  %v7046 = vpop.f32.mrb[0].mxu0
  %7047 = vmatprep.mubr.bf16.mxu0 %v6516
  %7048 = vmatmul.mubr.bf16.gmra.mrb[0].mxu0 %v6172
  %v7049 = vpop.f32.mrb[0].mxu0
  %v7050 = vadd.f32 0.0, %v7049
  %v7051 = vpop.f32.mrb[0].mxu0
  %v7052 = vpop.f32.mrb[0].mxu0
  %v7053 = vadd.f32 0.0, %v7052
  %v7054 = vpop.f32.mrb[0].mxu0
  %7055 = vmatprep.mubr.bf16.mxu0 %v6519
  %7056 = vmatmul.mubr.bf16.gmra.mrb[0].mxu0 %v6174
  %v7057 = vpop.f32.mrb[0].mxu0
  %v7058 = vpop.f32.mrb[0].mxu0
  %v7059 = vpop.f32.mrb[0].mxu0
  %v7060 = vpop.f32.mrb[0].mxu0
  %7061 = vmatprep.mubr.bf16.mxu0 %v6522
  %7062 = vmatmul.mubr.bf16.gmra.mrb[0].mxu0 %v6176
  %v7063 = vpop.f32.mrb[0].mxu0
  %v7064 = vpop.f32.mrb[0].mxu0
  %v7065 = vpop.f32.mrb[0].mxu0
  %v7066 = vpop.f32.mrb[0].mxu0
  %7067 = vmatprep.mubr.bf16.mxu0 %v6525
  %7068 = vmatmul.mubr.bf16.gmra.mrb[0].mxu0 %v6178
  %v7069 = vpop.f32.mrb[0].mxu0
  %v7070 = vadd.f32 0.0, %v7069
  %v7071 = vpop.f32.mrb[0].mxu0
  %v7072 = vpop.f32.mrb[0].mxu0
  %v7073 = vadd.f32 0.0, %v7072
  %v7074 = vpop.f32.mrb[0].mxu0
  %7075 = vmatprep.mubr.bf16.mxu0 %v6528
  %7076 = vmatmul.mubr.bf16.gmra.mrb[0].mxu0 %v6180
  %v7077 = vpop.f32.mrb[0].mxu0
  %v7078 = vadd.f32 0.0, %v7077
  %v7079 = vpop.f32.mrb[0].mxu0
  %v7080 = vpop.f32.mrb[0].mxu0
  %v7081 = vadd.f32 0.0, %v7080
  %v7082 = vpop.f32.mrb[0].mxu0
  %7083 = vmatprep.mubr.bf16.mxu0 %v6531
  %7084 = vmatmul.mubr.bf16.gmra.mrb[0].mxu0 %v6182
  %v7085 = vpop.f32.mrb[0].mxu0
  %v7086 = vadd.f32 0.0, %v7085
  %v7087 = vpop.f32.mrb[0].mxu0
  %v7088 = vpop.f32.mrb[0].mxu0
  %v7089 = vadd.f32 0.0, %v7088
  %v7090 = vpop.f32.mrb[0].mxu0
  %7091 = vmatprep.mubr.bf16.mxu0 %v6534
  %7092 = vmatmul.mubr.bf16.gmra.mrb[0].mxu0 %v6184
  %v7093 = vpop.f32.mrb[0].mxu0
  %v7094 = vadd.f32 0.0, %v7093
  %v7095 = vpop.f32.mrb[0].mxu0
  %v7096 = vpop.f32.mrb[0].mxu0
  %v7097 = vadd.f32 0.0, %v7096
  %v7098 = vpop.f32.mrb[0].mxu0
  %7099 = vmatprep.mubr.bf16.mxu0 %v6537
  %7100 = vmatmul.mubr.bf16.gmra.mrb[0].mxu0 %v6186
  %v7101 = vpop.f32.mrb[0].mxu0
  %v7102 = vadd.f32 0.0, %v7101
  %v7103 = vpop.f32.mrb[0].mxu0
  %v7104 = vpop.f32.mrb[0].mxu0
  %v7105 = vadd.f32 0.0, %v7104
  %v7106 = vpop.f32.mrb[0].mxu0
  %7107 = vmatprep.mubr.bf16.mxu0 %v6540
  %7108 = vmatmul.mubr.bf16.gmra.mrb[0].mxu0 %v6188
  %v7109 = vpop.f32.mrb[0].mxu0
  %v7110 = vpop.f32.mrb[0].mxu0
  %v7111 = vpop.f32.mrb[0].mxu0
  %v7112 = vpop.f32.mrb[0].mxu0
  %7113 = vmatprep.mubr.bf16.mxu0 %v6543
  %7114 = vmatmul.mubr.bf16.gmra.mrb[0].mxu0 %v6190
  %v7115 = vpop.f32.mrb[0].mxu0
  %v7116 = vpop.f32.mrb[0].mxu0
  %v7117 = vpop.f32.mrb[0].mxu0
  %v7118 = vpop.f32.mrb[0].mxu0
  %7119 = vmatprep.mubr.bf16.mxu0 %v6546
  %7120 = vmatmul.mubr.bf16.gmra.mrb[0].mxu0 %v6192
  %v7121 = vpop.f32.mrb[0].mxu0
  %v7122 = vadd.f32 0.0, %v7121
  %v7123 = vpop.f32.mrb[0].mxu0
  %v7124 = vpop.f32.mrb[0].mxu0
  %v7125 = vadd.f32 0.0, %v7124
  %v7126 = vpop.f32.mrb[0].mxu0
  %7127 = vmatprep.mubr.bf16.mxu0 %v6549
  %7128 = vmatmul.mubr.bf16.gmra.mrb[0].mxu0 %v6194
  %v7129 = vpop.f32.mrb[0].mxu0
  %v7130 = vadd.f32 0.0, %v7129
  %v7131 = vpop.f32.mrb[0].mxu0
  %v7132 = vpop.f32.mrb[0].mxu0
  %v7133 = vadd.f32 0.0, %v7132
  %v7134 = vpop.f32.mrb[0].mxu0
  %7135 = vmatprep.mubr.bf16.mxu0 %v6552
  %7136 = vmatmul.mubr.bf16.gmra.mrb[0].mxu0 %v6196
  %v7137 = vpop.f32.mrb[0].mxu0
  %v7138 = vadd.f32 0.0, %v7137
  %v7139 = vpop.f32.mrb[0].mxu0
  %v7140 = vpop.f32.mrb[0].mxu0
  %v7141 = vadd.f32 0.0, %v7140
  %v7142 = vpop.f32.mrb[0].mxu0
  %7143 = vmatprep.mubr.bf16.mxu0 %v6555
  %7144 = vmatmul.mubr.bf16.gmra.mrb[0].mxu0 %v6198
  %v7145 = vpop.f32.mrb[0].mxu0
  %v7146 = vadd.f32 0.0, %v7145
  %v7147 = vpop.f32.mrb[0].mxu0
  %v7148 = vpop.f32.mrb[0].mxu0
  %v7149 = vadd.f32 0.0, %v7148
  %v7150 = vpop.f32.mrb[0].mxu0
  %7151 = vmatprep.mubr.bf16.mxu0 %v6558
  %7152 = vmatmul.mubr.bf16.gmra.mrb[0].mxu0 %v6200
  %v7153 = vpop.f32.mrb[0].mxu0
  %v7154 = vadd.f32 0.0, %v7153
  %v7155 = vpop.f32.mrb[0].mxu0
  %v7156 = vpop.f32.mrb[0].mxu0
  %v7157 = vadd.f32 0.0, %v7156
  %v7158 = vpop.f32.mrb[0].mxu0
  %7159 = vmatprep.mubr.bf16.mxu0 %v6561
  %7160 = vmatmul.mubr.bf16.gmra.mrb[0].mxu0 %v6202
  %v7161 = vpop.f32.mrb[0].mxu0
  %v7162 = vpop.f32.mrb[0].mxu0
  %v7163 = vpop.f32.mrb[0].mxu0
  %v7164 = vpop.f32.mrb[0].mxu0
  %7165 = vmatprep.mubr.bf16.mxu0 %v6564
  %7166 = vmatmul.mubr.bf16.gmra.mrb[0].mxu0 %v6204
  %v7167 = vpop.f32.mrb[0].mxu0
  %v7168 = vpop.f32.mrb[0].mxu0
  %v7169 = vpop.f32.mrb[0].mxu0
  %v7170 = vpop.f32.mrb[0].mxu0
  %7171 = vmatprep.mubr.bf16.mxu0 %v6567
  %7172 = vmatmul.mubr.bf16.gmra.mrb[0].mxu0 %v6206
  %v7173 = vpop.f32.mrb[0].mxu0
  %v7174 = vadd.f32 0.0, %v7173
  %v7175 = vpop.f32.mrb[0].mxu0
  %v7176 = vpop.f32.mrb[0].mxu0
  %v7177 = vadd.f32 0.0, %v7176
  %v7178 = vpop.f32.mrb[0].mxu0
  %7179 = vmatprep.mubr.bf16.mxu0 %v6570
  %7180 = vmatmul.mubr.bf16.gmra.mrb[0].mxu0 %v6208
  %v7181 = vpop.f32.mrb[0].mxu0
  %v7182 = vadd.f32 0.0, %v7181
  %v7183 = vpop.f32.mrb[0].mxu0
  %v7184 = vpop.f32.mrb[0].mxu0
  %v7185 = vadd.f32 0.0, %v7184
  %v7186 = vpop.f32.mrb[0].mxu0
  %7187 = vmatprep.mubr.bf16.mxu0 %v6573
  %7188 = vmatmul.mubr.bf16.gmra.mrb[0].mxu0 %v6210
  %v7189 = vpop.f32.mrb[0].mxu0
  %v7190 = vadd.f32 0.0, %v7189
  %v7191 = vpop.f32.mrb[0].mxu0
  %v7192 = vpop.f32.mrb[0].mxu0
  %v7193 = vadd.f32 0.0, %v7192
  %v7194 = vpop.f32.mrb[0].mxu0
  %7195 = vmatprep.mubr.bf16.mxu0 %v6576
  %7196 = vmatmul.mubr.bf16.gmra.mrb[0].mxu0 %v6212
  %v7197 = vpop.f32.mrb[0].mxu0
  %v7198 = vadd.f32 0.0, %v7197
  %v7199 = vpop.f32.mrb[0].mxu0
  %v7200 = vpop.f32.mrb[0].mxu0
  %v7201 = vadd.f32 0.0, %v7200
  %v7202 = vpop.f32.mrb[0].mxu0
  %7203 = vmatprep.mubr.bf16.mxu0 %v6579
  %7204 = vmatmul.mubr.bf16.gmra.mrb[0].mxu0 %v6214
  %v7205 = vpop.f32.mrb[0].mxu0
  %v7206 = vadd.f32 0.0, %v7205
  %v7207 = vpop.f32.mrb[0].mxu0
  %v7208 = vpop.f32.mrb[0].mxu0
  %v7209 = vadd.f32 0.0, %v7208
  %v7210 = vpop.f32.mrb[0].mxu0
  %7211 = vmatprep.mubr.bf16.mxu0 %v6582
  %7212 = vmatmul.mubr.bf16.gmra.mrb[0].mxu0 %v6216
  %v7213 = vpop.f32.mrb[0].mxu0
  %v7214 = vpop.f32.mrb[0].mxu0
  %v7215 = vpop.f32.mrb[0].mxu0
  %v7216 = vpop.f32.mrb[0].mxu0
  %7217 = vmatprep.mubr.bf16.mxu0 %v6585
  %7218 = vmatmul.mubr.bf16.gmra.mrb[0].mxu0 %v6218
  %v7219 = vpop.f32.mrb[0].mxu0
  %v7220 = vpop.f32.mrb[0].mxu0
  %v7221 = vpop.f32.mrb[0].mxu0
  %v7222 = vpop.f32.mrb[0].mxu0
  %7223 = vmatprep.mubr.bf16.mxu0 %v6588
  %7224 = vmatmul.mubr.bf16.gmra.mrb[0].mxu0 %v6220
  %v7225 = vpop.f32.mrb[0].mxu0
  %v7226 = vpop.f32.mrb[0].mxu0
  %v7227 = vpop.f32.mrb[0].mxu0
  %v7228 = vpop.f32.mrb[0].mxu0
  %7229 = vmatprep.mubr.bf16.mxu0 %v6591
  %7230 = vmatmul.mubr.bf16.gmra.mrb[0].mxu0 %v6222
  %v7231 = vpop.f32.mrb[0].mxu0
  %v7232 = vpop.f32.mrb[0].mxu0
  %v7233 = vpop.f32.mrb[0].mxu0
  %v7234 = vpop.f32.mrb[0].mxu0
  %7235 = vmatprep.mubr.bf16.mxu0 %v6594
  %7236 = vmatmul.mubr.bf16.gmra.mrb[0].mxu0 %v6224
  %v7237 = vpop.f32.mrb[0].mxu0
  %v7238 = vpop.f32.mrb[0].mxu0
  %v7239 = vpop.f32.mrb[0].mxu0
  %v7240 = vpop.f32.mrb[0].mxu0
  %7241 = vmatprep.mubr.bf16.mxu0 %v6597
  %7242 = vmatmul.mubr.bf16.gmra.mrb[0].mxu0 %v6226
  %v7243 = vpop.f32.mrb[0].mxu0
  %v7244 = vpop.f32.mrb[0].mxu0
  %v7245 = vpop.f32.mrb[0].mxu0
  %v7246 = vpop.f32.mrb[0].mxu0
  %7247 = vmatprep.mubr.bf16.mxu0 %v6600
  %7248 = vmatmul.mubr.bf16.gmra.mrb[0].mxu0 %v6228
  %v7249 = vpop.f32.mrb[0].mxu0
  %v7250 = vpop.f32.mrb[0].mxu0
  %v7251 = vpop.f32.mrb[0].mxu0
  %v7252 = vpop.f32.mrb[0].mxu0
  %7253 = vmatprep.mubr.bf16.mxu0 %v6603
  %7254 = vmatmul.mubr.bf16.gmra.mrb[0].mxu0 %v6230
  %v7255 = vpop.f32.mrb[0].mxu0
  %v7256 = vpop.f32.mrb[0].mxu0
  %v7257 = vpop.f32.mrb[0].mxu0
  %v7258 = vpop.f32.mrb[0].mxu0
  %7259 = vmatprep.mubr.bf16.mxu0 %v6606
  %7260 = vmatmul.mubr.bf16.gmra.mrb[0].mxu0 %v6232
  %v7261 = vpop.f32.mrb[0].mxu0
  %v7262 = vpop.f32.mrb[0].mxu0
  %v7263 = vpop.f32.mrb[0].mxu0
  %v7264 = vpop.f32.mrb[0].mxu0
  %7265 = vmatprep.mubr.bf16.mxu0 %v6609
  %7266 = vmatmul.mubr.bf16.gmra.mrb[0].mxu0 %v6234
  %v7267 = vpop.f32.mrb[0].mxu0
  %v7268 = vpop.f32.mrb[0].mxu0
  %v7269 = vpop.f32.mrb[0].mxu0
  %v7270 = vpop.f32.mrb[0].mxu0
  %7271 = vmatprep.mubr.bf16.mxu0 %v6612
  %7272 = vmatmul.mubr.bf16.gmra.mrb[0].mxu0 %v6236
  %v7273 = vpop.f32.mrb[0].mxu0
  %v7274 = vpop.f32.mrb[0].mxu0
  %v7275 = vpop.f32.mrb[0].mxu0
  %v7276 = vpop.f32.mrb[0].mxu0
  %7277 = vmatprep.mubr.bf16.mxu0 %v6615
  %7278 = vmatmul.mubr.bf16.gmra.mrb[0].mxu0 %v6238
  %v7279 = vpop.f32.mrb[0].mxu0
  %v7280 = vpop.f32.mrb[0].mxu0
  %v7281 = vpop.f32.mrb[0].mxu0
  %v7282 = vpop.f32.mrb[0].mxu0
  %7283 = vmatprep.mubr.bf16.mxu0 %v6618
  %7284 = vmatmul.mubr.bf16.gmra.mrb[0].mxu0 %v6240
  %v7285 = vpop.f32.mrb[0].mxu0
  %v7286 = vpop.f32.mrb[0].mxu0
  %v7287 = vpop.f32.mrb[0].mxu0
  %v7288 = vpop.f32.mrb[0].mxu0
  %7289 = vmatprep.mubr.bf16.mxu0 %v6621
  %7290 = vmatmul.mubr.bf16.gmra.mrb[0].mxu0 %v6242
  %v7291 = vpop.f32.mrb[0].mxu0
  %v7292 = vpop.f32.mrb[0].mxu0
  %v7293 = vpop.f32.mrb[0].mxu0
  %v7294 = vpop.f32.mrb[0].mxu0
  %7295 = vmatprep.mubr.bf16.mxu0 %v6624
  %7296 = vmatmul.mubr.bf16.gmra.mrb[0].mxu0 %v6244
  %v7297 = vpop.f32.mrb[0].mxu0
  %v7298 = vpop.f32.mrb[0].mxu0
  %v7299 = vpop.f32.mrb[0].mxu0
  %v7300 = vpop.f32.mrb[0].mxu0
  %7301 = vmatprep.mubr.bf16.mxu0 %v6627
  %7302 = vmatmul.mubr.bf16.gmra.mrb[0].mxu0 %v6246
  %v7303 = vpop.f32.mrb[0].mxu0
  %v7304 = vpop.f32.mrb[0].mxu0
  %v7305 = vpop.f32.mrb[0].mxu0
  %v7306 = vpop.f32.mrb[0].mxu0
  %7307 = vmatprep.mubr.bf16.mxu0 %v6630
  %7308 = vmatmul.mubr.bf16.gmra.mrb[0].mxu0 %v6248
  %v7309 = vpop.f32.mrb[0].mxu0
  %v7310 = vpop.f32.mrb[0].mxu0
  %v7311 = vpop.f32.mrb[0].mxu0
  %v7312 = vpop.f32.mrb[0].mxu0
  %7313 = vmatprep.mubr.bf16.mxu0 %v6633
  %7314 = vmatmul.mubr.bf16.gmra.mrb[0].mxu0 %v6250
  %v7315 = vpop.f32.mrb[0].mxu0
  %v7316 = vpop.f32.mrb[0].mxu0
  %v7317 = vpop.f32.mrb[0].mxu0
  %v7318 = vpop.f32.mrb[0].mxu0
  %7319 = vmatprep.mubr.bf16.mxu0 %v6636
  %7320 = vmatmul.mubr.bf16.gmra.mrb[0].mxu0 %v6252
  %v7321 = vpop.f32.mrb[0].mxu0
  %v7322 = vpop.f32.mrb[0].mxu0
  %v7323 = vpop.f32.mrb[0].mxu0
  %v7324 = vpop.f32.mrb[0].mxu0
  %7325 = vmatprep.mubr.bf16.mxu0 %v6639
  %7326 = vmatmul.mubr.bf16.gmra.mrb[0].mxu0 %v6254
  %v7327 = vpop.f32.mrb[0].mxu0
  %v7328 = vpop.f32.mrb[0].mxu0
  %v7329 = vpop.f32.mrb[0].mxu0
  %v7330 = vpop.f32.mrb[0].mxu0
  %7331 = vmatprep.mubr.bf16.mxu0 %v6642
  %7332 = vmatmul.mubr.bf16.gmra.mrb[0].mxu0 %v6256
  %v7333 = vpop.f32.mrb[0].mxu0
  %v7334 = vpop.f32.mrb[0].mxu0
  %v7335 = vpop.f32.mrb[0].mxu0
  %v7336 = vpop.f32.mrb[0].mxu0
  %7337 = vmatprep.mubr.bf16.mxu0 %v6645
  %7338 = vmatmul.mubr.bf16.gmra.mrb[0].mxu0 %v6258
  %v7339 = vpop.f32.mrb[0].mxu0
  %v7340 = vpop.f32.mrb[0].mxu0
  %v7341 = vpop.f32.mrb[0].mxu0
  %v7342 = vpop.f32.mrb[0].mxu0
  %7343 = vmatprep.mubr.bf16.mxu0 %v6648
  %7344 = vmatmul.mubr.bf16.gmra.mrb[0].mxu0 %v6260
  %v7345 = vpop.f32.mrb[0].mxu0
  %v7346 = vpop.f32.mrb[0].mxu0
  %v7347 = vpop.f32.mrb[0].mxu0
  %v7348 = vpop.f32.mrb[0].mxu0
  %7349 = vmatprep.mubr.bf16.mxu0 %v6651
  %7350 = vmatmul.mubr.bf16.gmra.mrb[0].mxu0 %v6282
  %v7351 = vpop.f32.mrb[0].mxu0
  %v7352 = vpop.f32.mrb[0].mxu0
  %v7353 = vpop.f32.mrb[0].mxu0
  %v7354 = vpop.f32.mrb[0].mxu0
  %7355 = vmatprep.mubr.bf16.mxu0 %v6654
  %7356 = vmatmul.mubr.bf16.gmra.mrb[0].mxu0 %v6284
  %v7357 = vpop.f32.mrb[0].mxu0
  %v7358 = vpop.f32.mrb[0].mxu0
  %v7359 = vpop.f32.mrb[0].mxu0
  %v7360 = vpop.f32.mrb[0].mxu0
  %7361 = vmatprep.mubr.bf16.mxu0 %v6657
  %7362 = vmatmul.mubr.bf16.gmra.mrb[0].mxu0 %v6286
  %v7363 = vpop.f32.mrb[0].mxu0
  %v7364 = vpop.f32.mrb[0].mxu0
  %v7365 = vpop.f32.mrb[0].mxu0
  %v7366 = vpop.f32.mrb[0].mxu0
  %7367 = vmatprep.mubr.bf16.mxu0 %v6660
  %7368 = vmatmul.mubr.bf16.gmra.mrb[0].mxu0 %v6288
  %v7369 = vpop.f32.mrb[0].mxu0
  %v7370 = vpop.f32.mrb[0].mxu0
  %v7371 = vpop.f32.mrb[0].mxu0
  %v7372 = vpop.f32.mrb[0].mxu0
  %7373 = vmatprep.mubr.bf16.mxu0 %v6663
  %7374 = vmatmul.mubr.bf16.gmra.mrb[0].mxu0 %v6290
  %v7375 = vpop.f32.mrb[0].mxu0
  %v7376 = vpop.f32.mrb[0].mxu0
  %v7377 = vpop.f32.mrb[0].mxu0
  %v7378 = vpop.f32.mrb[0].mxu0
  %7379 = vmatprep.mubr.bf16.mxu0 %v6666
  %7380 = vmatmul.mubr.bf16.gmra.mrb[0].mxu0 %v6292
  %v7381 = vpop.f32.mrb[0].mxu0
  %v7382 = vpop.f32.mrb[0].mxu0
  %v7383 = vpop.f32.mrb[0].mxu0
  %v7384 = vpop.f32.mrb[0].mxu0
  %7385 = vmatprep.mubr.bf16.mxu0 %v6669
  %7386 = vmatmul.mubr.bf16.gmra.mrb[0].mxu0 %v6294
  %v7387 = vpop.f32.mrb[0].mxu0
  %v7388 = vpop.f32.mrb[0].mxu0
  %v7389 = vpop.f32.mrb[0].mxu0
  %v7390 = vpop.f32.mrb[0].mxu0
  %7391 = vdwg.mxu0
  %v7412 = vunpack.c.l.b16 %v6262
  %v7413 = vunpack.c.l.b16 %v6263
  %v7414 = vunpack.c.l.b16 %v6264
  %v7415 = vunpack.c.l.b16 %v6265
  %v7416 = vunpack.c.l.b16 %v6266
  %v7417 = vunpack.c.l.b16 %v6267
  %v7418 = vunpack.c.l.b16 %v6268
  %v7419 = vunpack.c.l.b16 %v6269
  %v7420 = vunpack.c.l.b16 %v6270
  %v7421 = vunpack.c.l.b16 %v6271
  %v7422 = vunpack.c.l.b16 %v6272
  %v7423 = vunpack.c.l.b16 %v6273
  %v7424 = vunpack.c.l.b16 %v6274
  %v7425 = vunpack.c.l.b16 %v6275
  %v7426 = vunpack.c.l.b16 %v6276
  %v7427 = vunpack.c.l.b16 %v6277
  %v7428 = vunpack.c.l.b16 %v6278
  %v7429 = vunpack.c.l.b16 %v6279
  %v7430 = vunpack.c.l.b16 %v6280
  %v7431 = vunpack.c.l.b16 %v6281
  %v7432 = vpack.c.b16 %v7413, %v7412
  %v7433 = vpack.c.b16 %v7415, %v7414
  %v7434 = vpack.c.b16 %v7417, %v7416
  %v7435 = vpack.c.b16 %v7419, %v7418
  %v7436 = vpack.c.b16 %v7421, %v7420
  %v7437 = vpack.c.b16 %v7423, %v7422
  %v7438 = vpack.c.b16 %v7425, %v7424
  %v7439 = vpack.c.b16 %v7427, %v7426
  %v7440 = vpack.c.b16 %v7429, %v7428
  %v7441 = vpack.c.b16 %v7431, %v7430
  %v7453 = vsel %vm4345, %v6067, 0
  %v7456 = vsel %vm4345, %v6069, 0
  %v7459 = vsel %vm4345, %v6071, 0
  %v7462 = vsel %vm4345, %v6073, 0
  %v7465 = vsel %vm4345, %v6075, 0
  %v7468 = vsel %vm4345, %v6077, 0
  %v7471 = vsel %vm4345, %v6079, 0
  %7473 = vmatprep.subr.bf16.mxu0 0
  %7474 = vmatpush1.bf16.msra.mxu0 %v7432
  %7475 = vmatprep.subr.bf16.mxu0 0
  %7476 = vmatpush1.bf16.msra.mxu0 %v7433
  %7477 = vmatprep.subr.bf16.mxu0 0
  %7478 = vmatpush1.bf16.msra.mxu0 %v7434
  %7479 = vmatprep.subr.bf16.mxu0 0
  %7480 = vmatpush1.bf16.msra.mxu0 %v7435
  %7481 = vmatprep.subr.bf16.mxu0 0
  %7482 = vmatpush1.bf16.msra.mxu0 %v7436
  %7483 = vmatprep.subr.bf16.mxu0 0
  %7484 = vmatpush1.bf16.msra.mxu0 %v7437
  %7485 = vmatprep.subr.bf16.mxu0 0
  %7486 = vmatpush1.bf16.msra.mxu0 %v7438
  %7487 = vmatprep.subr.bf16.mxu0 0
  %7488 = vmatpush1.bf16.msra.mxu0 %v7439
  %7489 = vmatprep.subr.bf16.mxu0 0
  %7490 = vmatpush1.bf16.msra.mxu0 %v7440
  %7491 = vmatprep.subr.bf16.mxu0 0
  %7492 = vmatpush1.bf16.msra.mxu0 %v7441
  %7493 = vmatprep.subr.bf16.mxu0 0
  %7494 = vmatpush1.bf16.msra.mxu0 0
  %7495 = vmatprep.subr.bf16.mxu0 0
  %7496 = vmatpush1.bf16.msra.mxu0 0
  %7497 = vmatprep.subr.bf16.mxu0 0
  %7498 = vmatpush1.bf16.msra.mxu0 0
  %7499 = vmatprep.subr.bf16.mxu0 0
  %7500 = vmatpush1.bf16.msra.mxu0 0
  %7501 = vmatprep.subr.bf16.mxu0 0
  %7502 = vmatpush1.bf16.msra.mxu0 0
  %7503 = vmatprep.subr.bf16.mxu0 0
  %7504 = vmatpush1.bf16.msra.mxu0 0
  %7505 = vmatprep.mubr.bf16.mxu0 %v7453
  %7506 = vmatmul.mubr.bf16.gmra.mrb[0].mxu0 %v6066
  %v7507 = vpop.f32.mrb[0].mxu0
  %v7508 = vadd.f32 %v6706, %v7507
  %v7509 = vpop.f32.mrb[0].mxu0
  %v7510 = vpop.f32.mrb[0].mxu0
  %v7511 = vadd.f32 %v6709, %v7510
  %v7512 = vpop.f32.mrb[0].mxu0
  %7513 = vmatprep.mubr.bf16.mxu0 %v7456
  %7514 = vmatmul.mubr.bf16.gmra.mrb[0].mxu0 %v6068
  %v7515 = vpop.f32.mrb[0].mxu0
  %v7516 = vadd.f32 %v6714, %v7515
  %v7517 = vpop.f32.mrb[0].mxu0
  %v7518 = vpop.f32.mrb[0].mxu0
  %v7519 = vadd.f32 %v6717, %v7518
  %v7520 = vpop.f32.mrb[0].mxu0
  %7521 = vmatprep.mubr.bf16.mxu0 %v7459
  %7522 = vmatmul.mubr.bf16.gmra.mrb[0].mxu0 %v6070
  %v7523 = vpop.f32.mrb[0].mxu0
  %v7524 = vadd.f32 %v6722, %v7523
  %v7525 = vpop.f32.mrb[0].mxu0
  %v7526 = vpop.f32.mrb[0].mxu0
  %v7527 = vadd.f32 %v6725, %v7526
  %v7528 = vpop.f32.mrb[0].mxu0
  %7529 = vmatprep.mubr.bf16.mxu0 %v7462
  %7530 = vmatmul.mubr.bf16.gmra.mrb[0].mxu0 %v6072
  %v7531 = vpop.f32.mrb[0].mxu0
  %v7532 = vadd.f32 %v6730, %v7531
  %v7533 = vpop.f32.mrb[0].mxu0
  %v7534 = vpop.f32.mrb[0].mxu0
  %v7535 = vadd.f32 %v6733, %v7534
  %v7536 = vpop.f32.mrb[0].mxu0
  %7537 = vmatprep.mubr.bf16.mxu0 %v7465
  %7538 = vmatmul.mubr.bf16.gmra.mrb[0].mxu0 %v6074
  %v7539 = vpop.f32.mrb[0].mxu0
  %v7540 = vadd.f32 %v6738, %v7539
  %v7541 = vpop.f32.mrb[0].mxu0
  %v7542 = vpop.f32.mrb[0].mxu0
  %v7543 = vadd.f32 %v6741, %v7542
  %v7544 = vpop.f32.mrb[0].mxu0
  %7545 = vmatprep.mubr.bf16.mxu0 %v7468
  %7546 = vmatmul.mubr.bf16.gmra.mrb[0].mxu0 %v6076
  %v7547 = vpop.f32.mrb[0].mxu0
  %v7548 = vpop.f32.mrb[0].mxu0
  %v7549 = vpop.f32.mrb[0].mxu0
  %v7550 = vpop.f32.mrb[0].mxu0
  %7551 = vmatprep.mubr.bf16.mxu0 %v7471
  %7552 = vmatmul.mubr.bf16.gmra.mrb[0].mxu0 %v6078
  %v7553 = vpop.f32.mrb[0].mxu0
  %v7554 = vpop.f32.mrb[0].mxu0
  %v7555 = vpop.f32.mrb[0].mxu0
  %v7556 = vpop.f32.mrb[0].mxu0
  %7557 = vmatprep.mubr.bf16.mxu0 %v6378
  %7558 = vmatmul.mubr.bf16.gmra.mrb[0].mxu0 %v6080
  %v7559 = vpop.f32.mrb[0].mxu0
  %v7560 = vadd.f32 %v6758, %v7559
  %v7561 = vpop.f32.mrb[0].mxu0
  %v7562 = vpop.f32.mrb[0].mxu0
  %v7563 = vadd.f32 %v6761, %v7562
  %v7564 = vpop.f32.mrb[0].mxu0
  %7565 = vmatprep.mubr.bf16.mxu0 %v6381
  %7566 = vmatmul.mubr.bf16.gmra.mrb[0].mxu0 %v6082
  %v7567 = vpop.f32.mrb[0].mxu0
  %v7568 = vadd.f32 %v6766, %v7567
  %v7569 = vpop.f32.mrb[0].mxu0
  %v7570 = vpop.f32.mrb[0].mxu0
  %v7571 = vadd.f32 %v6769, %v7570
  %v7572 = vpop.f32.mrb[0].mxu0
  %7573 = vmatprep.mubr.bf16.mxu0 %v6384
  %7574 = vmatmul.mubr.bf16.gmra.mrb[0].mxu0 %v6084
  %v7575 = vpop.f32.mrb[0].mxu0
  %v7576 = vadd.f32 %v6774, %v7575
  %v7577 = vpop.f32.mrb[0].mxu0
  %v7578 = vpop.f32.mrb[0].mxu0
  %v7579 = vadd.f32 %v6777, %v7578
  %v7580 = vpop.f32.mrb[0].mxu0
  %7581 = vmatprep.mubr.bf16.mxu0 %v6387
  %7582 = vmatmul.mubr.bf16.gmra.mrb[0].mxu0 %v6086
  %v7583 = vpop.f32.mrb[0].mxu0
  %v7584 = vadd.f32 %v6782, %v7583
  %v7585 = vpop.f32.mrb[0].mxu0
  %v7586 = vpop.f32.mrb[0].mxu0
  %v7587 = vadd.f32 %v6785, %v7586
  %v7588 = vpop.f32.mrb[0].mxu0
  %7589 = vmatprep.mubr.bf16.mxu0 %v6390
  %7590 = vmatmul.mubr.bf16.gmra.mrb[0].mxu0 %v6088
  %v7591 = vpop.f32.mrb[0].mxu0
  %v7592 = vadd.f32 %v6790, %v7591
  %v7593 = vpop.f32.mrb[0].mxu0
  %v7594 = vpop.f32.mrb[0].mxu0
  %v7595 = vadd.f32 %v6793, %v7594
  %v7596 = vpop.f32.mrb[0].mxu0
  %7597 = vmatprep.mubr.bf16.mxu0 %v6393
  %7598 = vmatmul.mubr.bf16.gmra.mrb[0].mxu0 %v6090
  %v7599 = vpop.f32.mrb[0].mxu0
  %v7600 = vpop.f32.mrb[0].mxu0
  %v7601 = vpop.f32.mrb[0].mxu0
  %v7602 = vpop.f32.mrb[0].mxu0
  %7603 = vmatprep.mubr.bf16.mxu0 %v6396
  %7604 = vmatmul.mubr.bf16.gmra.mrb[0].mxu0 %v6092
  %v7605 = vpop.f32.mrb[0].mxu0
  %v7606 = vpop.f32.mrb[0].mxu0
  %v7607 = vpop.f32.mrb[0].mxu0
  %v7608 = vpop.f32.mrb[0].mxu0
  %7609 = vmatprep.mubr.bf16.mxu0 %v6399
  %7610 = vmatmul.mubr.bf16.gmra.mrb[0].mxu0 %v6094
  %v7611 = vpop.f32.mrb[0].mxu0
  %v7612 = vadd.f32 %v6810, %v7611
  %v7613 = vpop.f32.mrb[0].mxu0
  %v7614 = vpop.f32.mrb[0].mxu0
  %v7615 = vadd.f32 %v6813, %v7614
  %v7616 = vpop.f32.mrb[0].mxu0
  %7617 = vmatprep.mubr.bf16.mxu0 %v6402
  %7618 = vmatmul.mubr.bf16.gmra.mrb[0].mxu0 %v6096
  %v7619 = vpop.f32.mrb[0].mxu0
  %v7620 = vadd.f32 %v6818, %v7619
  %v7621 = vpop.f32.mrb[0].mxu0
  %v7622 = vpop.f32.mrb[0].mxu0
  %v7623 = vadd.f32 %v6821, %v7622
  %v7624 = vpop.f32.mrb[0].mxu0
  %7625 = vmatprep.mubr.bf16.mxu0 %v6405
  %7626 = vmatmul.mubr.bf16.gmra.mrb[0].mxu0 %v6098
  %v7627 = vpop.f32.mrb[0].mxu0
  %v7628 = vadd.f32 %v6826, %v7627
  %v7629 = vpop.f32.mrb[0].mxu0
  %v7630 = vpop.f32.mrb[0].mxu0
  %v7631 = vadd.f32 %v6829, %v7630
  %v7632 = vpop.f32.mrb[0].mxu0
  %7633 = vmatprep.mubr.bf16.mxu0 %v6408
  %7634 = vmatmul.mubr.bf16.gmra.mrb[0].mxu0 %v6100
  %v7635 = vpop.f32.mrb[0].mxu0
  %v7636 = vadd.f32 %v6834, %v7635
  %v7637 = vpop.f32.mrb[0].mxu0
  %v7638 = vpop.f32.mrb[0].mxu0
  %v7639 = vadd.f32 %v6837, %v7638
  %v7640 = vpop.f32.mrb[0].mxu0
  %7641 = vmatprep.mubr.bf16.mxu0 %v6411
  %7642 = vmatmul.mubr.bf16.gmra.mrb[0].mxu0 %v6102
  %v7643 = vpop.f32.mrb[0].mxu0
  %v7644 = vadd.f32 %v6842, %v7643
  %v7645 = vpop.f32.mrb[0].mxu0
  %v7646 = vpop.f32.mrb[0].mxu0
  %v7647 = vadd.f32 %v6845, %v7646
  %v7648 = vpop.f32.mrb[0].mxu0
  %7649 = vmatprep.mubr.bf16.mxu0 %v6414
  %7650 = vmatmul.mubr.bf16.gmra.mrb[0].mxu0 %v6104
  %v7651 = vpop.f32.mrb[0].mxu0
  %v7652 = vpop.f32.mrb[0].mxu0
  %v7653 = vpop.f32.mrb[0].mxu0
  %v7654 = vpop.f32.mrb[0].mxu0
  %7655 = vmatprep.mubr.bf16.mxu0 %v6417
  %7656 = vmatmul.mubr.bf16.gmra.mrb[0].mxu0 %v6106
  %v7657 = vpop.f32.mrb[0].mxu0
  %v7658 = vpop.f32.mrb[0].mxu0
  %v7659 = vpop.f32.mrb[0].mxu0
  %v7660 = vpop.f32.mrb[0].mxu0
  %7661 = vmatprep.mubr.bf16.mxu0 %v6420
  %7662 = vmatmul.mubr.bf16.gmra.mrb[0].mxu0 %v6108
  %v7663 = vpop.f32.mrb[0].mxu0
  %v7664 = vadd.f32 %v6862, %v7663
  %v7665 = vpop.f32.mrb[0].mxu0
  %v7666 = vpop.f32.mrb[0].mxu0
  %v7667 = vadd.f32 %v6865, %v7666
  %v7668 = vpop.f32.mrb[0].mxu0
  %7669 = vmatprep.mubr.bf16.mxu0 %v6423
  %7670 = vmatmul.mubr.bf16.gmra.mrb[0].mxu0 %v6110
  %v7671 = vpop.f32.mrb[0].mxu0
  %v7672 = vadd.f32 %v6870, %v7671
  %v7673 = vpop.f32.mrb[0].mxu0
  %v7674 = vpop.f32.mrb[0].mxu0
  %v7675 = vadd.f32 %v6873, %v7674
  %v7676 = vpop.f32.mrb[0].mxu0
  %7677 = vmatprep.mubr.bf16.mxu0 %v6426
  %7678 = vmatmul.mubr.bf16.gmra.mrb[0].mxu0 %v6112
  %v7679 = vpop.f32.mrb[0].mxu0
  %v7680 = vadd.f32 %v6878, %v7679
  %v7681 = vpop.f32.mrb[0].mxu0
  %v7682 = vpop.f32.mrb[0].mxu0
  %v7683 = vadd.f32 %v6881, %v7682
  %v7684 = vpop.f32.mrb[0].mxu0
  %7685 = vmatprep.mubr.bf16.mxu0 %v6429
  %7686 = vmatmul.mubr.bf16.gmra.mrb[0].mxu0 %v6114
  %v7687 = vpop.f32.mrb[0].mxu0
  %v7688 = vadd.f32 %v6886, %v7687
  %v7689 = vpop.f32.mrb[0].mxu0
  %v7690 = vpop.f32.mrb[0].mxu0
  %v7691 = vadd.f32 %v6889, %v7690
  %v7692 = vpop.f32.mrb[0].mxu0
  %7693 = vmatprep.mubr.bf16.mxu0 %v6432
  %7694 = vmatmul.mubr.bf16.gmra.mrb[0].mxu0 %v6116
  %v7695 = vpop.f32.mrb[0].mxu0
  %v7696 = vadd.f32 %v6894, %v7695
  %v7697 = vpop.f32.mrb[0].mxu0
  %v7698 = vpop.f32.mrb[0].mxu0
  %v7699 = vadd.f32 %v6897, %v7698
  %v7700 = vpop.f32.mrb[0].mxu0
  %7701 = vmatprep.mubr.bf16.mxu0 %v6435
  %7702 = vmatmul.mubr.bf16.gmra.mrb[0].mxu0 %v6118
  %v7703 = vpop.f32.mrb[0].mxu0
  %v7704 = vpop.f32.mrb[0].mxu0
  %v7705 = vpop.f32.mrb[0].mxu0
  %v7706 = vpop.f32.mrb[0].mxu0
  %7707 = vmatprep.mubr.bf16.mxu0 %v6438
  %7708 = vmatmul.mubr.bf16.gmra.mrb[0].mxu0 %v6120
  %v7709 = vpop.f32.mrb[0].mxu0
  %v7710 = vpop.f32.mrb[0].mxu0
  %v7711 = vpop.f32.mrb[0].mxu0
  %v7712 = vpop.f32.mrb[0].mxu0
  %7713 = vmatprep.mubr.bf16.mxu0 %v6441
  %7714 = vmatmul.mubr.bf16.gmra.mrb[0].mxu0 %v6122
  %v7715 = vpop.f32.mrb[0].mxu0
  %v7716 = vadd.f32 %v6914, %v7715
  %v7717 = vpop.f32.mrb[0].mxu0
  %v7718 = vpop.f32.mrb[0].mxu0
  %v7719 = vadd.f32 %v6917, %v7718
  %v7720 = vpop.f32.mrb[0].mxu0
  %7721 = vmatprep.mubr.bf16.mxu0 %v6444
  %7722 = vmatmul.mubr.bf16.gmra.mrb[0].mxu0 %v6124
  %v7723 = vpop.f32.mrb[0].mxu0
  %v7724 = vadd.f32 %v6922, %v7723
  %v7725 = vpop.f32.mrb[0].mxu0
  %v7726 = vpop.f32.mrb[0].mxu0
  %v7727 = vadd.f32 %v6925, %v7726
  %v7728 = vpop.f32.mrb[0].mxu0
  %7729 = vmatprep.mubr.bf16.mxu0 %v6447
  %7730 = vmatmul.mubr.bf16.gmra.mrb[0].mxu0 %v6126
  %v7731 = vpop.f32.mrb[0].mxu0
  %v7732 = vadd.f32 %v6930, %v7731
  %v7733 = vpop.f32.mrb[0].mxu0
  %v7734 = vpop.f32.mrb[0].mxu0
  %v7735 = vadd.f32 %v6933, %v7734
  %v7736 = vpop.f32.mrb[0].mxu0
  %7737 = vmatprep.mubr.bf16.mxu0 %v6450
  %7738 = vmatmul.mubr.bf16.gmra.mrb[0].mxu0 %v6128
  %v7739 = vpop.f32.mrb[0].mxu0
  %v7740 = vadd.f32 %v6938, %v7739
  %v7741 = vpop.f32.mrb[0].mxu0
  %v7742 = vpop.f32.mrb[0].mxu0
  %v7743 = vadd.f32 %v6941, %v7742
  %v7744 = vpop.f32.mrb[0].mxu0
  %7745 = vmatprep.mubr.bf16.mxu0 %v6453
  %7746 = vmatmul.mubr.bf16.gmra.mrb[0].mxu0 %v6130
  %v7747 = vpop.f32.mrb[0].mxu0
  %v7748 = vadd.f32 %v6946, %v7747
  %v7749 = vpop.f32.mrb[0].mxu0
  %v7750 = vpop.f32.mrb[0].mxu0
  %v7751 = vadd.f32 %v6949, %v7750
  %v7752 = vpop.f32.mrb[0].mxu0
  %7753 = vmatprep.mubr.bf16.mxu0 %v6456
  %7754 = vmatmul.mubr.bf16.gmra.mrb[0].mxu0 %v6132
  %v7755 = vpop.f32.mrb[0].mxu0
  %v7756 = vpop.f32.mrb[0].mxu0
  %v7757 = vpop.f32.mrb[0].mxu0
  %v7758 = vpop.f32.mrb[0].mxu0
  %7759 = vmatprep.mubr.bf16.mxu0 %v6459
  %7760 = vmatmul.mubr.bf16.gmra.mrb[0].mxu0 %v6134
  %v7761 = vpop.f32.mrb[0].mxu0
  %v7762 = vpop.f32.mrb[0].mxu0
  %v7763 = vpop.f32.mrb[0].mxu0
  %v7764 = vpop.f32.mrb[0].mxu0
  %7765 = vmatprep.mubr.bf16.mxu0 %v6462
  %7766 = vmatmul.mubr.bf16.gmra.mrb[0].mxu0 %v6136
  %v7767 = vpop.f32.mrb[0].mxu0
  %v7768 = vadd.f32 %v6966, %v7767
  %v7769 = vpop.f32.mrb[0].mxu0
  %v7770 = vpop.f32.mrb[0].mxu0
  %v7771 = vadd.f32 %v6969, %v7770
  %v7772 = vpop.f32.mrb[0].mxu0
  %7773 = vmatprep.mubr.bf16.mxu0 %v6465
  %7774 = vmatmul.mubr.bf16.gmra.mrb[0].mxu0 %v6138
  %v7775 = vpop.f32.mrb[0].mxu0
  %v7776 = vadd.f32 %v6974, %v7775
  %v7777 = vpop.f32.mrb[0].mxu0
  %v7778 = vpop.f32.mrb[0].mxu0
  %v7779 = vadd.f32 %v6977, %v7778
  %v7780 = vpop.f32.mrb[0].mxu0
  %7781 = vmatprep.mubr.bf16.mxu0 %v6468
  %7782 = vmatmul.mubr.bf16.gmra.mrb[0].mxu0 %v6140
  %v7783 = vpop.f32.mrb[0].mxu0
  %v7784 = vadd.f32 %v6982, %v7783
  %v7785 = vpop.f32.mrb[0].mxu0
  %v7786 = vpop.f32.mrb[0].mxu0
  %v7787 = vadd.f32 %v6985, %v7786
  %v7788 = vpop.f32.mrb[0].mxu0
  %7789 = vmatprep.mubr.bf16.mxu0 %v6471
  %7790 = vmatmul.mubr.bf16.gmra.mrb[0].mxu0 %v6142
  %v7791 = vpop.f32.mrb[0].mxu0
  %v7792 = vadd.f32 %v6990, %v7791
  %v7793 = vpop.f32.mrb[0].mxu0
  %v7794 = vpop.f32.mrb[0].mxu0
  %v7795 = vadd.f32 %v6993, %v7794
  %v7796 = vpop.f32.mrb[0].mxu0
  %7797 = vmatprep.mubr.bf16.mxu0 %v6474
  %7798 = vmatmul.mubr.bf16.gmra.mrb[0].mxu0 %v6144
  %v7799 = vpop.f32.mrb[0].mxu0
  %v7800 = vadd.f32 %v6998, %v7799
  %v7801 = vpop.f32.mrb[0].mxu0
  %v7802 = vpop.f32.mrb[0].mxu0
  %v7803 = vadd.f32 %v7001, %v7802
  %v7804 = vpop.f32.mrb[0].mxu0
  %7805 = vmatprep.mubr.bf16.mxu0 %v6477
  %7806 = vmatmul.mubr.bf16.gmra.mrb[0].mxu0 %v6146
  %v7807 = vpop.f32.mrb[0].mxu0
  %v7808 = vpop.f32.mrb[0].mxu0
  %v7809 = vpop.f32.mrb[0].mxu0
  %v7810 = vpop.f32.mrb[0].mxu0
  %7811 = vmatprep.mubr.bf16.mxu0 %v6480
  %7812 = vmatmul.mubr.bf16.gmra.mrb[0].mxu0 %v6148
  %v7813 = vpop.f32.mrb[0].mxu0
  %v7814 = vpop.f32.mrb[0].mxu0
  %v7815 = vpop.f32.mrb[0].mxu0
  %v7816 = vpop.f32.mrb[0].mxu0
  %7817 = vmatprep.mubr.bf16.mxu0 %v6483
  %7818 = vmatmul.mubr.bf16.gmra.mrb[0].mxu0 %v6150
  %v7819 = vpop.f32.mrb[0].mxu0
  %v7820 = vadd.f32 %v7018, %v7819
  %v7821 = vpop.f32.mrb[0].mxu0
  %v7822 = vpop.f32.mrb[0].mxu0
  %v7823 = vadd.f32 %v7021, %v7822
  %v7824 = vpop.f32.mrb[0].mxu0
  %7825 = vmatprep.mubr.bf16.mxu0 %v6486
  %7826 = vmatmul.mubr.bf16.gmra.mrb[0].mxu0 %v6152
  %v7827 = vpop.f32.mrb[0].mxu0
  %v7828 = vadd.f32 %v7026, %v7827
  %v7829 = vpop.f32.mrb[0].mxu0
  %v7830 = vpop.f32.mrb[0].mxu0
  %v7831 = vadd.f32 %v7029, %v7830
  %v7832 = vpop.f32.mrb[0].mxu0
  %7833 = vmatprep.mubr.bf16.mxu0 %v6489
  %7834 = vmatmul.mubr.bf16.gmra.mrb[0].mxu0 %v6154
  %v7835 = vpop.f32.mrb[0].mxu0
  %v7836 = vadd.f32 %v7034, %v7835
  %v7837 = vpop.f32.mrb[0].mxu0
  %v7838 = vpop.f32.mrb[0].mxu0
  %v7839 = vadd.f32 %v7037, %v7838
  %v7840 = vpop.f32.mrb[0].mxu0
  %7841 = vmatprep.mubr.bf16.mxu0 %v6492
  %7842 = vmatmul.mubr.bf16.gmra.mrb[0].mxu0 %v6156
  %v7843 = vpop.f32.mrb[0].mxu0
  %v7844 = vadd.f32 %v7042, %v7843
  %v7845 = vpop.f32.mrb[0].mxu0
  %v7846 = vpop.f32.mrb[0].mxu0
  %v7847 = vadd.f32 %v7045, %v7846
  %v7848 = vpop.f32.mrb[0].mxu0
  %7849 = vmatprep.mubr.bf16.mxu0 %v6495
  %7850 = vmatmul.mubr.bf16.gmra.mrb[0].mxu0 %v6158
  %v7851 = vpop.f32.mrb[0].mxu0
  %v7852 = vadd.f32 %v7050, %v7851
  %v7853 = vpop.f32.mrb[0].mxu0
  %v7854 = vpop.f32.mrb[0].mxu0
  %v7855 = vadd.f32 %v7053, %v7854
  %v7856 = vpop.f32.mrb[0].mxu0
  %7857 = vmatprep.mubr.bf16.mxu0 %v6498
  %7858 = vmatmul.mubr.bf16.gmra.mrb[0].mxu0 %v6160
  %v7859 = vpop.f32.mrb[0].mxu0
  %v7860 = vpop.f32.mrb[0].mxu0
  %v7861 = vpop.f32.mrb[0].mxu0
  %v7862 = vpop.f32.mrb[0].mxu0
  %7863 = vmatprep.mubr.bf16.mxu0 %v6501
  %7864 = vmatmul.mubr.bf16.gmra.mrb[0].mxu0 %v6162
  %v7865 = vpop.f32.mrb[0].mxu0
  %v7866 = vpop.f32.mrb[0].mxu0
  %v7867 = vpop.f32.mrb[0].mxu0
  %v7868 = vpop.f32.mrb[0].mxu0
  %7869 = vmatprep.mubr.bf16.mxu0 %v6504
  %7870 = vmatmul.mubr.bf16.gmra.mrb[0].mxu0 %v6164
  %v7871 = vpop.f32.mrb[0].mxu0
  %v7872 = vadd.f32 %v7070, %v7871
  %v7873 = vpop.f32.mrb[0].mxu0
  %v7874 = vpop.f32.mrb[0].mxu0
  %v7875 = vadd.f32 %v7073, %v7874
  %v7876 = vpop.f32.mrb[0].mxu0
  %7877 = vmatprep.mubr.bf16.mxu0 %v6507
  %7878 = vmatmul.mubr.bf16.gmra.mrb[0].mxu0 %v6166
  %v7879 = vpop.f32.mrb[0].mxu0
  %v7880 = vadd.f32 %v7078, %v7879
  %v7881 = vpop.f32.mrb[0].mxu0
  %v7882 = vpop.f32.mrb[0].mxu0
  %v7883 = vadd.f32 %v7081, %v7882
  %v7884 = vpop.f32.mrb[0].mxu0
  %7885 = vmatprep.mubr.bf16.mxu0 %v6510
  %7886 = vmatmul.mubr.bf16.gmra.mrb[0].mxu0 %v6168
  %v7887 = vpop.f32.mrb[0].mxu0
  %v7888 = vadd.f32 %v7086, %v7887
  %v7889 = vpop.f32.mrb[0].mxu0
  %v7890 = vpop.f32.mrb[0].mxu0
  %v7891 = vadd.f32 %v7089, %v7890
  %v7892 = vpop.f32.mrb[0].mxu0
  %7893 = vmatprep.mubr.bf16.mxu0 %v6513
  %7894 = vmatmul.mubr.bf16.gmra.mrb[0].mxu0 %v6170
  %v7895 = vpop.f32.mrb[0].mxu0
  %v7896 = vadd.f32 %v7094, %v7895
  %v7897 = vpop.f32.mrb[0].mxu0
  %v7898 = vpop.f32.mrb[0].mxu0
  %v7899 = vadd.f32 %v7097, %v7898
  %v7900 = vpop.f32.mrb[0].mxu0
  %7901 = vmatprep.mubr.bf16.mxu0 %v6516
  %7902 = vmatmul.mubr.bf16.gmra.mrb[0].mxu0 %v6172
  %v7903 = vpop.f32.mrb[0].mxu0
  %v7904 = vadd.f32 %v7102, %v7903
  %v7905 = vpop.f32.mrb[0].mxu0
  %v7906 = vpop.f32.mrb[0].mxu0
  %v7907 = vadd.f32 %v7105, %v7906
  %v7908 = vpop.f32.mrb[0].mxu0
  %7909 = vmatprep.mubr.bf16.mxu0 %v6519
  %7910 = vmatmul.mubr.bf16.gmra.mrb[0].mxu0 %v6174
  %v7911 = vpop.f32.mrb[0].mxu0
  %v7912 = vpop.f32.mrb[0].mxu0
  %v7913 = vpop.f32.mrb[0].mxu0
  %v7914 = vpop.f32.mrb[0].mxu0
  %7915 = vmatprep.mubr.bf16.mxu0 %v6522
  %7916 = vmatmul.mubr.bf16.gmra.mrb[0].mxu0 %v6176
  %v7917 = vpop.f32.mrb[0].mxu0
  %v7918 = vpop.f32.mrb[0].mxu0
  %v7919 = vpop.f32.mrb[0].mxu0
  %v7920 = vpop.f32.mrb[0].mxu0
  %7921 = vmatprep.mubr.bf16.mxu0 %v6525
  %7922 = vmatmul.mubr.bf16.gmra.mrb[0].mxu0 %v6178
  %v7923 = vpop.f32.mrb[0].mxu0
  %v7924 = vadd.f32 %v7122, %v7923
  %v7925 = vpop.f32.mrb[0].mxu0
  %v7926 = vpop.f32.mrb[0].mxu0
  %v7927 = vadd.f32 %v7125, %v7926
  %v7928 = vpop.f32.mrb[0].mxu0
  %7929 = vmatprep.mubr.bf16.mxu0 %v6528
  %7930 = vmatmul.mubr.bf16.gmra.mrb[0].mxu0 %v6180
  %v7931 = vpop.f32.mrb[0].mxu0
  %v7932 = vadd.f32 %v7130, %v7931
  %v7933 = vpop.f32.mrb[0].mxu0
  %v7934 = vpop.f32.mrb[0].mxu0
  %v7935 = vadd.f32 %v7133, %v7934
  %v7936 = vpop.f32.mrb[0].mxu0
  %7937 = vmatprep.mubr.bf16.mxu0 %v6531
  %7938 = vmatmul.mubr.bf16.gmra.mrb[0].mxu0 %v6182
  %v7939 = vpop.f32.mrb[0].mxu0
  %v7940 = vadd.f32 %v7138, %v7939
  %v7941 = vpop.f32.mrb[0].mxu0
  %v7942 = vpop.f32.mrb[0].mxu0
  %v7943 = vadd.f32 %v7141, %v7942
  %v7944 = vpop.f32.mrb[0].mxu0
  %7945 = vmatprep.mubr.bf16.mxu0 %v6534
  %7946 = vmatmul.mubr.bf16.gmra.mrb[0].mxu0 %v6184
  %v7947 = vpop.f32.mrb[0].mxu0
  %v7948 = vadd.f32 %v7146, %v7947
  %v7949 = vpop.f32.mrb[0].mxu0
  %v7950 = vpop.f32.mrb[0].mxu0
  %v7951 = vadd.f32 %v7149, %v7950
  %v7952 = vpop.f32.mrb[0].mxu0
  %7953 = vmatprep.mubr.bf16.mxu0 %v6537
  %7954 = vmatmul.mubr.bf16.gmra.mrb[0].mxu0 %v6186
  %v7955 = vpop.f32.mrb[0].mxu0
  %v7956 = vadd.f32 %v7154, %v7955
  %v7957 = vpop.f32.mrb[0].mxu0
  %v7958 = vpop.f32.mrb[0].mxu0
  %v7959 = vadd.f32 %v7157, %v7958
  %v7960 = vpop.f32.mrb[0].mxu0
  %7961 = vmatprep.mubr.bf16.mxu0 %v6540
  %7962 = vmatmul.mubr.bf16.gmra.mrb[0].mxu0 %v6188
  %v7963 = vpop.f32.mrb[0].mxu0
  %v7964 = vpop.f32.mrb[0].mxu0
  %v7965 = vpop.f32.mrb[0].mxu0
  %v7966 = vpop.f32.mrb[0].mxu0
  %7967 = vmatprep.mubr.bf16.mxu0 %v6543
  %7968 = vmatmul.mubr.bf16.gmra.mrb[0].mxu0 %v6190
  %v7969 = vpop.f32.mrb[0].mxu0
  %v7970 = vpop.f32.mrb[0].mxu0
  %v7971 = vpop.f32.mrb[0].mxu0
  %v7972 = vpop.f32.mrb[0].mxu0
  %7973 = vmatprep.mubr.bf16.mxu0 %v6546
  %7974 = vmatmul.mubr.bf16.gmra.mrb[0].mxu0 %v6192
  %v7975 = vpop.f32.mrb[0].mxu0
  %v7976 = vadd.f32 %v7174, %v7975
  %v7977 = vpop.f32.mrb[0].mxu0
  %v7978 = vpop.f32.mrb[0].mxu0
  %v7979 = vadd.f32 %v7177, %v7978
  %v7980 = vpop.f32.mrb[0].mxu0
  %7981 = vmatprep.mubr.bf16.mxu0 %v6549
  %7982 = vmatmul.mubr.bf16.gmra.mrb[0].mxu0 %v6194
  %v7983 = vpop.f32.mrb[0].mxu0
  %v7984 = vadd.f32 %v7182, %v7983
  %v7985 = vpop.f32.mrb[0].mxu0
  %v7986 = vpop.f32.mrb[0].mxu0
  %v7987 = vadd.f32 %v7185, %v7986
  %v7988 = vpop.f32.mrb[0].mxu0
  %7989 = vmatprep.mubr.bf16.mxu0 %v6552
  %7990 = vmatmul.mubr.bf16.gmra.mrb[0].mxu0 %v6196
  %v7991 = vpop.f32.mrb[0].mxu0
  %v7992 = vadd.f32 %v7190, %v7991
  %v7993 = vpop.f32.mrb[0].mxu0
  %v7994 = vpop.f32.mrb[0].mxu0
  %v7995 = vadd.f32 %v7193, %v7994
  %v7996 = vpop.f32.mrb[0].mxu0
  %7997 = vmatprep.mubr.bf16.mxu0 %v6555
  %7998 = vmatmul.mubr.bf16.gmra.mrb[0].mxu0 %v6198
  %v7999 = vpop.f32.mrb[0].mxu0
  %v8000 = vadd.f32 %v7198, %v7999
  %v8001 = vpop.f32.mrb[0].mxu0
  %v8002 = vpop.f32.mrb[0].mxu0
  %v8003 = vadd.f32 %v7201, %v8002
  %v8004 = vpop.f32.mrb[0].mxu0
  %8005 = vmatprep.mubr.bf16.mxu0 %v6558
  %8006 = vmatmul.mubr.bf16.gmra.mrb[0].mxu0 %v6200
  %v8007 = vpop.f32.mrb[0].mxu0
  %v8008 = vadd.f32 %v7206, %v8007
  %v8009 = vpop.f32.mrb[0].mxu0
  %v8010 = vpop.f32.mrb[0].mxu0
  %v8011 = vadd.f32 %v7209, %v8010
  %v8012 = vpop.f32.mrb[0].mxu0
  %8013 = vmatprep.mubr.bf16.mxu0 %v6561
  %8014 = vmatmul.mubr.bf16.gmra.mrb[0].mxu0 %v6202
  %v8015 = vpop.f32.mrb[0].mxu0
  %v8016 = vpop.f32.mrb[0].mxu0
  %v8017 = vpop.f32.mrb[0].mxu0
  %v8018 = vpop.f32.mrb[0].mxu0
  %8019 = vmatprep.mubr.bf16.mxu0 %v6564
  %8020 = vmatmul.mubr.bf16.gmra.mrb[0].mxu0 %v6204
  %v8021 = vpop.f32.mrb[0].mxu0
  %v8022 = vpop.f32.mrb[0].mxu0
  %v8023 = vpop.f32.mrb[0].mxu0
  %v8024 = vpop.f32.mrb[0].mxu0
  %8025 = vmatprep.mubr.bf16.mxu0 %v6567
  %8026 = vmatmul.mubr.bf16.gmra.mrb[0].mxu0 %v6206
  %v8027 = vpop.f32.mrb[0].mxu0
  %v8028 = vpop.f32.mrb[0].mxu0
  %v8029 = vpop.f32.mrb[0].mxu0
  %v8030 = vpop.f32.mrb[0].mxu0
  %8031 = vmatprep.mubr.bf16.mxu0 %v6570
  %8032 = vmatmul.mubr.bf16.gmra.mrb[0].mxu0 %v6208
  %v8033 = vpop.f32.mrb[0].mxu0
  %v8034 = vpop.f32.mrb[0].mxu0
  %v8035 = vpop.f32.mrb[0].mxu0
  %v8036 = vpop.f32.mrb[0].mxu0
  %8037 = vmatprep.mubr.bf16.mxu0 %v6573
  %8038 = vmatmul.mubr.bf16.gmra.mrb[0].mxu0 %v6210
  %v8039 = vpop.f32.mrb[0].mxu0
  %v8040 = vpop.f32.mrb[0].mxu0
  %v8041 = vpop.f32.mrb[0].mxu0
  %v8042 = vpop.f32.mrb[0].mxu0
  %8043 = vmatprep.mubr.bf16.mxu0 %v6576
  %8044 = vmatmul.mubr.bf16.gmra.mrb[0].mxu0 %v6212
  %v8045 = vpop.f32.mrb[0].mxu0
  %v8046 = vpop.f32.mrb[0].mxu0
  %v8047 = vpop.f32.mrb[0].mxu0
  %v8048 = vpop.f32.mrb[0].mxu0
  %8049 = vmatprep.mubr.bf16.mxu0 %v6579
  %8050 = vmatmul.mubr.bf16.gmra.mrb[0].mxu0 %v6214
  %v8051 = vpop.f32.mrb[0].mxu0
  %v8052 = vpop.f32.mrb[0].mxu0
  %v8053 = vpop.f32.mrb[0].mxu0
  %v8054 = vpop.f32.mrb[0].mxu0
  %8055 = vmatprep.mubr.bf16.mxu0 %v6582
  %8056 = vmatmul.mubr.bf16.gmra.mrb[0].mxu0 %v6216
  %v8057 = vpop.f32.mrb[0].mxu0
  %v8058 = vpop.f32.mrb[0].mxu0
  %v8059 = vpop.f32.mrb[0].mxu0
  %v8060 = vpop.f32.mrb[0].mxu0
  %8061 = vmatprep.mubr.bf16.mxu0 %v6585
  %8062 = vmatmul.mubr.bf16.gmra.mrb[0].mxu0 %v6218
  %v8063 = vpop.f32.mrb[0].mxu0
  %v8064 = vpop.f32.mrb[0].mxu0
  %v8065 = vpop.f32.mrb[0].mxu0
  %v8066 = vpop.f32.mrb[0].mxu0
  %8067 = vmatprep.mubr.bf16.mxu0 %v6588
  %8068 = vmatmul.mubr.bf16.gmra.mrb[0].mxu0 %v6220
  %v8069 = vpop.f32.mrb[0].mxu0
  %v8070 = vpop.f32.mrb[0].mxu0
  %v8071 = vpop.f32.mrb[0].mxu0
  %v8072 = vpop.f32.mrb[0].mxu0
  %8073 = vmatprep.mubr.bf16.mxu0 %v6591
  %8074 = vmatmul.mubr.bf16.gmra.mrb[0].mxu0 %v6222
  %v8075 = vpop.f32.mrb[0].mxu0
  %v8076 = vpop.f32.mrb[0].mxu0
  %v8077 = vpop.f32.mrb[0].mxu0
  %v8078 = vpop.f32.mrb[0].mxu0
  %8079 = vmatprep.mubr.bf16.mxu0 %v6594
  %8080 = vmatmul.mubr.bf16.gmra.mrb[0].mxu0 %v6224
  %v8081 = vpop.f32.mrb[0].mxu0
  %v8082 = vpop.f32.mrb[0].mxu0
  %v8083 = vpop.f32.mrb[0].mxu0
  %v8084 = vpop.f32.mrb[0].mxu0
  %8085 = vmatprep.mubr.bf16.mxu0 %v6597
  %8086 = vmatmul.mubr.bf16.gmra.mrb[0].mxu0 %v6226
  %v8087 = vpop.f32.mrb[0].mxu0
  %v8088 = vpop.f32.mrb[0].mxu0
  %v8089 = vpop.f32.mrb[0].mxu0
  %v8090 = vpop.f32.mrb[0].mxu0
  %8091 = vmatprep.mubr.bf16.mxu0 %v6600
  %8092 = vmatmul.mubr.bf16.gmra.mrb[0].mxu0 %v6228
  %v8093 = vpop.f32.mrb[0].mxu0
  %v8094 = vpop.f32.mrb[0].mxu0
  %v8095 = vpop.f32.mrb[0].mxu0
  %v8096 = vpop.f32.mrb[0].mxu0
  %8097 = vmatprep.mubr.bf16.mxu0 %v6603
  %8098 = vmatmul.mubr.bf16.gmra.mrb[0].mxu0 %v6230
  %v8099 = vpop.f32.mrb[0].mxu0
  %v8100 = vpop.f32.mrb[0].mxu0
  %v8101 = vpop.f32.mrb[0].mxu0
  %v8102 = vpop.f32.mrb[0].mxu0
  %8103 = vmatprep.mubr.bf16.mxu0 %v6606
  %8104 = vmatmul.mubr.bf16.gmra.mrb[0].mxu0 %v6232
  %v8105 = vpop.f32.mrb[0].mxu0
  %v8106 = vpop.f32.mrb[0].mxu0
  %v8107 = vpop.f32.mrb[0].mxu0
  %v8108 = vpop.f32.mrb[0].mxu0
  %8109 = vmatprep.mubr.bf16.mxu0 %v6609
  %8110 = vmatmul.mubr.bf16.gmra.mrb[0].mxu0 %v6234
  %v8111 = vpop.f32.mrb[0].mxu0
  %v8112 = vpop.f32.mrb[0].mxu0
  %v8113 = vpop.f32.mrb[0].mxu0
  %v8114 = vpop.f32.mrb[0].mxu0
  %8115 = vmatprep.mubr.bf16.mxu0 %v6612
  %8116 = vmatmul.mubr.bf16.gmra.mrb[0].mxu0 %v6236
  %v8117 = vpop.f32.mrb[0].mxu0
  %v8118 = vpop.f32.mrb[0].mxu0
  %v8119 = vpop.f32.mrb[0].mxu0
  %v8120 = vpop.f32.mrb[0].mxu0
  %8121 = vmatprep.mubr.bf16.mxu0 %v6615
  %8122 = vmatmul.mubr.bf16.gmra.mrb[0].mxu0 %v6238
  %v8123 = vpop.f32.mrb[0].mxu0
  %v8124 = vpop.f32.mrb[0].mxu0
  %v8125 = vpop.f32.mrb[0].mxu0
  %v8126 = vpop.f32.mrb[0].mxu0
  %8127 = vmatprep.mubr.bf16.mxu0 %v6618
  %8128 = vmatmul.mubr.bf16.gmra.mrb[0].mxu0 %v6240
  %v8129 = vpop.f32.mrb[0].mxu0
  %v8130 = vpop.f32.mrb[0].mxu0
  %v8131 = vpop.f32.mrb[0].mxu0
  %v8132 = vpop.f32.mrb[0].mxu0
  %8133 = vmatprep.mubr.bf16.mxu0 %v6621
  %8134 = vmatmul.mubr.bf16.gmra.mrb[0].mxu0 %v6242
  %v8135 = vpop.f32.mrb[0].mxu0
  %v8136 = vpop.f32.mrb[0].mxu0
  %v8137 = vpop.f32.mrb[0].mxu0
  %v8138 = vpop.f32.mrb[0].mxu0
  %8139 = vmatprep.mubr.bf16.mxu0 %v6624
  %8140 = vmatmul.mubr.bf16.gmra.mrb[0].mxu0 %v6244
  %v8141 = vpop.f32.mrb[0].mxu0
  %v8142 = vpop.f32.mrb[0].mxu0
  %v8143 = vpop.f32.mrb[0].mxu0
  %v8144 = vpop.f32.mrb[0].mxu0
  %8145 = vmatprep.mubr.bf16.mxu0 %v6627
  %8146 = vmatmul.mubr.bf16.gmra.mrb[0].mxu0 %v6246
  %v8147 = vpop.f32.mrb[0].mxu0
  %v8148 = vpop.f32.mrb[0].mxu0
  %v8149 = vpop.f32.mrb[0].mxu0
  %v8150 = vpop.f32.mrb[0].mxu0
  %8151 = vmatprep.mubr.bf16.mxu0 %v6630
  %8152 = vmatmul.mubr.bf16.gmra.mrb[0].mxu0 %v6248
  %v8153 = vpop.f32.mrb[0].mxu0
  %v8154 = vpop.f32.mrb[0].mxu0
  %v8155 = vpop.f32.mrb[0].mxu0
  %v8156 = vpop.f32.mrb[0].mxu0
  %8157 = vmatprep.mubr.bf16.mxu0 %v6633
  %8158 = vmatmul.mubr.bf16.gmra.mrb[0].mxu0 %v6250
  %v8159 = vpop.f32.mrb[0].mxu0
  %v8160 = vpop.f32.mrb[0].mxu0
  %v8161 = vpop.f32.mrb[0].mxu0
  %v8162 = vpop.f32.mrb[0].mxu0
  %8163 = vmatprep.mubr.bf16.mxu0 %v6636
  %8164 = vmatmul.mubr.bf16.gmra.mrb[0].mxu0 %v6252
  %v8165 = vpop.f32.mrb[0].mxu0
  %v8166 = vpop.f32.mrb[0].mxu0
  %v8167 = vpop.f32.mrb[0].mxu0
  %v8168 = vpop.f32.mrb[0].mxu0
  %8169 = vmatprep.mubr.bf16.mxu0 %v6639
  %8170 = vmatmul.mubr.bf16.gmra.mrb[0].mxu0 %v6254
  %v8171 = vpop.f32.mrb[0].mxu0
  %v8172 = vpop.f32.mrb[0].mxu0
  %v8173 = vpop.f32.mrb[0].mxu0
  %v8174 = vpop.f32.mrb[0].mxu0
  %8175 = vmatprep.mubr.bf16.mxu0 %v6642
  %8176 = vmatmul.mubr.bf16.gmra.mrb[0].mxu0 %v6256
  %v8177 = vpop.f32.mrb[0].mxu0
  %v8178 = vpop.f32.mrb[0].mxu0
  %v8179 = vpop.f32.mrb[0].mxu0
  %v8180 = vpop.f32.mrb[0].mxu0
  %8181 = vmatprep.mubr.bf16.mxu0 %v6645
  %8182 = vmatmul.mubr.bf16.gmra.mrb[0].mxu0 %v6258
  %v8183 = vpop.f32.mrb[0].mxu0
  %v8184 = vpop.f32.mrb[0].mxu0
  %v8185 = vpop.f32.mrb[0].mxu0
  %v8186 = vpop.f32.mrb[0].mxu0
  %8187 = vmatprep.mubr.bf16.mxu0 %v6648
  %8188 = vmatmul.mubr.bf16.gmra.mrb[0].mxu0 %v6260
  %v8189 = vpop.f32.mrb[0].mxu0
  %v8190 = vpop.f32.mrb[0].mxu0
  %v8191 = vpop.f32.mrb[0].mxu0
  %v8192 = vpop.f32.mrb[0].mxu0
  %8193 = vdwg.mxu0
  %v8194 = vld [vmem:[#allocation2 + $0xe0] sm:$0xff]
  %v8195 = vld [vmem:[#allocation2 + $0xe8] sm:$0xff]
  %v8196 = vld [vmem:[#allocation2 + $0xf0] sm:$0xff]
  %v8197 = vld [vmem:[#allocation2 + $0xf8] sm:$0xff]
  %v8198 = vld [vmem:[#allocation2 + $0x100] sm:$0xff]
  %v8199 = vld [vmem:[#allocation2 + $0x108] sm:$0xff]
  %v8200 = vld [vmem:[#allocation2 + $0x110] sm:$0xff]
  %v8201 = vld [vmem:[#allocation2 + $0x118] sm:$0xff]
  %v8202 = vld [vmem:[#allocation2 + $0x120] sm:$0xff]
  %v8203 = vld [vmem:[#allocation2 + $0x128] sm:$0xff]
  %v8204 = vld [vmem:[#allocation2 + $0x130] sm:$0xff]
  %v8205 = vld [vmem:[#allocation2 + $0x138] sm:$0xff]
  %v8206 = vld [vmem:[#allocation2 + $0x140] sm:$0xff]
  %v8207 = vld [vmem:[#allocation2 + $0x148] sm:$0xff]
  %v8208 = vld [vmem:[#allocation2 + $0x150] sm:$0xff]
  %v8209 = vld [vmem:[#allocation2 + $0x158] sm:$0xff]
  %v8210 = vld [vmem:[#allocation2 + $0x160] sm:$0xff]
  %v8211 = vld [vmem:[#allocation2 + $0x168] sm:$0xff]
  %v8212 = vld [vmem:[#allocation2 + $0x170] sm:$0xff]
  %v8213 = vld [vmem:[#allocation2 + $0x178] sm:$0xff]
  %v8214 = vld [vmem:[#allocation2 + $0x180] sm:$0xff]
  %v8215 = vld [vmem:[#allocation2 + $0x188] sm:$0xff]
  %v8216 = vld [vmem:[#allocation2 + $0x190] sm:$0xff]
  %v8217 = vld [vmem:[#allocation2 + $0x198] sm:$0xff]
  %v8218 = vld [vmem:[#allocation2 + $0x1a0] sm:$0xff]
  %v8219 = vld [vmem:[#allocation2 + $0x1a8] sm:$0xff]
  %v8220 = vld [vmem:[#allocation2 + $0x1b0] sm:$0xff]
  %v8221 = vld [vmem:[#allocation2 + $0x1b8] sm:$0xff]
  %v8222 = vld [vmem:[#allocation2 + $0x1c0] sm:$0xff]
  %v8223 = vld [vmem:[#allocation2 + $0x1c8] sm:$0xff]
  %v8224 = vld [vmem:[#allocation2 + $0x1d0] sm:$0xff]
  %v8225 = vld [vmem:[#allocation2 + $0x1d8] sm:$0xff]
  %v8226 = vld [vmem:[#allocation2 + $0x1e0] sm:$0xff]
  %v8227 = vld [vmem:[#allocation2 + $0x1e8] sm:$0xff]
  %v8228 = vld [vmem:[#allocation2 + $0x1f0] sm:$0xff]
  %v8229 = vld [vmem:[#allocation2 + $0x1f8] sm:$0xff]
  %v8230 = vld [vmem:[#allocation2 + $0x200] sm:$0xff]
  %v8231 = vld [vmem:[#allocation2 + $0x208] sm:$0xff]
  %v8232 = vld [vmem:[#allocation2 + $0x210] sm:$0xff]
  %v8233 = vld [vmem:[#allocation2 + $0x218] sm:$0xff]
  %v8234 = vld [vmem:[#allocation2 + $0x220] sm:$0xff]
  %v8235 = vld [vmem:[#allocation2 + $0x228] sm:$0xff]
  %v8236 = vld [vmem:[#allocation2 + $0x230] sm:$0xff]
  %v8237 = vld [vmem:[#allocation2 + $0x238] sm:$0xff]
  %v8238 = vld [vmem:[#allocation2 + $0x240] sm:$0xff]
  %v8239 = vld [vmem:[#allocation2 + $0x248] sm:$0xff]
  %v8240 = vld [vmem:[#allocation2 + $0x250] sm:$0xff]
  %v8241 = vld [vmem:[#allocation2 + $0x258] sm:$0xff]
  %v8242 = vld [vmem:[#allocation2 + $0x260] sm:$0xff]
  %v8243 = vld [vmem:[#allocation2 + $0x268] sm:$0xff]
  %v8244 = vld [vmem:[#allocation2 + $0x270] sm:$0xff]
  %v8245 = vld [vmem:[#allocation2 + $0x278] sm:$0xff]
  %v8246 = vld [vmem:[#allocation2 + $0x280] sm:$0xff]
  %v8247 = vld [vmem:[#allocation2 + $0x288] sm:$0xff]
  %v8248 = vld [vmem:[#allocation2 + $0x290] sm:$0xff]
  %v8249 = vld [vmem:[#allocation2 + $0x298] sm:$0xff]
  %v8250 = vld [vmem:[#allocation2 + $0x2a0] sm:$0xff]
  %v8251 = vld [vmem:[#allocation2 + $0x2a8] sm:$0xff]
  %v8252 = vld [vmem:[#allocation2 + $0x2b0] sm:$0xff]
  %v8253 = vld [vmem:[#allocation2 + $0x2b8] sm:$0xff]
  %v8254 = vld [vmem:[#allocation2 + $0x2c0] sm:$0xff]
  %v8255 = vld [vmem:[#allocation2 + $0x2c8] sm:$0xff]
  %v8256 = vld [vmem:[#allocation2 + $0x2d0] sm:$0xff]
  %v8257 = vld [vmem:[#allocation2 + $0x2d8] sm:$0xff]
  %v8258 = vld [vmem:[#allocation2 + $0x2e0] sm:$0xff]
  %v8259 = vld [vmem:[#allocation2 + $0x2e8] sm:$0xff]
  %v8260 = vld [vmem:[#allocation2 + $0x2f0] sm:$0xff]
  %v8261 = vld [vmem:[#allocation2 + $0x2f8] sm:$0xff]
  %v8262 = vld [vmem:[#allocation2 + $0x300] sm:$0xff]
  %v8263 = vld [vmem:[#allocation2 + $0x308] sm:$0xff]
  %v8264 = vld [vmem:[#allocation2 + $0x310] sm:$0xff]
  %v8265 = vld [vmem:[#allocation2 + $0x318] sm:$0xff]
  %v8266 = vld [vmem:[#allocation2 + $0x320] sm:$0xff]
  %v8267 = vld [vmem:[#allocation2 + $0x328] sm:$0xff]
  %v8268 = vld [vmem:[#allocation2 + $0x330] sm:$0xff]
  %v8269 = vld [vmem:[#allocation2 + $0x338] sm:$0xff]
  %v8270 = vld [vmem:[#allocation2 + $0x340] sm:$0xff]
  %v8271 = vld [vmem:[#allocation2 + $0x348] sm:$0xff]
  %v8272 = vld [vmem:[#allocation2 + $0x350] sm:$0xff]
  %v8273 = vld [vmem:[#allocation2 + $0x358] sm:$0xff]
  %v8274 = vld [vmem:[#allocation2 + $0x360] sm:$0xff]
  %v8275 = vld [vmem:[#allocation2 + $0x368] sm:$0xff]
  %v8276 = vld [vmem:[#allocation2 + $0x370] sm:$0xff]
  %v8277 = vld [vmem:[#allocation2 + $0x378] sm:$0xff]
  %v8278 = vld [vmem:[#allocation2 + $0x380] sm:$0xff]
  %v8279 = vld [vmem:[#allocation2 + $0x388] sm:$0xff]
  %v8280 = vld [vmem:[#allocation2 + $0x390] sm:$0xff]
  %v8281 = vld [vmem:[#allocation2 + $0x398] sm:$0xff]
  %v8282 = vld [vmem:[#allocation2 + $0x3a0] sm:$0xff]
  %v8283 = vld [vmem:[#allocation2 + $0x3a8] sm:$0xff]
  %v8284 = vld [vmem:[#allocation2 + $0x3b0] sm:$0xff]
  %v8285 = vld [vmem:[#allocation2 + $0x3b8] sm:$0xff]
  %v8286 = vld [vmem:[#allocation2 + $0x3c0] sm:$0xff]
  %v8287 = vld [vmem:[#allocation2 + $0x3c8] sm:$0xff]
  %v8288 = vld [vmem:[#allocation2 + $0x3d0] sm:$0xff]
  %v8289 = vld [vmem:[#allocation2 + $0x3d8] sm:$0xff]
  %v8290 = vld [vmem:[#allocation2 + $0x3e0] sm:$0xff]
  %v8291 = vld [vmem:[#allocation2 + $0x3e8] sm:$0xff]
  %v8292 = vld [vmem:[#allocation2 + $0x3f0] sm:$0xff]
  %v8293 = vld [vmem:[#allocation2 + $0x3f8] sm:$0xff]
  %v8294 = vld [vmem:[#allocation2 + $0x400] sm:$0xff]
  %v8295 = vld [vmem:[#allocation2 + $0x408] sm:$0xff]
  %v8296 = vld [vmem:[#allocation2 + $0x410] sm:$0xff]
  %v8297 = vld [vmem:[#allocation2 + $0x418] sm:$0xff]
  %v8298 = vld [vmem:[#allocation2 + $0x420] sm:$0xff]
  %v8299 = vld [vmem:[#allocation2 + $0x428] sm:$0xff]
  %v8300 = vld [vmem:[#allocation2 + $0x430] sm:$0xff]
  %v8301 = vld [vmem:[#allocation2 + $0x438] sm:$0xff]
  %v8302 = vld [vmem:[#allocation2 + $0x440] sm:$0xff]
  %v8303 = vld [vmem:[#allocation2 + $0x448] sm:$0xff]
  %v8304 = vld [vmem:[#allocation2 + $0x450] sm:$0xff]
  %v8305 = vld [vmem:[#allocation2 + $0x458] sm:$0xff]
  %v8306 = vld [vmem:[#allocation2 + $0x460] sm:$0xff]
  %v8307 = vld [vmem:[#allocation2 + $0x468] sm:$0xff]
  %v8308 = vld [vmem:[#allocation2 + $0x470] sm:$0xff]
  %v8309 = vld [vmem:[#allocation2 + $0x478] sm:$0xff]
  %v8310 = vld [vmem:[#allocation2 + $0x480] sm:$0xff]
  %v8311 = vld [vmem:[#allocation2 + $0x488] sm:$0xff]
  %v8312 = vld [vmem:[#allocation2 + $0x490] sm:$0xff]
  %v8313 = vld [vmem:[#allocation2 + $0x498] sm:$0xff]
  %v8314 = vld [vmem:[#allocation2 + $0x4a0] sm:$0xff]
  %v8315 = vld [vmem:[#allocation2 + $0x4a8] sm:$0xff]
  %v8316 = vld [vmem:[#allocation2 + $0x4b0] sm:$0xff]
  %v8317 = vld [vmem:[#allocation2 + $0x4b8] sm:$0xff]
  %v8318 = vld [vmem:[#allocation2 + $0x4c0] sm:$0xff]
  %v8319 = vld [vmem:[#allocation2 + $0x4c8] sm:$0xff]
  %v8320 = vld [vmem:[#allocation2 + $0x4d0] sm:$0xff]
  %v8321 = vld [vmem:[#allocation2 + $0x4d8] sm:$0xff]
  %v8322 = vld [vmem:[#allocation2 + $0x4e0] sm:$0xff]
  %v8323 = vld [vmem:[#allocation2 + $0x4e8] sm:$0xff]
  %v8324 = vld [vmem:[#allocation2 + $0x4f0] sm:$0xff]
  %v8325 = vld [vmem:[#allocation2 + $0x4f8] sm:$0xff]
  %v8326 = vld [vmem:[#allocation2 + $0x500] sm:$0xff]
  %v8327 = vld [vmem:[#allocation2 + $0x508] sm:$0xff]
  %v8328 = vld [vmem:[#allocation2 + $0x510] sm:$0xff]
  %v8329 = vld [vmem:[#allocation2 + $0x518] sm:$0xff]
  %v8330 = vld [vmem:[#allocation2 + $0x520] sm:$0xff]
  %v8331 = vld [vmem:[#allocation2 + $0x528] sm:$0xff]
  %v8332 = vld [vmem:[#allocation2 + $0x530] sm:$0xff]
  %v8333 = vld [vmem:[#allocation2 + $0x538] sm:$0xff]
  %v8334 = vld [vmem:[#allocation2 + $0x540] sm:$0xff]
  %v8335 = vld [vmem:[#allocation2 + $0x548] sm:$0xff]
  %v8336 = vld [vmem:[#allocation2 + $0x550] sm:$0xff]
  %v8337 = vld [vmem:[#allocation2 + $0x558] sm:$0xff]
  %v8338 = vld [vmem:[#allocation2 + $0x560] sm:$0xff]
  %v8339 = vld [vmem:[#allocation2 + $0x568] sm:$0xff]
  %v8340 = vld [vmem:[#allocation2 + $0x570] sm:$0xff]
  %v8341 = vld [vmem:[#allocation2 + $0x578] sm:$0xff]
  %v8342 = vld [vmem:[#allocation2 + $0x580] sm:$0xff]
  %v8343 = vld [vmem:[#allocation2 + $0x588] sm:$0xff]
  %v8344 = vld [vmem:[#allocation2 + $0x590] sm:$0xff]
  %v8345 = vld [vmem:[#allocation2 + $0x598] sm:$0xff]
  %v8346 = vld [vmem:[#allocation2 + $0x5a0] sm:$0xff]
  %v8347 = vld [vmem:[#allocation2 + $0x5a8] sm:$0xff]
  %v8348 = vld [vmem:[#allocation2 + $0x5b0] sm:$0xff]
  %v8349 = vld [vmem:[#allocation2 + $0x5b8] sm:$0xff]
  %v8350 = vld [vmem:[#allocation2 + $0x5c0] sm:$0xff]
  %v8351 = vld [vmem:[#allocation2 + $0x5c8] sm:$0xff]
  %v8352 = vld [vmem:[#allocation2 + $0x5d0] sm:$0xff]
  %v8353 = vld [vmem:[#allocation2 + $0x5d8] sm:$0xff]
  %v8354 = vld [vmem:[#allocation2 + $0x5e0] sm:$0xff]
  %v8355 = vld [vmem:[#allocation2 + $0x5e8] sm:$0xff]
  %v8356 = vld [vmem:[#allocation2 + $0x5f0] sm:$0xff]
  %v8357 = vld [vmem:[#allocation2 + $0x5f8] sm:$0xff]
  %v8358 = vld [vmem:[#allocation2 + $0x600] sm:$0xff]
  %v8359 = vld [vmem:[#allocation2 + $0x608] sm:$0xff]
  %v8360 = vld [vmem:[#allocation2 + $0x610] sm:$0xff]
  %v8361 = vld [vmem:[#allocation2 + $0x618] sm:$0xff]
  %v8362 = vld [vmem:[#allocation2 + $0x620] sm:$0xff]
  %v8363 = vld [vmem:[#allocation2 + $0x628] sm:$0xff]
  %v8364 = vld [vmem:[#allocation2 + $0x630] sm:$0xff]
  %v8365 = vld [vmem:[#allocation2 + $0x638] sm:$0xff]
  %v8366 = vld [vmem:[#allocation2 + $0x640] sm:$0xff]
  %v8367 = vld [vmem:[#allocation2 + $0x648] sm:$0xff]
  %v8368 = vld [vmem:[#allocation2 + $0x650] sm:$0xff]
  %v8369 = vld [vmem:[#allocation2 + $0x658] sm:$0xff]
  %v8370 = vld [vmem:[#allocation2 + $0x660] sm:$0xff]
  %v8371 = vld [vmem:[#allocation2 + $0x668] sm:$0xff]
  %v8372 = vld [vmem:[#allocation2 + $0x670] sm:$0xff]
  %v8373 = vld [vmem:[#allocation2 + $0x678] sm:$0xff]
  %v8374 = vld [vmem:[#allocation2 + $0x680] sm:$0xff]
  %v8375 = vld [vmem:[#allocation2 + $0x688] sm:$0xff]
  %v8376 = vld [vmem:[#allocation2 + $0x690] sm:$0xff]
  %v8377 = vld [vmem:[#allocation2 + $0x698] sm:$0xff]
  %v8378 = vld [vmem:[#allocation2 + $0x6a0] sm:$0xff]
  %v8379 = vld [vmem:[#allocation2 + $0x6a8] sm:$0xff]
  %v8380 = vld [vmem:[#allocation2 + $0x6b0] sm:$0xff]
  %v8381 = vld [vmem:[#allocation2 + $0x6b8] sm:$0xff]
  %v8382 = vld [vmem:[#allocation2 + $0x6c0] sm:$0xff]
  %v8383 = vld [vmem:[#allocation2 + $0x6c8] sm:$0xff]
  %v8384 = vld [vmem:[#allocation2 + $0x6d0] sm:$0xff]
  %v8385 = vld [vmem:[#allocation2 + $0x6d8] sm:$0xff]
  %v8386 = vld [vmem:[#allocation2 + $0x6e0] sm:$0xff]
  %v8387 = vld [vmem:[#allocation2 + $0x6e8] sm:$0xff]
  %v8388 = vld [vmem:[#allocation2 + $0x6f0] sm:$0xff]
  %v8389 = vld [vmem:[#allocation2 + $0x6f8] sm:$0xff]
  %s8390 = scalar_lea.vmem %s3, 160
  %v8391 = vld [vmem:[%s8390] sm:$0xf]
  %v8392 = vld [vmem:[%s8390 + $0x4] sm:$0xf]
  %v8393 = vld [vmem:[%s8390 + $0x8] sm:$0xf]
  %v8394 = vld [vmem:[%s8390 + $0xc] sm:$0xf]
  %v8395 = vld [vmem:[%s8390 + $0x10] sm:$0xf]
  %v8396 = vld [vmem:[%s8390 + $0x14] sm:$0xf]
  %v8397 = vld [vmem:[%s8390 + $0x18] sm:$0xf]
  %v8398 = vld [vmem:[%s8390 + $0x1c] sm:$0xf]
  %v8399 = vld [vmem:[%s8390 + $0x20] sm:$0xf]
  %v8400 = vld [vmem:[%s8390 + $0x24] sm:$0xf]
  %v8401 = vld [vmem:[%s8390 + $0x28] sm:$0xf]
  %v8402 = vld [vmem:[%s8390 + $0x2c] sm:$0xf]
  %v8403 = vld [vmem:[%s8390 + $0x30] sm:$0xf]
  %v8404 = vld [vmem:[%s8390 + $0x34] sm:$0xf]
  %v8405 = vld [vmem:[%s8390 + $0x38] sm:$0xf]
  %v8406 = vld [vmem:[%s8390 + $0x3c] sm:$0xf]
  %v8407 = vld [vmem:[%s8390 + $0x40] sm:$0xf]
  %v8408 = vld [vmem:[%s8390 + $0x44] sm:$0xf]
  %v8409 = vld [vmem:[%s8390 + $0x48] sm:$0xf]
  %v8410 = vld [vmem:[%s8390 + $0x4c] sm:$0xf]
  %v8431 = vunpack.c.l.b16 %v8391
  %v8432 = vunpack.c.l.b16 %v8392
  %v8433 = vunpack.c.l.b16 %v8393
  %v8434 = vunpack.c.l.b16 %v8394
  %v8435 = vunpack.c.l.b16 %v8395
  %v8436 = vunpack.c.l.b16 %v8396
  %v8437 = vunpack.c.l.b16 %v8397
  %v8438 = vunpack.c.l.b16 %v8398
  %v8439 = vunpack.c.l.b16 %v8399
  %v8440 = vunpack.c.l.b16 %v8400
  %v8441 = vunpack.c.l.b16 %v8401
  %v8442 = vunpack.c.l.b16 %v8402
  %v8443 = vunpack.c.l.b16 %v8403
  %v8444 = vunpack.c.l.b16 %v8404
  %v8445 = vunpack.c.l.b16 %v8405
  %v8446 = vunpack.c.l.b16 %v8406
  %v8447 = vunpack.c.l.b16 %v8407
  %v8448 = vunpack.c.l.b16 %v8408
  %v8449 = vunpack.c.l.b16 %v8409
  %v8450 = vunpack.c.l.b16 %v8410
  %v8451 = vpack.c.b16 %v8432, %v8431
  %v8452 = vpack.c.b16 %v8434, %v8433
  %v8453 = vpack.c.b16 %v8436, %v8435
  %v8454 = vpack.c.b16 %v8438, %v8437
  %v8455 = vpack.c.b16 %v8440, %v8439
  %v8456 = vpack.c.b16 %v8442, %v8441
  %v8457 = vpack.c.b16 %v8444, %v8443
  %v8458 = vpack.c.b16 %v8446, %v8445
  %v8459 = vpack.c.b16 %v8448, %v8447
  %v8460 = vpack.c.b16 %v8450, %v8449
  %v8472 = vsel %vm4345, %v8195, 0
  %v8475 = vsel %vm4345, %v8197, 0
  %v8478 = vsel %vm4345, %v8199, 0
  %v8481 = vsel %vm4345, %v8201, 0
  %v8484 = vsel %vm4345, %v8203, 0
  %v8487 = vsel %vm4345, %v8205, 0
  %v8490 = vsel %vm4345, %v8207, 0
  %v8493 = vsel %vm4345, %v8209, 0
  %v8496 = vsel %vm4345, %v8211, 0
  %v8499 = vsel %vm4345, %v8213, 0
  %v8502 = vsel %vm4345, %v8215, 0
  %v8505 = vsel %vm4345, %v8217, 0
  %v8508 = vsel %vm4345, %v8219, 0
  %v8511 = vsel %vm4345, %v8221, 0
  %v8514 = vsel %vm4345, %v8223, 0
  %v8517 = vsel %vm4345, %v8225, 0
  %v8520 = vsel %vm4345, %v8227, 0
  %v8523 = vsel %vm4345, %v8229, 0
  %v8526 = vsel %vm4345, %v8231, 0
  %v8529 = vsel %vm4345, %v8233, 0
  %v8532 = vsel %vm4345, %v8235, 0
  %v8535 = vsel %vm4345, %v8237, 0
  %v8538 = vsel %vm4345, %v8239, 0
  %v8541 = vsel %vm4345, %v8241, 0
  %v8544 = vsel %vm4345, %v8243, 0
  %v8547 = vsel %vm4345, %v8245, 0
  %v8550 = vsel %vm4345, %v8247, 0
  %v8553 = vsel %vm4345, %v8249, 0
  %v8556 = vsel %vm4345, %v8251, 0
  %v8559 = vsel %vm4345, %v8253, 0
  %v8562 = vsel %vm4345, %v8255, 0
  %v8565 = vsel %vm4345, %v8257, 0
  %v8568 = vsel %vm4345, %v8259, 0
  %v8571 = vsel %vm4345, %v8261, 0
  %v8574 = vsel %vm4345, %v8263, 0
  %v8577 = vsel %vm4345, %v8265, 0
  %v8580 = vsel %vm4345, %v8267, 0
  %v8583 = vsel %vm4345, %v8269, 0
  %v8586 = vsel %vm4345, %v8271, 0
  %v8589 = vsel %vm4345, %v8273, 0
  %v8592 = vsel %vm4345, %v8275, 0
  %v8595 = vsel %vm4345, %v8277, 0
  %v8598 = vsel %vm4345, %v8279, 0
  %v8601 = vsel %vm4345, %v8281, 0
  %v8604 = vsel %vm4345, %v8283, 0
  %v8607 = vsel %vm4345, %v8285, 0
  %v8610 = vsel %vm4345, %v8287, 0
  %v8613 = vsel %vm4345, %v8289, 0
  %v8616 = vsel %vm4345, %v8291, 0
  %v8619 = vsel %vm4345, %v8293, 0
  %v8622 = vsel %vm4345, %v8295, 0
  %v8625 = vsel %vm4345, %v8297, 0
  %v8628 = vsel %vm4345, %v8299, 0
  %v8631 = vsel %vm4345, %v8301, 0
  %v8634 = vsel %vm4345, %v8303, 0
  %v8637 = vsel %vm4345, %v8305, 0
  %v8640 = vsel %vm4345, %v8307, 0
  %v8643 = vsel %vm4345, %v8309, 0
  %v8646 = vsel %vm4345, %v8311, 0
  %v8649 = vsel %vm4345, %v8313, 0
  %v8652 = vsel %vm4345, %v8315, 0
  %v8655 = vsel %vm4345, %v8317, 0
  %v8658 = vsel %vm4345, %v8319, 0
  %v8661 = vsel %vm4345, %v8321, 0
  %v8664 = vsel %vm4345, %v8323, 0
  %v8667 = vsel %vm4345, %v8325, 0
  %v8670 = vsel %vm4345, %v8327, 0
  %v8673 = vsel %vm4345, %v8329, 0
  %v8676 = vsel %vm4345, %v8331, 0
  %v8679 = vsel %vm4345, %v8333, 0
  %v8682 = vsel %vm4345, %v8335, 0
  %v8685 = vsel %vm4345, %v8337, 0
  %v8688 = vsel %vm4345, %v8339, 0
  %v8691 = vsel %vm4345, %v8341, 0
  %v8694 = vsel %vm4345, %v8343, 0
  %v8697 = vsel %vm4345, %v8345, 0
  %v8700 = vsel %vm4345, %v8347, 0
  %v8703 = vsel %vm4345, %v8349, 0
  %v8706 = vsel %vm4345, %v8351, 0
  %v8709 = vsel %vm4345, %v8353, 0
  %v8712 = vsel %vm4345, %v8355, 0
  %v8715 = vsel %vm4345, %v8357, 0
  %v8718 = vsel %vm4345, %v8359, 0
  %v8721 = vsel %vm4345, %v8361, 0
  %v8724 = vsel %vm4345, %v8363, 0
  %v8727 = vsel %vm4345, %v8365, 0
  %v8730 = vsel %vm4345, %v8367, 0
  %v8733 = vsel %vm4345, %v8369, 0
  %v8736 = vsel %vm4345, %v8371, 0
  %v8739 = vsel %vm4345, %v8373, 0
  %v8742 = vsel %vm4345, %v8375, 0
  %v8745 = vsel %vm4345, %v8377, 0
  %v8748 = vsel %vm4345, %v8379, 0
  %v8751 = vsel %vm4345, %v8381, 0
  %v8754 = vsel %vm4345, %v8383, 0
  %v8757 = vsel %vm4345, %v8385, 0
  %v8760 = vsel %vm4345, %v8387, 0
  %v8763 = vsel %vm4345, %v8389, 0
  %8765 = vmatprep.subr.bf16.mxu0 0
  %8766 = vmatpush1.bf16.msra.mxu0 %v8451
  %8767 = vmatprep.subr.bf16.mxu0 0
  %8768 = vmatpush1.bf16.msra.mxu0 %v8452
  %8769 = vmatprep.subr.bf16.mxu0 0
  %8770 = vmatpush1.bf16.msra.mxu0 %v8453
  %8771 = vmatprep.subr.bf16.mxu0 0
  %8772 = vmatpush1.bf16.msra.mxu0 %v8454
  %8773 = vmatprep.subr.bf16.mxu0 0
  %8774 = vmatpush1.bf16.msra.mxu0 %v8455
  %8775 = vmatprep.subr.bf16.mxu0 0
  %8776 = vmatpush1.bf16.msra.mxu0 %v8456
  %8777 = vmatprep.subr.bf16.mxu0 0
  %8778 = vmatpush1.bf16.msra.mxu0 %v8457
  %8779 = vmatprep.subr.bf16.mxu0 0
  %8780 = vmatpush1.bf16.msra.mxu0 %v8458
  %8781 = vmatprep.subr.bf16.mxu0 0
  %8782 = vmatpush1.bf16.msra.mxu0 %v8459
  %8783 = vmatprep.subr.bf16.mxu0 0
  %8784 = vmatpush1.bf16.msra.mxu0 %v8460
  %8785 = vmatprep.subr.bf16.mxu0 0
  %8786 = vmatpush1.bf16.msra.mxu0 0
  %8787 = vmatprep.subr.bf16.mxu0 0
  %8788 = vmatpush1.bf16.msra.mxu0 0
  %8789 = vmatprep.subr.bf16.mxu0 0
  %8790 = vmatpush1.bf16.msra.mxu0 0
  %8791 = vmatprep.subr.bf16.mxu0 0
  %8792 = vmatpush1.bf16.msra.mxu0 0
  %8793 = vmatprep.subr.bf16.mxu0 0
  %8794 = vmatpush1.bf16.msra.mxu0 0
  %8795 = vmatprep.subr.bf16.mxu0 0
  %8796 = vmatpush1.bf16.msra.mxu0 0
  %8797 = vmatprep.mubr.bf16.mxu0 %v8472
  %8798 = vmatmul.mubr.bf16.gmra.mrb[0].mxu0 %v8194
  %v8799 = vpop.f32.mrb[0].mxu0
  %v8800 = vadd.f32 0.0, %v8799
  %v8801 = vpop.f32.mrb[0].mxu0
  %v8802 = vpop.f32.mrb[0].mxu0
  %v8803 = vadd.f32 0.0, %v8802
  %v8804 = vpop.f32.mrb[0].mxu0
  %8805 = vmatprep.mubr.bf16.mxu0 %v8475
  %8806 = vmatmul.mubr.bf16.gmra.mrb[0].mxu0 %v8196
  %v8807 = vpop.f32.mrb[0].mxu0
  %v8808 = vadd.f32 0.0, %v8807
  %v8809 = vpop.f32.mrb[0].mxu0
  %v8810 = vpop.f32.mrb[0].mxu0
  %v8811 = vadd.f32 0.0, %v8810
  %v8812 = vpop.f32.mrb[0].mxu0
  %8813 = vmatprep.mubr.bf16.mxu0 %v8478
  %8814 = vmatmul.mubr.bf16.gmra.mrb[0].mxu0 %v8198
  %v8815 = vpop.f32.mrb[0].mxu0
  %v8816 = vadd.f32 0.0, %v8815
  %v8817 = vpop.f32.mrb[0].mxu0
  %v8818 = vpop.f32.mrb[0].mxu0
  %v8819 = vadd.f32 0.0, %v8818
  %v8820 = vpop.f32.mrb[0].mxu0
  %8821 = vmatprep.mubr.bf16.mxu0 %v8481
  %8822 = vmatmul.mubr.bf16.gmra.mrb[0].mxu0 %v8200
  %v8823 = vpop.f32.mrb[0].mxu0
  %v8824 = vadd.f32 0.0, %v8823
  %v8825 = vpop.f32.mrb[0].mxu0
  %v8826 = vpop.f32.mrb[0].mxu0
  %v8827 = vadd.f32 0.0, %v8826
  %v8828 = vpop.f32.mrb[0].mxu0
  %8829 = vmatprep.mubr.bf16.mxu0 %v8484
  %8830 = vmatmul.mubr.bf16.gmra.mrb[0].mxu0 %v8202
  %v8831 = vpop.f32.mrb[0].mxu0
  %v8832 = vadd.f32 0.0, %v8831
  %v8833 = vpop.f32.mrb[0].mxu0
  %v8834 = vpop.f32.mrb[0].mxu0
  %v8835 = vadd.f32 0.0, %v8834
  %v8836 = vpop.f32.mrb[0].mxu0
  %8837 = vmatprep.mubr.bf16.mxu0 %v8487
  %8838 = vmatmul.mubr.bf16.gmra.mrb[0].mxu0 %v8204
  %v8839 = vpop.f32.mrb[0].mxu0
  %v8840 = vpop.f32.mrb[0].mxu0
  %v8841 = vpop.f32.mrb[0].mxu0
  %v8842 = vpop.f32.mrb[0].mxu0
  %8843 = vmatprep.mubr.bf16.mxu0 %v8490
  %8844 = vmatmul.mubr.bf16.gmra.mrb[0].mxu0 %v8206
  %v8845 = vpop.f32.mrb[0].mxu0
  %v8846 = vpop.f32.mrb[0].mxu0
  %v8847 = vpop.f32.mrb[0].mxu0
  %v8848 = vpop.f32.mrb[0].mxu0
  %8849 = vmatprep.mubr.bf16.mxu0 %v8493
  %8850 = vmatmul.mubr.bf16.gmra.mrb[0].mxu0 %v8208
  %v8851 = vpop.f32.mrb[0].mxu0
  %v8852 = vadd.f32 0.0, %v8851
  %v8853 = vpop.f32.mrb[0].mxu0
  %v8854 = vpop.f32.mrb[0].mxu0
  %v8855 = vadd.f32 0.0, %v8854
  %v8856 = vpop.f32.mrb[0].mxu0
  %8857 = vmatprep.mubr.bf16.mxu0 %v8496
  %8858 = vmatmul.mubr.bf16.gmra.mrb[0].mxu0 %v8210
  %v8859 = vpop.f32.mrb[0].mxu0
  %v8860 = vadd.f32 0.0, %v8859
  %v8861 = vpop.f32.mrb[0].mxu0
  %v8862 = vpop.f32.mrb[0].mxu0
  %v8863 = vadd.f32 0.0, %v8862
  %v8864 = vpop.f32.mrb[0].mxu0
  %8865 = vmatprep.mubr.bf16.mxu0 %v8499
  %8866 = vmatmul.mubr.bf16.gmra.mrb[0].mxu0 %v8212
  %v8867 = vpop.f32.mrb[0].mxu0
  %v8868 = vadd.f32 0.0, %v8867
  %v8869 = vpop.f32.mrb[0].mxu0
  %v8870 = vpop.f32.mrb[0].mxu0
  %v8871 = vadd.f32 0.0, %v8870
  %v8872 = vpop.f32.mrb[0].mxu0
  %8873 = vmatprep.mubr.bf16.mxu0 %v8502
  %8874 = vmatmul.mubr.bf16.gmra.mrb[0].mxu0 %v8214
  %v8875 = vpop.f32.mrb[0].mxu0
  %v8876 = vadd.f32 0.0, %v8875
  %v8877 = vpop.f32.mrb[0].mxu0
  %v8878 = vpop.f32.mrb[0].mxu0
  %v8879 = vadd.f32 0.0, %v8878
  %v8880 = vpop.f32.mrb[0].mxu0
  %8881 = vmatprep.mubr.bf16.mxu0 %v8505
  %8882 = vmatmul.mubr.bf16.gmra.mrb[0].mxu0 %v8216
  %v8883 = vpop.f32.mrb[0].mxu0
  %v8884 = vadd.f32 0.0, %v8883
  %v8885 = vpop.f32.mrb[0].mxu0
  %v8886 = vpop.f32.mrb[0].mxu0
  %v8887 = vadd.f32 0.0, %v8886
  %v8888 = vpop.f32.mrb[0].mxu0
  %8889 = vmatprep.mubr.bf16.mxu0 %v8508
  %8890 = vmatmul.mubr.bf16.gmra.mrb[0].mxu0 %v8218
  %v8891 = vpop.f32.mrb[0].mxu0
  %v8892 = vpop.f32.mrb[0].mxu0
  %v8893 = vpop.f32.mrb[0].mxu0
  %v8894 = vpop.f32.mrb[0].mxu0
  %8895 = vmatprep.mubr.bf16.mxu0 %v8511
  %8896 = vmatmul.mubr.bf16.gmra.mrb[0].mxu0 %v8220
  %v8897 = vpop.f32.mrb[0].mxu0
  %v8898 = vpop.f32.mrb[0].mxu0
  %v8899 = vpop.f32.mrb[0].mxu0
  %v8900 = vpop.f32.mrb[0].mxu0
  %8901 = vmatprep.mubr.bf16.mxu0 %v8514
  %8902 = vmatmul.mubr.bf16.gmra.mrb[0].mxu0 %v8222
  %v8903 = vpop.f32.mrb[0].mxu0
  %v8904 = vadd.f32 0.0, %v8903
  %v8905 = vpop.f32.mrb[0].mxu0
  %v8906 = vpop.f32.mrb[0].mxu0
  %v8907 = vadd.f32 0.0, %v8906
  %v8908 = vpop.f32.mrb[0].mxu0
  %8909 = vmatprep.mubr.bf16.mxu0 %v8517
  %8910 = vmatmul.mubr.bf16.gmra.mrb[0].mxu0 %v8224
  %v8911 = vpop.f32.mrb[0].mxu0
  %v8912 = vadd.f32 0.0, %v8911
  %v8913 = vpop.f32.mrb[0].mxu0
  %v8914 = vpop.f32.mrb[0].mxu0
  %v8915 = vadd.f32 0.0, %v8914
  %v8916 = vpop.f32.mrb[0].mxu0
  %8917 = vmatprep.mubr.bf16.mxu0 %v8520
  %8918 = vmatmul.mubr.bf16.gmra.mrb[0].mxu0 %v8226
  %v8919 = vpop.f32.mrb[0].mxu0
  %v8920 = vadd.f32 0.0, %v8919
  %v8921 = vpop.f32.mrb[0].mxu0
  %v8922 = vpop.f32.mrb[0].mxu0
  %v8923 = vadd.f32 0.0, %v8922
  %v8924 = vpop.f32.mrb[0].mxu0
  %8925 = vmatprep.mubr.bf16.mxu0 %v8523
  %8926 = vmatmul.mubr.bf16.gmra.mrb[0].mxu0 %v8228
  %v8927 = vpop.f32.mrb[0].mxu0
  %v8928 = vadd.f32 0.0, %v8927
  %v8929 = vpop.f32.mrb[0].mxu0
  %v8930 = vpop.f32.mrb[0].mxu0
  %v8931 = vadd.f32 0.0, %v8930
  %v8932 = vpop.f32.mrb[0].mxu0
  %8933 = vmatprep.mubr.bf16.mxu0 %v8526
  %8934 = vmatmul.mubr.bf16.gmra.mrb[0].mxu0 %v8230
  %v8935 = vpop.f32.mrb[0].mxu0
  %v8936 = vadd.f32 0.0, %v8935
  %v8937 = vpop.f32.mrb[0].mxu0
  %v8938 = vpop.f32.mrb[0].mxu0
  %v8939 = vadd.f32 0.0, %v8938
  %v8940 = vpop.f32.mrb[0].mxu0
  %8941 = vmatprep.mubr.bf16.mxu0 %v8529
  %8942 = vmatmul.mubr.bf16.gmra.mrb[0].mxu0 %v8232
  %v8943 = vpop.f32.mrb[0].mxu0
  %v8944 = vpop.f32.mrb[0].mxu0
  %v8945 = vpop.f32.mrb[0].mxu0
  %v8946 = vpop.f32.mrb[0].mxu0
  %8947 = vmatprep.mubr.bf16.mxu0 %v8532
  %8948 = vmatmul.mubr.bf16.gmra.mrb[0].mxu0 %v8234
  %v8949 = vpop.f32.mrb[0].mxu0
  %v8950 = vpop.f32.mrb[0].mxu0
  %v8951 = vpop.f32.mrb[0].mxu0
  %v8952 = vpop.f32.mrb[0].mxu0
  %8953 = vmatprep.mubr.bf16.mxu0 %v8535
  %8954 = vmatmul.mubr.bf16.gmra.mrb[0].mxu0 %v8236
  %v8955 = vpop.f32.mrb[0].mxu0
  %v8956 = vadd.f32 0.0, %v8955
  %v8957 = vpop.f32.mrb[0].mxu0
  %v8958 = vpop.f32.mrb[0].mxu0
  %v8959 = vadd.f32 0.0, %v8958
  %v8960 = vpop.f32.mrb[0].mxu0
  %8961 = vmatprep.mubr.bf16.mxu0 %v8538
  %8962 = vmatmul.mubr.bf16.gmra.mrb[0].mxu0 %v8238
  %v8963 = vpop.f32.mrb[0].mxu0
  %v8964 = vadd.f32 0.0, %v8963
  %v8965 = vpop.f32.mrb[0].mxu0
  %v8966 = vpop.f32.mrb[0].mxu0
  %v8967 = vadd.f32 0.0, %v8966
  %v8968 = vpop.f32.mrb[0].mxu0
  %8969 = vmatprep.mubr.bf16.mxu0 %v8541
  %8970 = vmatmul.mubr.bf16.gmra.mrb[0].mxu0 %v8240
  %v8971 = vpop.f32.mrb[0].mxu0
  %v8972 = vadd.f32 0.0, %v8971
  %v8973 = vpop.f32.mrb[0].mxu0
  %v8974 = vpop.f32.mrb[0].mxu0
  %v8975 = vadd.f32 0.0, %v8974
  %v8976 = vpop.f32.mrb[0].mxu0
  %8977 = vmatprep.mubr.bf16.mxu0 %v8544
  %8978 = vmatmul.mubr.bf16.gmra.mrb[0].mxu0 %v8242
  %v8979 = vpop.f32.mrb[0].mxu0
  %v8980 = vadd.f32 0.0, %v8979
  %v8981 = vpop.f32.mrb[0].mxu0
  %v8982 = vpop.f32.mrb[0].mxu0
  %v8983 = vadd.f32 0.0, %v8982
  %v8984 = vpop.f32.mrb[0].mxu0
  %8985 = vmatprep.mubr.bf16.mxu0 %v8547
  %8986 = vmatmul.mubr.bf16.gmra.mrb[0].mxu0 %v8244
  %v8987 = vpop.f32.mrb[0].mxu0
  %v8988 = vadd.f32 0.0, %v8987
  %v8989 = vpop.f32.mrb[0].mxu0
  %v8990 = vpop.f32.mrb[0].mxu0
  %v8991 = vadd.f32 0.0, %v8990
  %v8992 = vpop.f32.mrb[0].mxu0
  %8993 = vmatprep.mubr.bf16.mxu0 %v8550
  %8994 = vmatmul.mubr.bf16.gmra.mrb[0].mxu0 %v8246
  %v8995 = vpop.f32.mrb[0].mxu0
  %v8996 = vpop.f32.mrb[0].mxu0
  %v8997 = vpop.f32.mrb[0].mxu0
  %v8998 = vpop.f32.mrb[0].mxu0
  %8999 = vmatprep.mubr.bf16.mxu0 %v8553
  %9000 = vmatmul.mubr.bf16.gmra.mrb[0].mxu0 %v8248
  %v9001 = vpop.f32.mrb[0].mxu0
  %v9002 = vpop.f32.mrb[0].mxu0
  %v9003 = vpop.f32.mrb[0].mxu0
  %v9004 = vpop.f32.mrb[0].mxu0
  %9005 = vmatprep.mubr.bf16.mxu0 %v8556
  %9006 = vmatmul.mubr.bf16.gmra.mrb[0].mxu0 %v8250
  %v9007 = vpop.f32.mrb[0].mxu0
  %v9008 = vadd.f32 0.0, %v9007
  %v9009 = vpop.f32.mrb[0].mxu0
  %v9010 = vpop.f32.mrb[0].mxu0
  %v9011 = vadd.f32 0.0, %v9010
  %v9012 = vpop.f32.mrb[0].mxu0
  %9013 = vmatprep.mubr.bf16.mxu0 %v8559
  %9014 = vmatmul.mubr.bf16.gmra.mrb[0].mxu0 %v8252
  %v9015 = vpop.f32.mrb[0].mxu0
  %v9016 = vadd.f32 0.0, %v9015
  %v9017 = vpop.f32.mrb[0].mxu0
  %v9018 = vpop.f32.mrb[0].mxu0
  %v9019 = vadd.f32 0.0, %v9018
  %v9020 = vpop.f32.mrb[0].mxu0
  %9021 = vmatprep.mubr.bf16.mxu0 %v8562
  %9022 = vmatmul.mubr.bf16.gmra.mrb[0].mxu0 %v8254
  %v9023 = vpop.f32.mrb[0].mxu0
  %v9024 = vadd.f32 0.0, %v9023
  %v9025 = vpop.f32.mrb[0].mxu0
  %v9026 = vpop.f32.mrb[0].mxu0
  %v9027 = vadd.f32 0.0, %v9026
  %v9028 = vpop.f32.mrb[0].mxu0
  %9029 = vmatprep.mubr.bf16.mxu0 %v8565
  %9030 = vmatmul.mubr.bf16.gmra.mrb[0].mxu0 %v8256
  %v9031 = vpop.f32.mrb[0].mxu0
  %v9032 = vadd.f32 0.0, %v9031
  %v9033 = vpop.f32.mrb[0].mxu0
  %v9034 = vpop.f32.mrb[0].mxu0
  %v9035 = vadd.f32 0.0, %v9034
  %v9036 = vpop.f32.mrb[0].mxu0
  %9037 = vmatprep.mubr.bf16.mxu0 %v8568
  %9038 = vmatmul.mubr.bf16.gmra.mrb[0].mxu0 %v8258
  %v9039 = vpop.f32.mrb[0].mxu0
  %v9040 = vadd.f32 0.0, %v9039
  %v9041 = vpop.f32.mrb[0].mxu0
  %v9042 = vpop.f32.mrb[0].mxu0
  %v9043 = vadd.f32 0.0, %v9042
  %v9044 = vpop.f32.mrb[0].mxu0
  %9045 = vmatprep.mubr.bf16.mxu0 %v8571
  %9046 = vmatmul.mubr.bf16.gmra.mrb[0].mxu0 %v8260
  %v9047 = vpop.f32.mrb[0].mxu0
  %v9048 = vpop.f32.mrb[0].mxu0
  %v9049 = vpop.f32.mrb[0].mxu0
  %v9050 = vpop.f32.mrb[0].mxu0
  %9051 = vmatprep.mubr.bf16.mxu0 %v8574
  %9052 = vmatmul.mubr.bf16.gmra.mrb[0].mxu0 %v8262
  %v9053 = vpop.f32.mrb[0].mxu0
  %v9054 = vpop.f32.mrb[0].mxu0
  %v9055 = vpop.f32.mrb[0].mxu0
  %v9056 = vpop.f32.mrb[0].mxu0
  %9057 = vmatprep.mubr.bf16.mxu0 %v8577
  %9058 = vmatmul.mubr.bf16.gmra.mrb[0].mxu0 %v8264
  %v9059 = vpop.f32.mrb[0].mxu0
  %v9060 = vadd.f32 0.0, %v9059
  %v9061 = vpop.f32.mrb[0].mxu0
  %v9062 = vpop.f32.mrb[0].mxu0
  %v9063 = vadd.f32 0.0, %v9062
  %v9064 = vpop.f32.mrb[0].mxu0
  %9065 = vmatprep.mubr.bf16.mxu0 %v8580
  %9066 = vmatmul.mubr.bf16.gmra.mrb[0].mxu0 %v8266
  %v9067 = vpop.f32.mrb[0].mxu0
  %v9068 = vadd.f32 0.0, %v9067
  %v9069 = vpop.f32.mrb[0].mxu0
  %v9070 = vpop.f32.mrb[0].mxu0
  %v9071 = vadd.f32 0.0, %v9070
  %v9072 = vpop.f32.mrb[0].mxu0
  %9073 = vmatprep.mubr.bf16.mxu0 %v8583
  %9074 = vmatmul.mubr.bf16.gmra.mrb[0].mxu0 %v8268
  %v9075 = vpop.f32.mrb[0].mxu0
  %v9076 = vadd.f32 0.0, %v9075
  %v9077 = vpop.f32.mrb[0].mxu0
  %v9078 = vpop.f32.mrb[0].mxu0
  %v9079 = vadd.f32 0.0, %v9078
  %v9080 = vpop.f32.mrb[0].mxu0
  %9081 = vmatprep.mubr.bf16.mxu0 %v8586
  %9082 = vmatmul.mubr.bf16.gmra.mrb[0].mxu0 %v8270
  %v9083 = vpop.f32.mrb[0].mxu0
  %v9084 = vadd.f32 0.0, %v9083
  %v9085 = vpop.f32.mrb[0].mxu0
  %v9086 = vpop.f32.mrb[0].mxu0
  %v9087 = vadd.f32 0.0, %v9086
  %v9088 = vpop.f32.mrb[0].mxu0
  %9089 = vmatprep.mubr.bf16.mxu0 %v8589
  %9090 = vmatmul.mubr.bf16.gmra.mrb[0].mxu0 %v8272
  %v9091 = vpop.f32.mrb[0].mxu0
  %v9092 = vadd.f32 0.0, %v9091
  %v9093 = vpop.f32.mrb[0].mxu0
  %v9094 = vpop.f32.mrb[0].mxu0
  %v9095 = vadd.f32 0.0, %v9094
  %v9096 = vpop.f32.mrb[0].mxu0
  %9097 = vmatprep.mubr.bf16.mxu0 %v8592
  %9098 = vmatmul.mubr.bf16.gmra.mrb[0].mxu0 %v8274
  %v9099 = vpop.f32.mrb[0].mxu0
  %v9100 = vpop.f32.mrb[0].mxu0
  %v9101 = vpop.f32.mrb[0].mxu0
  %v9102 = vpop.f32.mrb[0].mxu0
  %9103 = vmatprep.mubr.bf16.mxu0 %v8595
  %9104 = vmatmul.mubr.bf16.gmra.mrb[0].mxu0 %v8276
  %v9105 = vpop.f32.mrb[0].mxu0
  %v9106 = vpop.f32.mrb[0].mxu0
  %v9107 = vpop.f32.mrb[0].mxu0
  %v9108 = vpop.f32.mrb[0].mxu0
  %9109 = vmatprep.mubr.bf16.mxu0 %v8598
  %9110 = vmatmul.mubr.bf16.gmra.mrb[0].mxu0 %v8278
  %v9111 = vpop.f32.mrb[0].mxu0
  %v9112 = vadd.f32 0.0, %v9111
  %v9113 = vpop.f32.mrb[0].mxu0
  %v9114 = vpop.f32.mrb[0].mxu0
  %v9115 = vadd.f32 0.0, %v9114
  %v9116 = vpop.f32.mrb[0].mxu0
  %9117 = vmatprep.mubr.bf16.mxu0 %v8601
  %9118 = vmatmul.mubr.bf16.gmra.mrb[0].mxu0 %v8280
  %v9119 = vpop.f32.mrb[0].mxu0
  %v9120 = vadd.f32 0.0, %v9119
  %v9121 = vpop.f32.mrb[0].mxu0
  %v9122 = vpop.f32.mrb[0].mxu0
  %v9123 = vadd.f32 0.0, %v9122
  %v9124 = vpop.f32.mrb[0].mxu0
  %9125 = vmatprep.mubr.bf16.mxu0 %v8604
  %9126 = vmatmul.mubr.bf16.gmra.mrb[0].mxu0 %v8282
  %v9127 = vpop.f32.mrb[0].mxu0
  %v9128 = vadd.f32 0.0, %v9127
  %v9129 = vpop.f32.mrb[0].mxu0
  %v9130 = vpop.f32.mrb[0].mxu0
  %v9131 = vadd.f32 0.0, %v9130
  %v9132 = vpop.f32.mrb[0].mxu0
  %9133 = vmatprep.mubr.bf16.mxu0 %v8607
  %9134 = vmatmul.mubr.bf16.gmra.mrb[0].mxu0 %v8284
  %v9135 = vpop.f32.mrb[0].mxu0
  %v9136 = vadd.f32 0.0, %v9135
  %v9137 = vpop.f32.mrb[0].mxu0
  %v9138 = vpop.f32.mrb[0].mxu0
  %v9139 = vadd.f32 0.0, %v9138
  %v9140 = vpop.f32.mrb[0].mxu0
  %9141 = vmatprep.mubr.bf16.mxu0 %v8610
  %9142 = vmatmul.mubr.bf16.gmra.mrb[0].mxu0 %v8286
  %v9143 = vpop.f32.mrb[0].mxu0
  %v9144 = vadd.f32 0.0, %v9143
  %v9145 = vpop.f32.mrb[0].mxu0
  %v9146 = vpop.f32.mrb[0].mxu0
  %v9147 = vadd.f32 0.0, %v9146
  %v9148 = vpop.f32.mrb[0].mxu0
  %9149 = vmatprep.mubr.bf16.mxu0 %v8613
  %9150 = vmatmul.mubr.bf16.gmra.mrb[0].mxu0 %v8288
  %v9151 = vpop.f32.mrb[0].mxu0
  %v9152 = vpop.f32.mrb[0].mxu0
  %v9153 = vpop.f32.mrb[0].mxu0
  %v9154 = vpop.f32.mrb[0].mxu0
  %9155 = vmatprep.mubr.bf16.mxu0 %v8616
  %9156 = vmatmul.mubr.bf16.gmra.mrb[0].mxu0 %v8290
  %v9157 = vpop.f32.mrb[0].mxu0
  %v9158 = vpop.f32.mrb[0].mxu0
  %v9159 = vpop.f32.mrb[0].mxu0
  %v9160 = vpop.f32.mrb[0].mxu0
  %9161 = vmatprep.mubr.bf16.mxu0 %v8619
  %9162 = vmatmul.mubr.bf16.gmra.mrb[0].mxu0 %v8292
  %v9163 = vpop.f32.mrb[0].mxu0
  %v9164 = vadd.f32 0.0, %v9163
  %v9165 = vpop.f32.mrb[0].mxu0
  %v9166 = vpop.f32.mrb[0].mxu0
  %v9167 = vadd.f32 0.0, %v9166
  %v9168 = vpop.f32.mrb[0].mxu0
  %9169 = vmatprep.mubr.bf16.mxu0 %v8622
  %9170 = vmatmul.mubr.bf16.gmra.mrb[0].mxu0 %v8294
  %v9171 = vpop.f32.mrb[0].mxu0
  %v9172 = vadd.f32 0.0, %v9171
  %v9173 = vpop.f32.mrb[0].mxu0
  %v9174 = vpop.f32.mrb[0].mxu0
  %v9175 = vadd.f32 0.0, %v9174
  %v9176 = vpop.f32.mrb[0].mxu0
  %9177 = vmatprep.mubr.bf16.mxu0 %v8625
  %9178 = vmatmul.mubr.bf16.gmra.mrb[0].mxu0 %v8296
  %v9179 = vpop.f32.mrb[0].mxu0
  %v9180 = vadd.f32 0.0, %v9179
  %v9181 = vpop.f32.mrb[0].mxu0
  %v9182 = vpop.f32.mrb[0].mxu0
  %v9183 = vadd.f32 0.0, %v9182
  %v9184 = vpop.f32.mrb[0].mxu0
  %9185 = vmatprep.mubr.bf16.mxu0 %v8628
  %9186 = vmatmul.mubr.bf16.gmra.mrb[0].mxu0 %v8298
  %v9187 = vpop.f32.mrb[0].mxu0
  %v9188 = vadd.f32 0.0, %v9187
  %v9189 = vpop.f32.mrb[0].mxu0
  %v9190 = vpop.f32.mrb[0].mxu0
  %v9191 = vadd.f32 0.0, %v9190
  %v9192 = vpop.f32.mrb[0].mxu0
  %9193 = vmatprep.mubr.bf16.mxu0 %v8631
  %9194 = vmatmul.mubr.bf16.gmra.mrb[0].mxu0 %v8300
  %v9195 = vpop.f32.mrb[0].mxu0
  %v9196 = vadd.f32 0.0, %v9195
  %v9197 = vpop.f32.mrb[0].mxu0
  %v9198 = vpop.f32.mrb[0].mxu0
  %v9199 = vadd.f32 0.0, %v9198
  %v9200 = vpop.f32.mrb[0].mxu0
  %9201 = vmatprep.mubr.bf16.mxu0 %v8634
  %9202 = vmatmul.mubr.bf16.gmra.mrb[0].mxu0 %v8302
  %v9203 = vpop.f32.mrb[0].mxu0
  %v9204 = vpop.f32.mrb[0].mxu0
  %v9205 = vpop.f32.mrb[0].mxu0
  %v9206 = vpop.f32.mrb[0].mxu0
  %9207 = vmatprep.mubr.bf16.mxu0 %v8637
  %9208 = vmatmul.mubr.bf16.gmra.mrb[0].mxu0 %v8304
  %v9209 = vpop.f32.mrb[0].mxu0
  %v9210 = vpop.f32.mrb[0].mxu0
  %v9211 = vpop.f32.mrb[0].mxu0
  %v9212 = vpop.f32.mrb[0].mxu0
  %9213 = vmatprep.mubr.bf16.mxu0 %v8640
  %9214 = vmatmul.mubr.bf16.gmra.mrb[0].mxu0 %v8306
  %v9215 = vpop.f32.mrb[0].mxu0
  %v9216 = vadd.f32 0.0, %v9215
  %v9217 = vpop.f32.mrb[0].mxu0
  %v9218 = vpop.f32.mrb[0].mxu0
  %v9219 = vadd.f32 0.0, %v9218
  %v9220 = vpop.f32.mrb[0].mxu0
  %9221 = vmatprep.mubr.bf16.mxu0 %v8643
  %9222 = vmatmul.mubr.bf16.gmra.mrb[0].mxu0 %v8308
  %v9223 = vpop.f32.mrb[0].mxu0
  %v9224 = vadd.f32 0.0, %v9223
  %v9225 = vpop.f32.mrb[0].mxu0
  %v9226 = vpop.f32.mrb[0].mxu0
  %v9227 = vadd.f32 0.0, %v9226
  %v9228 = vpop.f32.mrb[0].mxu0
  %9229 = vmatprep.mubr.bf16.mxu0 %v8646
  %9230 = vmatmul.mubr.bf16.gmra.mrb[0].mxu0 %v8310
  %v9231 = vpop.f32.mrb[0].mxu0
  %v9232 = vadd.f32 0.0, %v9231
  %v9233 = vpop.f32.mrb[0].mxu0
  %v9234 = vpop.f32.mrb[0].mxu0
  %v9235 = vadd.f32 0.0, %v9234
  %v9236 = vpop.f32.mrb[0].mxu0
  %9237 = vmatprep.mubr.bf16.mxu0 %v8649
  %9238 = vmatmul.mubr.bf16.gmra.mrb[0].mxu0 %v8312
  %v9239 = vpop.f32.mrb[0].mxu0
  %v9240 = vadd.f32 0.0, %v9239
  %v9241 = vpop.f32.mrb[0].mxu0
  %v9242 = vpop.f32.mrb[0].mxu0
  %v9243 = vadd.f32 0.0, %v9242
  %v9244 = vpop.f32.mrb[0].mxu0
  %9245 = vmatprep.mubr.bf16.mxu0 %v8652
  %9246 = vmatmul.mubr.bf16.gmra.mrb[0].mxu0 %v8314
  %v9247 = vpop.f32.mrb[0].mxu0
  %v9248 = vadd.f32 0.0, %v9247
  %v9249 = vpop.f32.mrb[0].mxu0
  %v9250 = vpop.f32.mrb[0].mxu0
  %v9251 = vadd.f32 0.0, %v9250
  %v9252 = vpop.f32.mrb[0].mxu0
  %9253 = vmatprep.mubr.bf16.mxu0 %v8655
  %9254 = vmatmul.mubr.bf16.gmra.mrb[0].mxu0 %v8316
  %v9255 = vpop.f32.mrb[0].mxu0
  %v9256 = vpop.f32.mrb[0].mxu0
  %v9257 = vpop.f32.mrb[0].mxu0
  %v9258 = vpop.f32.mrb[0].mxu0
  %9259 = vmatprep.mubr.bf16.mxu0 %v8658
  %9260 = vmatmul.mubr.bf16.gmra.mrb[0].mxu0 %v8318
  %v9261 = vpop.f32.mrb[0].mxu0
  %v9262 = vpop.f32.mrb[0].mxu0
  %v9263 = vpop.f32.mrb[0].mxu0
  %v9264 = vpop.f32.mrb[0].mxu0
  %9265 = vmatprep.mubr.bf16.mxu0 %v8661
  %9266 = vmatmul.mubr.bf16.gmra.mrb[0].mxu0 %v8320
  %v9267 = vpop.f32.mrb[0].mxu0
  %v9268 = vadd.f32 0.0, %v9267
  %v9269 = vpop.f32.mrb[0].mxu0
  %v9270 = vpop.f32.mrb[0].mxu0
  %v9271 = vadd.f32 0.0, %v9270
  %v9272 = vpop.f32.mrb[0].mxu0
  %9273 = vmatprep.mubr.bf16.mxu0 %v8664
  %9274 = vmatmul.mubr.bf16.gmra.mrb[0].mxu0 %v8322
  %v9275 = vpop.f32.mrb[0].mxu0
  %v9276 = vadd.f32 0.0, %v9275
  %v9277 = vpop.f32.mrb[0].mxu0
  %v9278 = vpop.f32.mrb[0].mxu0
  %v9279 = vadd.f32 0.0, %v9278
  %v9280 = vpop.f32.mrb[0].mxu0
  %9281 = vmatprep.mubr.bf16.mxu0 %v8667
  %9282 = vmatmul.mubr.bf16.gmra.mrb[0].mxu0 %v8324
  %v9283 = vpop.f32.mrb[0].mxu0
  %v9284 = vadd.f32 0.0, %v9283
  %v9285 = vpop.f32.mrb[0].mxu0
  %v9286 = vpop.f32.mrb[0].mxu0
  %v9287 = vadd.f32 0.0, %v9286
  %v9288 = vpop.f32.mrb[0].mxu0
  %9289 = vmatprep.mubr.bf16.mxu0 %v8670
  %9290 = vmatmul.mubr.bf16.gmra.mrb[0].mxu0 %v8326
  %v9291 = vpop.f32.mrb[0].mxu0
  %v9292 = vadd.f32 0.0, %v9291
  %v9293 = vpop.f32.mrb[0].mxu0
  %v9294 = vpop.f32.mrb[0].mxu0
  %v9295 = vadd.f32 0.0, %v9294
  %v9296 = vpop.f32.mrb[0].mxu0
  %9297 = vmatprep.mubr.bf16.mxu0 %v8673
  %9298 = vmatmul.mubr.bf16.gmra.mrb[0].mxu0 %v8328
  %v9299 = vpop.f32.mrb[0].mxu0
  %v9300 = vadd.f32 0.0, %v9299
  %v9301 = vpop.f32.mrb[0].mxu0
  %v9302 = vpop.f32.mrb[0].mxu0
  %v9303 = vadd.f32 0.0, %v9302
  %v9304 = vpop.f32.mrb[0].mxu0
  %9305 = vmatprep.mubr.bf16.mxu0 %v8676
  %9306 = vmatmul.mubr.bf16.gmra.mrb[0].mxu0 %v8330
  %v9307 = vpop.f32.mrb[0].mxu0
  %v9308 = vpop.f32.mrb[0].mxu0
  %v9309 = vpop.f32.mrb[0].mxu0
  %v9310 = vpop.f32.mrb[0].mxu0
  %9311 = vmatprep.mubr.bf16.mxu0 %v8679
  %9312 = vmatmul.mubr.bf16.gmra.mrb[0].mxu0 %v8332
  %v9313 = vpop.f32.mrb[0].mxu0
  %v9314 = vpop.f32.mrb[0].mxu0
  %v9315 = vpop.f32.mrb[0].mxu0
  %v9316 = vpop.f32.mrb[0].mxu0
  %9317 = vmatprep.mubr.bf16.mxu0 %v8682
  %9318 = vmatmul.mubr.bf16.gmra.mrb[0].mxu0 %v8334
  %v9319 = vpop.f32.mrb[0].mxu0
  %v9320 = vpop.f32.mrb[0].mxu0
  %v9321 = vpop.f32.mrb[0].mxu0
  %v9322 = vpop.f32.mrb[0].mxu0
  %9323 = vmatprep.mubr.bf16.mxu0 %v8685
  %9324 = vmatmul.mubr.bf16.gmra.mrb[0].mxu0 %v8336
  %v9325 = vpop.f32.mrb[0].mxu0
  %v9326 = vpop.f32.mrb[0].mxu0
  %v9327 = vpop.f32.mrb[0].mxu0
  %v9328 = vpop.f32.mrb[0].mxu0
  %9329 = vmatprep.mubr.bf16.mxu0 %v8688
  %9330 = vmatmul.mubr.bf16.gmra.mrb[0].mxu0 %v8338
  %v9331 = vpop.f32.mrb[0].mxu0
  %v9332 = vpop.f32.mrb[0].mxu0
  %v9333 = vpop.f32.mrb[0].mxu0
  %v9334 = vpop.f32.mrb[0].mxu0
  %9335 = vmatprep.mubr.bf16.mxu0 %v8691
  %9336 = vmatmul.mubr.bf16.gmra.mrb[0].mxu0 %v8340
  %v9337 = vpop.f32.mrb[0].mxu0
  %v9338 = vpop.f32.mrb[0].mxu0
  %v9339 = vpop.f32.mrb[0].mxu0
  %v9340 = vpop.f32.mrb[0].mxu0
  %9341 = vmatprep.mubr.bf16.mxu0 %v8694
  %9342 = vmatmul.mubr.bf16.gmra.mrb[0].mxu0 %v8342
  %v9343 = vpop.f32.mrb[0].mxu0
  %v9344 = vpop.f32.mrb[0].mxu0
  %v9345 = vpop.f32.mrb[0].mxu0
  %v9346 = vpop.f32.mrb[0].mxu0
  %9347 = vmatprep.mubr.bf16.mxu0 %v8697
  %9348 = vmatmul.mubr.bf16.gmra.mrb[0].mxu0 %v8344
  %v9349 = vpop.f32.mrb[0].mxu0
  %v9350 = vpop.f32.mrb[0].mxu0
  %v9351 = vpop.f32.mrb[0].mxu0
  %v9352 = vpop.f32.mrb[0].mxu0
  %9353 = vmatprep.mubr.bf16.mxu0 %v8700
  %9354 = vmatmul.mubr.bf16.gmra.mrb[0].mxu0 %v8346
  %v9355 = vpop.f32.mrb[0].mxu0
  %v9356 = vpop.f32.mrb[0].mxu0
  %v9357 = vpop.f32.mrb[0].mxu0
  %v9358 = vpop.f32.mrb[0].mxu0
  %9359 = vmatprep.mubr.bf16.mxu0 %v8703
  %9360 = vmatmul.mubr.bf16.gmra.mrb[0].mxu0 %v8348
  %v9361 = vpop.f32.mrb[0].mxu0
  %v9362 = vpop.f32.mrb[0].mxu0
  %v9363 = vpop.f32.mrb[0].mxu0
  %v9364 = vpop.f32.mrb[0].mxu0
  %9365 = vmatprep.mubr.bf16.mxu0 %v8706
  %9366 = vmatmul.mubr.bf16.gmra.mrb[0].mxu0 %v8350
  %v9367 = vpop.f32.mrb[0].mxu0
  %v9368 = vpop.f32.mrb[0].mxu0
  %v9369 = vpop.f32.mrb[0].mxu0
  %v9370 = vpop.f32.mrb[0].mxu0
  %9371 = vmatprep.mubr.bf16.mxu0 %v8709
  %9372 = vmatmul.mubr.bf16.gmra.mrb[0].mxu0 %v8352
  %v9373 = vpop.f32.mrb[0].mxu0
  %v9374 = vpop.f32.mrb[0].mxu0
  %v9375 = vpop.f32.mrb[0].mxu0
  %v9376 = vpop.f32.mrb[0].mxu0
  %9377 = vmatprep.mubr.bf16.mxu0 %v8712
  %9378 = vmatmul.mubr.bf16.gmra.mrb[0].mxu0 %v8354
  %v9379 = vpop.f32.mrb[0].mxu0
  %v9380 = vpop.f32.mrb[0].mxu0
  %v9381 = vpop.f32.mrb[0].mxu0
  %v9382 = vpop.f32.mrb[0].mxu0
  %9383 = vmatprep.mubr.bf16.mxu0 %v8715
  %9384 = vmatmul.mubr.bf16.gmra.mrb[0].mxu0 %v8356
  %v9385 = vpop.f32.mrb[0].mxu0
  %v9386 = vpop.f32.mrb[0].mxu0
  %v9387 = vpop.f32.mrb[0].mxu0
  %v9388 = vpop.f32.mrb[0].mxu0
  %9389 = vmatprep.mubr.bf16.mxu0 %v8718
  %9390 = vmatmul.mubr.bf16.gmra.mrb[0].mxu0 %v8358
  %v9391 = vpop.f32.mrb[0].mxu0
  %v9392 = vpop.f32.mrb[0].mxu0
  %v9393 = vpop.f32.mrb[0].mxu0
  %v9394 = vpop.f32.mrb[0].mxu0
  %9395 = vmatprep.mubr.bf16.mxu0 %v8721
  %9396 = vmatmul.mubr.bf16.gmra.mrb[0].mxu0 %v8360
  %v9397 = vpop.f32.mrb[0].mxu0
  %v9398 = vpop.f32.mrb[0].mxu0
  %v9399 = vpop.f32.mrb[0].mxu0
  %v9400 = vpop.f32.mrb[0].mxu0
  %9401 = vmatprep.mubr.bf16.mxu0 %v8724
  %9402 = vmatmul.mubr.bf16.gmra.mrb[0].mxu0 %v8362
  %v9403 = vpop.f32.mrb[0].mxu0
  %v9404 = vpop.f32.mrb[0].mxu0
  %v9405 = vpop.f32.mrb[0].mxu0
  %v9406 = vpop.f32.mrb[0].mxu0
  %9407 = vmatprep.mubr.bf16.mxu0 %v8727
  %9408 = vmatmul.mubr.bf16.gmra.mrb[0].mxu0 %v8364
  %v9409 = vpop.f32.mrb[0].mxu0
  %v9410 = vpop.f32.mrb[0].mxu0
  %v9411 = vpop.f32.mrb[0].mxu0
  %v9412 = vpop.f32.mrb[0].mxu0
  %9413 = vmatprep.mubr.bf16.mxu0 %v8730
  %9414 = vmatmul.mubr.bf16.gmra.mrb[0].mxu0 %v8366
  %v9415 = vpop.f32.mrb[0].mxu0
  %v9416 = vpop.f32.mrb[0].mxu0
  %v9417 = vpop.f32.mrb[0].mxu0
  %v9418 = vpop.f32.mrb[0].mxu0
  %9419 = vmatprep.mubr.bf16.mxu0 %v8733
  %9420 = vmatmul.mubr.bf16.gmra.mrb[0].mxu0 %v8368
  %v9421 = vpop.f32.mrb[0].mxu0
  %v9422 = vpop.f32.mrb[0].mxu0
  %v9423 = vpop.f32.mrb[0].mxu0
  %v9424 = vpop.f32.mrb[0].mxu0
  %9425 = vmatprep.mubr.bf16.mxu0 %v8736
  %9426 = vmatmul.mubr.bf16.gmra.mrb[0].mxu0 %v8370
  %v9427 = vpop.f32.mrb[0].mxu0
  %v9428 = vpop.f32.mrb[0].mxu0
  %v9429 = vpop.f32.mrb[0].mxu0
  %v9430 = vpop.f32.mrb[0].mxu0
  %9431 = vmatprep.mubr.bf16.mxu0 %v8739
  %9432 = vmatmul.mubr.bf16.gmra.mrb[0].mxu0 %v8372
  %v9433 = vpop.f32.mrb[0].mxu0
  %v9434 = vpop.f32.mrb[0].mxu0
  %v9435 = vpop.f32.mrb[0].mxu0
  %v9436 = vpop.f32.mrb[0].mxu0
  %9437 = vmatprep.mubr.bf16.mxu0 %v8742
  %9438 = vmatmul.mubr.bf16.gmra.mrb[0].mxu0 %v8374
  %v9439 = vpop.f32.mrb[0].mxu0
  %v9440 = vpop.f32.mrb[0].mxu0
  %v9441 = vpop.f32.mrb[0].mxu0
  %v9442 = vpop.f32.mrb[0].mxu0
  %9443 = vmatprep.mubr.bf16.mxu0 %v8745
  %9444 = vmatmul.mubr.bf16.gmra.mrb[0].mxu0 %v8376
  %v9445 = vpop.f32.mrb[0].mxu0
  %v9446 = vpop.f32.mrb[0].mxu0
  %v9447 = vpop.f32.mrb[0].mxu0
  %v9448 = vpop.f32.mrb[0].mxu0
  %9449 = vmatprep.mubr.bf16.mxu0 %v8748
  %9450 = vmatmul.mubr.bf16.gmra.mrb[0].mxu0 %v8378
  %v9451 = vpop.f32.mrb[0].mxu0
  %v9452 = vpop.f32.mrb[0].mxu0
  %v9453 = vpop.f32.mrb[0].mxu0
  %v9454 = vpop.f32.mrb[0].mxu0
  %9455 = vmatprep.mubr.bf16.mxu0 %v8751
  %9456 = vmatmul.mubr.bf16.gmra.mrb[0].mxu0 %v8380
  %v9457 = vpop.f32.mrb[0].mxu0
  %v9458 = vpop.f32.mrb[0].mxu0
  %v9459 = vpop.f32.mrb[0].mxu0
  %v9460 = vpop.f32.mrb[0].mxu0
  %9461 = vmatprep.mubr.bf16.mxu0 %v8754
  %9462 = vmatmul.mubr.bf16.gmra.mrb[0].mxu0 %v8382
  %v9463 = vpop.f32.mrb[0].mxu0
  %v9464 = vpop.f32.mrb[0].mxu0
  %v9465 = vpop.f32.mrb[0].mxu0
  %v9466 = vpop.f32.mrb[0].mxu0
  %9467 = vmatprep.mubr.bf16.mxu0 %v8757
  %9468 = vmatmul.mubr.bf16.gmra.mrb[0].mxu0 %v8384
  %v9469 = vpop.f32.mrb[0].mxu0
  %v9470 = vpop.f32.mrb[0].mxu0
  %v9471 = vpop.f32.mrb[0].mxu0
  %v9472 = vpop.f32.mrb[0].mxu0
  %9473 = vmatprep.mubr.bf16.mxu0 %v8760
  %9474 = vmatmul.mubr.bf16.gmra.mrb[0].mxu0 %v8386
  %v9475 = vpop.f32.mrb[0].mxu0
  %v9476 = vpop.f32.mrb[0].mxu0
  %v9477 = vpop.f32.mrb[0].mxu0
  %v9478 = vpop.f32.mrb[0].mxu0
  %9479 = vmatprep.mubr.bf16.mxu0 %v8763
  %9480 = vmatmul.mubr.bf16.gmra.mrb[0].mxu0 %v8388
  %v9481 = vpop.f32.mrb[0].mxu0
  %v9482 = vpop.f32.mrb[0].mxu0
  %v9483 = vpop.f32.mrb[0].mxu0
  %v9484 = vpop.f32.mrb[0].mxu0
  %9485 = vdwg.mxu0
  %v9486 = vadd.f32 %v7508, %v8800
  %v9487 = vadd.f32 %v7511, %v8803
  %v9488 = vadd.f32 %v7516, %v8808
  %v9489 = vadd.f32 %v7519, %v8811
  %v9490 = vadd.f32 %v7524, %v8816
  %v9491 = vadd.f32 %v7527, %v8819
  %v9492 = vadd.f32 %v7532, %v8824
  %v9493 = vadd.f32 %v7535, %v8827
  %v9494 = vadd.f32 %v7540, %v8832
  %v9495 = vadd.f32 %v7543, %v8835
  %v9496 = vadd.f32 %v7560, %v8852
  %v9497 = vadd.f32 %v7563, %v8855
  %v9498 = vadd.f32 %v7568, %v8860
  %v9499 = vadd.f32 %v7571, %v8863
  %v9500 = vadd.f32 %v7576, %v8868
  %v9501 = vadd.f32 %v7579, %v8871
  %v9502 = vadd.f32 %v7584, %v8876
  %v9503 = vadd.f32 %v7587, %v8879
  %v9504 = vadd.f32 %v7592, %v8884
  %v9505 = vadd.f32 %v7595, %v8887
  %v9506 = vadd.f32 %v7612, %v8904
  %v9507 = vadd.f32 %v7615, %v8907
  %v9508 = vadd.f32 %v7620, %v8912
  %v9509 = vadd.f32 %v7623, %v8915
  %v9510 = vadd.f32 %v7628, %v8920
  %v9511 = vadd.f32 %v7631, %v8923
  %v9512 = vadd.f32 %v7636, %v8928
  %v9513 = vadd.f32 %v7639, %v8931
  %v9514 = vadd.f32 %v7644, %v8936
  %v9515 = vadd.f32 %v7647, %v8939
  %v9516 = vadd.f32 %v7664, %v8956
  %v9517 = vadd.f32 %v7667, %v8959
  %v9518 = vadd.f32 %v7672, %v8964
  %v9519 = vadd.f32 %v7675, %v8967
  %v9520 = vadd.f32 %v7680, %v8972
  %v9521 = vadd.f32 %v7683, %v8975
  %v9522 = vadd.f32 %v7688, %v8980
  %v9523 = vadd.f32 %v7691, %v8983
  %v9524 = vadd.f32 %v7696, %v8988
  %v9525 = vadd.f32 %v7699, %v8991
  %v9526 = vadd.f32 %v7716, %v9008
  %v9527 = vadd.f32 %v7719, %v9011
  %v9528 = vadd.f32 %v7724, %v9016
  %v9529 = vadd.f32 %v7727, %v9019
  %v9530 = vadd.f32 %v7732, %v9024
  %v9531 = vadd.f32 %v7735, %v9027
  %v9532 = vadd.f32 %v7740, %v9032
  %v9533 = vadd.f32 %v7743, %v9035
  %v9534 = vadd.f32 %v7748, %v9040
  %v9535 = vadd.f32 %v7751, %v9043
  %v9536 = vadd.f32 %v7768, %v9060
  %v9537 = vadd.f32 %v7771, %v9063
  %v9538 = vadd.f32 %v7776, %v9068
  %v9539 = vadd.f32 %v7779, %v9071
  %v9540 = vadd.f32 %v7784, %v9076
  %v9541 = vadd.f32 %v7787, %v9079
  %v9542 = vadd.f32 %v7792, %v9084
  %v9543 = vadd.f32 %v7795, %v9087
  %v9544 = vadd.f32 %v7800, %v9092
  %v9545 = vadd.f32 %v7803, %v9095
  %v9546 = vadd.f32 %v7820, %v9112
  %v9547 = vadd.f32 %v7823, %v9115
  %v9548 = vadd.f32 %v7828, %v9120
  %v9549 = vadd.f32 %v7831, %v9123
  %v9550 = vadd.f32 %v7836, %v9128
  %v9551 = vadd.f32 %v7839, %v9131
  %v9552 = vadd.f32 %v7844, %v9136
  %v9553 = vadd.f32 %v7847, %v9139
  %v9554 = vadd.f32 %v7852, %v9144
  %v9555 = vadd.f32 %v7855, %v9147
  %v9556 = vadd.f32 %v7872, %v9164
  %v9557 = vadd.f32 %v7875, %v9167
  %v9558 = vadd.f32 %v7880, %v9172
  %v9559 = vadd.f32 %v7883, %v9175
  %v9560 = vadd.f32 %v7888, %v9180
  %v9561 = vadd.f32 %v7891, %v9183
  %v9562 = vadd.f32 %v7896, %v9188
  %v9563 = vadd.f32 %v7899, %v9191
  %v9564 = vadd.f32 %v7904, %v9196
  %v9565 = vadd.f32 %v7907, %v9199
  %v9566 = vadd.f32 %v7924, %v9216
  %v9567 = vadd.f32 %v7927, %v9219
  %v9568 = vadd.f32 %v7932, %v9224
  %v9569 = vadd.f32 %v7935, %v9227
  %v9570 = vadd.f32 %v7940, %v9232
  %v9571 = vadd.f32 %v7943, %v9235
  %v9572 = vadd.f32 %v7948, %v9240
  %v9573 = vadd.f32 %v7951, %v9243
  %v9574 = vadd.f32 %v7956, %v9248
  %v9575 = vadd.f32 %v7959, %v9251
  %v9576 = vadd.f32 %v7976, %v9268
  %v9577 = vadd.f32 %v7979, %v9271
  %v9578 = vadd.f32 %v7984, %v9276
  %v9579 = vadd.f32 %v7987, %v9279
  %v9580 = vadd.f32 %v7992, %v9284
  %v9581 = vadd.f32 %v7995, %v9287
  %v9582 = vadd.f32 %v8000, %v9292
  %v9583 = vadd.f32 %v8003, %v9295
  %v9584 = vadd.f32 %v8008, %v9300
  %v9585 = vadd.f32 %v8011, %v9303
  %v9586 = vld [vmem:[#allocation2 + $0x150] sm:$0xff]
  %v9587 = vld [vmem:[#allocation2 + $0x158] sm:$0xff]
  %v9588 = vld [vmem:[#allocation2 + $0x160] sm:$0xff]
  %v9589 = vld [vmem:[#allocation2 + $0x168] sm:$0xff]
  %v9590 = vld [vmem:[#allocation2 + $0x170] sm:$0xff]
  %v9591 = vld [vmem:[#allocation2 + $0x178] sm:$0xff]
  %v9592 = vld [vmem:[#allocation2 + $0x180] sm:$0xff]
  %v9593 = vld [vmem:[#allocation2 + $0x188] sm:$0xff]
  %v9594 = vld [vmem:[#allocation2 + $0x190] sm:$0xff]
  %v9595 = vld [vmem:[#allocation2 + $0x198] sm:$0xff]
  %v9596 = vld [vmem:[#allocation2 + $0x1a0] sm:$0xff]
  %v9597 = vld [vmem:[#allocation2 + $0x1a8] sm:$0xff]
  %v9598 = vld [vmem:[#allocation2 + $0x1b0] sm:$0xff]
  %v9599 = vld [vmem:[#allocation2 + $0x1b8] sm:$0xff]
  %v9600 = vld [vmem:[#allocation2 + $0x1c0] sm:$0xff]
  %v9601 = vld [vmem:[#allocation2 + $0x1c8] sm:$0xff]
  %v9602 = vld [vmem:[#allocation2 + $0x1d0] sm:$0xff]
  %v9603 = vld [vmem:[#allocation2 + $0x1d8] sm:$0xff]
  %v9604 = vld [vmem:[#allocation2 + $0x1e0] sm:$0xff]
  %v9605 = vld [vmem:[#allocation2 + $0x1e8] sm:$0xff]
  %v9606 = vld [vmem:[#allocation2 + $0x1f0] sm:$0xff]
  %v9607 = vld [vmem:[#allocation2 + $0x1f8] sm:$0xff]
  %v9608 = vld [vmem:[#allocation2 + $0x200] sm:$0xff]
  %v9609 = vld [vmem:[#allocation2 + $0x208] sm:$0xff]
  %v9610 = vld [vmem:[#allocation2 + $0x210] sm:$0xff]
  %v9611 = vld [vmem:[#allocation2 + $0x218] sm:$0xff]
  %v9612 = vld [vmem:[#allocation2 + $0x220] sm:$0xff]
  %v9613 = vld [vmem:[#allocation2 + $0x228] sm:$0xff]
  %v9614 = vld [vmem:[#allocation2 + $0x230] sm:$0xff]
  %v9615 = vld [vmem:[#allocation2 + $0x238] sm:$0xff]
  %v9616 = vld [vmem:[#allocation2 + $0x240] sm:$0xff]
  %v9617 = vld [vmem:[#allocation2 + $0x248] sm:$0xff]
  %v9618 = vld [vmem:[#allocation2 + $0x250] sm:$0xff]
  %v9619 = vld [vmem:[#allocation2 + $0x258] sm:$0xff]
  %v9620 = vld [vmem:[#allocation2 + $0x260] sm:$0xff]
  %v9621 = vld [vmem:[#allocation2 + $0x268] sm:$0xff]
  %v9622 = vld [vmem:[#allocation2 + $0x270] sm:$0xff]
  %v9623 = vld [vmem:[#allocation2 + $0x278] sm:$0xff]
  %v9624 = vld [vmem:[#allocation2 + $0x280] sm:$0xff]
  %v9625 = vld [vmem:[#allocation2 + $0x288] sm:$0xff]
  %v9626 = vld [vmem:[#allocation2 + $0x290] sm:$0xff]
  %v9627 = vld [vmem:[#allocation2 + $0x298] sm:$0xff]
  %v9628 = vld [vmem:[#allocation2 + $0x2a0] sm:$0xff]
  %v9629 = vld [vmem:[#allocation2 + $0x2a8] sm:$0xff]
  %v9630 = vld [vmem:[#allocation2 + $0x2b0] sm:$0xff]
  %v9631 = vld [vmem:[#allocation2 + $0x2b8] sm:$0xff]
  %v9632 = vld [vmem:[#allocation2 + $0x2c0] sm:$0xff]
  %v9633 = vld [vmem:[#allocation2 + $0x2c8] sm:$0xff]
  %v9634 = vld [vmem:[#allocation2 + $0x2d0] sm:$0xff]
  %v9635 = vld [vmem:[#allocation2 + $0x2d8] sm:$0xff]
  %v9636 = vld [vmem:[#allocation2 + $0x2e0] sm:$0xff]
  %v9637 = vld [vmem:[#allocation2 + $0x2e8] sm:$0xff]
  %v9638 = vld [vmem:[#allocation2 + $0x2f0] sm:$0xff]
  %v9639 = vld [vmem:[#allocation2 + $0x2f8] sm:$0xff]
  %v9640 = vld [vmem:[#allocation2 + $0x300] sm:$0xff]
  %v9641 = vld [vmem:[#allocation2 + $0x308] sm:$0xff]
  %v9642 = vld [vmem:[#allocation2 + $0x310] sm:$0xff]
  %v9643 = vld [vmem:[#allocation2 + $0x318] sm:$0xff]
  %v9644 = vld [vmem:[#allocation2 + $0x320] sm:$0xff]
  %v9645 = vld [vmem:[#allocation2 + $0x328] sm:$0xff]
  %v9646 = vld [vmem:[#allocation2 + $0x330] sm:$0xff]
  %v9647 = vld [vmem:[#allocation2 + $0x338] sm:$0xff]
  %v9648 = vld [vmem:[#allocation2 + $0x340] sm:$0xff]
  %v9649 = vld [vmem:[#allocation2 + $0x348] sm:$0xff]
  %v9650 = vld [vmem:[#allocation2 + $0x350] sm:$0xff]
  %v9651 = vld [vmem:[#allocation2 + $0x358] sm:$0xff]
  %v9652 = vld [vmem:[#allocation2 + $0x360] sm:$0xff]
  %v9653 = vld [vmem:[#allocation2 + $0x368] sm:$0xff]
  %v9654 = vld [vmem:[#allocation2 + $0x370] sm:$0xff]
  %v9655 = vld [vmem:[#allocation2 + $0x378] sm:$0xff]
  %v9656 = vld [vmem:[#allocation2 + $0x380] sm:$0xff]
  %v9657 = vld [vmem:[#allocation2 + $0x388] sm:$0xff]
  %v9658 = vld [vmem:[#allocation2 + $0x390] sm:$0xff]
  %v9659 = vld [vmem:[#allocation2 + $0x398] sm:$0xff]
  %v9660 = vld [vmem:[#allocation2 + $0x3a0] sm:$0xff]
  %v9661 = vld [vmem:[#allocation2 + $0x3a8] sm:$0xff]
  %v9662 = vld [vmem:[#allocation2 + $0x3b0] sm:$0xff]
  %v9663 = vld [vmem:[#allocation2 + $0x3b8] sm:$0xff]
  %v9664 = vld [vmem:[#allocation2 + $0x3c0] sm:$0xff]
  %v9665 = vld [vmem:[#allocation2 + $0x3c8] sm:$0xff]
  %v9666 = vld [vmem:[#allocation2 + $0x3d0] sm:$0xff]
  %v9667 = vld [vmem:[#allocation2 + $0x3d8] sm:$0xff]
  %v9668 = vld [vmem:[#allocation2 + $0x3e0] sm:$0xff]
  %v9669 = vld [vmem:[#allocation2 + $0x3e8] sm:$0xff]
  %v9670 = vld [vmem:[#allocation2 + $0x3f0] sm:$0xff]
  %v9671 = vld [vmem:[#allocation2 + $0x3f8] sm:$0xff]
  %v9672 = vld [vmem:[#allocation2 + $0x400] sm:$0xff]
  %v9673 = vld [vmem:[#allocation2 + $0x408] sm:$0xff]
  %v9674 = vld [vmem:[#allocation2 + $0x410] sm:$0xff]
  %v9675 = vld [vmem:[#allocation2 + $0x418] sm:$0xff]
  %v9676 = vld [vmem:[#allocation2 + $0x420] sm:$0xff]
  %v9677 = vld [vmem:[#allocation2 + $0x428] sm:$0xff]
  %v9678 = vld [vmem:[#allocation2 + $0x430] sm:$0xff]
  %v9679 = vld [vmem:[#allocation2 + $0x438] sm:$0xff]
  %v9680 = vld [vmem:[#allocation2 + $0x440] sm:$0xff]
  %v9681 = vld [vmem:[#allocation2 + $0x448] sm:$0xff]
  %v9682 = vld [vmem:[#allocation2 + $0x450] sm:$0xff]
  %v9683 = vld [vmem:[#allocation2 + $0x458] sm:$0xff]
  %v9684 = vld [vmem:[#allocation2 + $0x460] sm:$0xff]
  %v9685 = vld [vmem:[#allocation2 + $0x468] sm:$0xff]
  %v9686 = vld [vmem:[#allocation2 + $0x470] sm:$0xff]
  %v9687 = vld [vmem:[#allocation2 + $0x478] sm:$0xff]
  %v9688 = vld [vmem:[#allocation2 + $0x480] sm:$0xff]
  %v9689 = vld [vmem:[#allocation2 + $0x488] sm:$0xff]
  %v9690 = vld [vmem:[#allocation2 + $0x490] sm:$0xff]
  %v9691 = vld [vmem:[#allocation2 + $0x498] sm:$0xff]
  %v9692 = vld [vmem:[#allocation2 + $0x4a0] sm:$0xff]
  %v9693 = vld [vmem:[#allocation2 + $0x4a8] sm:$0xff]
  %v9694 = vld [vmem:[#allocation2 + $0x4b0] sm:$0xff]
  %v9695 = vld [vmem:[#allocation2 + $0x4b8] sm:$0xff]
  %v9696 = vld [vmem:[#allocation2 + $0x4c0] sm:$0xff]
  %v9697 = vld [vmem:[#allocation2 + $0x4c8] sm:$0xff]
  %v9698 = vld [vmem:[#allocation2 + $0x4d0] sm:$0xff]
  %v9699 = vld [vmem:[#allocation2 + $0x4d8] sm:$0xff]
  %v9700 = vld [vmem:[#allocation2 + $0x4e0] sm:$0xff]
  %v9701 = vld [vmem:[#allocation2 + $0x4e8] sm:$0xff]
  %v9702 = vld [vmem:[#allocation2 + $0x4f0] sm:$0xff]
  %v9703 = vld [vmem:[#allocation2 + $0x4f8] sm:$0xff]
  %v9704 = vld [vmem:[#allocation2 + $0x500] sm:$0xff]
  %v9705 = vld [vmem:[#allocation2 + $0x508] sm:$0xff]
  %v9706 = vld [vmem:[#allocation2 + $0x510] sm:$0xff]
  %v9707 = vld [vmem:[#allocation2 + $0x518] sm:$0xff]
  %v9708 = vld [vmem:[#allocation2 + $0x520] sm:$0xff]
  %v9709 = vld [vmem:[#allocation2 + $0x528] sm:$0xff]
  %v9710 = vld [vmem:[#allocation2 + $0x530] sm:$0xff]
  %v9711 = vld [vmem:[#allocation2 + $0x538] sm:$0xff]
  %v9712 = vld [vmem:[#allocation2 + $0x540] sm:$0xff]
  %v9713 = vld [vmem:[#allocation2 + $0x548] sm:$0xff]
  %v9714 = vld [vmem:[#allocation2 + $0x550] sm:$0xff]
  %v9715 = vld [vmem:[#allocation2 + $0x558] sm:$0xff]
  %v9716 = vld [vmem:[#allocation2 + $0x560] sm:$0xff]
  %v9717 = vld [vmem:[#allocation2 + $0x568] sm:$0xff]
  %v9718 = vld [vmem:[#allocation2 + $0x570] sm:$0xff]
  %v9719 = vld [vmem:[#allocation2 + $0x578] sm:$0xff]
  %v9720 = vld [vmem:[#allocation2 + $0x580] sm:$0xff]
  %v9721 = vld [vmem:[#allocation2 + $0x588] sm:$0xff]
  %v9722 = vld [vmem:[#allocation2 + $0x590] sm:$0xff]
  %v9723 = vld [vmem:[#allocation2 + $0x598] sm:$0xff]
  %v9724 = vld [vmem:[#allocation2 + $0x5a0] sm:$0xff]
  %v9725 = vld [vmem:[#allocation2 + $0x5a8] sm:$0xff]
  %v9726 = vld [vmem:[#allocation2 + $0x5b0] sm:$0xff]
  %v9727 = vld [vmem:[#allocation2 + $0x5b8] sm:$0xff]
  %v9728 = vld [vmem:[#allocation2 + $0x5c0] sm:$0xff]
  %v9729 = vld [vmem:[#allocation2 + $0x5c8] sm:$0xff]
  %v9730 = vld [vmem:[#allocation2 + $0x5d0] sm:$0xff]
  %v9731 = vld [vmem:[#allocation2 + $0x5d8] sm:$0xff]
  %v9732 = vld [vmem:[#allocation2 + $0x5e0] sm:$0xff]
  %v9733 = vld [vmem:[#allocation2 + $0x5e8] sm:$0xff]
  %v9734 = vld [vmem:[#allocation2 + $0x5f0] sm:$0xff]
  %v9735 = vld [vmem:[#allocation2 + $0x5f8] sm:$0xff]
  %v9736 = vld [vmem:[#allocation2 + $0x600] sm:$0xff]
  %v9737 = vld [vmem:[#allocation2 + $0x608] sm:$0xff]
  %v9738 = vld [vmem:[#allocation2 + $0x610] sm:$0xff]
  %v9739 = vld [vmem:[#allocation2 + $0x618] sm:$0xff]
  %v9740 = vld [vmem:[#allocation2 + $0x620] sm:$0xff]
  %v9741 = vld [vmem:[#allocation2 + $0x628] sm:$0xff]
  %v9742 = vld [vmem:[#allocation2 + $0x630] sm:$0xff]
  %v9743 = vld [vmem:[#allocation2 + $0x638] sm:$0xff]
  %v9744 = vld [vmem:[#allocation2 + $0x640] sm:$0xff]
  %v9745 = vld [vmem:[#allocation2 + $0x648] sm:$0xff]
  %v9746 = vld [vmem:[#allocation2 + $0x650] sm:$0xff]
  %v9747 = vld [vmem:[#allocation2 + $0x658] sm:$0xff]
  %v9748 = vld [vmem:[#allocation2 + $0x660] sm:$0xff]
  %v9749 = vld [vmem:[#allocation2 + $0x668] sm:$0xff]
  %v9750 = vld [vmem:[#allocation2 + $0x670] sm:$0xff]
  %v9751 = vld [vmem:[#allocation2 + $0x678] sm:$0xff]
  %v9752 = vld [vmem:[#allocation2 + $0x680] sm:$0xff]
  %v9753 = vld [vmem:[#allocation2 + $0x688] sm:$0xff]
  %v9754 = vld [vmem:[#allocation2 + $0x690] sm:$0xff]
  %v9755 = vld [vmem:[#allocation2 + $0x698] sm:$0xff]
  %v9756 = vld [vmem:[#allocation2 + $0x6a0] sm:$0xff]
  %v9757 = vld [vmem:[#allocation2 + $0x6a8] sm:$0xff]
  %v9758 = vld [vmem:[#allocation2 + $0x6b0] sm:$0xff]
  %v9759 = vld [vmem:[#allocation2 + $0x6b8] sm:$0xff]
  %v9760 = vld [vmem:[#allocation2 + $0x6c0] sm:$0xff]
  %v9761 = vld [vmem:[#allocation2 + $0x6c8] sm:$0xff]
  %v9762 = vld [vmem:[#allocation2 + $0x6d0] sm:$0xff]
  %v9763 = vld [vmem:[#allocation2 + $0x6d8] sm:$0xff]
  %v9764 = vld [vmem:[#allocation2 + $0x6e0] sm:$0xff]
  %v9765 = vld [vmem:[#allocation2 + $0x6e8] sm:$0xff]
  %v9766 = vld [vmem:[#allocation2 + $0x6f0] sm:$0xff]
  %v9767 = vld [vmem:[#allocation2 + $0x6f8] sm:$0xff]
  %v9768 = vld [vmem:[#allocation2 + $0x700] sm:$0xff]
  %v9769 = vld [vmem:[#allocation2 + $0x708] sm:$0xff]
  %v9770 = vld [vmem:[#allocation2 + $0x710] sm:$0xff]
  %v9771 = vld [vmem:[#allocation2 + $0x718] sm:$0xff]
  %v9772 = vld [vmem:[#allocation2 + $0x720] sm:$0xff]
  %v9773 = vld [vmem:[#allocation2 + $0x728] sm:$0xff]
  %v9774 = vld [vmem:[#allocation2 + $0x730] sm:$0xff]
  %v9775 = vld [vmem:[#allocation2 + $0x738] sm:$0xff]
  %v9776 = vld [vmem:[#allocation2 + $0x740] sm:$0xff]
  %v9777 = vld [vmem:[#allocation2 + $0x748] sm:$0xff]
  %v9778 = vld [vmem:[#allocation2 + $0x750] sm:$0xff]
  %v9779 = vld [vmem:[#allocation2 + $0x758] sm:$0xff]
  %v9780 = vld [vmem:[#allocation2 + $0x760] sm:$0xff]
  %v9781 = vld [vmem:[#allocation2 + $0x768] sm:$0xff]
  %s9782 = scalar_lea.vmem %s3, 240
  %v9783 = vld [vmem:[%s9782] sm:$0xf]
  %v9784 = vld [vmem:[%s9782 + $0x4] sm:$0xf]
  %v9785 = vld [vmem:[%s9782 + $0x8] sm:$0xf]
  %v9786 = vld [vmem:[%s9782 + $0xc] sm:$0xf]
  %v9787 = vld [vmem:[%s9782 + $0x10] sm:$0xf]
  %v9788 = vld [vmem:[%s9782 + $0x14] sm:$0xf]
  %v9789 = vld [vmem:[%s9782 + $0x18] sm:$0xf]
  %v9790 = vld [vmem:[%s9782 + $0x1c] sm:$0xf]
  %v9791 = vld [vmem:[%s9782 + $0x20] sm:$0xf]
  %v9792 = vld [vmem:[%s9782 + $0x24] sm:$0xf]
  %v9793 = vld [vmem:[%s9782 + $0x28] sm:$0xf]
  %v9794 = vld [vmem:[%s9782 + $0x2c] sm:$0xf]
  %v9795 = vld [vmem:[%s9782 + $0x30] sm:$0xf]
  %v9796 = vld [vmem:[%s9782 + $0x34] sm:$0xf]
  %v9797 = vld [vmem:[%s9782 + $0x38] sm:$0xf]
  %v9798 = vld [vmem:[%s9782 + $0x3c] sm:$0xf]
  %v9799 = vld [vmem:[%s9782 + $0x40] sm:$0xf]
  %v9800 = vld [vmem:[%s9782 + $0x44] sm:$0xf]
  %v9801 = vld [vmem:[%s9782 + $0x48] sm:$0xf]
  %v9802 = vld [vmem:[%s9782 + $0x4c] sm:$0xf]
  %v9823 = vunpack.c.l.b16 %v9783
  %v9824 = vunpack.c.l.b16 %v9784
  %v9825 = vunpack.c.l.b16 %v9785
  %v9826 = vunpack.c.l.b16 %v9786
  %v9827 = vunpack.c.l.b16 %v9787
  %v9828 = vunpack.c.l.b16 %v9788
  %v9829 = vunpack.c.l.b16 %v9789
  %v9830 = vunpack.c.l.b16 %v9790
  %v9831 = vunpack.c.l.b16 %v9791
  %v9832 = vunpack.c.l.b16 %v9792
  %v9833 = vunpack.c.l.b16 %v9793
  %v9834 = vunpack.c.l.b16 %v9794
  %v9835 = vunpack.c.l.b16 %v9795
  %v9836 = vunpack.c.l.b16 %v9796
  %v9837 = vunpack.c.l.b16 %v9797
  %v9838 = vunpack.c.l.b16 %v9798
  %v9839 = vunpack.c.l.b16 %v9799
  %v9840 = vunpack.c.l.b16 %v9800
  %v9841 = vunpack.c.l.b16 %v9801
  %v9842 = vunpack.c.l.b16 %v9802
  %v9843 = vpack.c.b16 %v9824, %v9823
  %v9844 = vpack.c.b16 %v9826, %v9825
  %v9845 = vpack.c.b16 %v9828, %v9827
  %v9846 = vpack.c.b16 %v9830, %v9829
  %v9847 = vpack.c.b16 %v9832, %v9831
  %v9848 = vpack.c.b16 %v9834, %v9833
  %v9849 = vpack.c.b16 %v9836, %v9835
  %v9850 = vpack.c.b16 %v9838, %v9837
  %v9851 = vpack.c.b16 %v9840, %v9839
  %v9852 = vpack.c.b16 %v9842, %v9841
  %v9864 = vsel %vm4345, %v9587, 0
  %v9867 = vsel %vm4345, %v9589, 0
  %v9870 = vsel %vm4345, %v9591, 0
  %v9873 = vsel %vm4345, %v9593, 0
  %v9876 = vsel %vm4345, %v9595, 0
  %v9879 = vsel %vm4345, %v9597, 0
  %v9882 = vsel %vm4345, %v9599, 0
  %v9885 = vsel %vm4345, %v9601, 0
  %v9888 = vsel %vm4345, %v9603, 0
  %v9891 = vsel %vm4345, %v9605, 0
  %v9894 = vsel %vm4345, %v9607, 0
  %v9897 = vsel %vm4345, %v9609, 0
  %v9900 = vsel %vm4345, %v9611, 0
  %v9903 = vsel %vm4345, %v9613, 0
  %v9906 = vsel %vm4345, %v9615, 0
  %v9909 = vsel %vm4345, %v9617, 0
  %v9912 = vsel %vm4345, %v9619, 0
  %v9915 = vsel %vm4345, %v9621, 0
  %v9918 = vsel %vm4345, %v9623, 0
  %v9921 = vsel %vm4345, %v9625, 0
  %v9924 = vsel %vm4345, %v9627, 0
  %v9927 = vsel %vm4345, %v9629, 0
  %v9930 = vsel %vm4345, %v9631, 0
  %v9933 = vsel %vm4345, %v9633, 0
  %v9936 = vsel %vm4345, %v9635, 0
  %v9939 = vsel %vm4345, %v9637, 0
  %v9942 = vsel %vm4345, %v9639, 0
  %v9945 = vsel %vm4345, %v9641, 0
  %v9948 = vsel %vm4345, %v9643, 0
  %v9951 = vsel %vm4345, %v9645, 0
  %v9954 = vsel %vm4345, %v9647, 0
  %v9957 = vsel %vm4345, %v9649, 0
  %v9960 = vsel %vm4345, %v9651, 0
  %v9963 = vsel %vm4345, %v9653, 0
  %v9966 = vsel %vm4345, %v9655, 0
  %v9969 = vsel %vm4345, %v9657, 0
  %v9972 = vsel %vm4345, %v9659, 0
  %v9975 = vsel %vm4345, %v9661, 0
  %v9978 = vsel %vm4345, %v9663, 0
  %v9981 = vsel %vm4345, %v9665, 0
  %v9984 = vsel %vm4345, %v9667, 0
  %v9987 = vsel %vm4345, %v9669, 0
  %v9990 = vsel %vm4345, %v9671, 0
  %v9993 = vsel %vm4345, %v9673, 0
  %v9996 = vsel %vm4345, %v9675, 0
  %v9999 = vsel %vm4345, %v9677, 0
  %v10002 = vsel %vm4345, %v9679, 0
  %v10005 = vsel %vm4345, %v9681, 0
  %v10008 = vsel %vm4345, %v9683, 0
  %v10011 = vsel %vm4345, %v9685, 0
  %v10014 = vsel %vm4345, %v9687, 0
  %v10017 = vsel %vm4345, %v9689, 0
  %v10020 = vsel %vm4345, %v9691, 0
  %v10023 = vsel %vm4345, %v9693, 0
  %v10026 = vsel %vm4345, %v9695, 0
  %v10029 = vsel %vm4345, %v9697, 0
  %v10032 = vsel %vm4345, %v9699, 0
  %v10035 = vsel %vm4345, %v9701, 0
  %v10038 = vsel %vm4345, %v9703, 0
  %v10041 = vsel %vm4345, %v9705, 0
  %v10044 = vsel %vm4345, %v9707, 0
  %v10047 = vsel %vm4345, %v9709, 0
  %v10050 = vsel %vm4345, %v9711, 0
  %v10053 = vsel %vm4345, %v9713, 0
  %v10056 = vsel %vm4345, %v9715, 0
  %v10059 = vsel %vm4345, %v9717, 0
  %v10062 = vsel %vm4345, %v9719, 0
  %v10065 = vsel %vm4345, %v9721, 0
  %v10068 = vsel %vm4345, %v9723, 0
  %v10071 = vsel %vm4345, %v9725, 0
  %v10074 = vsel %vm4345, %v9727, 0
  %v10077 = vsel %vm4345, %v9729, 0
  %v10080 = vsel %vm4345, %v9731, 0
  %v10083 = vsel %vm4345, %v9733, 0
  %v10086 = vsel %vm4345, %v9735, 0
  %v10089 = vsel %vm4345, %v9737, 0
  %v10092 = vsel %vm4345, %v9739, 0
  %v10095 = vsel %vm4345, %v9741, 0
  %v10098 = vsel %vm4345, %v9743, 0
  %v10101 = vsel %vm4345, %v9745, 0
  %v10104 = vsel %vm4345, %v9747, 0
  %v10107 = vsel %vm4345, %v9749, 0
  %v10110 = vsel %vm4345, %v9751, 0
  %v10113 = vsel %vm4345, %v9753, 0
  %v10116 = vsel %vm4345, %v9755, 0
  %v10119 = vsel %vm4345, %v9757, 0
  %v10122 = vsel %vm4345, %v9759, 0
  %v10125 = vsel %vm4345, %v9761, 0
  %v10128 = vsel %vm4345, %v9763, 0
  %v10131 = vsel %vm4345, %v9765, 0
  %v10134 = vsel %vm4345, %v9767, 0
  %v10137 = vsel %vm4345, %v9769, 0
  %v10140 = vsel %vm4345, %v9771, 0
  %v10143 = vsel %vm4345, %v9773, 0
  %v10146 = vsel %vm4345, %v9775, 0
  %v10149 = vsel %vm4345, %v9777, 0
  %v10152 = vsel %vm4345, %v9779, 0
  %v10155 = vsel %vm4345, %v9781, 0
  %10157 = vmatprep.subr.bf16.mxu0 0
  %10158 = vmatpush1.bf16.msra.mxu0 %v9843
  %10159 = vmatprep.subr.bf16.mxu0 0
  %10160 = vmatpush1.bf16.msra.mxu0 %v9844
  %10161 = vmatprep.subr.bf16.mxu0 0
  %10162 = vmatpush1.bf16.msra.mxu0 %v9845
  %10163 = vmatprep.subr.bf16.mxu0 0
  %10164 = vmatpush1.bf16.msra.mxu0 %v9846
  %10165 = vmatprep.subr.bf16.mxu0 0
  %10166 = vmatpush1.bf16.msra.mxu0 %v9847
  %10167 = vmatprep.subr.bf16.mxu0 0
  %10168 = vmatpush1.bf16.msra.mxu0 %v9848
  %10169 = vmatprep.subr.bf16.mxu0 0
  %10170 = vmatpush1.bf16.msra.mxu0 %v9849
  %10171 = vmatprep.subr.bf16.mxu0 0
  %10172 = vmatpush1.bf16.msra.mxu0 %v9850
  %10173 = vmatprep.subr.bf16.mxu0 0
  %10174 = vmatpush1.bf16.msra.mxu0 %v9851
  %10175 = vmatprep.subr.bf16.mxu0 0
  %10176 = vmatpush1.bf16.msra.mxu0 %v9852
  %10177 = vmatprep.subr.bf16.mxu0 0
  %10178 = vmatpush1.bf16.msra.mxu0 0
  %10179 = vmatprep.subr.bf16.mxu0 0
  %10180 = vmatpush1.bf16.msra.mxu0 0
  %10181 = vmatprep.subr.bf16.mxu0 0
  %10182 = vmatpush1.bf16.msra.mxu0 0
  %10183 = vmatprep.subr.bf16.mxu0 0
  %10184 = vmatpush1.bf16.msra.mxu0 0
  %10185 = vmatprep.subr.bf16.mxu0 0
  %10186 = vmatpush1.bf16.msra.mxu0 0
  %10187 = vmatprep.subr.bf16.mxu0 0
  %10188 = vmatpush1.bf16.msra.mxu0 0
  %10189 = vmatprep.mubr.bf16.mxu0 %v9864
  %10190 = vmatmul.mubr.bf16.gmra.mrb[0].mxu0 %v9586
  %v10191 = vpop.f32.mrb[0].mxu0
  %v10192 = vadd.f32 0.0, %v10191
  %v10193 = vpop.f32.mrb[0].mxu0
  %v10194 = vpop.f32.mrb[0].mxu0
  %v10195 = vadd.f32 0.0, %v10194
  %v10196 = vpop.f32.mrb[0].mxu0
  %10197 = vmatprep.mubr.bf16.mxu0 %v9867
  %10198 = vmatmul.mubr.bf16.gmra.mrb[0].mxu0 %v9588
  %v10199 = vpop.f32.mrb[0].mxu0
  %v10200 = vadd.f32 0.0, %v10199
  %v10201 = vpop.f32.mrb[0].mxu0
  %v10202 = vpop.f32.mrb[0].mxu0
  %v10203 = vadd.f32 0.0, %v10202
  %v10204 = vpop.f32.mrb[0].mxu0
  %10205 = vmatprep.mubr.bf16.mxu0 %v9870
  %10206 = vmatmul.mubr.bf16.gmra.mrb[0].mxu0 %v9590
  %v10207 = vpop.f32.mrb[0].mxu0
  %v10208 = vadd.f32 0.0, %v10207
  %v10209 = vpop.f32.mrb[0].mxu0
  %v10210 = vpop.f32.mrb[0].mxu0
  %v10211 = vadd.f32 0.0, %v10210
  %v10212 = vpop.f32.mrb[0].mxu0
  %10213 = vmatprep.mubr.bf16.mxu0 %v9873
  %10214 = vmatmul.mubr.bf16.gmra.mrb[0].mxu0 %v9592
  %v10215 = vpop.f32.mrb[0].mxu0
  %v10216 = vadd.f32 0.0, %v10215
  %v10217 = vpop.f32.mrb[0].mxu0
  %v10218 = vpop.f32.mrb[0].mxu0
  %v10219 = vadd.f32 0.0, %v10218
  %v10220 = vpop.f32.mrb[0].mxu0
  %10221 = vmatprep.mubr.bf16.mxu0 %v9876
  %10222 = vmatmul.mubr.bf16.gmra.mrb[0].mxu0 %v9594
  %v10223 = vpop.f32.mrb[0].mxu0
  %v10224 = vadd.f32 0.0, %v10223
  %v10225 = vpop.f32.mrb[0].mxu0
  %v10226 = vpop.f32.mrb[0].mxu0
  %v10227 = vadd.f32 0.0, %v10226
  %v10228 = vpop.f32.mrb[0].mxu0
  %10229 = vmatprep.mubr.bf16.mxu0 %v9879
  %10230 = vmatmul.mubr.bf16.gmra.mrb[0].mxu0 %v9596
  %v10231 = vpop.f32.mrb[0].mxu0
  %v10232 = vpop.f32.mrb[0].mxu0
  %v10233 = vpop.f32.mrb[0].mxu0
  %v10234 = vpop.f32.mrb[0].mxu0
  %10235 = vmatprep.mubr.bf16.mxu0 %v9882
  %10236 = vmatmul.mubr.bf16.gmra.mrb[0].mxu0 %v9598
  %v10237 = vpop.f32.mrb[0].mxu0
  %v10238 = vpop.f32.mrb[0].mxu0
  %v10239 = vpop.f32.mrb[0].mxu0
  %v10240 = vpop.f32.mrb[0].mxu0
  %10241 = vmatprep.mubr.bf16.mxu0 %v9885
  %10242 = vmatmul.mubr.bf16.gmra.mrb[0].mxu0 %v9600
  %v10243 = vpop.f32.mrb[0].mxu0
  %v10244 = vadd.f32 0.0, %v10243
  %v10245 = vpop.f32.mrb[0].mxu0
  %v10246 = vpop.f32.mrb[0].mxu0
  %v10247 = vadd.f32 0.0, %v10246
  %v10248 = vpop.f32.mrb[0].mxu0
  %10249 = vmatprep.mubr.bf16.mxu0 %v9888
  %10250 = vmatmul.mubr.bf16.gmra.mrb[0].mxu0 %v9602
  %v10251 = vpop.f32.mrb[0].mxu0
  %v10252 = vadd.f32 0.0, %v10251
  %v10253 = vpop.f32.mrb[0].mxu0
  %v10254 = vpop.f32.mrb[0].mxu0
  %v10255 = vadd.f32 0.0, %v10254
  %v10256 = vpop.f32.mrb[0].mxu0
  %10257 = vmatprep.mubr.bf16.mxu0 %v9891
  %10258 = vmatmul.mubr.bf16.gmra.mrb[0].mxu0 %v9604
  %v10259 = vpop.f32.mrb[0].mxu0
  %v10260 = vadd.f32 0.0, %v10259
  %v10261 = vpop.f32.mrb[0].mxu0
  %v10262 = vpop.f32.mrb[0].mxu0
  %v10263 = vadd.f32 0.0, %v10262
  %v10264 = vpop.f32.mrb[0].mxu0
  %10265 = vmatprep.mubr.bf16.mxu0 %v9894
  %10266 = vmatmul.mubr.bf16.gmra.mrb[0].mxu0 %v9606
  %v10267 = vpop.f32.mrb[0].mxu0
  %v10268 = vadd.f32 0.0, %v10267
  %v10269 = vpop.f32.mrb[0].mxu0
  %v10270 = vpop.f32.mrb[0].mxu0
  %v10271 = vadd.f32 0.0, %v10270
  %v10272 = vpop.f32.mrb[0].mxu0
  %10273 = vmatprep.mubr.bf16.mxu0 %v9897
  %10274 = vmatmul.mubr.bf16.gmra.mrb[0].mxu0 %v9608
  %v10275 = vpop.f32.mrb[0].mxu0
  %v10276 = vadd.f32 0.0, %v10275
  %v10277 = vpop.f32.mrb[0].mxu0
  %v10278 = vpop.f32.mrb[0].mxu0
  %v10279 = vadd.f32 0.0, %v10278
  %v10280 = vpop.f32.mrb[0].mxu0
  %10281 = vmatprep.mubr.bf16.mxu0 %v9900
  %10282 = vmatmul.mubr.bf16.gmra.mrb[0].mxu0 %v9610
  %v10283 = vpop.f32.mrb[0].mxu0
  %v10284 = vpop.f32.mrb[0].mxu0
  %v10285 = vpop.f32.mrb[0].mxu0
  %v10286 = vpop.f32.mrb[0].mxu0
  %10287 = vmatprep.mubr.bf16.mxu0 %v9903
  %10288 = vmatmul.mubr.bf16.gmra.mrb[0].mxu0 %v9612
  %v10289 = vpop.f32.mrb[0].mxu0
  %v10290 = vpop.f32.mrb[0].mxu0
  %v10291 = vpop.f32.mrb[0].mxu0
  %v10292 = vpop.f32.mrb[0].mxu0
  %10293 = vmatprep.mubr.bf16.mxu0 %v9906
  %10294 = vmatmul.mubr.bf16.gmra.mrb[0].mxu0 %v9614
  %v10295 = vpop.f32.mrb[0].mxu0
  %v10296 = vadd.f32 0.0, %v10295
  %v10297 = vpop.f32.mrb[0].mxu0
  %v10298 = vpop.f32.mrb[0].mxu0
  %v10299 = vadd.f32 0.0, %v10298
  %v10300 = vpop.f32.mrb[0].mxu0
  %10301 = vmatprep.mubr.bf16.mxu0 %v9909
  %10302 = vmatmul.mubr.bf16.gmra.mrb[0].mxu0 %v9616
  %v10303 = vpop.f32.mrb[0].mxu0
  %v10304 = vadd.f32 0.0, %v10303
  %v10305 = vpop.f32.mrb[0].mxu0
  %v10306 = vpop.f32.mrb[0].mxu0
  %v10307 = vadd.f32 0.0, %v10306
  %v10308 = vpop.f32.mrb[0].mxu0
  %10309 = vmatprep.mubr.bf16.mxu0 %v9912
  %10310 = vmatmul.mubr.bf16.gmra.mrb[0].mxu0 %v9618
  %v10311 = vpop.f32.mrb[0].mxu0
  %v10312 = vadd.f32 0.0, %v10311
  %v10313 = vpop.f32.mrb[0].mxu0
  %v10314 = vpop.f32.mrb[0].mxu0
  %v10315 = vadd.f32 0.0, %v10314
  %v10316 = vpop.f32.mrb[0].mxu0
  %10317 = vmatprep.mubr.bf16.mxu0 %v9915
  %10318 = vmatmul.mubr.bf16.gmra.mrb[0].mxu0 %v9620
  %v10319 = vpop.f32.mrb[0].mxu0
  %v10320 = vadd.f32 0.0, %v10319
  %v10321 = vpop.f32.mrb[0].mxu0
  %v10322 = vpop.f32.mrb[0].mxu0
  %v10323 = vadd.f32 0.0, %v10322
  %v10324 = vpop.f32.mrb[0].mxu0
  %10325 = vmatprep.mubr.bf16.mxu0 %v9918
  %10326 = vmatmul.mubr.bf16.gmra.mrb[0].mxu0 %v9622
  %v10327 = vpop.f32.mrb[0].mxu0
  %v10328 = vadd.f32 0.0, %v10327
  %v10329 = vpop.f32.mrb[0].mxu0
  %v10330 = vpop.f32.mrb[0].mxu0
  %v10331 = vadd.f32 0.0, %v10330
  %v10332 = vpop.f32.mrb[0].mxu0
  %10333 = vmatprep.mubr.bf16.mxu0 %v9921
  %10334 = vmatmul.mubr.bf16.gmra.mrb[0].mxu0 %v9624
  %v10335 = vpop.f32.mrb[0].mxu0
  %v10336 = vpop.f32.mrb[0].mxu0
  %v10337 = vpop.f32.mrb[0].mxu0
  %v10338 = vpop.f32.mrb[0].mxu0
  %10339 = vmatprep.mubr.bf16.mxu0 %v9924
  %10340 = vmatmul.mubr.bf16.gmra.mrb[0].mxu0 %v9626
  %v10341 = vpop.f32.mrb[0].mxu0
  %v10342 = vpop.f32.mrb[0].mxu0
  %v10343 = vpop.f32.mrb[0].mxu0
  %v10344 = vpop.f32.mrb[0].mxu0
  %10345 = vmatprep.mubr.bf16.mxu0 %v9927
  %10346 = vmatmul.mubr.bf16.gmra.mrb[0].mxu0 %v9628
  %v10347 = vpop.f32.mrb[0].mxu0
  %v10348 = vadd.f32 0.0, %v10347
  %v10349 = vpop.f32.mrb[0].mxu0
  %v10350 = vpop.f32.mrb[0].mxu0
  %v10351 = vadd.f32 0.0, %v10350
  %v10352 = vpop.f32.mrb[0].mxu0
  %10353 = vmatprep.mubr.bf16.mxu0 %v9930
  %10354 = vmatmul.mubr.bf16.gmra.mrb[0].mxu0 %v9630
  %v10355 = vpop.f32.mrb[0].mxu0
  %v10356 = vadd.f32 0.0, %v10355
  %v10357 = vpop.f32.mrb[0].mxu0
  %v10358 = vpop.f32.mrb[0].mxu0
  %v10359 = vadd.f32 0.0, %v10358
  %v10360 = vpop.f32.mrb[0].mxu0
  %10361 = vmatprep.mubr.bf16.mxu0 %v9933
  %10362 = vmatmul.mubr.bf16.gmra.mrb[0].mxu0 %v9632
  %v10363 = vpop.f32.mrb[0].mxu0
  %v10364 = vadd.f32 0.0, %v10363
  %v10365 = vpop.f32.mrb[0].mxu0
  %v10366 = vpop.f32.mrb[0].mxu0
  %v10367 = vadd.f32 0.0, %v10366
  %v10368 = vpop.f32.mrb[0].mxu0
  %10369 = vmatprep.mubr.bf16.mxu0 %v9936
  %10370 = vmatmul.mubr.bf16.gmra.mrb[0].mxu0 %v9634
  %v10371 = vpop.f32.mrb[0].mxu0
  %v10372 = vadd.f32 0.0, %v10371
  %v10373 = vpop.f32.mrb[0].mxu0
  %v10374 = vpop.f32.mrb[0].mxu0
  %v10375 = vadd.f32 0.0, %v10374
  %v10376 = vpop.f32.mrb[0].mxu0
  %10377 = vmatprep.mubr.bf16.mxu0 %v9939
  %10378 = vmatmul.mubr.bf16.gmra.mrb[0].mxu0 %v9636
  %v10379 = vpop.f32.mrb[0].mxu0
  %v10380 = vadd.f32 0.0, %v10379
  %v10381 = vpop.f32.mrb[0].mxu0
  %v10382 = vpop.f32.mrb[0].mxu0
  %v10383 = vadd.f32 0.0, %v10382
  %v10384 = vpop.f32.mrb[0].mxu0
  %10385 = vmatprep.mubr.bf16.mxu0 %v9942
  %10386 = vmatmul.mubr.bf16.gmra.mrb[0].mxu0 %v9638
  %v10387 = vpop.f32.mrb[0].mxu0
  %v10388 = vpop.f32.mrb[0].mxu0
  %v10389 = vpop.f32.mrb[0].mxu0
  %v10390 = vpop.f32.mrb[0].mxu0
  %10391 = vmatprep.mubr.bf16.mxu0 %v9945
  %10392 = vmatmul.mubr.bf16.gmra.mrb[0].mxu0 %v9640
  %v10393 = vpop.f32.mrb[0].mxu0
  %v10394 = vpop.f32.mrb[0].mxu0
  %v10395 = vpop.f32.mrb[0].mxu0
  %v10396 = vpop.f32.mrb[0].mxu0
  %10397 = vmatprep.mubr.bf16.mxu0 %v9948
  %10398 = vmatmul.mubr.bf16.gmra.mrb[0].mxu0 %v9642
  %v10399 = vpop.f32.mrb[0].mxu0
  %v10400 = vadd.f32 0.0, %v10399
  %v10401 = vpop.f32.mrb[0].mxu0
  %v10402 = vpop.f32.mrb[0].mxu0
  %v10403 = vadd.f32 0.0, %v10402
  %v10404 = vpop.f32.mrb[0].mxu0
  %10405 = vmatprep.mubr.bf16.mxu0 %v9951
  %10406 = vmatmul.mubr.bf16.gmra.mrb[0].mxu0 %v9644
  %v10407 = vpop.f32.mrb[0].mxu0
  %v10408 = vadd.f32 0.0, %v10407
  %v10409 = vpop.f32.mrb[0].mxu0
  %v10410 = vpop.f32.mrb[0].mxu0
  %v10411 = vadd.f32 0.0, %v10410
  %v10412 = vpop.f32.mrb[0].mxu0
  %10413 = vmatprep.mubr.bf16.mxu0 %v9954
  %10414 = vmatmul.mubr.bf16.gmra.mrb[0].mxu0 %v9646
  %v10415 = vpop.f32.mrb[0].mxu0
  %v10416 = vadd.f32 0.0, %v10415
  %v10417 = vpop.f32.mrb[0].mxu0
  %v10418 = vpop.f32.mrb[0].mxu0
  %v10419 = vadd.f32 0.0, %v10418
  %v10420 = vpop.f32.mrb[0].mxu0
  %10421 = vmatprep.mubr.bf16.mxu0 %v9957
  %10422 = vmatmul.mubr.bf16.gmra.mrb[0].mxu0 %v9648
  %v10423 = vpop.f32.mrb[0].mxu0
  %v10424 = vadd.f32 0.0, %v10423
  %v10425 = vpop.f32.mrb[0].mxu0
  %v10426 = vpop.f32.mrb[0].mxu0
  %v10427 = vadd.f32 0.0, %v10426
  %v10428 = vpop.f32.mrb[0].mxu0
  %10429 = vmatprep.mubr.bf16.mxu0 %v9960
  %10430 = vmatmul.mubr.bf16.gmra.mrb[0].mxu0 %v9650
  %v10431 = vpop.f32.mrb[0].mxu0
  %v10432 = vadd.f32 0.0, %v10431
  %v10433 = vpop.f32.mrb[0].mxu0
  %v10434 = vpop.f32.mrb[0].mxu0
  %v10435 = vadd.f32 0.0, %v10434
  %v10436 = vpop.f32.mrb[0].mxu0
  %10437 = vmatprep.mubr.bf16.mxu0 %v9963
  %10438 = vmatmul.mubr.bf16.gmra.mrb[0].mxu0 %v9652
  %v10439 = vpop.f32.mrb[0].mxu0
  %v10440 = vpop.f32.mrb[0].mxu0
  %v10441 = vpop.f32.mrb[0].mxu0
  %v10442 = vpop.f32.mrb[0].mxu0
  %10443 = vmatprep.mubr.bf16.mxu0 %v9966
  %10444 = vmatmul.mubr.bf16.gmra.mrb[0].mxu0 %v9654
  %v10445 = vpop.f32.mrb[0].mxu0
  %v10446 = vpop.f32.mrb[0].mxu0
  %v10447 = vpop.f32.mrb[0].mxu0
  %v10448 = vpop.f32.mrb[0].mxu0
  %10449 = vmatprep.mubr.bf16.mxu0 %v9969
  %10450 = vmatmul.mubr.bf16.gmra.mrb[0].mxu0 %v9656
  %v10451 = vpop.f32.mrb[0].mxu0
  %v10452 = vadd.f32 0.0, %v10451
  %v10453 = vpop.f32.mrb[0].mxu0
  %v10454 = vpop.f32.mrb[0].mxu0
  %v10455 = vadd.f32 0.0, %v10454
  %v10456 = vpop.f32.mrb[0].mxu0
  %10457 = vmatprep.mubr.bf16.mxu0 %v9972
  %10458 = vmatmul.mubr.bf16.gmra.mrb[0].mxu0 %v9658
  %v10459 = vpop.f32.mrb[0].mxu0
  %v10460 = vadd.f32 0.0, %v10459
  %v10461 = vpop.f32.mrb[0].mxu0
  %v10462 = vpop.f32.mrb[0].mxu0
  %v10463 = vadd.f32 0.0, %v10462
  %v10464 = vpop.f32.mrb[0].mxu0
  %10465 = vmatprep.mubr.bf16.mxu0 %v9975
  %10466 = vmatmul.mubr.bf16.gmra.mrb[0].mxu0 %v9660
  %v10467 = vpop.f32.mrb[0].mxu0
  %v10468 = vadd.f32 0.0, %v10467
  %v10469 = vpop.f32.mrb[0].mxu0
  %v10470 = vpop.f32.mrb[0].mxu0
  %v10471 = vadd.f32 0.0, %v10470
  %v10472 = vpop.f32.mrb[0].mxu0
  %10473 = vmatprep.mubr.bf16.mxu0 %v9978
  %10474 = vmatmul.mubr.bf16.gmra.mrb[0].mxu0 %v9662
  %v10475 = vpop.f32.mrb[0].mxu0
  %v10476 = vadd.f32 0.0, %v10475
  %v10477 = vpop.f32.mrb[0].mxu0
  %v10478 = vpop.f32.mrb[0].mxu0
  %v10479 = vadd.f32 0.0, %v10478
  %v10480 = vpop.f32.mrb[0].mxu0
  %10481 = vmatprep.mubr.bf16.mxu0 %v9981
  %10482 = vmatmul.mubr.bf16.gmra.mrb[0].mxu0 %v9664
  %v10483 = vpop.f32.mrb[0].mxu0
  %v10484 = vadd.f32 0.0, %v10483
  %v10485 = vpop.f32.mrb[0].mxu0
  %v10486 = vpop.f32.mrb[0].mxu0
  %v10487 = vadd.f32 0.0, %v10486
  %v10488 = vpop.f32.mrb[0].mxu0
  %10489 = vmatprep.mubr.bf16.mxu0 %v9984
  %10490 = vmatmul.mubr.bf16.gmra.mrb[0].mxu0 %v9666
  %v10491 = vpop.f32.mrb[0].mxu0
  %v10492 = vpop.f32.mrb[0].mxu0
  %v10493 = vpop.f32.mrb[0].mxu0
  %v10494 = vpop.f32.mrb[0].mxu0
  %10495 = vmatprep.mubr.bf16.mxu0 %v9987
  %10496 = vmatmul.mubr.bf16.gmra.mrb[0].mxu0 %v9668
  %v10497 = vpop.f32.mrb[0].mxu0
  %v10498 = vpop.f32.mrb[0].mxu0
  %v10499 = vpop.f32.mrb[0].mxu0
  %v10500 = vpop.f32.mrb[0].mxu0
  %10501 = vmatprep.mubr.bf16.mxu0 %v9990
  %10502 = vmatmul.mubr.bf16.gmra.mrb[0].mxu0 %v9670
  %v10503 = vpop.f32.mrb[0].mxu0
  %v10504 = vadd.f32 0.0, %v10503
  %v10505 = vpop.f32.mrb[0].mxu0
  %v10506 = vpop.f32.mrb[0].mxu0
  %v10507 = vadd.f32 0.0, %v10506
  %v10508 = vpop.f32.mrb[0].mxu0
  %10509 = vmatprep.mubr.bf16.mxu0 %v9993
  %10510 = vmatmul.mubr.bf16.gmra.mrb[0].mxu0 %v9672
  %v10511 = vpop.f32.mrb[0].mxu0
  %v10512 = vadd.f32 0.0, %v10511
  %v10513 = vpop.f32.mrb[0].mxu0
  %v10514 = vpop.f32.mrb[0].mxu0
  %v10515 = vadd.f32 0.0, %v10514
  %v10516 = vpop.f32.mrb[0].mxu0
  %10517 = vmatprep.mubr.bf16.mxu0 %v9996
  %10518 = vmatmul.mubr.bf16.gmra.mrb[0].mxu0 %v9674
  %v10519 = vpop.f32.mrb[0].mxu0
  %v10520 = vadd.f32 0.0, %v10519
  %v10521 = vpop.f32.mrb[0].mxu0
  %v10522 = vpop.f32.mrb[0].mxu0
  %v10523 = vadd.f32 0.0, %v10522
  %v10524 = vpop.f32.mrb[0].mxu0
  %10525 = vmatprep.mubr.bf16.mxu0 %v9999
  %10526 = vmatmul.mubr.bf16.gmra.mrb[0].mxu0 %v9676
  %v10527 = vpop.f32.mrb[0].mxu0
  %v10528 = vadd.f32 0.0, %v10527
  %v10529 = vpop.f32.mrb[0].mxu0
  %v10530 = vpop.f32.mrb[0].mxu0
  %v10531 = vadd.f32 0.0, %v10530
  %v10532 = vpop.f32.mrb[0].mxu0
  %10533 = vmatprep.mubr.bf16.mxu0 %v10002
  %10534 = vmatmul.mubr.bf16.gmra.mrb[0].mxu0 %v9678
  %v10535 = vpop.f32.mrb[0].mxu0
  %v10536 = vadd.f32 0.0, %v10535
  %v10537 = vpop.f32.mrb[0].mxu0
  %v10538 = vpop.f32.mrb[0].mxu0
  %v10539 = vadd.f32 0.0, %v10538
  %v10540 = vpop.f32.mrb[0].mxu0
  %10541 = vmatprep.mubr.bf16.mxu0 %v10005
  %10542 = vmatmul.mubr.bf16.gmra.mrb[0].mxu0 %v9680
  %v10543 = vpop.f32.mrb[0].mxu0
  %v10544 = vpop.f32.mrb[0].mxu0
  %v10545 = vpop.f32.mrb[0].mxu0
  %v10546 = vpop.f32.mrb[0].mxu0
  %10547 = vmatprep.mubr.bf16.mxu0 %v10008
  %10548 = vmatmul.mubr.bf16.gmra.mrb[0].mxu0 %v9682
  %v10549 = vpop.f32.mrb[0].mxu0
  %v10550 = vpop.f32.mrb[0].mxu0
  %v10551 = vpop.f32.mrb[0].mxu0
  %v10552 = vpop.f32.mrb[0].mxu0
  %10553 = vmatprep.mubr.bf16.mxu0 %v10011
  %10554 = vmatmul.mubr.bf16.gmra.mrb[0].mxu0 %v9684
  %v10555 = vpop.f32.mrb[0].mxu0
  %v10556 = vadd.f32 0.0, %v10555
  %v10557 = vpop.f32.mrb[0].mxu0
  %v10558 = vpop.f32.mrb[0].mxu0
  %v10559 = vadd.f32 0.0, %v10558
  %v10560 = vpop.f32.mrb[0].mxu0
  %10561 = vmatprep.mubr.bf16.mxu0 %v10014
  %10562 = vmatmul.mubr.bf16.gmra.mrb[0].mxu0 %v9686
  %v10563 = vpop.f32.mrb[0].mxu0
  %v10564 = vadd.f32 0.0, %v10563
  %v10565 = vpop.f32.mrb[0].mxu0
  %v10566 = vpop.f32.mrb[0].mxu0
  %v10567 = vadd.f32 0.0, %v10566
  %v10568 = vpop.f32.mrb[0].mxu0
  %10569 = vmatprep.mubr.bf16.mxu0 %v10017
  %10570 = vmatmul.mubr.bf16.gmra.mrb[0].mxu0 %v9688
  %v10571 = vpop.f32.mrb[0].mxu0
  %v10572 = vadd.f32 0.0, %v10571
  %v10573 = vpop.f32.mrb[0].mxu0
  %v10574 = vpop.f32.mrb[0].mxu0
  %v10575 = vadd.f32 0.0, %v10574
  %v10576 = vpop.f32.mrb[0].mxu0
  %10577 = vmatprep.mubr.bf16.mxu0 %v10020
  %10578 = vmatmul.mubr.bf16.gmra.mrb[0].mxu0 %v9690
  %v10579 = vpop.f32.mrb[0].mxu0
  %v10580 = vadd.f32 0.0, %v10579
  %v10581 = vpop.f32.mrb[0].mxu0
  %v10582 = vpop.f32.mrb[0].mxu0
  %v10583 = vadd.f32 0.0, %v10582
  %v10584 = vpop.f32.mrb[0].mxu0
  %10585 = vmatprep.mubr.bf16.mxu0 %v10023
  %10586 = vmatmul.mubr.bf16.gmra.mrb[0].mxu0 %v9692
  %v10587 = vpop.f32.mrb[0].mxu0
  %v10588 = vadd.f32 0.0, %v10587
  %v10589 = vpop.f32.mrb[0].mxu0
  %v10590 = vpop.f32.mrb[0].mxu0
  %v10591 = vadd.f32 0.0, %v10590
  %v10592 = vpop.f32.mrb[0].mxu0
  %10593 = vmatprep.mubr.bf16.mxu0 %v10026
  %10594 = vmatmul.mubr.bf16.gmra.mrb[0].mxu0 %v9694
  %v10595 = vpop.f32.mrb[0].mxu0
  %v10596 = vpop.f32.mrb[0].mxu0
  %v10597 = vpop.f32.mrb[0].mxu0
  %v10598 = vpop.f32.mrb[0].mxu0
  %10599 = vmatprep.mubr.bf16.mxu0 %v10029
  %10600 = vmatmul.mubr.bf16.gmra.mrb[0].mxu0 %v9696
  %v10601 = vpop.f32.mrb[0].mxu0
  %v10602 = vpop.f32.mrb[0].mxu0
  %v10603 = vpop.f32.mrb[0].mxu0
  %v10604 = vpop.f32.mrb[0].mxu0
  %10605 = vmatprep.mubr.bf16.mxu0 %v10032
  %10606 = vmatmul.mubr.bf16.gmra.mrb[0].mxu0 %v9698
  %v10607 = vpop.f32.mrb[0].mxu0
  %v10608 = vadd.f32 0.0, %v10607
  %v10609 = vpop.f32.mrb[0].mxu0
  %v10610 = vpop.f32.mrb[0].mxu0
  %v10611 = vadd.f32 0.0, %v10610
  %v10612 = vpop.f32.mrb[0].mxu0
  %10613 = vmatprep.mubr.bf16.mxu0 %v10035
  %10614 = vmatmul.mubr.bf16.gmra.mrb[0].mxu0 %v9700
  %v10615 = vpop.f32.mrb[0].mxu0
  %v10616 = vadd.f32 0.0, %v10615
  %v10617 = vpop.f32.mrb[0].mxu0
  %v10618 = vpop.f32.mrb[0].mxu0
  %v10619 = vadd.f32 0.0, %v10618
  %v10620 = vpop.f32.mrb[0].mxu0
  %10621 = vmatprep.mubr.bf16.mxu0 %v10038
  %10622 = vmatmul.mubr.bf16.gmra.mrb[0].mxu0 %v9702
  %v10623 = vpop.f32.mrb[0].mxu0
  %v10624 = vadd.f32 0.0, %v10623
  %v10625 = vpop.f32.mrb[0].mxu0
  %v10626 = vpop.f32.mrb[0].mxu0
  %v10627 = vadd.f32 0.0, %v10626
  %v10628 = vpop.f32.mrb[0].mxu0
  %10629 = vmatprep.mubr.bf16.mxu0 %v10041
  %10630 = vmatmul.mubr.bf16.gmra.mrb[0].mxu0 %v9704
  %v10631 = vpop.f32.mrb[0].mxu0
  %v10632 = vadd.f32 0.0, %v10631
  %v10633 = vpop.f32.mrb[0].mxu0
  %v10634 = vpop.f32.mrb[0].mxu0
  %v10635 = vadd.f32 0.0, %v10634
  %v10636 = vpop.f32.mrb[0].mxu0
  %10637 = vmatprep.mubr.bf16.mxu0 %v10044
  %10638 = vmatmul.mubr.bf16.gmra.mrb[0].mxu0 %v9706
  %v10639 = vpop.f32.mrb[0].mxu0
  %v10640 = vadd.f32 0.0, %v10639
  %v10641 = vpop.f32.mrb[0].mxu0
  %v10642 = vpop.f32.mrb[0].mxu0
  %v10643 = vadd.f32 0.0, %v10642
  %v10644 = vpop.f32.mrb[0].mxu0
  %10645 = vmatprep.mubr.bf16.mxu0 %v10047
  %10646 = vmatmul.mubr.bf16.gmra.mrb[0].mxu0 %v9708
  %v10647 = vpop.f32.mrb[0].mxu0
  %v10648 = vpop.f32.mrb[0].mxu0
  %v10649 = vpop.f32.mrb[0].mxu0
  %v10650 = vpop.f32.mrb[0].mxu0
  %10651 = vmatprep.mubr.bf16.mxu0 %v10050
  %10652 = vmatmul.mubr.bf16.gmra.mrb[0].mxu0 %v9710
  %v10653 = vpop.f32.mrb[0].mxu0
  %v10654 = vpop.f32.mrb[0].mxu0
  %v10655 = vpop.f32.mrb[0].mxu0
  %v10656 = vpop.f32.mrb[0].mxu0
  %10657 = vmatprep.mubr.bf16.mxu0 %v10053
  %10658 = vmatmul.mubr.bf16.gmra.mrb[0].mxu0 %v9712
  %v10659 = vpop.f32.mrb[0].mxu0
  %v10660 = vadd.f32 0.0, %v10659
  %v10661 = vpop.f32.mrb[0].mxu0
  %v10662 = vpop.f32.mrb[0].mxu0
  %v10663 = vadd.f32 0.0, %v10662
  %v10664 = vpop.f32.mrb[0].mxu0
  %10665 = vmatprep.mubr.bf16.mxu0 %v10056
  %10666 = vmatmul.mubr.bf16.gmra.mrb[0].mxu0 %v9714
  %v10667 = vpop.f32.mrb[0].mxu0
  %v10668 = vadd.f32 0.0, %v10667
  %v10669 = vpop.f32.mrb[0].mxu0
  %v10670 = vpop.f32.mrb[0].mxu0
  %v10671 = vadd.f32 0.0, %v10670
  %v10672 = vpop.f32.mrb[0].mxu0
  %10673 = vmatprep.mubr.bf16.mxu0 %v10059
  %10674 = vmatmul.mubr.bf16.gmra.mrb[0].mxu0 %v9716
  %v10675 = vpop.f32.mrb[0].mxu0
  %v10676 = vadd.f32 0.0, %v10675
  %v10677 = vpop.f32.mrb[0].mxu0
  %v10678 = vpop.f32.mrb[0].mxu0
  %v10679 = vadd.f32 0.0, %v10678
  %v10680 = vpop.f32.mrb[0].mxu0
  %10681 = vmatprep.mubr.bf16.mxu0 %v10062
  %10682 = vmatmul.mubr.bf16.gmra.mrb[0].mxu0 %v9718
  %v10683 = vpop.f32.mrb[0].mxu0
  %v10684 = vadd.f32 0.0, %v10683
  %v10685 = vpop.f32.mrb[0].mxu0
  %v10686 = vpop.f32.mrb[0].mxu0
  %v10687 = vadd.f32 0.0, %v10686
  %v10688 = vpop.f32.mrb[0].mxu0
  %10689 = vmatprep.mubr.bf16.mxu0 %v10065
  %10690 = vmatmul.mubr.bf16.gmra.mrb[0].mxu0 %v9720
  %v10691 = vpop.f32.mrb[0].mxu0
  %v10692 = vadd.f32 0.0, %v10691
  %v10693 = vpop.f32.mrb[0].mxu0
  %v10694 = vpop.f32.mrb[0].mxu0
  %v10695 = vadd.f32 0.0, %v10694
  %v10696 = vpop.f32.mrb[0].mxu0
  %10697 = vmatprep.mubr.bf16.mxu0 %v10068
  %10698 = vmatmul.mubr.bf16.gmra.mrb[0].mxu0 %v9722
  %v10699 = vpop.f32.mrb[0].mxu0
  %v10700 = vpop.f32.mrb[0].mxu0
  %v10701 = vpop.f32.mrb[0].mxu0
  %v10702 = vpop.f32.mrb[0].mxu0
  %10703 = vmatprep.mubr.bf16.mxu0 %v10071
  %10704 = vmatmul.mubr.bf16.gmra.mrb[0].mxu0 %v9724
  %v10705 = vpop.f32.mrb[0].mxu0
  %v10706 = vpop.f32.mrb[0].mxu0
  %v10707 = vpop.f32.mrb[0].mxu0
  %v10708 = vpop.f32.mrb[0].mxu0
  %10709 = vmatprep.mubr.bf16.mxu0 %v10074
  %10710 = vmatmul.mubr.bf16.gmra.mrb[0].mxu0 %v9726
  %v10711 = vpop.f32.mrb[0].mxu0
  %v10712 = vpop.f32.mrb[0].mxu0
  %v10713 = vpop.f32.mrb[0].mxu0
  %v10714 = vpop.f32.mrb[0].mxu0
  %10715 = vmatprep.mubr.bf16.mxu0 %v10077
  %10716 = vmatmul.mubr.bf16.gmra.mrb[0].mxu0 %v9728
  %v10717 = vpop.f32.mrb[0].mxu0
  %v10718 = vpop.f32.mrb[0].mxu0
  %v10719 = vpop.f32.mrb[0].mxu0
  %v10720 = vpop.f32.mrb[0].mxu0
  %10721 = vmatprep.mubr.bf16.mxu0 %v10080
  %10722 = vmatmul.mubr.bf16.gmra.mrb[0].mxu0 %v9730
  %v10723 = vpop.f32.mrb[0].mxu0
  %v10724 = vpop.f32.mrb[0].mxu0
  %v10725 = vpop.f32.mrb[0].mxu0
  %v10726 = vpop.f32.mrb[0].mxu0
  %10727 = vmatprep.mubr.bf16.mxu0 %v10083
  %10728 = vmatmul.mubr.bf16.gmra.mrb[0].mxu0 %v9732
  %v10729 = vpop.f32.mrb[0].mxu0
  %v10730 = vpop.f32.mrb[0].mxu0
  %v10731 = vpop.f32.mrb[0].mxu0
  %v10732 = vpop.f32.mrb[0].mxu0
  %10733 = vmatprep.mubr.bf16.mxu0 %v10086
  %10734 = vmatmul.mubr.bf16.gmra.mrb[0].mxu0 %v9734
  %v10735 = vpop.f32.mrb[0].mxu0
  %v10736 = vpop.f32.mrb[0].mxu0
  %v10737 = vpop.f32.mrb[0].mxu0
  %v10738 = vpop.f32.mrb[0].mxu0
  %10739 = vmatprep.mubr.bf16.mxu0 %v10089
  %10740 = vmatmul.mubr.bf16.gmra.mrb[0].mxu0 %v9736
  %v10741 = vpop.f32.mrb[0].mxu0
  %v10742 = vpop.f32.mrb[0].mxu0
  %v10743 = vpop.f32.mrb[0].mxu0
  %v10744 = vpop.f32.mrb[0].mxu0
  %10745 = vmatprep.mubr.bf16.mxu0 %v10092
  %10746 = vmatmul.mubr.bf16.gmra.mrb[0].mxu0 %v9738
  %v10747 = vpop.f32.mrb[0].mxu0
  %v10748 = vpop.f32.mrb[0].mxu0
  %v10749 = vpop.f32.mrb[0].mxu0
  %v10750 = vpop.f32.mrb[0].mxu0
  %10751 = vmatprep.mubr.bf16.mxu0 %v10095
  %10752 = vmatmul.mubr.bf16.gmra.mrb[0].mxu0 %v9740
  %v10753 = vpop.f32.mrb[0].mxu0
  %v10754 = vpop.f32.mrb[0].mxu0
  %v10755 = vpop.f32.mrb[0].mxu0
  %v10756 = vpop.f32.mrb[0].mxu0
  %10757 = vmatprep.mubr.bf16.mxu0 %v10098
  %10758 = vmatmul.mubr.bf16.gmra.mrb[0].mxu0 %v9742
  %v10759 = vpop.f32.mrb[0].mxu0
  %v10760 = vpop.f32.mrb[0].mxu0
  %v10761 = vpop.f32.mrb[0].mxu0
  %v10762 = vpop.f32.mrb[0].mxu0
  %10763 = vmatprep.mubr.bf16.mxu0 %v10101
  %10764 = vmatmul.mubr.bf16.gmra.mrb[0].mxu0 %v9744
  %v10765 = vpop.f32.mrb[0].mxu0
  %v10766 = vpop.f32.mrb[0].mxu0
  %v10767 = vpop.f32.mrb[0].mxu0
  %v10768 = vpop.f32.mrb[0].mxu0
  %10769 = vmatprep.mubr.bf16.mxu0 %v10104
  %10770 = vmatmul.mubr.bf16.gmra.mrb[0].mxu0 %v9746
  %v10771 = vpop.f32.mrb[0].mxu0
  %v10772 = vpop.f32.mrb[0].mxu0
  %v10773 = vpop.f32.mrb[0].mxu0
  %v10774 = vpop.f32.mrb[0].mxu0
  %10775 = vmatprep.mubr.bf16.mxu0 %v10107
  %10776 = vmatmul.mubr.bf16.gmra.mrb[0].mxu0 %v9748
  %v10777 = vpop.f32.mrb[0].mxu0
  %v10778 = vpop.f32.mrb[0].mxu0
  %v10779 = vpop.f32.mrb[0].mxu0
  %v10780 = vpop.f32.mrb[0].mxu0
  %10781 = vmatprep.mubr.bf16.mxu0 %v10110
  %10782 = vmatmul.mubr.bf16.gmra.mrb[0].mxu0 %v9750
  %v10783 = vpop.f32.mrb[0].mxu0
  %v10784 = vpop.f32.mrb[0].mxu0
  %v10785 = vpop.f32.mrb[0].mxu0
  %v10786 = vpop.f32.mrb[0].mxu0
  %10787 = vmatprep.mubr.bf16.mxu0 %v10113
  %10788 = vmatmul.mubr.bf16.gmra.mrb[0].mxu0 %v9752
  %v10789 = vpop.f32.mrb[0].mxu0
  %v10790 = vpop.f32.mrb[0].mxu0
  %v10791 = vpop.f32.mrb[0].mxu0
  %v10792 = vpop.f32.mrb[0].mxu0
  %10793 = vmatprep.mubr.bf16.mxu0 %v10116
  %10794 = vmatmul.mubr.bf16.gmra.mrb[0].mxu0 %v9754
  %v10795 = vpop.f32.mrb[0].mxu0
  %v10796 = vpop.f32.mrb[0].mxu0
  %v10797 = vpop.f32.mrb[0].mxu0
  %v10798 = vpop.f32.mrb[0].mxu0
  %10799 = vmatprep.mubr.bf16.mxu0 %v10119
  %10800 = vmatmul.mubr.bf16.gmra.mrb[0].mxu0 %v9756
  %v10801 = vpop.f32.mrb[0].mxu0
  %v10802 = vpop.f32.mrb[0].mxu0
  %v10803 = vpop.f32.mrb[0].mxu0
  %v10804 = vpop.f32.mrb[0].mxu0
  %10805 = vmatprep.mubr.bf16.mxu0 %v10122
  %10806 = vmatmul.mubr.bf16.gmra.mrb[0].mxu0 %v9758
  %v10807 = vpop.f32.mrb[0].mxu0
  %v10808 = vpop.f32.mrb[0].mxu0
  %v10809 = vpop.f32.mrb[0].mxu0
  %v10810 = vpop.f32.mrb[0].mxu0
  %10811 = vmatprep.mubr.bf16.mxu0 %v10125
  %10812 = vmatmul.mubr.bf16.gmra.mrb[0].mxu0 %v9760
  %v10813 = vpop.f32.mrb[0].mxu0
  %v10814 = vpop.f32.mrb[0].mxu0
  %v10815 = vpop.f32.mrb[0].mxu0
  %v10816 = vpop.f32.mrb[0].mxu0
  %10817 = vmatprep.mubr.bf16.mxu0 %v10128
  %10818 = vmatmul.mubr.bf16.gmra.mrb[0].mxu0 %v9762
  %v10819 = vpop.f32.mrb[0].mxu0
  %v10820 = vpop.f32.mrb[0].mxu0
  %v10821 = vpop.f32.mrb[0].mxu0
  %v10822 = vpop.f32.mrb[0].mxu0
  %10823 = vmatprep.mubr.bf16.mxu0 %v10131
  %10824 = vmatmul.mubr.bf16.gmra.mrb[0].mxu0 %v9764
  %v10825 = vpop.f32.mrb[0].mxu0
  %v10826 = vpop.f32.mrb[0].mxu0
  %v10827 = vpop.f32.mrb[0].mxu0
  %v10828 = vpop.f32.mrb[0].mxu0
  %10829 = vmatprep.mubr.bf16.mxu0 %v10134
  %10830 = vmatmul.mubr.bf16.gmra.mrb[0].mxu0 %v9766
  %v10831 = vpop.f32.mrb[0].mxu0
  %v10832 = vpop.f32.mrb[0].mxu0
  %v10833 = vpop.f32.mrb[0].mxu0
  %v10834 = vpop.f32.mrb[0].mxu0
  %10835 = vmatprep.mubr.bf16.mxu0 %v10137
  %10836 = vmatmul.mubr.bf16.gmra.mrb[0].mxu0 %v9768
  %v10837 = vpop.f32.mrb[0].mxu0
  %v10838 = vpop.f32.mrb[0].mxu0
  %v10839 = vpop.f32.mrb[0].mxu0
  %v10840 = vpop.f32.mrb[0].mxu0
  %10841 = vmatprep.mubr.bf16.mxu0 %v10140
  %10842 = vmatmul.mubr.bf16.gmra.mrb[0].mxu0 %v9770
  %v10843 = vpop.f32.mrb[0].mxu0
  %v10844 = vpop.f32.mrb[0].mxu0
  %v10845 = vpop.f32.mrb[0].mxu0
  %v10846 = vpop.f32.mrb[0].mxu0
  %10847 = vmatprep.mubr.bf16.mxu0 %v10143
  %10848 = vmatmul.mubr.bf16.gmra.mrb[0].mxu0 %v9772
  %v10849 = vpop.f32.mrb[0].mxu0
  %v10850 = vpop.f32.mrb[0].mxu0
  %v10851 = vpop.f32.mrb[0].mxu0
  %v10852 = vpop.f32.mrb[0].mxu0
  %10853 = vmatprep.mubr.bf16.mxu0 %v10146
  %10854 = vmatmul.mubr.bf16.gmra.mrb[0].mxu0 %v9774
  %v10855 = vpop.f32.mrb[0].mxu0
  %v10856 = vpop.f32.mrb[0].mxu0
  %v10857 = vpop.f32.mrb[0].mxu0
  %v10858 = vpop.f32.mrb[0].mxu0
  %10859 = vmatprep.mubr.bf16.mxu0 %v10149
  %10860 = vmatmul.mubr.bf16.gmra.mrb[0].mxu0 %v9776
  %v10861 = vpop.f32.mrb[0].mxu0
  %v10862 = vpop.f32.mrb[0].mxu0
  %v10863 = vpop.f32.mrb[0].mxu0
  %v10864 = vpop.f32.mrb[0].mxu0
  %10865 = vmatprep.mubr.bf16.mxu0 %v10152
  %10866 = vmatmul.mubr.bf16.gmra.mrb[0].mxu0 %v9778
  %v10867 = vpop.f32.mrb[0].mxu0
  %v10868 = vpop.f32.mrb[0].mxu0
  %v10869 = vpop.f32.mrb[0].mxu0
  %v10870 = vpop.f32.mrb[0].mxu0
  %10871 = vmatprep.mubr.bf16.mxu0 %v10155
  %10872 = vmatmul.mubr.bf16.gmra.mrb[0].mxu0 %v9780
  %v10873 = vpop.f32.mrb[0].mxu0
  %v10874 = vpop.f32.mrb[0].mxu0
  %v10875 = vpop.f32.mrb[0].mxu0
  %v10876 = vpop.f32.mrb[0].mxu0
  %10877 = vdwg.mxu0
  %v10878 = vadd.f32 %v9486, %v10192
  %v10879 = vadd.f32 %v9487, %v10195
  %v10880 = vadd.f32 %v9488, %v10200
  %v10881 = vadd.f32 %v9489, %v10203
  %v10882 = vadd.f32 %v9490, %v10208
  %v10883 = vadd.f32 %v9491, %v10211
  %v10884 = vadd.f32 %v9492, %v10216
  %v10885 = vadd.f32 %v9493, %v10219
  %v10886 = vadd.f32 %v9494, %v10224
  %v10887 = vadd.f32 %v9495, %v10227
  %v10888 = vadd.f32 %v9496, %v10244
  %v10889 = vadd.f32 %v9497, %v10247
  %v10890 = vadd.f32 %v9498, %v10252
  %v10891 = vadd.f32 %v9499, %v10255
  %v10892 = vadd.f32 %v9500, %v10260
  %v10893 = vadd.f32 %v9501, %v10263
  %v10894 = vadd.f32 %v9502, %v10268
  %v10895 = vadd.f32 %v9503, %v10271
  %v10896 = vadd.f32 %v9504, %v10276
  %v10897 = vadd.f32 %v9505, %v10279
  %v10898 = vadd.f32 %v9506, %v10296
  %v10899 = vadd.f32 %v9507, %v10299
  %v10900 = vadd.f32 %v9508, %v10304
  %v10901 = vadd.f32 %v9509, %v10307
  %v10902 = vadd.f32 %v9510, %v10312
  %v10903 = vadd.f32 %v9511, %v10315
  %v10904 = vadd.f32 %v9512, %v10320
  %v10905 = vadd.f32 %v9513, %v10323
  %v10906 = vadd.f32 %v9514, %v10328
  %v10907 = vadd.f32 %v9515, %v10331
  %v10908 = vadd.f32 %v9516, %v10348
  %v10909 = vadd.f32 %v9517, %v10351
  %v10910 = vadd.f32 %v9518, %v10356
  %v10911 = vadd.f32 %v9519, %v10359
  %v10912 = vadd.f32 %v9520, %v10364
  %v10913 = vadd.f32 %v9521, %v10367
  %v10914 = vadd.f32 %v9522, %v10372
  %v10915 = vadd.f32 %v9523, %v10375
  %v10916 = vadd.f32 %v9524, %v10380
  %v10917 = vadd.f32 %v9525, %v10383
  %v10918 = vadd.f32 %v9526, %v10400
  %v10919 = vadd.f32 %v9527, %v10403
  %v10920 = vadd.f32 %v9528, %v10408
  %v10921 = vadd.f32 %v9529, %v10411
  %v10922 = vadd.f32 %v9530, %v10416
  %v10923 = vadd.f32 %v9531, %v10419
  %v10924 = vadd.f32 %v9532, %v10424
  %v10925 = vadd.f32 %v9533, %v10427
  %v10926 = vadd.f32 %v9534, %v10432
  %v10927 = vadd.f32 %v9535, %v10435
  %v10928 = vadd.f32 %v9536, %v10452
  %v10929 = vadd.f32 %v9537, %v10455
  %v10930 = vadd.f32 %v9538, %v10460
  %v10931 = vadd.f32 %v9539, %v10463
  %v10932 = vadd.f32 %v9540, %v10468
  %v10933 = vadd.f32 %v9541, %v10471
  %v10934 = vadd.f32 %v9542, %v10476
  %v10935 = vadd.f32 %v9543, %v10479
  %v10936 = vadd.f32 %v9544, %v10484
  %v10937 = vadd.f32 %v9545, %v10487
  %v10938 = vadd.f32 %v9546, %v10504
  %v10939 = vadd.f32 %v9547, %v10507
  %v10940 = vadd.f32 %v9548, %v10512
  %v10941 = vadd.f32 %v9549, %v10515
  %v10942 = vadd.f32 %v9550, %v10520
  %v10943 = vadd.f32 %v9551, %v10523
  %v10944 = vadd.f32 %v9552, %v10528
  %v10945 = vadd.f32 %v9553, %v10531
  %v10946 = vadd.f32 %v9554, %v10536
  %v10947 = vadd.f32 %v9555, %v10539
  %v10948 = vadd.f32 %v9556, %v10556
  %v10949 = vadd.f32 %v9557, %v10559
  %v10950 = vadd.f32 %v9558, %v10564
  %v10951 = vadd.f32 %v9559, %v10567
  %v10952 = vadd.f32 %v9560, %v10572
  %v10953 = vadd.f32 %v9561, %v10575
  %v10954 = vadd.f32 %v9562, %v10580
  %v10955 = vadd.f32 %v9563, %v10583
  %v10956 = vadd.f32 %v9564, %v10588
  %v10957 = vadd.f32 %v9565, %v10591
  %v10958 = vadd.f32 %v9566, %v10608
  %v10959 = vadd.f32 %v9567, %v10611
  %v10960 = vadd.f32 %v9568, %v10616
  %v10961 = vadd.f32 %v9569, %v10619
  %v10962 = vadd.f32 %v9570, %v10624
  %v10963 = vadd.f32 %v9571, %v10627
  %v10964 = vadd.f32 %v9572, %v10632
  %v10965 = vadd.f32 %v9573, %v10635
  %v10966 = vadd.f32 %v9574, %v10640
  %v10967 = vadd.f32 %v9575, %v10643
  %v10968 = vadd.f32 %v9576, %v10660
  %v10969 = vadd.f32 %v9577, %v10663
  %v10970 = vadd.f32 %v9578, %v10668
  %v10971 = vadd.f32 %v9579, %v10671
  %v10972 = vadd.f32 %v9580, %v10676
  %v10973 = vadd.f32 %v9581, %v10679
  %v10974 = vadd.f32 %v9582, %v10684
  %v10975 = vadd.f32 %v9583, %v10687
  %v10976 = vadd.f32 %v9584, %v10692
  %v10977 = vadd.f32 %v9585, %v10695
  %v10978 = vld [vmem:[#allocation2 + $0x1c0] sm:$0xff]
  %v10979 = vld [vmem:[#allocation2 + $0x1c8] sm:$0xff]
  %v10980 = vld [vmem:[#allocation2 + $0x1d0] sm:$0xff]
  %v10981 = vld [vmem:[#allocation2 + $0x1d8] sm:$0xff]
  %v10982 = vld [vmem:[#allocation2 + $0x1e0] sm:$0xff]
  %v10983 = vld [vmem:[#allocation2 + $0x1e8] sm:$0xff]
  %v10984 = vld [vmem:[#allocation2 + $0x1f0] sm:$0xff]
  %v10985 = vld [vmem:[#allocation2 + $0x1f8] sm:$0xff]
  %v10986 = vld [vmem:[#allocation2 + $0x200] sm:$0xff]
  %v10987 = vld [vmem:[#allocation2 + $0x208] sm:$0xff]
  %v10988 = vld [vmem:[#allocation2 + $0x210] sm:$0xff]
  %v10989 = vld [vmem:[#allocation2 + $0x218] sm:$0xff]
  %v10990 = vld [vmem:[#allocation2 + $0x220] sm:$0xff]
  %v10991 = vld [vmem:[#allocation2 + $0x228] sm:$0xff]
  %v10992 = vld [vmem:[#allocation2 + $0x230] sm:$0xff]
  %v10993 = vld [vmem:[#allocation2 + $0x238] sm:$0xff]
  %v10994 = vld [vmem:[#allocation2 + $0x240] sm:$0xff]
  %v10995 = vld [vmem:[#allocation2 + $0x248] sm:$0xff]
  %v10996 = vld [vmem:[#allocation2 + $0x250] sm:$0xff]
  %v10997 = vld [vmem:[#allocation2 + $0x258] sm:$0xff]
  %v10998 = vld [vmem:[#allocation2 + $0x260] sm:$0xff]
  %v10999 = vld [vmem:[#allocation2 + $0x268] sm:$0xff]
  %v11000 = vld [vmem:[#allocation2 + $0x270] sm:$0xff]
  %v11001 = vld [vmem:[#allocation2 + $0x278] sm:$0xff]
  %v11002 = vld [vmem:[#allocation2 + $0x280] sm:$0xff]
  %v11003 = vld [vmem:[#allocation2 + $0x288] sm:$0xff]
  %v11004 = vld [vmem:[#allocation2 + $0x290] sm:$0xff]
  %v11005 = vld [vmem:[#allocation2 + $0x298] sm:$0xff]
  %v11006 = vld [vmem:[#allocation2 + $0x2a0] sm:$0xff]
  %v11007 = vld [vmem:[#allocation2 + $0x2a8] sm:$0xff]
  %v11008 = vld [vmem:[#allocation2 + $0x2b0] sm:$0xff]
  %v11009 = vld [vmem:[#allocation2 + $0x2b8] sm:$0xff]
  %v11010 = vld [vmem:[#allocation2 + $0x2c0] sm:$0xff]
  %v11011 = vld [vmem:[#allocation2 + $0x2c8] sm:$0xff]
  %v11012 = vld [vmem:[#allocation2 + $0x2d0] sm:$0xff]
  %v11013 = vld [vmem:[#allocation2 + $0x2d8] sm:$0xff]
  %v11014 = vld [vmem:[#allocation2 + $0x2e0] sm:$0xff]
  %v11015 = vld [vmem:[#allocation2 + $0x2e8] sm:$0xff]
  %v11016 = vld [vmem:[#allocation2 + $0x2f0] sm:$0xff]
  %v11017 = vld [vmem:[#allocation2 + $0x2f8] sm:$0xff]
  %v11018 = vld [vmem:[#allocation2 + $0x300] sm:$0xff]
  %v11019 = vld [vmem:[#allocation2 + $0x308] sm:$0xff]
  %v11020 = vld [vmem:[#allocation2 + $0x310] sm:$0xff]
  %v11021 = vld [vmem:[#allocation2 + $0x318] sm:$0xff]
  %v11022 = vld [vmem:[#allocation2 + $0x320] sm:$0xff]
  %v11023 = vld [vmem:[#allocation2 + $0x328] sm:$0xff]
  %v11024 = vld [vmem:[#allocation2 + $0x330] sm:$0xff]
  %v11025 = vld [vmem:[#allocation2 + $0x338] sm:$0xff]
  %v11026 = vld [vmem:[#allocation2 + $0x340] sm:$0xff]
  %v11027 = vld [vmem:[#allocation2 + $0x348] sm:$0xff]
  %v11028 = vld [vmem:[#allocation2 + $0x350] sm:$0xff]
  %v11029 = vld [vmem:[#allocation2 + $0x358] sm:$0xff]
  %v11030 = vld [vmem:[#allocation2 + $0x360] sm:$0xff]
  %v11031 = vld [vmem:[#allocation2 + $0x368] sm:$0xff]
  %v11032 = vld [vmem:[#allocation2 + $0x370] sm:$0xff]
  %v11033 = vld [vmem:[#allocation2 + $0x378] sm:$0xff]
  %v11034 = vld [vmem:[#allocation2 + $0x380] sm:$0xff]
  %v11035 = vld [vmem:[#allocation2 + $0x388] sm:$0xff]
  %v11036 = vld [vmem:[#allocation2 + $0x390] sm:$0xff]
  %v11037 = vld [vmem:[#allocation2 + $0x398] sm:$0xff]
  %v11038 = vld [vmem:[#allocation2 + $0x3a0] sm:$0xff]
  %v11039 = vld [vmem:[#allocation2 + $0x3a8] sm:$0xff]
  %v11040 = vld [vmem:[#allocation2 + $0x3b0] sm:$0xff]
  %v11041 = vld [vmem:[#allocation2 + $0x3b8] sm:$0xff]
  %v11042 = vld [vmem:[#allocation2 + $0x3c0] sm:$0xff]
  %v11043 = vld [vmem:[#allocation2 + $0x3c8] sm:$0xff]
  %v11044 = vld [vmem:[#allocation2 + $0x3d0] sm:$0xff]
  %v11045 = vld [vmem:[#allocation2 + $0x3d8] sm:$0xff]
  %v11046 = vld [vmem:[#allocation2 + $0x3e0] sm:$0xff]
  %v11047 = vld [vmem:[#allocation2 + $0x3e8] sm:$0xff]
  %v11048 = vld [vmem:[#allocation2 + $0x3f0] sm:$0xff]
  %v11049 = vld [vmem:[#allocation2 + $0x3f8] sm:$0xff]
  %v11050 = vld [vmem:[#allocation2 + $0x400] sm:$0xff]
  %v11051 = vld [vmem:[#allocation2 + $0x408] sm:$0xff]
  %v11052 = vld [vmem:[#allocation2 + $0x410] sm:$0xff]
  %v11053 = vld [vmem:[#allocation2 + $0x418] sm:$0xff]
  %v11054 = vld [vmem:[#allocation2 + $0x420] sm:$0xff]
  %v11055 = vld [vmem:[#allocation2 + $0x428] sm:$0xff]
  %v11056 = vld [vmem:[#allocation2 + $0x430] sm:$0xff]
  %v11057 = vld [vmem:[#allocation2 + $0x438] sm:$0xff]
  %v11058 = vld [vmem:[#allocation2 + $0x440] sm:$0xff]
  %v11059 = vld [vmem:[#allocation2 + $0x448] sm:$0xff]
  %v11060 = vld [vmem:[#allocation2 + $0x450] sm:$0xff]
  %v11061 = vld [vmem:[#allocation2 + $0x458] sm:$0xff]
  %v11062 = vld [vmem:[#allocation2 + $0x460] sm:$0xff]
  %v11063 = vld [vmem:[#allocation2 + $0x468] sm:$0xff]
  %v11064 = vld [vmem:[#allocation2 + $0x470] sm:$0xff]
  %v11065 = vld [vmem:[#allocation2 + $0x478] sm:$0xff]
  %v11066 = vld [vmem:[#allocation2 + $0x480] sm:$0xff]
  %v11067 = vld [vmem:[#allocation2 + $0x488] sm:$0xff]
  %v11068 = vld [vmem:[#allocation2 + $0x490] sm:$0xff]
  %v11069 = vld [vmem:[#allocation2 + $0x498] sm:$0xff]
  %v11070 = vld [vmem:[#allocation2 + $0x4a0] sm:$0xff]
  %v11071 = vld [vmem:[#allocation2 + $0x4a8] sm:$0xff]
  %v11072 = vld [vmem:[#allocation2 + $0x4b0] sm:$0xff]
  %v11073 = vld [vmem:[#allocation2 + $0x4b8] sm:$0xff]
  %v11074 = vld [vmem:[#allocation2 + $0x4c0] sm:$0xff]
  %v11075 = vld [vmem:[#allocation2 + $0x4c8] sm:$0xff]
  %v11076 = vld [vmem:[#allocation2 + $0x4d0] sm:$0xff]
  %v11077 = vld [vmem:[#allocation2 + $0x4d8] sm:$0xff]
  %v11078 = vld [vmem:[#allocation2 + $0x4e0] sm:$0xff]
  %v11079 = vld [vmem:[#allocation2 + $0x4e8] sm:$0xff]
  %v11080 = vld [vmem:[#allocation2 + $0x4f0] sm:$0xff]
  %v11081 = vld [vmem:[#allocation2 + $0x4f8] sm:$0xff]
  %v11082 = vld [vmem:[#allocation2 + $0x500] sm:$0xff]
  %v11083 = vld [vmem:[#allocation2 + $0x508] sm:$0xff]
  %v11084 = vld [vmem:[#allocation2 + $0x510] sm:$0xff]
  %v11085 = vld [vmem:[#allocation2 + $0x518] sm:$0xff]
  %v11086 = vld [vmem:[#allocation2 + $0x520] sm:$0xff]
  %v11087 = vld [vmem:[#allocation2 + $0x528] sm:$0xff]
  %v11088 = vld [vmem:[#allocation2 + $0x530] sm:$0xff]
  %v11089 = vld [vmem:[#allocation2 + $0x538] sm:$0xff]
  %v11090 = vld [vmem:[#allocation2 + $0x540] sm:$0xff]
  %v11091 = vld [vmem:[#allocation2 + $0x548] sm:$0xff]
  %v11092 = vld [vmem:[#allocation2 + $0x550] sm:$0xff]
  %v11093 = vld [vmem:[#allocation2 + $0x558] sm:$0xff]
  %v11094 = vld [vmem:[#allocation2 + $0x560] sm:$0xff]
  %v11095 = vld [vmem:[#allocation2 + $0x568] sm:$0xff]
  %v11096 = vld [vmem:[#allocation2 + $0x570] sm:$0xff]
  %v11097 = vld [vmem:[#allocation2 + $0x578] sm:$0xff]
  %v11098 = vld [vmem:[#allocation2 + $0x580] sm:$0xff]
  %v11099 = vld [vmem:[#allocation2 + $0x588] sm:$0xff]
  %v11100 = vld [vmem:[#allocation2 + $0x590] sm:$0xff]
  %v11101 = vld [vmem:[#allocation2 + $0x598] sm:$0xff]
  %v11102 = vld [vmem:[#allocation2 + $0x5a0] sm:$0xff]
  %v11103 = vld [vmem:[#allocation2 + $0x5a8] sm:$0xff]
  %v11104 = vld [vmem:[#allocation2 + $0x5b0] sm:$0xff]
  %v11105 = vld [vmem:[#allocation2 + $0x5b8] sm:$0xff]
  %v11106 = vld [vmem:[#allocation2 + $0x5c0] sm:$0xff]
  %v11107 = vld [vmem:[#allocation2 + $0x5c8] sm:$0xff]
  %v11108 = vld [vmem:[#allocation2 + $0x5d0] sm:$0xff]
  %v11109 = vld [vmem:[#allocation2 + $0x5d8] sm:$0xff]
  %v11110 = vld [vmem:[#allocation2 + $0x5e0] sm:$0xff]
  %v11111 = vld [vmem:[#allocation2 + $0x5e8] sm:$0xff]
  %v11112 = vld [vmem:[#allocation2 + $0x5f0] sm:$0xff]
  %v11113 = vld [vmem:[#allocation2 + $0x5f8] sm:$0xff]
  %v11114 = vld [vmem:[#allocation2 + $0x600] sm:$0xff]
  %v11115 = vld [vmem:[#allocation2 + $0x608] sm:$0xff]
  %v11116 = vld [vmem:[#allocation2 + $0x610] sm:$0xff]
  %v11117 = vld [vmem:[#allocation2 + $0x618] sm:$0xff]
  %v11118 = vld [vmem:[#allocation2 + $0x620] sm:$0xff]
  %v11119 = vld [vmem:[#allocation2 + $0x628] sm:$0xff]
  %v11120 = vld [vmem:[#allocation2 + $0x630] sm:$0xff]
  %v11121 = vld [vmem:[#allocation2 + $0x638] sm:$0xff]
  %v11122 = vld [vmem:[#allocation2 + $0x640] sm:$0xff]
  %v11123 = vld [vmem:[#allocation2 + $0x648] sm:$0xff]
  %v11124 = vld [vmem:[#allocation2 + $0x650] sm:$0xff]
  %v11125 = vld [vmem:[#allocation2 + $0x658] sm:$0xff]
  %v11126 = vld [vmem:[#allocation2 + $0x660] sm:$0xff]
  %v11127 = vld [vmem:[#allocation2 + $0x668] sm:$0xff]
  %v11128 = vld [vmem:[#allocation2 + $0x670] sm:$0xff]
  %v11129 = vld [vmem:[#allocation2 + $0x678] sm:$0xff]
  %v11130 = vld [vmem:[#allocation2 + $0x680] sm:$0xff]
  %v11131 = vld [vmem:[#allocation2 + $0x688] sm:$0xff]
  %v11132 = vld [vmem:[#allocation2 + $0x690] sm:$0xff]
  %v11133 = vld [vmem:[#allocation2 + $0x698] sm:$0xff]
  %v11134 = vld [vmem:[#allocation2 + $0x6a0] sm:$0xff]
  %v11135 = vld [vmem:[#allocation2 + $0x6a8] sm:$0xff]
  %v11136 = vld [vmem:[#allocation2 + $0x6b0] sm:$0xff]
  %v11137 = vld [vmem:[#allocation2 + $0x6b8] sm:$0xff]
  %v11138 = vld [vmem:[#allocation2 + $0x6c0] sm:$0xff]
  %v11139 = vld [vmem:[#allocation2 + $0x6c8] sm:$0xff]
  %v11140 = vld [vmem:[#allocation2 + $0x6d0] sm:$0xff]
  %v11141 = vld [vmem:[#allocation2 + $0x6d8] sm:$0xff]
  %v11142 = vld [vmem:[#allocation2 + $0x6e0] sm:$0xff]
  %v11143 = vld [vmem:[#allocation2 + $0x6e8] sm:$0xff]
  %v11144 = vld [vmem:[#allocation2 + $0x6f0] sm:$0xff]
  %v11145 = vld [vmem:[#allocation2 + $0x6f8] sm:$0xff]
  %v11146 = vld [vmem:[#allocation2 + $0x700] sm:$0xff]
  %v11147 = vld [vmem:[#allocation2 + $0x708] sm:$0xff]
  %v11148 = vld [vmem:[#allocation2 + $0x710] sm:$0xff]
  %v11149 = vld [vmem:[#allocation2 + $0x718] sm:$0xff]
  %v11150 = vld [vmem:[#allocation2 + $0x720] sm:$0xff]
  %v11151 = vld [vmem:[#allocation2 + $0x728] sm:$0xff]
  %v11152 = vld [vmem:[#allocation2 + $0x730] sm:$0xff]
  %v11153 = vld [vmem:[#allocation2 + $0x738] sm:$0xff]
  %v11154 = vld [vmem:[#allocation2 + $0x740] sm:$0xff]
  %v11155 = vld [vmem:[#allocation2 + $0x748] sm:$0xff]
  %v11156 = vld [vmem:[#allocation2 + $0x750] sm:$0xff]
  %v11157 = vld [vmem:[#allocation2 + $0x758] sm:$0xff]
  %v11158 = vld [vmem:[#allocation2 + $0x760] sm:$0xff]
  %v11159 = vld [vmem:[#allocation2 + $0x768] sm:$0xff]
  %v11160 = vld [vmem:[#allocation2 + $0x770] sm:$0xff]
  %v11161 = vld [vmem:[#allocation2 + $0x778] sm:$0xff]
  %v11162 = vld [vmem:[#allocation2 + $0x780] sm:$0xff]
  %v11163 = vld [vmem:[#allocation2 + $0x788] sm:$0xff]
  %v11164 = vld [vmem:[#allocation2 + $0x790] sm:$0xff]
  %v11165 = vld [vmem:[#allocation2 + $0x798] sm:$0xff]
  %v11166 = vld [vmem:[#allocation2 + $0x7a0] sm:$0xff]
  %v11167 = vld [vmem:[#allocation2 + $0x7a8] sm:$0xff]
  %v11168 = vld [vmem:[#allocation2 + $0x7b0] sm:$0xff]
  %v11169 = vld [vmem:[#allocation2 + $0x7b8] sm:$0xff]
  %v11170 = vld [vmem:[#allocation2 + $0x7c0] sm:$0xff]
  %v11171 = vld [vmem:[#allocation2 + $0x7c8] sm:$0xff]
  %v11172 = vld [vmem:[#allocation2 + $0x7d0] sm:$0xff]
  %v11173 = vld [vmem:[#allocation2 + $0x7d8] sm:$0xff]
  %s11174 = scalar_lea.vmem %s3, 320
  %v11175 = vld [vmem:[%s11174] sm:$0xf]
  %v11176 = vld [vmem:[%s11174 + $0x4] sm:$0xf]
  %v11177 = vld [vmem:[%s11174 + $0x8] sm:$0xf]
  %v11178 = vld [vmem:[%s11174 + $0xc] sm:$0xf]
  %v11179 = vld [vmem:[%s11174 + $0x10] sm:$0xf]
  %v11180 = vld [vmem:[%s11174 + $0x14] sm:$0xf]
  %v11181 = vld [vmem:[%s11174 + $0x18] sm:$0xf]
  %v11182 = vld [vmem:[%s11174 + $0x1c] sm:$0xf]
  %v11183 = vld [vmem:[%s11174 + $0x20] sm:$0xf]
  %v11184 = vld [vmem:[%s11174 + $0x24] sm:$0xf]
  %v11185 = vld [vmem:[%s11174 + $0x28] sm:$0xf]
  %v11186 = vld [vmem:[%s11174 + $0x2c] sm:$0xf]
  %v11187 = vld [vmem:[%s11174 + $0x30] sm:$0xf]
  %v11188 = vld [vmem:[%s11174 + $0x34] sm:$0xf]
  %v11189 = vld [vmem:[%s11174 + $0x38] sm:$0xf]
  %v11190 = vld [vmem:[%s11174 + $0x3c] sm:$0xf]
  %v11191 = vld [vmem:[%s11174 + $0x40] sm:$0xf]
  %v11192 = vld [vmem:[%s11174 + $0x44] sm:$0xf]
  %v11193 = vld [vmem:[%s11174 + $0x48] sm:$0xf]
  %v11194 = vld [vmem:[%s11174 + $0x4c] sm:$0xf]
  %v11215 = vunpack.c.l.b16 %v11175
  %v11216 = vunpack.c.l.b16 %v11176
  %v11217 = vunpack.c.l.b16 %v11177
  %v11218 = vunpack.c.l.b16 %v11178
  %v11219 = vunpack.c.l.b16 %v11179
  %v11220 = vunpack.c.l.b16 %v11180
  %v11221 = vunpack.c.l.b16 %v11181
  %v11222 = vunpack.c.l.b16 %v11182
  %v11223 = vunpack.c.l.b16 %v11183
  %v11224 = vunpack.c.l.b16 %v11184
  %v11225 = vunpack.c.l.b16 %v11185
  %v11226 = vunpack.c.l.b16 %v11186
  %v11227 = vunpack.c.l.b16 %v11187
  %v11228 = vunpack.c.l.b16 %v11188
  %v11229 = vunpack.c.l.b16 %v11189
  %v11230 = vunpack.c.l.b16 %v11190
  %v11231 = vunpack.c.l.b16 %v11191
  %v11232 = vunpack.c.l.b16 %v11192
  %v11233 = vunpack.c.l.b16 %v11193
  %v11234 = vunpack.c.l.b16 %v11194
  %v11235 = vpack.c.b16 %v11216, %v11215
  %v11236 = vpack.c.b16 %v11218, %v11217
  %v11237 = vpack.c.b16 %v11220, %v11219
  %v11238 = vpack.c.b16 %v11222, %v11221
  %v11239 = vpack.c.b16 %v11224, %v11223
  %v11240 = vpack.c.b16 %v11226, %v11225
  %v11241 = vpack.c.b16 %v11228, %v11227
  %v11242 = vpack.c.b16 %v11230, %v11229
  %v11243 = vpack.c.b16 %v11232, %v11231
  %v11244 = vpack.c.b16 %v11234, %v11233
  %v11256 = vsel %vm4345, %v10979, 0
  %v11259 = vsel %vm4345, %v10981, 0
  %v11262 = vsel %vm4345, %v10983, 0
  %v11265 = vsel %vm4345, %v10985, 0
  %v11268 = vsel %vm4345, %v10987, 0
  %v11271 = vsel %vm4345, %v10989, 0
  %v11274 = vsel %vm4345, %v10991, 0
  %v11277 = vsel %vm4345, %v10993, 0
  %v11280 = vsel %vm4345, %v10995, 0
  %v11283 = vsel %vm4345, %v10997, 0
  %v11286 = vsel %vm4345, %v10999, 0
  %v11289 = vsel %vm4345, %v11001, 0
  %v11292 = vsel %vm4345, %v11003, 0
  %v11295 = vsel %vm4345, %v11005, 0
  %v11298 = vsel %vm4345, %v11007, 0
  %v11301 = vsel %vm4345, %v11009, 0
  %v11304 = vsel %vm4345, %v11011, 0
  %v11307 = vsel %vm4345, %v11013, 0
  %v11310 = vsel %vm4345, %v11015, 0
  %v11313 = vsel %vm4345, %v11017, 0
  %v11316 = vsel %vm4345, %v11019, 0
  %v11319 = vsel %vm4345, %v11021, 0
  %v11322 = vsel %vm4345, %v11023, 0
  %v11325 = vsel %vm4345, %v11025, 0
  %v11328 = vsel %vm4345, %v11027, 0
  %v11331 = vsel %vm4345, %v11029, 0
  %v11334 = vsel %vm4345, %v11031, 0
  %v11337 = vsel %vm4345, %v11033, 0
  %v11340 = vsel %vm4345, %v11035, 0
  %v11343 = vsel %vm4345, %v11037, 0
  %v11346 = vsel %vm4345, %v11039, 0
  %v11349 = vsel %vm4345, %v11041, 0
  %v11352 = vsel %vm4345, %v11043, 0
  %v11355 = vsel %vm4345, %v11045, 0
  %v11358 = vsel %vm4345, %v11047, 0
  %v11361 = vsel %vm4345, %v11049, 0
  %v11364 = vsel %vm4345, %v11051, 0
  %v11367 = vsel %vm4345, %v11053, 0
  %v11370 = vsel %vm4345, %v11055, 0
  %v11373 = vsel %vm4345, %v11057, 0
  %v11376 = vsel %vm4345, %v11059, 0
  %v11379 = vsel %vm4345, %v11061, 0
  %v11382 = vsel %vm4345, %v11063, 0
  %v11385 = vsel %vm4345, %v11065, 0
  %v11388 = vsel %vm4345, %v11067, 0
  %v11391 = vsel %vm4345, %v11069, 0
  %v11394 = vsel %vm4345, %v11071, 0
  %v11397 = vsel %vm4345, %v11073, 0
  %v11400 = vsel %vm4345, %v11075, 0
  %v11403 = vsel %vm4345, %v11077, 0
  %v11406 = vsel %vm4345, %v11079, 0
  %v11409 = vsel %vm4345, %v11081, 0
  %v11412 = vsel %vm4345, %v11083, 0
  %v11415 = vsel %vm4345, %v11085, 0
  %v11418 = vsel %vm4345, %v11087, 0
  %v11421 = vsel %vm4345, %v11089, 0
  %v11424 = vsel %vm4345, %v11091, 0
  %v11427 = vsel %vm4345, %v11093, 0
  %v11430 = vsel %vm4345, %v11095, 0
  %v11433 = vsel %vm4345, %v11097, 0
  %v11436 = vsel %vm4345, %v11099, 0
  %v11439 = vsel %vm4345, %v11101, 0
  %v11442 = vsel %vm4345, %v11103, 0
  %v11445 = vsel %vm4345, %v11105, 0
  %v11448 = vsel %vm4345, %v11107, 0
  %v11451 = vsel %vm4345, %v11109, 0
  %v11454 = vsel %vm4345, %v11111, 0
  %v11457 = vsel %vm4345, %v11113, 0
  %v11460 = vsel %vm4345, %v11115, 0
  %v11463 = vsel %vm4345, %v11117, 0
  %v11466 = vsel %vm4345, %v11119, 0
  %v11469 = vsel %vm4345, %v11121, 0
  %v11472 = vsel %vm4345, %v11123, 0
  %v11475 = vsel %vm4345, %v11125, 0
  %v11478 = vsel %vm4345, %v11127, 0
  %v11481 = vsel %vm4345, %v11129, 0
  %v11484 = vsel %vm4345, %v11131, 0
  %v11487 = vsel %vm4345, %v11133, 0
  %v11490 = vsel %vm4345, %v11135, 0
  %v11493 = vsel %vm4345, %v11137, 0
  %v11496 = vsel %vm4345, %v11139, 0
  %v11499 = vsel %vm4345, %v11141, 0
  %v11502 = vsel %vm4345, %v11143, 0
  %v11505 = vsel %vm4345, %v11145, 0
  %v11508 = vsel %vm4345, %v11147, 0
  %v11511 = vsel %vm4345, %v11149, 0
  %v11514 = vsel %vm4345, %v11151, 0
  %v11517 = vsel %vm4345, %v11153, 0
  %v11520 = vsel %vm4345, %v11155, 0
  %v11523 = vsel %vm4345, %v11157, 0
  %v11526 = vsel %vm4345, %v11159, 0
  %v11529 = vsel %vm4345, %v11161, 0
  %v11532 = vsel %vm4345, %v11163, 0
  %v11535 = vsel %vm4345, %v11165, 0
  %v11538 = vsel %vm4345, %v11167, 0
  %v11541 = vsel %vm4345, %v11169, 0
  %v11544 = vsel %vm4345, %v11171, 0
  %v11547 = vsel %vm4345, %v11173, 0
  %11549 = vmatprep.subr.bf16.mxu0 0
  %11550 = vmatpush1.bf16.msra.mxu0 %v11235
  %11551 = vmatprep.subr.bf16.mxu0 0
  %11552 = vmatpush1.bf16.msra.mxu0 %v11236
  %11553 = vmatprep.subr.bf16.mxu0 0
  %11554 = vmatpush1.bf16.msra.mxu0 %v11237
  %11555 = vmatprep.subr.bf16.mxu0 0
  %11556 = vmatpush1.bf16.msra.mxu0 %v11238
  %11557 = vmatprep.subr.bf16.mxu0 0
  %11558 = vmatpush1.bf16.msra.mxu0 %v11239
  %11559 = vmatprep.subr.bf16.mxu0 0
  %11560 = vmatpush1.bf16.msra.mxu0 %v11240
  %11561 = vmatprep.subr.bf16.mxu0 0
  %11562 = vmatpush1.bf16.msra.mxu0 %v11241
  %11563 = vmatprep.subr.bf16.mxu0 0
  %11564 = vmatpush1.bf16.msra.mxu0 %v11242
  %11565 = vmatprep.subr.bf16.mxu0 0
  %11566 = vmatpush1.bf16.msra.mxu0 %v11243
  %11567 = vmatprep.subr.bf16.mxu0 0
  %11568 = vmatpush1.bf16.msra.mxu0 %v11244
  %11569 = vmatprep.subr.bf16.mxu0 0
  %11570 = vmatpush1.bf16.msra.mxu0 0
  %11571 = vmatprep.subr.bf16.mxu0 0
  %11572 = vmatpush1.bf16.msra.mxu0 0
  %11573 = vmatprep.subr.bf16.mxu0 0
  %11574 = vmatpush1.bf16.msra.mxu0 0
  %11575 = vmatprep.subr.bf16.mxu0 0
  %11576 = vmatpush1.bf16.msra.mxu0 0
  %11577 = vmatprep.subr.bf16.mxu0 0
  %11578 = vmatpush1.bf16.msra.mxu0 0
  %11579 = vmatprep.subr.bf16.mxu0 0
  %11580 = vmatpush1.bf16.msra.mxu0 0
  %11581 = vmatprep.mubr.bf16.mxu0 %v11256
  %11582 = vmatmul.mubr.bf16.gmra.mrb[0].mxu0 %v10978
  %v11583 = vpop.f32.mrb[0].mxu0
  %v11584 = vadd.f32 0.0, %v11583
  %v11585 = vpop.f32.mrb[0].mxu0
  %v11586 = vpop.f32.mrb[0].mxu0
  %v11587 = vadd.f32 0.0, %v11586
  %v11588 = vpop.f32.mrb[0].mxu0
  %11589 = vmatprep.mubr.bf16.mxu0 %v11259
  %11590 = vmatmul.mubr.bf16.gmra.mrb[0].mxu0 %v10980
  %v11591 = vpop.f32.mrb[0].mxu0
  %v11592 = vadd.f32 0.0, %v11591
  %v11593 = vpop.f32.mrb[0].mxu0
  %v11594 = vpop.f32.mrb[0].mxu0
  %v11595 = vadd.f32 0.0, %v11594
  %v11596 = vpop.f32.mrb[0].mxu0
  %11597 = vmatprep.mubr.bf16.mxu0 %v11262
  %11598 = vmatmul.mubr.bf16.gmra.mrb[0].mxu0 %v10982
  %v11599 = vpop.f32.mrb[0].mxu0
  %v11600 = vadd.f32 0.0, %v11599
  %v11601 = vpop.f32.mrb[0].mxu0
  %v11602 = vpop.f32.mrb[0].mxu0
  %v11603 = vadd.f32 0.0, %v11602
  %v11604 = vpop.f32.mrb[0].mxu0
  %11605 = vmatprep.mubr.bf16.mxu0 %v11265
  %11606 = vmatmul.mubr.bf16.gmra.mrb[0].mxu0 %v10984
  %v11607 = vpop.f32.mrb[0].mxu0
  %v11608 = vadd.f32 0.0, %v11607
  %v11609 = vpop.f32.mrb[0].mxu0
  %v11610 = vpop.f32.mrb[0].mxu0
  %v11611 = vadd.f32 0.0, %v11610
  %v11612 = vpop.f32.mrb[0].mxu0
  %11613 = vmatprep.mubr.bf16.mxu0 %v11268
  %11614 = vmatmul.mubr.bf16.gmra.mrb[0].mxu0 %v10986
  %v11615 = vpop.f32.mrb[0].mxu0
  %v11616 = vadd.f32 0.0, %v11615
  %v11617 = vpop.f32.mrb[0].mxu0
  %v11618 = vpop.f32.mrb[0].mxu0
  %v11619 = vadd.f32 0.0, %v11618
  %v11620 = vpop.f32.mrb[0].mxu0
  %11621 = vmatprep.mubr.bf16.mxu0 %v11271
  %11622 = vmatmul.mubr.bf16.gmra.mrb[0].mxu0 %v10988
  %v11623 = vpop.f32.mrb[0].mxu0
  %v11624 = vpop.f32.mrb[0].mxu0
  %v11625 = vpop.f32.mrb[0].mxu0
  %v11626 = vpop.f32.mrb[0].mxu0
  %11627 = vmatprep.mubr.bf16.mxu0 %v11274
  %11628 = vmatmul.mubr.bf16.gmra.mrb[0].mxu0 %v10990
  %v11629 = vpop.f32.mrb[0].mxu0
  %v11630 = vpop.f32.mrb[0].mxu0
  %v11631 = vpop.f32.mrb[0].mxu0
  %v11632 = vpop.f32.mrb[0].mxu0
  %11633 = vmatprep.mubr.bf16.mxu0 %v11277
  %11634 = vmatmul.mubr.bf16.gmra.mrb[0].mxu0 %v10992
  %v11635 = vpop.f32.mrb[0].mxu0
  %v11636 = vadd.f32 0.0, %v11635
  %v11637 = vpop.f32.mrb[0].mxu0
  %v11638 = vpop.f32.mrb[0].mxu0
  %v11639 = vadd.f32 0.0, %v11638
  %v11640 = vpop.f32.mrb[0].mxu0
  %11641 = vmatprep.mubr.bf16.mxu0 %v11280
  %11642 = vmatmul.mubr.bf16.gmra.mrb[0].mxu0 %v10994
  %v11643 = vpop.f32.mrb[0].mxu0
  %v11644 = vadd.f32 0.0, %v11643
  %v11645 = vpop.f32.mrb[0].mxu0
  %v11646 = vpop.f32.mrb[0].mxu0
  %v11647 = vadd.f32 0.0, %v11646
  %v11648 = vpop.f32.mrb[0].mxu0
  %11649 = vmatprep.mubr.bf16.mxu0 %v11283
  %11650 = vmatmul.mubr.bf16.gmra.mrb[0].mxu0 %v10996
  %v11651 = vpop.f32.mrb[0].mxu0
  %v11652 = vadd.f32 0.0, %v11651
  %v11653 = vpop.f32.mrb[0].mxu0
  %v11654 = vpop.f32.mrb[0].mxu0
  %v11655 = vadd.f32 0.0, %v11654
  %v11656 = vpop.f32.mrb[0].mxu0
  %11657 = vmatprep.mubr.bf16.mxu0 %v11286
  %11658 = vmatmul.mubr.bf16.gmra.mrb[0].mxu0 %v10998
  %v11659 = vpop.f32.mrb[0].mxu0
  %v11660 = vadd.f32 0.0, %v11659
  %v11661 = vpop.f32.mrb[0].mxu0
  %v11662 = vpop.f32.mrb[0].mxu0
  %v11663 = vadd.f32 0.0, %v11662
  %v11664 = vpop.f32.mrb[0].mxu0
  %11665 = vmatprep.mubr.bf16.mxu0 %v11289
  %11666 = vmatmul.mubr.bf16.gmra.mrb[0].mxu0 %v11000
  %v11667 = vpop.f32.mrb[0].mxu0
  %v11668 = vadd.f32 0.0, %v11667
  %v11669 = vpop.f32.mrb[0].mxu0
  %v11670 = vpop.f32.mrb[0].mxu0
  %v11671 = vadd.f32 0.0, %v11670
  %v11672 = vpop.f32.mrb[0].mxu0
  %11673 = vmatprep.mubr.bf16.mxu0 %v11292
  %11674 = vmatmul.mubr.bf16.gmra.mrb[0].mxu0 %v11002
  %v11675 = vpop.f32.mrb[0].mxu0
  %v11676 = vpop.f32.mrb[0].mxu0
  %v11677 = vpop.f32.mrb[0].mxu0
  %v11678 = vpop.f32.mrb[0].mxu0
  %11679 = vmatprep.mubr.bf16.mxu0 %v11295
  %11680 = vmatmul.mubr.bf16.gmra.mrb[0].mxu0 %v11004
  %v11681 = vpop.f32.mrb[0].mxu0
  %v11682 = vpop.f32.mrb[0].mxu0
  %v11683 = vpop.f32.mrb[0].mxu0
  %v11684 = vpop.f32.mrb[0].mxu0
  %11685 = vmatprep.mubr.bf16.mxu0 %v11298
  %11686 = vmatmul.mubr.bf16.gmra.mrb[0].mxu0 %v11006
  %v11687 = vpop.f32.mrb[0].mxu0
  %v11688 = vadd.f32 0.0, %v11687
  %v11689 = vpop.f32.mrb[0].mxu0
  %v11690 = vpop.f32.mrb[0].mxu0
  %v11691 = vadd.f32 0.0, %v11690
  %v11692 = vpop.f32.mrb[0].mxu0
  %11693 = vmatprep.mubr.bf16.mxu0 %v11301
  %11694 = vmatmul.mubr.bf16.gmra.mrb[0].mxu0 %v11008
  %v11695 = vpop.f32.mrb[0].mxu0
  %v11696 = vadd.f32 0.0, %v11695
  %v11697 = vpop.f32.mrb[0].mxu0
  %v11698 = vpop.f32.mrb[0].mxu0
  %v11699 = vadd.f32 0.0, %v11698
  %v11700 = vpop.f32.mrb[0].mxu0
  %11701 = vmatprep.mubr.bf16.mxu0 %v11304
  %11702 = vmatmul.mubr.bf16.gmra.mrb[0].mxu0 %v11010
  %v11703 = vpop.f32.mrb[0].mxu0
  %v11704 = vadd.f32 0.0, %v11703
  %v11705 = vpop.f32.mrb[0].mxu0
  %v11706 = vpop.f32.mrb[0].mxu0
  %v11707 = vadd.f32 0.0, %v11706
  %v11708 = vpop.f32.mrb[0].mxu0
  %11709 = vmatprep.mubr.bf16.mxu0 %v11307
  %11710 = vmatmul.mubr.bf16.gmra.mrb[0].mxu0 %v11012
  %v11711 = vpop.f32.mrb[0].mxu0
  %v11712 = vadd.f32 0.0, %v11711
  %v11713 = vpop.f32.mrb[0].mxu0
  %v11714 = vpop.f32.mrb[0].mxu0
  %v11715 = vadd.f32 0.0, %v11714
  %v11716 = vpop.f32.mrb[0].mxu0
  %11717 = vmatprep.mubr.bf16.mxu0 %v11310
  %11718 = vmatmul.mubr.bf16.gmra.mrb[0].mxu0 %v11014
  %v11719 = vpop.f32.mrb[0].mxu0
  %v11720 = vadd.f32 0.0, %v11719
  %v11721 = vpop.f32.mrb[0].mxu0
  %v11722 = vpop.f32.mrb[0].mxu0
  %v11723 = vadd.f32 0.0, %v11722
  %v11724 = vpop.f32.mrb[0].mxu0
  %11725 = vmatprep.mubr.bf16.mxu0 %v11313
  %11726 = vmatmul.mubr.bf16.gmra.mrb[0].mxu0 %v11016
  %v11727 = vpop.f32.mrb[0].mxu0
  %v11728 = vpop.f32.mrb[0].mxu0
  %v11729 = vpop.f32.mrb[0].mxu0
  %v11730 = vpop.f32.mrb[0].mxu0
  %11731 = vmatprep.mubr.bf16.mxu0 %v11316
  %11732 = vmatmul.mubr.bf16.gmra.mrb[0].mxu0 %v11018
  %v11733 = vpop.f32.mrb[0].mxu0
  %v11734 = vpop.f32.mrb[0].mxu0
  %v11735 = vpop.f32.mrb[0].mxu0
  %v11736 = vpop.f32.mrb[0].mxu0
  %11737 = vmatprep.mubr.bf16.mxu0 %v11319
  %11738 = vmatmul.mubr.bf16.gmra.mrb[0].mxu0 %v11020
  %v11739 = vpop.f32.mrb[0].mxu0
  %v11740 = vadd.f32 0.0, %v11739
  %v11741 = vpop.f32.mrb[0].mxu0
  %v11742 = vpop.f32.mrb[0].mxu0
  %v11743 = vadd.f32 0.0, %v11742
  %v11744 = vpop.f32.mrb[0].mxu0
  %11745 = vmatprep.mubr.bf16.mxu0 %v11322
  %11746 = vmatmul.mubr.bf16.gmra.mrb[0].mxu0 %v11022
  %v11747 = vpop.f32.mrb[0].mxu0
  %v11748 = vadd.f32 0.0, %v11747
  %v11749 = vpop.f32.mrb[0].mxu0
  %v11750 = vpop.f32.mrb[0].mxu0
  %v11751 = vadd.f32 0.0, %v11750
  %v11752 = vpop.f32.mrb[0].mxu0
  %11753 = vmatprep.mubr.bf16.mxu0 %v11325
  %11754 = vmatmul.mubr.bf16.gmra.mrb[0].mxu0 %v11024
  %v11755 = vpop.f32.mrb[0].mxu0
  %v11756 = vadd.f32 0.0, %v11755
  %v11757 = vpop.f32.mrb[0].mxu0
  %v11758 = vpop.f32.mrb[0].mxu0
  %v11759 = vadd.f32 0.0, %v11758
  %v11760 = vpop.f32.mrb[0].mxu0
  %11761 = vmatprep.mubr.bf16.mxu0 %v11328
  %11762 = vmatmul.mubr.bf16.gmra.mrb[0].mxu0 %v11026
  %v11763 = vpop.f32.mrb[0].mxu0
  %v11764 = vadd.f32 0.0, %v11763
  %v11765 = vpop.f32.mrb[0].mxu0
  %v11766 = vpop.f32.mrb[0].mxu0
  %v11767 = vadd.f32 0.0, %v11766
  %v11768 = vpop.f32.mrb[0].mxu0
  %11769 = vmatprep.mubr.bf16.mxu0 %v11331
  %11770 = vmatmul.mubr.bf16.gmra.mrb[0].mxu0 %v11028
  %v11771 = vpop.f32.mrb[0].mxu0
  %v11772 = vadd.f32 0.0, %v11771
  %v11773 = vpop.f32.mrb[0].mxu0
  %v11774 = vpop.f32.mrb[0].mxu0
  %v11775 = vadd.f32 0.0, %v11774
  %v11776 = vpop.f32.mrb[0].mxu0
  %11777 = vmatprep.mubr.bf16.mxu0 %v11334
  %11778 = vmatmul.mubr.bf16.gmra.mrb[0].mxu0 %v11030
  %v11779 = vpop.f32.mrb[0].mxu0
  %v11780 = vpop.f32.mrb[0].mxu0
  %v11781 = vpop.f32.mrb[0].mxu0
  %v11782 = vpop.f32.mrb[0].mxu0
  %11783 = vmatprep.mubr.bf16.mxu0 %v11337
  %11784 = vmatmul.mubr.bf16.gmra.mrb[0].mxu0 %v11032
  %v11785 = vpop.f32.mrb[0].mxu0
  %v11786 = vpop.f32.mrb[0].mxu0
  %v11787 = vpop.f32.mrb[0].mxu0
  %v11788 = vpop.f32.mrb[0].mxu0
  %11789 = vmatprep.mubr.bf16.mxu0 %v11340
  %11790 = vmatmul.mubr.bf16.gmra.mrb[0].mxu0 %v11034
  %v11791 = vpop.f32.mrb[0].mxu0
  %v11792 = vadd.f32 0.0, %v11791
  %v11793 = vpop.f32.mrb[0].mxu0
  %v11794 = vpop.f32.mrb[0].mxu0
  %v11795 = vadd.f32 0.0, %v11794
  %v11796 = vpop.f32.mrb[0].mxu0
  %11797 = vmatprep.mubr.bf16.mxu0 %v11343
  %11798 = vmatmul.mubr.bf16.gmra.mrb[0].mxu0 %v11036
  %v11799 = vpop.f32.mrb[0].mxu0
  %v11800 = vadd.f32 0.0, %v11799
  %v11801 = vpop.f32.mrb[0].mxu0
  %v11802 = vpop.f32.mrb[0].mxu0
  %v11803 = vadd.f32 0.0, %v11802
  %v11804 = vpop.f32.mrb[0].mxu0
  %11805 = vmatprep.mubr.bf16.mxu0 %v11346
  %11806 = vmatmul.mubr.bf16.gmra.mrb[0].mxu0 %v11038
  %v11807 = vpop.f32.mrb[0].mxu0
  %v11808 = vadd.f32 0.0, %v11807
  %v11809 = vpop.f32.mrb[0].mxu0
  %v11810 = vpop.f32.mrb[0].mxu0
  %v11811 = vadd.f32 0.0, %v11810
  %v11812 = vpop.f32.mrb[0].mxu0
  %11813 = vmatprep.mubr.bf16.mxu0 %v11349
  %11814 = vmatmul.mubr.bf16.gmra.mrb[0].mxu0 %v11040
  %v11815 = vpop.f32.mrb[0].mxu0
  %v11816 = vadd.f32 0.0, %v11815
  %v11817 = vpop.f32.mrb[0].mxu0
  %v11818 = vpop.f32.mrb[0].mxu0
  %v11819 = vadd.f32 0.0, %v11818
  %v11820 = vpop.f32.mrb[0].mxu0
  %11821 = vmatprep.mubr.bf16.mxu0 %v11352
  %11822 = vmatmul.mubr.bf16.gmra.mrb[0].mxu0 %v11042
  %v11823 = vpop.f32.mrb[0].mxu0
  %v11824 = vadd.f32 0.0, %v11823
  %v11825 = vpop.f32.mrb[0].mxu0
  %v11826 = vpop.f32.mrb[0].mxu0
  %v11827 = vadd.f32 0.0, %v11826
  %v11828 = vpop.f32.mrb[0].mxu0
  %11829 = vmatprep.mubr.bf16.mxu0 %v11355
  %11830 = vmatmul.mubr.bf16.gmra.mrb[0].mxu0 %v11044
  %v11831 = vpop.f32.mrb[0].mxu0
  %v11832 = vpop.f32.mrb[0].mxu0
  %v11833 = vpop.f32.mrb[0].mxu0
  %v11834 = vpop.f32.mrb[0].mxu0
  %11835 = vmatprep.mubr.bf16.mxu0 %v11358
  %11836 = vmatmul.mubr.bf16.gmra.mrb[0].mxu0 %v11046
  %v11837 = vpop.f32.mrb[0].mxu0
  %v11838 = vpop.f32.mrb[0].mxu0
  %v11839 = vpop.f32.mrb[0].mxu0
  %v11840 = vpop.f32.mrb[0].mxu0
  %11841 = vmatprep.mubr.bf16.mxu0 %v11361
  %11842 = vmatmul.mubr.bf16.gmra.mrb[0].mxu0 %v11048
  %v11843 = vpop.f32.mrb[0].mxu0
  %v11844 = vadd.f32 0.0, %v11843
  %v11845 = vpop.f32.mrb[0].mxu0
  %v11846 = vpop.f32.mrb[0].mxu0
  %v11847 = vadd.f32 0.0, %v11846
  %v11848 = vpop.f32.mrb[0].mxu0
  %11849 = vmatprep.mubr.bf16.mxu0 %v11364
  %11850 = vmatmul.mubr.bf16.gmra.mrb[0].mxu0 %v11050
  %v11851 = vpop.f32.mrb[0].mxu0
  %v11852 = vadd.f32 0.0, %v11851
  %v11853 = vpop.f32.mrb[0].mxu0
  %v11854 = vpop.f32.mrb[0].mxu0
  %v11855 = vadd.f32 0.0, %v11854
  %v11856 = vpop.f32.mrb[0].mxu0
  %11857 = vmatprep.mubr.bf16.mxu0 %v11367
  %11858 = vmatmul.mubr.bf16.gmra.mrb[0].mxu0 %v11052
  %v11859 = vpop.f32.mrb[0].mxu0
  %v11860 = vadd.f32 0.0, %v11859
  %v11861 = vpop.f32.mrb[0].mxu0
  %v11862 = vpop.f32.mrb[0].mxu0
  %v11863 = vadd.f32 0.0, %v11862
  %v11864 = vpop.f32.mrb[0].mxu0
  %11865 = vmatprep.mubr.bf16.mxu0 %v11370
  %11866 = vmatmul.mubr.bf16.gmra.mrb[0].mxu0 %v11054
  %v11867 = vpop.f32.mrb[0].mxu0
  %v11868 = vadd.f32 0.0, %v11867
  %v11869 = vpop.f32.mrb[0].mxu0
  %v11870 = vpop.f32.mrb[0].mxu0
  %v11871 = vadd.f32 0.0, %v11870
  %v11872 = vpop.f32.mrb[0].mxu0
  %11873 = vmatprep.mubr.bf16.mxu0 %v11373
  %11874 = vmatmul.mubr.bf16.gmra.mrb[0].mxu0 %v11056
  %v11875 = vpop.f32.mrb[0].mxu0
  %v11876 = vadd.f32 0.0, %v11875
  %v11877 = vpop.f32.mrb[0].mxu0
  %v11878 = vpop.f32.mrb[0].mxu0
  %v11879 = vadd.f32 0.0, %v11878
  %v11880 = vpop.f32.mrb[0].mxu0
  %11881 = vmatprep.mubr.bf16.mxu0 %v11376
  %11882 = vmatmul.mubr.bf16.gmra.mrb[0].mxu0 %v11058
  %v11883 = vpop.f32.mrb[0].mxu0
  %v11884 = vpop.f32.mrb[0].mxu0
  %v11885 = vpop.f32.mrb[0].mxu0
  %v11886 = vpop.f32.mrb[0].mxu0
  %11887 = vmatprep.mubr.bf16.mxu0 %v11379
  %11888 = vmatmul.mubr.bf16.gmra.mrb[0].mxu0 %v11060
  %v11889 = vpop.f32.mrb[0].mxu0
  %v11890 = vpop.f32.mrb[0].mxu0
  %v11891 = vpop.f32.mrb[0].mxu0
  %v11892 = vpop.f32.mrb[0].mxu0
  %11893 = vmatprep.mubr.bf16.mxu0 %v11382
  %11894 = vmatmul.mubr.bf16.gmra.mrb[0].mxu0 %v11062
  %v11895 = vpop.f32.mrb[0].mxu0
  %v11896 = vadd.f32 0.0, %v11895
  %v11897 = vpop.f32.mrb[0].mxu0
  %v11898 = vpop.f32.mrb[0].mxu0
  %v11899 = vadd.f32 0.0, %v11898
  %v11900 = vpop.f32.mrb[0].mxu0
  %11901 = vmatprep.mubr.bf16.mxu0 %v11385
  %11902 = vmatmul.mubr.bf16.gmra.mrb[0].mxu0 %v11064
  %v11903 = vpop.f32.mrb[0].mxu0
  %v11904 = vadd.f32 0.0, %v11903
  %v11905 = vpop.f32.mrb[0].mxu0
  %v11906 = vpop.f32.mrb[0].mxu0
  %v11907 = vadd.f32 0.0, %v11906
  %v11908 = vpop.f32.mrb[0].mxu0
  %11909 = vmatprep.mubr.bf16.mxu0 %v11388
  %11910 = vmatmul.mubr.bf16.gmra.mrb[0].mxu0 %v11066
  %v11911 = vpop.f32.mrb[0].mxu0
  %v11912 = vadd.f32 0.0, %v11911
  %v11913 = vpop.f32.mrb[0].mxu0
  %v11914 = vpop.f32.mrb[0].mxu0
  %v11915 = vadd.f32 0.0, %v11914
  %v11916 = vpop.f32.mrb[0].mxu0
  %11917 = vmatprep.mubr.bf16.mxu0 %v11391
  %11918 = vmatmul.mubr.bf16.gmra.mrb[0].mxu0 %v11068
  %v11919 = vpop.f32.mrb[0].mxu0
  %v11920 = vadd.f32 0.0, %v11919
  %v11921 = vpop.f32.mrb[0].mxu0
  %v11922 = vpop.f32.mrb[0].mxu0
  %v11923 = vadd.f32 0.0, %v11922
  %v11924 = vpop.f32.mrb[0].mxu0
  %11925 = vmatprep.mubr.bf16.mxu0 %v11394
  %11926 = vmatmul.mubr.bf16.gmra.mrb[0].mxu0 %v11070
  %v11927 = vpop.f32.mrb[0].mxu0
  %v11928 = vadd.f32 0.0, %v11927
  %v11929 = vpop.f32.mrb[0].mxu0
  %v11930 = vpop.f32.mrb[0].mxu0
  %v11931 = vadd.f32 0.0, %v11930
  %v11932 = vpop.f32.mrb[0].mxu0
  %11933 = vmatprep.mubr.bf16.mxu0 %v11397
  %11934 = vmatmul.mubr.bf16.gmra.mrb[0].mxu0 %v11072
  %v11935 = vpop.f32.mrb[0].mxu0
  %v11936 = vpop.f32.mrb[0].mxu0
  %v11937 = vpop.f32.mrb[0].mxu0
  %v11938 = vpop.f32.mrb[0].mxu0
  %11939 = vmatprep.mubr.bf16.mxu0 %v11400
  %11940 = vmatmul.mubr.bf16.gmra.mrb[0].mxu0 %v11074
  %v11941 = vpop.f32.mrb[0].mxu0
  %v11942 = vpop.f32.mrb[0].mxu0
  %v11943 = vpop.f32.mrb[0].mxu0
  %v11944 = vpop.f32.mrb[0].mxu0
  %11945 = vmatprep.mubr.bf16.mxu0 %v11403
  %11946 = vmatmul.mubr.bf16.gmra.mrb[0].mxu0 %v11076
  %v11947 = vpop.f32.mrb[0].mxu0
  %v11948 = vadd.f32 0.0, %v11947
  %v11949 = vpop.f32.mrb[0].mxu0
  %v11950 = vpop.f32.mrb[0].mxu0
  %v11951 = vadd.f32 0.0, %v11950
  %v11952 = vpop.f32.mrb[0].mxu0
  %11953 = vmatprep.mubr.bf16.mxu0 %v11406
  %11954 = vmatmul.mubr.bf16.gmra.mrb[0].mxu0 %v11078
  %v11955 = vpop.f32.mrb[0].mxu0
  %v11956 = vadd.f32 0.0, %v11955
  %v11957 = vpop.f32.mrb[0].mxu0
  %v11958 = vpop.f32.mrb[0].mxu0
  %v11959 = vadd.f32 0.0, %v11958
  %v11960 = vpop.f32.mrb[0].mxu0
  %11961 = vmatprep.mubr.bf16.mxu0 %v11409
  %11962 = vmatmul.mubr.bf16.gmra.mrb[0].mxu0 %v11080
  %v11963 = vpop.f32.mrb[0].mxu0
  %v11964 = vadd.f32 0.0, %v11963
  %v11965 = vpop.f32.mrb[0].mxu0
  %v11966 = vpop.f32.mrb[0].mxu0
  %v11967 = vadd.f32 0.0, %v11966
  %v11968 = vpop.f32.mrb[0].mxu0
  %11969 = vmatprep.mubr.bf16.mxu0 %v11412
  %11970 = vmatmul.mubr.bf16.gmra.mrb[0].mxu0 %v11082
  %v11971 = vpop.f32.mrb[0].mxu0
  %v11972 = vadd.f32 0.0, %v11971
  %v11973 = vpop.f32.mrb[0].mxu0
  %v11974 = vpop.f32.mrb[0].mxu0
  %v11975 = vadd.f32 0.0, %v11974
  %v11976 = vpop.f32.mrb[0].mxu0
  %11977 = vmatprep.mubr.bf16.mxu0 %v11415
  %11978 = vmatmul.mubr.bf16.gmra.mrb[0].mxu0 %v11084
  %v11979 = vpop.f32.mrb[0].mxu0
  %v11980 = vadd.f32 0.0, %v11979
  %v11981 = vpop.f32.mrb[0].mxu0
  %v11982 = vpop.f32.mrb[0].mxu0
  %v11983 = vadd.f32 0.0, %v11982
  %v11984 = vpop.f32.mrb[0].mxu0
  %11985 = vmatprep.mubr.bf16.mxu0 %v11418
  %11986 = vmatmul.mubr.bf16.gmra.mrb[0].mxu0 %v11086
  %v11987 = vpop.f32.mrb[0].mxu0
  %v11988 = vpop.f32.mrb[0].mxu0
  %v11989 = vpop.f32.mrb[0].mxu0
  %v11990 = vpop.f32.mrb[0].mxu0
  %11991 = vmatprep.mubr.bf16.mxu0 %v11421
  %11992 = vmatmul.mubr.bf16.gmra.mrb[0].mxu0 %v11088
  %v11993 = vpop.f32.mrb[0].mxu0
  %v11994 = vpop.f32.mrb[0].mxu0
  %v11995 = vpop.f32.mrb[0].mxu0
  %v11996 = vpop.f32.mrb[0].mxu0
  %11997 = vmatprep.mubr.bf16.mxu0 %v11424
  %11998 = vmatmul.mubr.bf16.gmra.mrb[0].mxu0 %v11090
  %v11999 = vpop.f32.mrb[0].mxu0
  %v12000 = vadd.f32 0.0, %v11999
  %v12001 = vpop.f32.mrb[0].mxu0
  %v12002 = vpop.f32.mrb[0].mxu0
  %v12003 = vadd.f32 0.0, %v12002
  %v12004 = vpop.f32.mrb[0].mxu0
  %12005 = vmatprep.mubr.bf16.mxu0 %v11427
  %12006 = vmatmul.mubr.bf16.gmra.mrb[0].mxu0 %v11092
  %v12007 = vpop.f32.mrb[0].mxu0
  %v12008 = vadd.f32 0.0, %v12007
  %v12009 = vpop.f32.mrb[0].mxu0
  %v12010 = vpop.f32.mrb[0].mxu0
  %v12011 = vadd.f32 0.0, %v12010
  %v12012 = vpop.f32.mrb[0].mxu0
  %12013 = vmatprep.mubr.bf16.mxu0 %v11430
  %12014 = vmatmul.mubr.bf16.gmra.mrb[0].mxu0 %v11094
  %v12015 = vpop.f32.mrb[0].mxu0
  %v12016 = vadd.f32 0.0, %v12015
  %v12017 = vpop.f32.mrb[0].mxu0
  %v12018 = vpop.f32.mrb[0].mxu0
  %v12019 = vadd.f32 0.0, %v12018
  %v12020 = vpop.f32.mrb[0].mxu0
  %12021 = vmatprep.mubr.bf16.mxu0 %v11433
  %12022 = vmatmul.mubr.bf16.gmra.mrb[0].mxu0 %v11096
  %v12023 = vpop.f32.mrb[0].mxu0
  %v12024 = vadd.f32 0.0, %v12023
  %v12025 = vpop.f32.mrb[0].mxu0
  %v12026 = vpop.f32.mrb[0].mxu0
  %v12027 = vadd.f32 0.0, %v12026
  %v12028 = vpop.f32.mrb[0].mxu0
  %12029 = vmatprep.mubr.bf16.mxu0 %v11436
  %12030 = vmatmul.mubr.bf16.gmra.mrb[0].mxu0 %v11098
  %v12031 = vpop.f32.mrb[0].mxu0
  %v12032 = vadd.f32 0.0, %v12031
  %v12033 = vpop.f32.mrb[0].mxu0
  %v12034 = vpop.f32.mrb[0].mxu0
  %v12035 = vadd.f32 0.0, %v12034
  %v12036 = vpop.f32.mrb[0].mxu0
  %12037 = vmatprep.mubr.bf16.mxu0 %v11439
  %12038 = vmatmul.mubr.bf16.gmra.mrb[0].mxu0 %v11100
  %v12039 = vpop.f32.mrb[0].mxu0
  %v12040 = vpop.f32.mrb[0].mxu0
  %v12041 = vpop.f32.mrb[0].mxu0
  %v12042 = vpop.f32.mrb[0].mxu0
  %12043 = vmatprep.mubr.bf16.mxu0 %v11442
  %12044 = vmatmul.mubr.bf16.gmra.mrb[0].mxu0 %v11102
  %v12045 = vpop.f32.mrb[0].mxu0
  %v12046 = vpop.f32.mrb[0].mxu0
  %v12047 = vpop.f32.mrb[0].mxu0
  %v12048 = vpop.f32.mrb[0].mxu0
  %12049 = vmatprep.mubr.bf16.mxu0 %v11445
  %12050 = vmatmul.mubr.bf16.gmra.mrb[0].mxu0 %v11104
  %v12051 = vpop.f32.mrb[0].mxu0
  %v12052 = vadd.f32 0.0, %v12051
  %v12053 = vpop.f32.mrb[0].mxu0
  %v12054 = vpop.f32.mrb[0].mxu0
  %v12055 = vadd.f32 0.0, %v12054
  %v12056 = vpop.f32.mrb[0].mxu0
  %12057 = vmatprep.mubr.bf16.mxu0 %v11448
  %12058 = vmatmul.mubr.bf16.gmra.mrb[0].mxu0 %v11106
  %v12059 = vpop.f32.mrb[0].mxu0
  %v12060 = vadd.f32 0.0, %v12059
  %v12061 = vpop.f32.mrb[0].mxu0
  %v12062 = vpop.f32.mrb[0].mxu0
  %v12063 = vadd.f32 0.0, %v12062
  %v12064 = vpop.f32.mrb[0].mxu0
  %12065 = vmatprep.mubr.bf16.mxu0 %v11451
  %12066 = vmatmul.mubr.bf16.gmra.mrb[0].mxu0 %v11108
  %v12067 = vpop.f32.mrb[0].mxu0
  %v12068 = vadd.f32 0.0, %v12067
  %v12069 = vpop.f32.mrb[0].mxu0
  %v12070 = vpop.f32.mrb[0].mxu0
  %v12071 = vadd.f32 0.0, %v12070
  %v12072 = vpop.f32.mrb[0].mxu0
  %12073 = vmatprep.mubr.bf16.mxu0 %v11454
  %12074 = vmatmul.mubr.bf16.gmra.mrb[0].mxu0 %v11110
  %v12075 = vpop.f32.mrb[0].mxu0
  %v12076 = vadd.f32 0.0, %v12075
  %v12077 = vpop.f32.mrb[0].mxu0
  %v12078 = vpop.f32.mrb[0].mxu0
  %v12079 = vadd.f32 0.0, %v12078
  %v12080 = vpop.f32.mrb[0].mxu0
  %12081 = vmatprep.mubr.bf16.mxu0 %v11457
  %12082 = vmatmul.mubr.bf16.gmra.mrb[0].mxu0 %v11112
  %v12083 = vpop.f32.mrb[0].mxu0
  %v12084 = vadd.f32 0.0, %v12083
  %v12085 = vpop.f32.mrb[0].mxu0
  %v12086 = vpop.f32.mrb[0].mxu0
  %v12087 = vadd.f32 0.0, %v12086
  %v12088 = vpop.f32.mrb[0].mxu0
  %12089 = vmatprep.mubr.bf16.mxu0 %v11460
  %12090 = vmatmul.mubr.bf16.gmra.mrb[0].mxu0 %v11114
  %v12091 = vpop.f32.mrb[0].mxu0
  %v12092 = vpop.f32.mrb[0].mxu0
  %v12093 = vpop.f32.mrb[0].mxu0
  %v12094 = vpop.f32.mrb[0].mxu0
  %12095 = vmatprep.mubr.bf16.mxu0 %v11463
  %12096 = vmatmul.mubr.bf16.gmra.mrb[0].mxu0 %v11116
  %v12097 = vpop.f32.mrb[0].mxu0
  %v12098 = vpop.f32.mrb[0].mxu0
  %v12099 = vpop.f32.mrb[0].mxu0
  %v12100 = vpop.f32.mrb[0].mxu0
  %12101 = vmatprep.mubr.bf16.mxu0 %v11466
  %12102 = vmatmul.mubr.bf16.gmra.mrb[0].mxu0 %v11118
  %v12103 = vpop.f32.mrb[0].mxu0
  %v12104 = vpop.f32.mrb[0].mxu0
  %v12105 = vpop.f32.mrb[0].mxu0
  %v12106 = vpop.f32.mrb[0].mxu0
  %12107 = vmatprep.mubr.bf16.mxu0 %v11469
  %12108 = vmatmul.mubr.bf16.gmra.mrb[0].mxu0 %v11120
  %v12109 = vpop.f32.mrb[0].mxu0
  %v12110 = vpop.f32.mrb[0].mxu0
  %v12111 = vpop.f32.mrb[0].mxu0
  %v12112 = vpop.f32.mrb[0].mxu0
  %12113 = vmatprep.mubr.bf16.mxu0 %v11472
  %12114 = vmatmul.mubr.bf16.gmra.mrb[0].mxu0 %v11122
  %v12115 = vpop.f32.mrb[0].mxu0
  %v12116 = vpop.f32.mrb[0].mxu0
  %v12117 = vpop.f32.mrb[0].mxu0
  %v12118 = vpop.f32.mrb[0].mxu0
  %12119 = vmatprep.mubr.bf16.mxu0 %v11475
  %12120 = vmatmul.mubr.bf16.gmra.mrb[0].mxu0 %v11124
  %v12121 = vpop.f32.mrb[0].mxu0
  %v12122 = vpop.f32.mrb[0].mxu0
  %v12123 = vpop.f32.mrb[0].mxu0
  %v12124 = vpop.f32.mrb[0].mxu0
  %12125 = vmatprep.mubr.bf16.mxu0 %v11478
  %12126 = vmatmul.mubr.bf16.gmra.mrb[0].mxu0 %v11126
  %v12127 = vpop.f32.mrb[0].mxu0
  %v12128 = vpop.f32.mrb[0].mxu0
  %v12129 = vpop.f32.mrb[0].mxu0
  %v12130 = vpop.f32.mrb[0].mxu0
  %12131 = vmatprep.mubr.bf16.mxu0 %v11481
  %12132 = vmatmul.mubr.bf16.gmra.mrb[0].mxu0 %v11128
  %v12133 = vpop.f32.mrb[0].mxu0
  %v12134 = vpop.f32.mrb[0].mxu0
  %v12135 = vpop.f32.mrb[0].mxu0
  %v12136 = vpop.f32.mrb[0].mxu0
  %12137 = vmatprep.mubr.bf16.mxu0 %v11484
  %12138 = vmatmul.mubr.bf16.gmra.mrb[0].mxu0 %v11130
  %v12139 = vpop.f32.mrb[0].mxu0
  %v12140 = vpop.f32.mrb[0].mxu0
  %v12141 = vpop.f32.mrb[0].mxu0
  %v12142 = vpop.f32.mrb[0].mxu0
  %12143 = vmatprep.mubr.bf16.mxu0 %v11487
  %12144 = vmatmul.mubr.bf16.gmra.mrb[0].mxu0 %v11132
  %v12145 = vpop.f32.mrb[0].mxu0
  %v12146 = vpop.f32.mrb[0].mxu0
  %v12147 = vpop.f32.mrb[0].mxu0
  %v12148 = vpop.f32.mrb[0].mxu0
  %12149 = vmatprep.mubr.bf16.mxu0 %v11490
  %12150 = vmatmul.mubr.bf16.gmra.mrb[0].mxu0 %v11134
  %v12151 = vpop.f32.mrb[0].mxu0
  %v12152 = vpop.f32.mrb[0].mxu0
  %v12153 = vpop.f32.mrb[0].mxu0
  %v12154 = vpop.f32.mrb[0].mxu0
  %12155 = vmatprep.mubr.bf16.mxu0 %v11493
  %12156 = vmatmul.mubr.bf16.gmra.mrb[0].mxu0 %v11136
  %v12157 = vpop.f32.mrb[0].mxu0
  %v12158 = vpop.f32.mrb[0].mxu0
  %v12159 = vpop.f32.mrb[0].mxu0
  %v12160 = vpop.f32.mrb[0].mxu0
  %12161 = vmatprep.mubr.bf16.mxu0 %v11496
  %12162 = vmatmul.mubr.bf16.gmra.mrb[0].mxu0 %v11138
  %v12163 = vpop.f32.mrb[0].mxu0
  %v12164 = vpop.f32.mrb[0].mxu0
  %v12165 = vpop.f32.mrb[0].mxu0
  %v12166 = vpop.f32.mrb[0].mxu0
  %12167 = vmatprep.mubr.bf16.mxu0 %v11499
  %12168 = vmatmul.mubr.bf16.gmra.mrb[0].mxu0 %v11140
  %v12169 = vpop.f32.mrb[0].mxu0
  %v12170 = vpop.f32.mrb[0].mxu0
  %v12171 = vpop.f32.mrb[0].mxu0
  %v12172 = vpop.f32.mrb[0].mxu0
  %12173 = vmatprep.mubr.bf16.mxu0 %v11502
  %12174 = vmatmul.mubr.bf16.gmra.mrb[0].mxu0 %v11142
  %v12175 = vpop.f32.mrb[0].mxu0
  %v12176 = vpop.f32.mrb[0].mxu0
  %v12177 = vpop.f32.mrb[0].mxu0
  %v12178 = vpop.f32.mrb[0].mxu0
  %12179 = vmatprep.mubr.bf16.mxu0 %v11505
  %12180 = vmatmul.mubr.bf16.gmra.mrb[0].mxu0 %v11144
  %v12181 = vpop.f32.mrb[0].mxu0
  %v12182 = vpop.f32.mrb[0].mxu0
  %v12183 = vpop.f32.mrb[0].mxu0
  %v12184 = vpop.f32.mrb[0].mxu0
  %12185 = vmatprep.mubr.bf16.mxu0 %v11508
  %12186 = vmatmul.mubr.bf16.gmra.mrb[0].mxu0 %v11146
  %v12187 = vpop.f32.mrb[0].mxu0
  %v12188 = vpop.f32.mrb[0].mxu0
  %v12189 = vpop.f32.mrb[0].mxu0
  %v12190 = vpop.f32.mrb[0].mxu0
  %12191 = vmatprep.mubr.bf16.mxu0 %v11511
  %12192 = vmatmul.mubr.bf16.gmra.mrb[0].mxu0 %v11148
  %v12193 = vpop.f32.mrb[0].mxu0
  %v12194 = vpop.f32.mrb[0].mxu0
  %v12195 = vpop.f32.mrb[0].mxu0
  %v12196 = vpop.f32.mrb[0].mxu0
  %12197 = vmatprep.mubr.bf16.mxu0 %v11514
  %12198 = vmatmul.mubr.bf16.gmra.mrb[0].mxu0 %v11150
  %v12199 = vpop.f32.mrb[0].mxu0
  %v12200 = vpop.f32.mrb[0].mxu0
  %v12201 = vpop.f32.mrb[0].mxu0
  %v12202 = vpop.f32.mrb[0].mxu0
  %12203 = vmatprep.mubr.bf16.mxu0 %v11517
  %12204 = vmatmul.mubr.bf16.gmra.mrb[0].mxu0 %v11152
  %v12205 = vpop.f32.mrb[0].mxu0
  %v12206 = vpop.f32.mrb[0].mxu0
  %v12207 = vpop.f32.mrb[0].mxu0
  %v12208 = vpop.f32.mrb[0].mxu0
  %12209 = vmatprep.mubr.bf16.mxu0 %v11520
  %12210 = vmatmul.mubr.bf16.gmra.mrb[0].mxu0 %v11154
  %v12211 = vpop.f32.mrb[0].mxu0
  %v12212 = vpop.f32.mrb[0].mxu0
  %v12213 = vpop.f32.mrb[0].mxu0
  %v12214 = vpop.f32.mrb[0].mxu0
  %12215 = vmatprep.mubr.bf16.mxu0 %v11523
  %12216 = vmatmul.mubr.bf16.gmra.mrb[0].mxu0 %v11156
  %v12217 = vpop.f32.mrb[0].mxu0
  %v12218 = vpop.f32.mrb[0].mxu0
  %v12219 = vpop.f32.mrb[0].mxu0
  %v12220 = vpop.f32.mrb[0].mxu0
  %12221 = vmatprep.mubr.bf16.mxu0 %v11526
  %12222 = vmatmul.mubr.bf16.gmra.mrb[0].mxu0 %v11158
  %v12223 = vpop.f32.mrb[0].mxu0
  %v12224 = vpop.f32.mrb[0].mxu0
  %v12225 = vpop.f32.mrb[0].mxu0
  %v12226 = vpop.f32.mrb[0].mxu0
  %12227 = vmatprep.mubr.bf16.mxu0 %v11529
  %12228 = vmatmul.mubr.bf16.gmra.mrb[0].mxu0 %v11160
  %v12229 = vpop.f32.mrb[0].mxu0
  %v12230 = vpop.f32.mrb[0].mxu0
  %v12231 = vpop.f32.mrb[0].mxu0
  %v12232 = vpop.f32.mrb[0].mxu0
  %12233 = vmatprep.mubr.bf16.mxu0 %v11532
  %12234 = vmatmul.mubr.bf16.gmra.mrb[0].mxu0 %v11162
  %v12235 = vpop.f32.mrb[0].mxu0
  %v12236 = vpop.f32.mrb[0].mxu0
  %v12237 = vpop.f32.mrb[0].mxu0
  %v12238 = vpop.f32.mrb[0].mxu0
  %12239 = vmatprep.mubr.bf16.mxu0 %v11535
  %12240 = vmatmul.mubr.bf16.gmra.mrb[0].mxu0 %v11164
  %v12241 = vpop.f32.mrb[0].mxu0
  %v12242 = vpop.f32.mrb[0].mxu0
  %v12243 = vpop.f32.mrb[0].mxu0
  %v12244 = vpop.f32.mrb[0].mxu0
  %12245 = vmatprep.mubr.bf16.mxu0 %v11538
  %12246 = vmatmul.mubr.bf16.gmra.mrb[0].mxu0 %v11166
  %v12247 = vpop.f32.mrb[0].mxu0
  %v12248 = vpop.f32.mrb[0].mxu0
  %v12249 = vpop.f32.mrb[0].mxu0
  %v12250 = vpop.f32.mrb[0].mxu0
  %12251 = vmatprep.mubr.bf16.mxu0 %v11541
  %12252 = vmatmul.mubr.bf16.gmra.mrb[0].mxu0 %v11168
  %v12253 = vpop.f32.mrb[0].mxu0
  %v12254 = vpop.f32.mrb[0].mxu0
  %v12255 = vpop.f32.mrb[0].mxu0
  %v12256 = vpop.f32.mrb[0].mxu0
  %12257 = vmatprep.mubr.bf16.mxu0 %v11544
  %12258 = vmatmul.mubr.bf16.gmra.mrb[0].mxu0 %v11170
  %v12259 = vpop.f32.mrb[0].mxu0
  %v12260 = vpop.f32.mrb[0].mxu0
  %v12261 = vpop.f32.mrb[0].mxu0
  %v12262 = vpop.f32.mrb[0].mxu0
  %12263 = vmatprep.mubr.bf16.mxu0 %v11547
  %12264 = vmatmul.mubr.bf16.gmra.mrb[0].mxu0 %v11172
  %v12265 = vpop.f32.mrb[0].mxu0
  %v12266 = vpop.f32.mrb[0].mxu0
  %v12267 = vpop.f32.mrb[0].mxu0
  %v12268 = vpop.f32.mrb[0].mxu0
  %12269 = vdwg.mxu0
  %v12270 = vadd.f32 %v10878, %v11584
  %v12271 = vadd.f32 %v10879, %v11587
  %v12272 = vadd.f32 %v10880, %v11592
  %v12273 = vadd.f32 %v10881, %v11595
  %v12274 = vadd.f32 %v10882, %v11600
  %v12275 = vadd.f32 %v10883, %v11603
  %v12276 = vadd.f32 %v10884, %v11608
  %v12277 = vadd.f32 %v10885, %v11611
  %v12278 = vadd.f32 %v10886, %v11616
  %v12279 = vadd.f32 %v10887, %v11619
  %v12280 = vadd.f32 %v10888, %v11636
  %v12281 = vadd.f32 %v10889, %v11639
  %v12282 = vadd.f32 %v10890, %v11644
  %v12283 = vadd.f32 %v10891, %v11647
  %v12284 = vadd.f32 %v10892, %v11652
  %v12285 = vadd.f32 %v10893, %v11655
  %v12286 = vadd.f32 %v10894, %v11660
  %v12287 = vadd.f32 %v10895, %v11663
  %v12288 = vadd.f32 %v10896, %v11668
  %v12289 = vadd.f32 %v10897, %v11671
  %v12290 = vadd.f32 %v10898, %v11688
  %v12291 = vadd.f32 %v10899, %v11691
  %v12292 = vadd.f32 %v10900, %v11696
  %v12293 = vadd.f32 %v10901, %v11699
  %v12294 = vadd.f32 %v10902, %v11704
  %v12295 = vadd.f32 %v10903, %v11707
  %v12296 = vadd.f32 %v10904, %v11712
  %v12297 = vadd.f32 %v10905, %v11715
  %v12298 = vadd.f32 %v10906, %v11720
  %v12299 = vadd.f32 %v10907, %v11723
  %v12300 = vadd.f32 %v10908, %v11740
  %v12301 = vadd.f32 %v10909, %v11743
  %v12302 = vadd.f32 %v10910, %v11748
  %v12303 = vadd.f32 %v10911, %v11751
  %v12304 = vadd.f32 %v10912, %v11756
  %v12305 = vadd.f32 %v10913, %v11759
  %v12306 = vadd.f32 %v10914, %v11764
  %v12307 = vadd.f32 %v10915, %v11767
  %v12308 = vadd.f32 %v10916, %v11772
  %v12309 = vadd.f32 %v10917, %v11775
  %v12310 = vadd.f32 %v10918, %v11792
  %v12311 = vadd.f32 %v10919, %v11795
  %v12312 = vadd.f32 %v10920, %v11800
  %v12313 = vadd.f32 %v10921, %v11803
  %v12314 = vadd.f32 %v10922, %v11808
  %v12315 = vadd.f32 %v10923, %v11811
  %v12316 = vadd.f32 %v10924, %v11816
  %v12317 = vadd.f32 %v10925, %v11819
  %v12318 = vadd.f32 %v10926, %v11824
  %v12319 = vadd.f32 %v10927, %v11827
  %v12320 = vadd.f32 %v10928, %v11844
  %v12321 = vadd.f32 %v10929, %v11847
  %v12322 = vadd.f32 %v10930, %v11852
  %v12323 = vadd.f32 %v10931, %v11855
  %v12324 = vadd.f32 %v10932, %v11860
  %v12325 = vadd.f32 %v10933, %v11863
  %v12326 = vadd.f32 %v10934, %v11868
  %v12327 = vadd.f32 %v10935, %v11871
  %v12328 = vadd.f32 %v10936, %v11876
  %v12329 = vadd.f32 %v10937, %v11879
  %v12330 = vadd.f32 %v10938, %v11896
  %v12331 = vadd.f32 %v10939, %v11899
  %v12332 = vadd.f32 %v10940, %v11904
  %v12333 = vadd.f32 %v10941, %v11907
  %v12334 = vadd.f32 %v10942, %v11912
  %v12335 = vadd.f32 %v10943, %v11915
  %v12336 = vadd.f32 %v10944, %v11920
  %v12337 = vadd.f32 %v10945, %v11923
  %v12338 = vadd.f32 %v10946, %v11928
  %v12339 = vadd.f32 %v10947, %v11931
  %v12340 = vadd.f32 %v10948, %v11948
  %v12341 = vadd.f32 %v10949, %v11951
  %v12342 = vadd.f32 %v10950, %v11956
  %v12343 = vadd.f32 %v10951, %v11959
  %v12344 = vadd.f32 %v10952, %v11964
  %v12345 = vadd.f32 %v10953, %v11967
  %v12346 = vadd.f32 %v10954, %v11972
  %v12347 = vadd.f32 %v10955, %v11975
  %v12348 = vadd.f32 %v10956, %v11980
  %v12349 = vadd.f32 %v10957, %v11983
  %v12350 = vadd.f32 %v10958, %v12000
  %v12351 = vadd.f32 %v10959, %v12003
  %v12352 = vadd.f32 %v10960, %v12008
  %v12353 = vadd.f32 %v10961, %v12011
  %v12354 = vadd.f32 %v10962, %v12016
  %v12355 = vadd.f32 %v10963, %v12019
  %v12356 = vadd.f32 %v10964, %v12024
  %v12357 = vadd.f32 %v10965, %v12027
  %v12358 = vadd.f32 %v10966, %v12032
  %v12359 = vadd.f32 %v10967, %v12035
  %v12360 = vadd.f32 %v10968, %v12052
  %v12361 = vadd.f32 %v10969, %v12055
  %v12362 = vadd.f32 %v10970, %v12060
  %v12363 = vadd.f32 %v10971, %v12063
  %v12364 = vadd.f32 %v10972, %v12068
  %v12365 = vadd.f32 %v10973, %v12071
  %v12366 = vadd.f32 %v10974, %v12076
  %v12367 = vadd.f32 %v10975, %v12079
  %v12368 = vadd.f32 %v10976, %v12084
  %v12369 = vadd.f32 %v10977, %v12087
  %v12370 = vmax.f32 %v12270, %v12280
  %v12371 = vmax.f32 %v12271, %v12281
  %v12372 = vmax.f32 %v12272, %v12282
  %v12373 = vmax.f32 %v12273, %v12283
  %v12374 = vmax.f32 %v12274, %v12284
  %v12375 = vmax.f32 %v12275, %v12285
  %v12376 = vmax.f32 %v12276, %v12286
  %v12377 = vmax.f32 %v12277, %v12287
  %v12378 = vmax.f32 %v12278, %v12288
  %v12379 = vmax.f32 %v12279, %v12289
  %v12380 = vmax.f32 %v12290, %v12300
  %v12381 = vmax.f32 %v12291, %v12301
  %v12382 = vmax.f32 %v12292, %v12302
  %v12383 = vmax.f32 %v12293, %v12303
  %v12384 = vmax.f32 %v12294, %v12304
  %v12385 = vmax.f32 %v12295, %v12305
  %v12386 = vmax.f32 %v12296, %v12306
  %v12387 = vmax.f32 %v12297, %v12307
  %v12388 = vmax.f32 %v12298, %v12308
  %v12389 = vmax.f32 %v12299, %v12309
  %v12390 = vmax.f32 %v12310, %v12320
  %v12391 = vmax.f32 %v12311, %v12321
  %v12392 = vmax.f32 %v12312, %v12322
  %v12393 = vmax.f32 %v12313, %v12323
  %v12394 = vmax.f32 %v12314, %v12324
  %v12395 = vmax.f32 %v12315, %v12325
  %v12396 = vmax.f32 %v12316, %v12326
  %v12397 = vmax.f32 %v12317, %v12327
  %v12398 = vmax.f32 %v12318, %v12328
  %v12399 = vmax.f32 %v12319, %v12329
  %v12400 = vmax.f32 %v12330, %v12340
  %v12401 = vmax.f32 %v12331, %v12341
  %v12402 = vmax.f32 %v12332, %v12342
  %v12403 = vmax.f32 %v12333, %v12343
  %v12404 = vmax.f32 %v12334, %v12344
  %v12405 = vmax.f32 %v12335, %v12345
  %v12406 = vmax.f32 %v12336, %v12346
  %v12407 = vmax.f32 %v12337, %v12347
  %v12408 = vmax.f32 %v12338, %v12348
  %v12409 = vmax.f32 %v12339, %v12349
  %v12410 = vmax.f32 %v12350, %v12360
  %v12411 = vmax.f32 %v12351, %v12361
  %v12412 = vmax.f32 %v12352, %v12362
  %v12413 = vmax.f32 %v12353, %v12363
  %v12414 = vmax.f32 %v12354, %v12364
  %v12415 = vmax.f32 %v12355, %v12365
  %v12416 = vmax.f32 %v12356, %v12366
  %v12417 = vmax.f32 %v12357, %v12367
  %v12418 = vmax.f32 %v12358, %v12368
  %v12419 = vmax.f32 %v12359, %v12369
  %v12420 = vmax.f32 %v12370, %v12371
  %v12421 = vmax.f32 %v12372, %v12373
  %v12422 = vmax.f32 %v12374, %v12375
  %v12423 = vmax.f32 %v12376, %v12377
  %v12424 = vmax.f32 %v12378, %v12379
  %v12425 = vmax.f32 %v12380, %v12381
  %v12426 = vmax.f32 %v12382, %v12383
  %v12427 = vmax.f32 %v12384, %v12385
  %v12428 = vmax.f32 %v12386, %v12387
  %v12429 = vmax.f32 %v12388, %v12389
  %v12430 = vmax.f32 %v12390, %v12391
  %v12431 = vmax.f32 %v12392, %v12393
  %v12432 = vmax.f32 %v12394, %v12395
  %v12433 = vmax.f32 %v12396, %v12397
  %v12434 = vmax.f32 %v12398, %v12399
  %v12435 = vmax.f32 %v12400, %v12401
  %v12436 = vmax.f32 %v12402, %v12403
  %v12437 = vmax.f32 %v12404, %v12405
  %v12438 = vmax.f32 %v12406, %v12407
  %v12439 = vmax.f32 %v12408, %v12409
  %v12440 = vmax.f32 %v12410, %v12411
  %v12441 = vmax.f32 %v12412, %v12413
  %v12442 = vmax.f32 %v12414, %v12415
  %v12443 = vmax.f32 %v12416, %v12417
  %v12444 = vmax.f32 %v12418, %v12419
  %v12445 = vld [vmem:[%s4] sm:$0x1]
  %v12447 = vlaneseq
  %v12448 = vshrl.u32 %v12447, 7
  %v12449 = vsub.s32 0, %v12448
  %v12450 = vrot.slane %v12445, %v12449
  %v12452 = vadd.f32 %v12420, %v12450
  %v12453 = vadd.f32 %v12421, %v12450
  %v12454 = vadd.f32 %v12422, %v12450
  %v12455 = vadd.f32 %v12423, %v12450
  %v12456 = vadd.f32 %v12424, %v12450
  %v12457 = vadd.f32 %v12425, %v12450
  %v12458 = vadd.f32 %v12426, %v12450
  %v12459 = vadd.f32 %v12427, %v12450
  %v12460 = vadd.f32 %v12428, %v12450
  %v12461 = vadd.f32 %v12429, %v12450
  %v12462 = vadd.f32 %v12430, %v12450
  %v12463 = vadd.f32 %v12431, %v12450
  %v12464 = vadd.f32 %v12432, %v12450
  %v12465 = vadd.f32 %v12433, %v12450
  %v12466 = vadd.f32 %v12434, %v12450
  %v12467 = vadd.f32 %v12435, %v12450
  %v12468 = vadd.f32 %v12436, %v12450
  %v12469 = vadd.f32 %v12437, %v12450
  %v12470 = vadd.f32 %v12438, %v12450
  %v12471 = vadd.f32 %v12439, %v12450
  %v12472 = vadd.f32 %v12440, %v12450
  %v12473 = vadd.f32 %v12441, %v12450
  %v12474 = vadd.f32 %v12442, %v12450
  %v12475 = vadd.f32 %v12443, %v12450
  %v12476 = vadd.f32 %v12444, %v12450
  %v12477 = vmax.f32 %v12452, 0.0
  %v12478 = vmax.f32 %v12453, 0.0
  %v12479 = vmax.f32 %v12454, 0.0
  %v12480 = vmax.f32 %v12455, 0.0
  %v12481 = vmax.f32 %v12456, 0.0
  %v12482 = vmax.f32 %v12457, 0.0
  %v12483 = vmax.f32 %v12458, 0.0
  %v12484 = vmax.f32 %v12459, 0.0
  %v12485 = vmax.f32 %v12460, 0.0
  %v12486 = vmax.f32 %v12461, 0.0
  %v12487 = vmax.f32 %v12462, 0.0
  %v12488 = vmax.f32 %v12463, 0.0
  %v12489 = vmax.f32 %v12464, 0.0
  %v12490 = vmax.f32 %v12465, 0.0
  %v12491 = vmax.f32 %v12466, 0.0
  %v12492 = vmax.f32 %v12467, 0.0
  %v12493 = vmax.f32 %v12468, 0.0
  %v12494 = vmax.f32 %v12469, 0.0
  %v12495 = vmax.f32 %v12470, 0.0
  %v12496 = vmax.f32 %v12471, 0.0
  %v12497 = vmax.f32 %v12472, 0.0
  %v12498 = vmax.f32 %v12473, 0.0
  %v12499 = vmax.f32 %v12474, 0.0
  %v12500 = vmax.f32 %v12475, 0.0
  %v12501 = vmax.f32 %v12476, 0.0
  %v12502 = vpack.c.bf16 %v12477, %v12477
  %v12503 = vpack.c.bf16 %v12478, %v12478
  %v12504 = vpack.c.bf16 %v12479, %v12479
  %v12505 = vpack.c.bf16 %v12480, %v12480
  %v12506 = vpack.c.bf16 %v12481, %v12481
  %v12507 = vpack.c.bf16 %v12482, %v12482
  %v12508 = vpack.c.bf16 %v12483, %v12483
  %v12509 = vpack.c.bf16 %v12484, %v12484
  %v12510 = vpack.c.bf16 %v12485, %v12485
  %v12511 = vpack.c.bf16 %v12486, %v12486
  %v12512 = vpack.c.bf16 %v12487, %v12487
  %v12513 = vpack.c.bf16 %v12488, %v12488
  %v12514 = vpack.c.bf16 %v12489, %v12489
  %v12515 = vpack.c.bf16 %v12490, %v12490
  %v12516 = vpack.c.bf16 %v12491, %v12491
  %v12517 = vpack.c.bf16 %v12492, %v12492
  %v12518 = vpack.c.bf16 %v12493, %v12493
  %v12519 = vpack.c.bf16 %v12494, %v12494
  %v12520 = vpack.c.bf16 %v12495, %v12495
  %v12521 = vpack.c.bf16 %v12496, %v12496
  %v12522 = vpack.c.bf16 %v12497, %v12497
  %v12523 = vpack.c.bf16 %v12498, %v12498
  %v12524 = vpack.c.bf16 %v12499, %v12499
  %v12525 = vpack.c.bf16 %v12500, %v12500
  %v12526 = vpack.c.bf16 %v12501, %v12501
  %12528 = vrot.lane.b32.xlu0 %v12503, 64
  %v12529 = vpop.permute.xlu0 %12528
  %12531 = vrot.lane.b32.xlu0 %v12505, 64
  %v12532 = vpop.permute.xlu0 %12531
  %12534 = vrot.lane.b32.xlu0 %v12507, 64
  %v12535 = vpop.permute.xlu0 %12534
  %12537 = vrot.lane.b32.xlu0 %v12509, 64
  %v12538 = vpop.permute.xlu0 %12537
  %12540 = vrot.lane.b32.xlu0 %v12511, 64
  %v12541 = vpop.permute.xlu0 %12540
  %12543 = vrot.lane.b32.xlu0 %v12513, 64
  %v12544 = vpop.permute.xlu0 %12543
  %12546 = vrot.lane.b32.xlu0 %v12515, 64
  %v12547 = vpop.permute.xlu0 %12546
  %12549 = vrot.lane.b32.xlu0 %v12517, 64
  %v12550 = vpop.permute.xlu0 %12549
  %vm12551 = vcmask 523264
  %v12554 = vsel %vm12551, %v12502, %v12529
  %v12558 = vsel %vm12551, %v12504, %v12532
  %v12562 = vsel %vm12551, %v12506, %v12535
  %v12566 = vsel %vm12551, %v12508, %v12538
  %v12570 = vsel %vm12551, %v12510, %v12541
  %v12574 = vsel %vm12551, %v12512, %v12544
  %v12578 = vsel %vm12551, %v12514, %v12547
  %v12582 = vsel %vm12551, %v12516, %v12550
  %12585 = vrot.lane.b32.xlu0 %v12519, 64
  %v12586 = vpop.permute.xlu0 %12585
  %12588 = vrot.lane.b32.xlu0 %v12521, 64
  %v12589 = vpop.permute.xlu0 %12588
  %12591 = vrot.lane.b32.xlu0 %v12523, 64
  %v12592 = vpop.permute.xlu0 %12591
  %12594 = vrot.lane.b32.xlu0 %v12525, 64
  %v12595 = vpop.permute.xlu0 %12594
  %v12598 = vsel %vm12551, %v12518, %v12586
  %v12602 = vsel %vm12551, %v12520, %v12589
  %v12606 = vsel %vm12551, %v12522, %v12592
  %v12610 = vsel %vm12551, %v12524, %v12595
  %v12612 = vld [vmem:[%s5] sm:$0xf]
  %v12613 = vld [vmem:[%s5 + $0x4] sm:$0xf]
  %v12614 = vld [vmem:[%s5 + $0x8] sm:$0xf]
  %v12615 = vld [vmem:[%s5 + $0xc] sm:$0xf]
  %v12616 = vld [vmem:[%s5 + $0x10] sm:$0xf]
  %v12617 = vld [vmem:[%s5 + $0x14] sm:$0xf]
  %v12618 = vld [vmem:[%s5 + $0x18] sm:$0xf]
  %v12619 = vld [vmem:[%s5 + $0x1c] sm:$0xf]
  %v12620 = vld [vmem:[%s5 + $0x20] sm:$0xf]
  %v12621 = vld [vmem:[%s5 + $0x24] sm:$0xf]
  %v12622 = vld [vmem:[%s5 + $0x28] sm:$0xf]
  %v12623 = vld [vmem:[%s5 + $0x2c] sm:$0xf]
  %v12624 = vld [vmem:[%s5 + $0x30] sm:$0xf]
  %v12625 = vld [vmem:[%s5 + $0x34] sm:$0xf]
  %v12626 = vld [vmem:[%s5 + $0x38] sm:$0xf]
  %v12627 = vld [vmem:[%s5 + $0x3c] sm:$0xf]
  %v12628 = vld [vmem:[%s5 + $0x40] sm:$0xf]
  %v12629 = vld [vmem:[%s5 + $0x44] sm:$0xf]
  %v12630 = vld [vmem:[%s5 + $0x48] sm:$0xf]
  %v12631 = vld [vmem:[%s5 + $0x4c] sm:$0xf]
  %v12632 = vld [vmem:[%s5 + $0x50] sm:$0xf]
  %v12633 = vld [vmem:[%s5 + $0x54] sm:$0xf]
  %v12634 = vld [vmem:[%s5 + $0x58] sm:$0xf]
  %v12635 = vld [vmem:[%s5 + $0x5c] sm:$0xf]
  %v12636 = vld [vmem:[%s5 + $0x60] sm:$0xf]
  %v12637 = vld [vmem:[%s5 + $0x64] sm:$0xf]
  %v12638 = vld [vmem:[%s5 + $0x68] sm:$0xf]
  %v12639 = vld [vmem:[%s5 + $0x6c] sm:$0xf]
  %v12640 = vld [vmem:[%s5 + $0x70] sm:$0xf]
  %v12641 = vld [vmem:[%s5 + $0x74] sm:$0xf]
  %v12642 = vld [vmem:[%s5 + $0x78] sm:$0xf]
  %v12643 = vld [vmem:[%s5 + $0x7c] sm:$0xf]
  %v12644 = vld [vmem:[%s5 + $0x80] sm:$0xf]
  %v12645 = vld [vmem:[%s5 + $0x84] sm:$0xf]
  %v12646 = vld [vmem:[%s5 + $0x88] sm:$0xf]
  %v12647 = vld [vmem:[%s5 + $0x8c] sm:$0xf]
  %v12648 = vld [vmem:[%s5 + $0x90] sm:$0xf]
  %v12649 = vld [vmem:[%s5 + $0x94] sm:$0xf]
  %v12650 = vld [vmem:[%s5 + $0x98] sm:$0xf]
  %v12651 = vld [vmem:[%s5 + $0x9c] sm:$0xf]
  %v12652 = vld [vmem:[%s5 + $0xa0] sm:$0xf]
  %v12653 = vld [vmem:[%s5 + $0xa4] sm:$0xf]
  %v12654 = vld [vmem:[%s5 + $0xa8] sm:$0xf]
  %v12655 = vld [vmem:[%s5 + $0xac] sm:$0xf]
  %v12656 = vld [vmem:[%s5 + $0xb0] sm:$0xf]
  %v12657 = vld [vmem:[%s5 + $0xb4] sm:$0xf]
  %v12658 = vld [vmem:[%s5 + $0xb8] sm:$0xf]
  %v12659 = vld [vmem:[%s5 + $0xbc] sm:$0xf]
  %v12660 = vld [vmem:[%s5 + $0xc0] sm:$0xf]
  %v12661 = vld [vmem:[%s5 + $0xc4] sm:$0xf]
  %v12662 = vld [vmem:[%s5 + $0xc8] sm:$0xf]
  %v12663 = vld [vmem:[%s5 + $0xcc] sm:$0xf]
  %v12664 = vld [vmem:[%s5 + $0xd0] sm:$0xf]
  %v12665 = vld [vmem:[%s5 + $0xd4] sm:$0xf]
  %v12666 = vld [vmem:[%s5 + $0xd8] sm:$0xf]
  %v12667 = vld [vmem:[%s5 + $0xdc] sm:$0xf]
  %v12668 = vld [vmem:[%s5 + $0xe0] sm:$0xf]
  %v12669 = vld [vmem:[%s5 + $0xe4] sm:$0xf]
  %v12670 = vld [vmem:[%s5 + $0xe8] sm:$0xf]
  %v12671 = vld [vmem:[%s5 + $0xec] sm:$0xf]
  %v12672 = vld [vmem:[%s5 + $0xf0] sm:$0xf]
  %v12673 = vld [vmem:[%s5 + $0xf4] sm:$0xf]
  %v12674 = vld [vmem:[%s5 + $0xf8] sm:$0xf]
  %v12675 = vld [vmem:[%s5 + $0xfc] sm:$0xf]
  %v12676 = vld [vmem:[%s5 + $0x100] sm:$0xf]
  %v12677 = vld [vmem:[%s5 + $0x104] sm:$0xf]
  %v12678 = vld [vmem:[%s5 + $0x108] sm:$0xf]
  %v12679 = vld [vmem:[%s5 + $0x10c] sm:$0xf]
  %v12680 = vld [vmem:[%s5 + $0x110] sm:$0xf]
  %v12681 = vld [vmem:[%s5 + $0x114] sm:$0xf]
  %v12682 = vld [vmem:[%s5 + $0x118] sm:$0xf]
  %v12683 = vld [vmem:[%s5 + $0x11c] sm:$0xf]
  %v12684 = vld [vmem:[%s5 + $0x120] sm:$0xf]
  %v12685 = vld [vmem:[%s5 + $0x124] sm:$0xf]
  %v12686 = vld [vmem:[%s5 + $0x128] sm:$0xf]
  %v12687 = vld [vmem:[%s5 + $0x12c] sm:$0xf]
  %v12688 = vld [vmem:[%s5 + $0x130] sm:$0xf]
  %v12689 = vld [vmem:[%s5 + $0x134] sm:$0xf]
  %v12690 = vld [vmem:[%s5 + $0x138] sm:$0xf]
  %v12691 = vld [vmem:[%s5 + $0x13c] sm:$0xf]
  %v12692 = vld [vmem:[%s5 + $0x140] sm:$0xf]
  %v12693 = vld [vmem:[%s5 + $0x144] sm:$0xf]
  %v12694 = vld [vmem:[%s5 + $0x148] sm:$0xf]
  %v12695 = vld [vmem:[%s5 + $0x14c] sm:$0xf]
  %v12696 = vld [vmem:[%s5 + $0x150] sm:$0xf]
  %v12697 = vld [vmem:[%s5 + $0x154] sm:$0xf]
  %v12698 = vld [vmem:[%s5 + $0x158] sm:$0xf]
  %v12699 = vld [vmem:[%s5 + $0x15c] sm:$0xf]
  %v12700 = vld [vmem:[%s5 + $0x160] sm:$0xf]
  %v12701 = vld [vmem:[%s5 + $0x164] sm:$0xf]
  %v12702 = vld [vmem:[%s5 + $0x168] sm:$0xf]
  %v12703 = vld [vmem:[%s5 + $0x16c] sm:$0xf]
  %v12704 = vld [vmem:[%s5 + $0x170] sm:$0xf]
  %v12705 = vld [vmem:[%s5 + $0x174] sm:$0xf]
  %v12706 = vld [vmem:[%s5 + $0x178] sm:$0xf]
  %v12707 = vld [vmem:[%s5 + $0x17c] sm:$0xf]
  %v12708 = vld [vmem:[%s5 + $0x180] sm:$0xf]
  %v12709 = vld [vmem:[%s5 + $0x184] sm:$0xf]
  %v12710 = vld [vmem:[%s5 + $0x188] sm:$0xf]
  %v12711 = vld [vmem:[%s5 + $0x18c] sm:$0xf]
  %v12712 = vld [vmem:[%s5 + $0x190] sm:$0xf]
  %v12713 = vld [vmem:[%s5 + $0x194] sm:$0xf]
  %v12714 = vld [vmem:[%s5 + $0x198] sm:$0xf]
  %v12715 = vld [vmem:[%s5 + $0x19c] sm:$0xf]
  %v12716 = vld [vmem:[%s5 + $0x1a0] sm:$0xf]
  %v12717 = vld [vmem:[%s5 + $0x1a4] sm:$0xf]
  %v12718 = vld [vmem:[%s5 + $0x1a8] sm:$0xf]
  %v12719 = vld [vmem:[%s5 + $0x1ac] sm:$0xf]
  %v12720 = vld [vmem:[%s5 + $0x1b0] sm:$0xf]
  %v12721 = vld [vmem:[%s5 + $0x1b4] sm:$0xf]
  %v12722 = vld [vmem:[%s5 + $0x1b8] sm:$0xf]
  %v12723 = vld [vmem:[%s5 + $0x1bc] sm:$0xf]
  %v12724 = vld [vmem:[%s5 + $0x1c0] sm:$0xf]
  %v12725 = vld [vmem:[%s5 + $0x1c4] sm:$0xf]
  %v12726 = vld [vmem:[%s5 + $0x1c8] sm:$0xf]
  %v12727 = vld [vmem:[%s5 + $0x1cc] sm:$0xf]
  %v12728 = vld [vmem:[%s5 + $0x1d0] sm:$0xf]
  %v12729 = vld [vmem:[%s5 + $0x1d4] sm:$0xf]
  %v12730 = vld [vmem:[%s5 + $0x1d8] sm:$0xf]
  %v12731 = vld [vmem:[%s5 + $0x1dc] sm:$0xf]
  %v12732 = vld [vmem:[%s5 + $0x1e0] sm:$0xf]
  %v12733 = vld [vmem:[%s5 + $0x1e4] sm:$0xf]
  %v12734 = vld [vmem:[%s5 + $0x1e8] sm:$0xf]
  %v12735 = vld [vmem:[%s5 + $0x1ec] sm:$0xf]
  %v12736 = vld [vmem:[%s5 + $0x1f0] sm:$0xf]
  %v12737 = vld [vmem:[%s5 + $0x1f4] sm:$0xf]
  %v12738 = vld [vmem:[%s5 + $0x1f8] sm:$0xf]
  %v12739 = vld [vmem:[%s5 + $0x1fc] sm:$0xf]
  %v12740 = vld [vmem:[%s5 + $0x200] sm:$0xf]
  %v12741 = vld [vmem:[%s5 + $0x204] sm:$0xf]
  %v12742 = vld [vmem:[%s5 + $0x208] sm:$0xf]
  %v12743 = vld [vmem:[%s5 + $0x20c] sm:$0xf]
  %v12744 = vld [vmem:[%s5 + $0x210] sm:$0xf]
  %v12745 = vld [vmem:[%s5 + $0x214] sm:$0xf]
  %v12746 = vld [vmem:[%s5 + $0x218] sm:$0xf]
  %v12747 = vld [vmem:[%s5 + $0x21c] sm:$0xf]
  %v12748 = vld [vmem:[%s5 + $0x220] sm:$0xf]
  %v12749 = vld [vmem:[%s5 + $0x224] sm:$0xf]
  %v12750 = vld [vmem:[%s5 + $0x228] sm:$0xf]
  %v12751 = vld [vmem:[%s5 + $0x22c] sm:$0xf]
  %v12752 = vld [vmem:[%s5 + $0x230] sm:$0xf]
  %v12753 = vld [vmem:[%s5 + $0x234] sm:$0xf]
  %v12754 = vld [vmem:[%s5 + $0x238] sm:$0xf]
  %v12755 = vld [vmem:[%s5 + $0x23c] sm:$0xf]
  %v12756 = vld [vmem:[%s5 + $0x240] sm:$0xf]
  %v12757 = vld [vmem:[%s5 + $0x244] sm:$0xf]
  %v12758 = vld [vmem:[%s5 + $0x248] sm:$0xf]
  %v12759 = vld [vmem:[%s5 + $0x24c] sm:$0xf]
  %v12760 = vld [vmem:[%s5 + $0x250] sm:$0xf]
  %v12761 = vld [vmem:[%s5 + $0x254] sm:$0xf]
  %v12762 = vld [vmem:[%s5 + $0x258] sm:$0xf]
  %v12763 = vld [vmem:[%s5 + $0x25c] sm:$0xf]
  %v12764 = vld [vmem:[%s5 + $0x260] sm:$0xf]
  %v12765 = vld [vmem:[%s5 + $0x264] sm:$0xf]
  %v12766 = vld [vmem:[%s5 + $0x268] sm:$0xf]
  %v12767 = vld [vmem:[%s5 + $0x26c] sm:$0xf]
  %v12768 = vld [vmem:[%s5 + $0x270] sm:$0xf]
  %v12769 = vld [vmem:[%s5 + $0x274] sm:$0xf]
  %v12770 = vld [vmem:[%s5 + $0x278] sm:$0xf]
  %v12771 = vld [vmem:[%s5 + $0x27c] sm:$0xf]
  %v12772 = vld [vmem:[%s5 + $0x280] sm:$0xf]
  %v12773 = vld [vmem:[%s5 + $0x284] sm:$0xf]
  %v12774 = vld [vmem:[%s5 + $0x288] sm:$0xf]
  %v12775 = vld [vmem:[%s5 + $0x28c] sm:$0xf]
  %v12776 = vld [vmem:[%s5 + $0x290] sm:$0xf]
  %v12777 = vld [vmem:[%s5 + $0x294] sm:$0xf]
  %v12778 = vld [vmem:[%s5 + $0x298] sm:$0xf]
  %v12779 = vld [vmem:[%s5 + $0x29c] sm:$0xf]
  %v12780 = vld [vmem:[%s5 + $0x2a0] sm:$0xf]
  %v12781 = vld [vmem:[%s5 + $0x2a4] sm:$0xf]
  %v12782 = vld [vmem:[%s5 + $0x2a8] sm:$0xf]
  %v12783 = vld [vmem:[%s5 + $0x2ac] sm:$0xf]
  %v12784 = vld [vmem:[%s5 + $0x2b0] sm:$0xf]
  %v12785 = vld [vmem:[%s5 + $0x2b4] sm:$0xf]
  %v12786 = vld [vmem:[%s5 + $0x2b8] sm:$0xf]
  %v12787 = vld [vmem:[%s5 + $0x2bc] sm:$0xf]
  %v12788 = vld [vmem:[%s5 + $0x2c0] sm:$0xf]
  %v12789 = vld [vmem:[%s5 + $0x2c4] sm:$0xf]
  %v12790 = vld [vmem:[%s5 + $0x2c8] sm:$0xf]
  %v12791 = vld [vmem:[%s5 + $0x2cc] sm:$0xf]
  %v12792 = vld [vmem:[%s5 + $0x2d0] sm:$0xf]
  %v12793 = vld [vmem:[%s5 + $0x2d4] sm:$0xf]
  %v12794 = vld [vmem:[%s5 + $0x2d8] sm:$0xf]
  %v12795 = vld [vmem:[%s5 + $0x2dc] sm:$0xf]
  %v12796 = vld [vmem:[%s5 + $0x2e0] sm:$0xf]
  %v12797 = vld [vmem:[%s5 + $0x2e4] sm:$0xf]
  %v12798 = vld [vmem:[%s5 + $0x2e8] sm:$0xf]
  %v12799 = vld [vmem:[%s5 + $0x2ec] sm:$0xf]
  %v12800 = vld [vmem:[%s5 + $0x2f0] sm:$0xf]
  %v12801 = vld [vmem:[%s5 + $0x2f4] sm:$0xf]
  %v12802 = vld [vmem:[%s5 + $0x2f8] sm:$0xf]
  %v12803 = vld [vmem:[%s5 + $0x2fc] sm:$0xf]
  %v12804 = vld [vmem:[%s5 + $0x300] sm:$0xf]
  %v12805 = vld [vmem:[%s5 + $0x304] sm:$0xf]
  %v12806 = vld [vmem:[%s5 + $0x308] sm:$0xf]
  %v12807 = vld [vmem:[%s5 + $0x30c] sm:$0xf]
  %v12808 = vld [vmem:[%s5 + $0x310] sm:$0xf]
  %v12809 = vld [vmem:[%s5 + $0x314] sm:$0xf]
  %v12810 = vld [vmem:[%s5 + $0x318] sm:$0xf]
  %v12811 = vld [vmem:[%s5 + $0x31c] sm:$0xf]
  %v12812 = vld [vmem:[%s6] sm:$0x1]
  %v12814 = vlaneseq
  %v12815 = vshrl.u32 %v12814, 7
  %v12816 = vsub.s32 0, %v12815
  %v12817 = vrot.slane %v12812, %v12816
  %v13019 = vunpack.c.l.b16 %v12612
  %v13020 = vunpack.c.l.b16 %v12613
  %v13021 = vunpack.c.l.b16 %v12614
  %v13022 = vunpack.c.l.b16 %v12615
  %v13023 = vunpack.c.l.b16 %v12616
  %v13024 = vunpack.c.l.b16 %v12617
  %v13025 = vunpack.c.l.b16 %v12618
  %v13026 = vunpack.c.l.b16 %v12619
  %v13027 = vunpack.c.l.b16 %v12620
  %v13028 = vunpack.c.l.b16 %v12621
  %v13029 = vunpack.c.l.b16 %v12622
  %v13030 = vunpack.c.l.b16 %v12623
  %v13031 = vunpack.c.l.b16 %v12624
  %v13032 = vunpack.c.l.b16 %v12625
  %v13033 = vunpack.c.l.b16 %v12626
  %v13034 = vunpack.c.l.b16 %v12627
  %v13035 = vunpack.c.l.b16 %v12628
  %v13036 = vunpack.c.l.b16 %v12629
  %v13037 = vunpack.c.l.b16 %v12630
  %v13038 = vunpack.c.l.b16 %v12631
  %v13039 = vunpack.c.l.b16 %v12632
  %v13040 = vunpack.c.l.b16 %v12633
  %v13041 = vunpack.c.l.b16 %v12634
  %v13042 = vunpack.c.l.b16 %v12635
  %v13043 = vunpack.c.l.b16 %v12636
  %v13044 = vunpack.c.l.b16 %v12637
  %v13045 = vunpack.c.l.b16 %v12638
  %v13046 = vunpack.c.l.b16 %v12639
  %v13047 = vunpack.c.l.b16 %v12640
  %v13048 = vunpack.c.l.b16 %v12641
  %v13049 = vunpack.c.l.b16 %v12642
  %v13050 = vunpack.c.l.b16 %v12643
  %v13051 = vunpack.c.l.b16 %v12644
  %v13052 = vunpack.c.l.b16 %v12645
  %v13053 = vunpack.c.l.b16 %v12646
  %v13054 = vunpack.c.l.b16 %v12647
  %v13055 = vunpack.c.l.b16 %v12648
  %v13056 = vunpack.c.l.b16 %v12649
  %v13057 = vunpack.c.l.b16 %v12650
  %v13058 = vunpack.c.l.b16 %v12651
  %v13059 = vunpack.c.l.b16 %v12652
  %v13060 = vunpack.c.l.b16 %v12653
  %v13061 = vunpack.c.l.b16 %v12654
  %v13062 = vunpack.c.l.b16 %v12655
  %v13063 = vunpack.c.l.b16 %v12656
  %v13064 = vunpack.c.l.b16 %v12657
  %v13065 = vunpack.c.l.b16 %v12658
  %v13066 = vunpack.c.l.b16 %v12659
  %v13067 = vunpack.c.l.b16 %v12660
  %v13068 = vunpack.c.l.b16 %v12661
  %v13069 = vunpack.c.l.b16 %v12662
  %v13070 = vunpack.c.l.b16 %v12663
  %v13071 = vunpack.c.l.b16 %v12664
  %v13072 = vunpack.c.l.b16 %v12665
  %v13073 = vunpack.c.l.b16 %v12666
  %v13074 = vunpack.c.l.b16 %v12667
  %v13075 = vunpack.c.l.b16 %v12668
  %v13076 = vunpack.c.l.b16 %v12669
  %v13077 = vunpack.c.l.b16 %v12670
  %v13078 = vunpack.c.l.b16 %v12671
  %v13079 = vunpack.c.l.b16 %v12672
  %v13080 = vunpack.c.l.b16 %v12673
  %v13081 = vunpack.c.l.b16 %v12674
  %v13082 = vunpack.c.l.b16 %v12675
  %v13083 = vunpack.c.l.b16 %v12676
  %v13084 = vunpack.c.l.b16 %v12677
  %v13085 = vunpack.c.l.b16 %v12678
  %v13086 = vunpack.c.l.b16 %v12679
  %v13087 = vunpack.c.l.b16 %v12680
  %v13088 = vunpack.c.l.b16 %v12681
  %v13089 = vunpack.c.l.b16 %v12682
  %v13090 = vunpack.c.l.b16 %v12683
  %v13091 = vunpack.c.l.b16 %v12684
  %v13092 = vunpack.c.l.b16 %v12685
  %v13093 = vunpack.c.l.b16 %v12686
  %v13094 = vunpack.c.l.b16 %v12687
  %v13095 = vunpack.c.l.b16 %v12688
  %v13096 = vunpack.c.l.b16 %v12689
  %v13097 = vunpack.c.l.b16 %v12690
  %v13098 = vunpack.c.l.b16 %v12691
  %v13099 = vunpack.c.l.b16 %v12692
  %v13100 = vunpack.c.l.b16 %v12693
  %v13101 = vunpack.c.l.b16 %v12694
  %v13102 = vunpack.c.l.b16 %v12695
  %v13103 = vunpack.c.l.b16 %v12696
  %v13104 = vunpack.c.l.b16 %v12697
  %v13105 = vunpack.c.l.b16 %v12698
  %v13106 = vunpack.c.l.b16 %v12699
  %v13107 = vunpack.c.l.b16 %v12700
  %v13108 = vunpack.c.l.b16 %v12701
  %v13109 = vunpack.c.l.b16 %v12702
  %v13110 = vunpack.c.l.b16 %v12703
  %v13111 = vunpack.c.l.b16 %v12704
  %v13112 = vunpack.c.l.b16 %v12705
  %v13113 = vunpack.c.l.b16 %v12706
  %v13114 = vunpack.c.l.b16 %v12707
  %v13115 = vunpack.c.l.b16 %v12708
  %v13116 = vunpack.c.l.b16 %v12709
  %v13117 = vunpack.c.l.b16 %v12710
  %v13118 = vunpack.c.l.b16 %v12711
  %v13119 = vunpack.c.l.b16 %v12712
  %v13120 = vunpack.c.l.b16 %v12713
  %v13121 = vunpack.c.l.b16 %v12714
  %v13122 = vunpack.c.l.b16 %v12715
  %v13123 = vunpack.c.l.b16 %v12716
  %v13124 = vunpack.c.l.b16 %v12717
  %v13125 = vunpack.c.l.b16 %v12718
  %v13126 = vunpack.c.l.b16 %v12719
  %v13127 = vunpack.c.l.b16 %v12720
  %v13128 = vunpack.c.l.b16 %v12721
  %v13129 = vunpack.c.l.b16 %v12722
  %v13130 = vunpack.c.l.b16 %v12723
  %v13131 = vunpack.c.l.b16 %v12724
  %v13132 = vunpack.c.l.b16 %v12725
  %v13133 = vunpack.c.l.b16 %v12726
  %v13134 = vunpack.c.l.b16 %v12727
  %v13135 = vunpack.c.l.b16 %v12728
  %v13136 = vunpack.c.l.b16 %v12729
  %v13137 = vunpack.c.l.b16 %v12730
  %v13138 = vunpack.c.l.b16 %v12731
  %v13139 = vunpack.c.l.b16 %v12732
  %v13140 = vunpack.c.l.b16 %v12733
  %v13141 = vunpack.c.l.b16 %v12734
  %v13142 = vunpack.c.l.b16 %v12735
  %v13143 = vunpack.c.l.b16 %v12736
  %v13144 = vunpack.c.l.b16 %v12737
  %v13145 = vunpack.c.l.b16 %v12738
  %v13146 = vunpack.c.l.b16 %v12739
  %v13147 = vunpack.c.l.b16 %v12740
  %v13148 = vunpack.c.l.b16 %v12741
  %v13149 = vunpack.c.l.b16 %v12742
  %v13150 = vunpack.c.l.b16 %v12743
  %v13151 = vunpack.c.l.b16 %v12744
  %v13152 = vunpack.c.l.b16 %v12745
  %v13153 = vunpack.c.l.b16 %v12746
  %v13154 = vunpack.c.l.b16 %v12747
  %v13155 = vunpack.c.l.b16 %v12748
  %v13156 = vunpack.c.l.b16 %v12749
  %v13157 = vunpack.c.l.b16 %v12750
  %v13158 = vunpack.c.l.b16 %v12751
  %v13159 = vunpack.c.l.b16 %v12752
  %v13160 = vunpack.c.l.b16 %v12753
  %v13161 = vunpack.c.l.b16 %v12754
  %v13162 = vunpack.c.l.b16 %v12755
  %v13163 = vunpack.c.l.b16 %v12756
  %v13164 = vunpack.c.l.b16 %v12757
  %v13165 = vunpack.c.l.b16 %v12758
  %v13166 = vunpack.c.l.b16 %v12759
  %v13167 = vunpack.c.l.b16 %v12760
  %v13168 = vunpack.c.l.b16 %v12761
  %v13169 = vunpack.c.l.b16 %v12762
  %v13170 = vunpack.c.l.b16 %v12763
  %v13171 = vunpack.c.l.b16 %v12764
  %v13172 = vunpack.c.l.b16 %v12765
  %v13173 = vunpack.c.l.b16 %v12766
  %v13174 = vunpack.c.l.b16 %v12767
  %v13175 = vunpack.c.l.b16 %v12768
  %v13176 = vunpack.c.l.b16 %v12769
  %v13177 = vunpack.c.l.b16 %v12770
  %v13178 = vunpack.c.l.b16 %v12771
  %v13179 = vunpack.c.l.b16 %v12772
  %v13180 = vunpack.c.l.b16 %v12773
  %v13181 = vunpack.c.l.b16 %v12774
  %v13182 = vunpack.c.l.b16 %v12775
  %v13183 = vunpack.c.l.b16 %v12776
  %v13184 = vunpack.c.l.b16 %v12777
  %v13185 = vunpack.c.l.b16 %v12778
  %v13186 = vunpack.c.l.b16 %v12779
  %v13187 = vunpack.c.l.b16 %v12780
  %v13188 = vunpack.c.l.b16 %v12781
  %v13189 = vunpack.c.l.b16 %v12782
  %v13190 = vunpack.c.l.b16 %v12783
  %v13191 = vunpack.c.l.b16 %v12784
  %v13192 = vunpack.c.l.b16 %v12785
  %v13193 = vunpack.c.l.b16 %v12786
  %v13194 = vunpack.c.l.b16 %v12787
  %v13195 = vunpack.c.l.b16 %v12788
  %v13196 = vunpack.c.l.b16 %v12789
  %v13197 = vunpack.c.l.b16 %v12790
  %v13198 = vunpack.c.l.b16 %v12791
  %v13199 = vunpack.c.l.b16 %v12792
  %v13200 = vunpack.c.l.b16 %v12793
  %v13201 = vunpack.c.l.b16 %v12794
  %v13202 = vunpack.c.l.b16 %v12795
  %v13203 = vunpack.c.l.b16 %v12796
  %v13204 = vunpack.c.l.b16 %v12797
  %v13205 = vunpack.c.l.b16 %v12798
  %v13206 = vunpack.c.l.b16 %v12799
  %v13207 = vunpack.c.l.b16 %v12800
  %v13208 = vunpack.c.l.b16 %v12801
  %v13209 = vunpack.c.l.b16 %v12802
  %v13210 = vunpack.c.l.b16 %v12803
  %v13211 = vunpack.c.l.b16 %v12804
  %v13212 = vunpack.c.l.b16 %v12805
  %v13213 = vunpack.c.l.b16 %v12806
  %v13214 = vunpack.c.l.b16 %v12807
  %v13215 = vunpack.c.l.b16 %v12808
  %v13216 = vunpack.c.l.b16 %v12809
  %v13217 = vunpack.c.l.b16 %v12810
  %v13218 = vunpack.c.l.b16 %v12811
  %v13219 = vpack.c.b16 %v13020, %v13019
  %v13220 = vpack.c.b16 %v13022, %v13021
  %v13221 = vpack.c.b16 %v13024, %v13023
  %v13222 = vpack.c.b16 %v13026, %v13025
  %v13223 = vpack.c.b16 %v13028, %v13027
  %v13224 = vpack.c.b16 %v13030, %v13029
  %v13225 = vpack.c.b16 %v13032, %v13031
  %v13226 = vpack.c.b16 %v13034, %v13033
  %v13227 = vpack.c.b16 %v13036, %v13035
  %v13228 = vpack.c.b16 %v13038, %v13037
  %v13229 = vpack.c.b16 %v13040, %v13039
  %v13230 = vpack.c.b16 %v13042, %v13041
  %v13231 = vpack.c.b16 %v13044, %v13043
  %v13232 = vpack.c.b16 %v13046, %v13045
  %v13233 = vpack.c.b16 %v13048, %v13047
  %v13234 = vpack.c.b16 %v13050, %v13049
  %v13235 = vpack.c.b16 %v13052, %v13051
  %v13236 = vpack.c.b16 %v13054, %v13053
  %v13237 = vpack.c.b16 %v13056, %v13055
  %v13238 = vpack.c.b16 %v13058, %v13057
  %v13239 = vpack.c.b16 %v13060, %v13059
  %v13240 = vpack.c.b16 %v13062, %v13061
  %v13241 = vpack.c.b16 %v13064, %v13063
  %v13242 = vpack.c.b16 %v13066, %v13065
  %v13243 = vpack.c.b16 %v13068, %v13067
  %v13244 = vpack.c.b16 %v13070, %v13069
  %v13245 = vpack.c.b16 %v13072, %v13071
  %v13246 = vpack.c.b16 %v13074, %v13073
  %v13247 = vpack.c.b16 %v13076, %v13075
  %v13248 = vpack.c.b16 %v13078, %v13077
  %v13249 = vpack.c.b16 %v13080, %v13079
  %v13250 = vpack.c.b16 %v13082, %v13081
  %v13251 = vpack.c.b16 %v13084, %v13083
  %v13252 = vpack.c.b16 %v13086, %v13085
  %v13253 = vpack.c.b16 %v13088, %v13087
  %v13254 = vpack.c.b16 %v13090, %v13089
  %v13255 = vpack.c.b16 %v13092, %v13091
  %v13256 = vpack.c.b16 %v13094, %v13093
  %v13257 = vpack.c.b16 %v13096, %v13095
  %v13258 = vpack.c.b16 %v13098, %v13097
  %v13259 = vpack.c.b16 %v13100, %v13099
  %v13260 = vpack.c.b16 %v13102, %v13101
  %v13261 = vpack.c.b16 %v13104, %v13103
  %v13262 = vpack.c.b16 %v13106, %v13105
  %v13263 = vpack.c.b16 %v13108, %v13107
  %v13264 = vpack.c.b16 %v13110, %v13109
  %v13265 = vpack.c.b16 %v13112, %v13111
  %v13266 = vpack.c.b16 %v13114, %v13113
  %v13267 = vpack.c.b16 %v13116, %v13115
  %v13268 = vpack.c.b16 %v13118, %v13117
  %v13269 = vpack.c.b16 %v13120, %v13119
  %v13270 = vpack.c.b16 %v13122, %v13121
  %v13271 = vpack.c.b16 %v13124, %v13123
  %v13272 = vpack.c.b16 %v13126, %v13125
  %v13273 = vpack.c.b16 %v13128, %v13127
  %v13274 = vpack.c.b16 %v13130, %v13129
  %v13275 = vpack.c.b16 %v13132, %v13131
  %v13276 = vpack.c.b16 %v13134, %v13133
  %v13277 = vpack.c.b16 %v13136, %v13135
  %v13278 = vpack.c.b16 %v13138, %v13137
  %v13279 = vpack.c.b16 %v13140, %v13139
  %v13280 = vpack.c.b16 %v13142, %v13141
  %v13281 = vpack.c.b16 %v13144, %v13143
  %v13282 = vpack.c.b16 %v13146, %v13145
  %v13283 = vpack.c.b16 %v13148, %v13147
  %v13284 = vpack.c.b16 %v13150, %v13149
  %v13285 = vpack.c.b16 %v13152, %v13151
  %v13286 = vpack.c.b16 %v13154, %v13153
  %v13287 = vpack.c.b16 %v13156, %v13155
  %v13288 = vpack.c.b16 %v13158, %v13157
  %v13289 = vpack.c.b16 %v13160, %v13159
  %v13290 = vpack.c.b16 %v13162, %v13161
  %v13291 = vpack.c.b16 %v13164, %v13163
  %v13292 = vpack.c.b16 %v13166, %v13165
  %v13293 = vpack.c.b16 %v13168, %v13167
  %v13294 = vpack.c.b16 %v13170, %v13169
  %v13295 = vpack.c.b16 %v13172, %v13171
  %v13296 = vpack.c.b16 %v13174, %v13173
  %v13297 = vpack.c.b16 %v13176, %v13175
  %v13298 = vpack.c.b16 %v13178, %v13177
  %v13299 = vpack.c.b16 %v13180, %v13179
  %v13300 = vpack.c.b16 %v13182, %v13181
  %v13301 = vpack.c.b16 %v13184, %v13183
  %v13302 = vpack.c.b16 %v13186, %v13185
  %v13303 = vpack.c.b16 %v13188, %v13187
  %v13304 = vpack.c.b16 %v13190, %v13189
  %v13305 = vpack.c.b16 %v13192, %v13191
  %v13306 = vpack.c.b16 %v13194, %v13193
  %v13307 = vpack.c.b16 %v13196, %v13195
  %v13308 = vpack.c.b16 %v13198, %v13197
  %v13309 = vpack.c.b16 %v13200, %v13199
  %v13310 = vpack.c.b16 %v13202, %v13201
  %v13311 = vpack.c.b16 %v13204, %v13203
  %v13312 = vpack.c.b16 %v13206, %v13205
  %v13313 = vpack.c.b16 %v13208, %v13207
  %v13314 = vpack.c.b16 %v13210, %v13209
  %v13315 = vpack.c.b16 %v13212, %v13211
  %v13316 = vpack.c.b16 %v13214, %v13213
  %v13317 = vpack.c.b16 %v13216, %v13215
  %v13318 = vpack.c.b16 %v13218, %v13217
  %v13420 = vsel %vm12551, %v12526, 0
  %13422 = vmatprep.subr.bf16.mxu0 0
  %13423 = vmatpush1.bf16.msra.mxu0 %v13219
  %13424 = vmatprep.subr.bf16.mxu0 0
  %13425 = vmatpush1.bf16.msra.mxu0 %v13220
  %13426 = vmatprep.subr.bf16.mxu0 0
  %13427 = vmatpush1.bf16.msra.mxu0 %v13221
  %13428 = vmatprep.subr.bf16.mxu0 0
  %13429 = vmatpush1.bf16.msra.mxu0 %v13222
  %13430 = vmatprep.subr.bf16.mxu0 0
  %13431 = vmatpush1.bf16.msra.mxu0 %v13223
  %13432 = vmatprep.subr.bf16.mxu0 0
  %13433 = vmatpush1.bf16.msra.mxu0 %v13224
  %13434 = vmatprep.subr.bf16.mxu0 0
  %13435 = vmatpush1.bf16.msra.mxu0 %v13225
  %13436 = vmatprep.subr.bf16.mxu0 0
  %13437 = vmatpush1.bf16.msra.mxu0 %v13226
  %13438 = vmatprep.subr.bf16.mxu0 0
  %13439 = vmatpush1.bf16.msra.mxu0 %v13227
  %13440 = vmatprep.subr.bf16.mxu0 0
  %13441 = vmatpush1.bf16.msra.mxu0 %v13228
  %13442 = vmatprep.subr.bf16.mxu0 0
  %13443 = vmatpush1.bf16.msra.mxu0 %v13229
  %13444 = vmatprep.subr.bf16.mxu0 0
  %13445 = vmatpush1.bf16.msra.mxu0 %v13230
  %13446 = vmatprep.subr.bf16.mxu0 0
  %13447 = vmatpush1.bf16.msra.mxu0 %v13231
  %13448 = vmatprep.subr.bf16.mxu0 0
  %13449 = vmatpush1.bf16.msra.mxu0 %v13232
  %13450 = vmatprep.subr.bf16.mxu0 0
  %13451 = vmatpush1.bf16.msra.mxu0 %v13233
  %13452 = vmatprep.subr.bf16.mxu0 0
  %13453 = vmatpush1.bf16.msra.mxu0 %v13234
  %13454 = vmatprep.mubr.bf16.mxu0 %v12558
  %13455 = vmatmul.mubr.bf16.gmra.mrb[0].mxu0 %v12554
  %v13456 = vpop.f32.mrb[0].mxu0
  %v13457 = vadd.f32 %v12817, %v13456
  %v13458 = vpop.f32.mrb[0].mxu0
  %v13459 = vpop.f32.mrb[0].mxu0
  %v13460 = vpop.f32.mrb[0].mxu0
  %13461 = vdwg.mxu0
  %13462 = vmatprep.subr.bf16.mxu0 0
  %13463 = vmatpush1.bf16.msra.mxu0 %v13235
  %13464 = vmatprep.subr.bf16.mxu0 0
  %13465 = vmatpush1.bf16.msra.mxu0 %v13236
  %13466 = vmatprep.subr.bf16.mxu0 0
  %13467 = vmatpush1.bf16.msra.mxu0 %v13237
  %13468 = vmatprep.subr.bf16.mxu0 0
  %13469 = vmatpush1.bf16.msra.mxu0 %v13238
  %13470 = vmatprep.subr.bf16.mxu0 0
  %13471 = vmatpush1.bf16.msra.mxu0 %v13239
  %13472 = vmatprep.subr.bf16.mxu0 0
  %13473 = vmatpush1.bf16.msra.mxu0 %v13240
  %13474 = vmatprep.subr.bf16.mxu0 0
  %13475 = vmatpush1.bf16.msra.mxu0 %v13241
  %13476 = vmatprep.subr.bf16.mxu0 0
  %13477 = vmatpush1.bf16.msra.mxu0 %v13242
  %13478 = vmatprep.subr.bf16.mxu0 0
  %13479 = vmatpush1.bf16.msra.mxu0 %v13243
  %13480 = vmatprep.subr.bf16.mxu0 0
  %13481 = vmatpush1.bf16.msra.mxu0 %v13244
  %13482 = vmatprep.subr.bf16.mxu0 0
  %13483 = vmatpush1.bf16.msra.mxu0 %v13245
  %13484 = vmatprep.subr.bf16.mxu0 0
  %13485 = vmatpush1.bf16.msra.mxu0 %v13246
  %13486 = vmatprep.subr.bf16.mxu0 0
  %13487 = vmatpush1.bf16.msra.mxu0 %v13247
  %13488 = vmatprep.subr.bf16.mxu0 0
  %13489 = vmatpush1.bf16.msra.mxu0 %v13248
  %13490 = vmatprep.subr.bf16.mxu0 0
  %13491 = vmatpush1.bf16.msra.mxu0 %v13249
  %13492 = vmatprep.subr.bf16.mxu0 0
  %13493 = vmatpush1.bf16.msra.mxu0 %v13250
  %13494 = vmatprep.mubr.bf16.mxu0 %v12566
  %13495 = vmatmul.mubr.bf16.gmra.mrb[0].mxu0 %v12562
  %v13496 = vpop.f32.mrb[0].mxu0
  %v13497 = vadd.f32 %v13457, %v13496
  %v13498 = vpop.f32.mrb[0].mxu0
  %v13499 = vpop.f32.mrb[0].mxu0
  %v13500 = vpop.f32.mrb[0].mxu0
  %13501 = vdwg.mxu0
  %13502 = vmatprep.subr.bf16.mxu0 0
  %13503 = vmatpush1.bf16.msra.mxu0 %v13251
  %13504 = vmatprep.subr.bf16.mxu0 0
  %13505 = vmatpush1.bf16.msra.mxu0 %v13252
  %13506 = vmatprep.subr.bf16.mxu0 0
  %13507 = vmatpush1.bf16.msra.mxu0 %v13253
  %13508 = vmatprep.subr.bf16.mxu0 0
  %13509 = vmatpush1.bf16.msra.mxu0 %v13254
  %13510 = vmatprep.subr.bf16.mxu0 0
  %13511 = vmatpush1.bf16.msra.mxu0 %v13255
  %13512 = vmatprep.subr.bf16.mxu0 0
  %13513 = vmatpush1.bf16.msra.mxu0 %v13256
  %13514 = vmatprep.subr.bf16.mxu0 0
  %13515 = vmatpush1.bf16.msra.mxu0 %v13257
  %13516 = vmatprep.subr.bf16.mxu0 0
  %13517 = vmatpush1.bf16.msra.mxu0 %v13258
  %13518 = vmatprep.subr.bf16.mxu0 0
  %13519 = vmatpush1.bf16.msra.mxu0 %v13259
  %13520 = vmatprep.subr.bf16.mxu0 0
  %13521 = vmatpush1.bf16.msra.mxu0 %v13260
  %13522 = vmatprep.subr.bf16.mxu0 0
  %13523 = vmatpush1.bf16.msra.mxu0 %v13261
  %13524 = vmatprep.subr.bf16.mxu0 0
  %13525 = vmatpush1.bf16.msra.mxu0 %v13262
  %13526 = vmatprep.subr.bf16.mxu0 0
  %13527 = vmatpush1.bf16.msra.mxu0 %v13263
  %13528 = vmatprep.subr.bf16.mxu0 0
  %13529 = vmatpush1.bf16.msra.mxu0 %v13264
  %13530 = vmatprep.subr.bf16.mxu0 0
  %13531 = vmatpush1.bf16.msra.mxu0 %v13265
  %13532 = vmatprep.subr.bf16.mxu0 0
  %13533 = vmatpush1.bf16.msra.mxu0 %v13266
  %13534 = vmatprep.mubr.bf16.mxu0 %v12574
  %13535 = vmatmul.mubr.bf16.gmra.mrb[0].mxu0 %v12570
  %v13536 = vpop.f32.mrb[0].mxu0
  %v13537 = vadd.f32 %v13497, %v13536
  %v13538 = vpop.f32.mrb[0].mxu0
  %v13539 = vpop.f32.mrb[0].mxu0
  %v13540 = vpop.f32.mrb[0].mxu0
  %13541 = vdwg.mxu0
  %13542 = vmatprep.subr.bf16.mxu0 0
  %13543 = vmatpush1.bf16.msra.mxu0 %v13267
  %13544 = vmatprep.subr.bf16.mxu0 0
  %13545 = vmatpush1.bf16.msra.mxu0 %v13268
  %13546 = vmatprep.subr.bf16.mxu0 0
  %13547 = vmatpush1.bf16.msra.mxu0 %v13269
  %13548 = vmatprep.subr.bf16.mxu0 0
  %13549 = vmatpush1.bf16.msra.mxu0 %v13270
  %13550 = vmatprep.subr.bf16.mxu0 0
  %13551 = vmatpush1.bf16.msra.mxu0 %v13271
  %13552 = vmatprep.subr.bf16.mxu0 0
  %13553 = vmatpush1.bf16.msra.mxu0 %v13272
  %13554 = vmatprep.subr.bf16.mxu0 0
  %13555 = vmatpush1.bf16.msra.mxu0 %v13273
  %13556 = vmatprep.subr.bf16.mxu0 0
  %13557 = vmatpush1.bf16.msra.mxu0 %v13274
  %13558 = vmatprep.subr.bf16.mxu0 0
  %13559 = vmatpush1.bf16.msra.mxu0 %v13275
  %13560 = vmatprep.subr.bf16.mxu0 0
  %13561 = vmatpush1.bf16.msra.mxu0 %v13276
  %13562 = vmatprep.subr.bf16.mxu0 0
  %13563 = vmatpush1.bf16.msra.mxu0 %v13277
  %13564 = vmatprep.subr.bf16.mxu0 0
  %13565 = vmatpush1.bf16.msra.mxu0 %v13278
  %13566 = vmatprep.subr.bf16.mxu0 0
  %13567 = vmatpush1.bf16.msra.mxu0 %v13279
  %13568 = vmatprep.subr.bf16.mxu0 0
  %13569 = vmatpush1.bf16.msra.mxu0 %v13280
  %13570 = vmatprep.subr.bf16.mxu0 0
  %13571 = vmatpush1.bf16.msra.mxu0 %v13281
  %13572 = vmatprep.subr.bf16.mxu0 0
  %13573 = vmatpush1.bf16.msra.mxu0 %v13282
  %13574 = vmatprep.mubr.bf16.mxu0 %v12582
  %13575 = vmatmul.mubr.bf16.gmra.mrb[0].mxu0 %v12578
  %v13576 = vpop.f32.mrb[0].mxu0
  %v13577 = vadd.f32 %v13537, %v13576
  %v13578 = vpop.f32.mrb[0].mxu0
  %v13579 = vpop.f32.mrb[0].mxu0
  %v13580 = vpop.f32.mrb[0].mxu0
  %13581 = vdwg.mxu0
  %13582 = vmatprep.subr.bf16.mxu0 0
  %13583 = vmatpush1.bf16.msra.mxu0 %v13283
  %13584 = vmatprep.subr.bf16.mxu0 0
  %13585 = vmatpush1.bf16.msra.mxu0 %v13284
  %13586 = vmatprep.subr.bf16.mxu0 0
  %13587 = vmatpush1.bf16.msra.mxu0 %v13285
  %13588 = vmatprep.subr.bf16.mxu0 0
  %13589 = vmatpush1.bf16.msra.mxu0 %v13286
  %13590 = vmatprep.subr.bf16.mxu0 0
  %13591 = vmatpush1.bf16.msra.mxu0 %v13287
  %13592 = vmatprep.subr.bf16.mxu0 0
  %13593 = vmatpush1.bf16.msra.mxu0 %v13288
  %13594 = vmatprep.subr.bf16.mxu0 0
  %13595 = vmatpush1.bf16.msra.mxu0 %v13289
  %13596 = vmatprep.subr.bf16.mxu0 0
  %13597 = vmatpush1.bf16.msra.mxu0 %v13290
  %13598 = vmatprep.subr.bf16.mxu0 0
  %13599 = vmatpush1.bf16.msra.mxu0 %v13291
  %13600 = vmatprep.subr.bf16.mxu0 0
  %13601 = vmatpush1.bf16.msra.mxu0 %v13292
  %13602 = vmatprep.subr.bf16.mxu0 0
  %13603 = vmatpush1.bf16.msra.mxu0 %v13293
  %13604 = vmatprep.subr.bf16.mxu0 0
  %13605 = vmatpush1.bf16.msra.mxu0 %v13294
  %13606 = vmatprep.subr.bf16.mxu0 0
  %13607 = vmatpush1.bf16.msra.mxu0 %v13295
  %13608 = vmatprep.subr.bf16.mxu0 0
  %13609 = vmatpush1.bf16.msra.mxu0 %v13296
  %13610 = vmatprep.subr.bf16.mxu0 0
  %13611 = vmatpush1.bf16.msra.mxu0 %v13297
  %13612 = vmatprep.subr.bf16.mxu0 0
  %13613 = vmatpush1.bf16.msra.mxu0 %v13298
  %13614 = vmatprep.mubr.bf16.mxu0 %v12602
  %13615 = vmatmul.mubr.bf16.gmra.mrb[0].mxu0 %v12598
  %v13616 = vpop.f32.mrb[0].mxu0
  %v13617 = vadd.f32 %v13577, %v13616
  %v13618 = vpop.f32.mrb[0].mxu0
  %v13619 = vpop.f32.mrb[0].mxu0
  %v13620 = vpop.f32.mrb[0].mxu0
  %13621 = vdwg.mxu0
  %13622 = vmatprep.subr.bf16.mxu0 0
  %13623 = vmatpush1.bf16.msra.mxu0 %v13299
  %13624 = vmatprep.subr.bf16.mxu0 0
  %13625 = vmatpush1.bf16.msra.mxu0 %v13300
  %13626 = vmatprep.subr.bf16.mxu0 0
  %13627 = vmatpush1.bf16.msra.mxu0 %v13301
  %13628 = vmatprep.subr.bf16.mxu0 0
  %13629 = vmatpush1.bf16.msra.mxu0 %v13302
  %13630 = vmatprep.subr.bf16.mxu0 0
  %13631 = vmatpush1.bf16.msra.mxu0 %v13303
  %13632 = vmatprep.subr.bf16.mxu0 0
  %13633 = vmatpush1.bf16.msra.mxu0 %v13304
  %13634 = vmatprep.subr.bf16.mxu0 0
  %13635 = vmatpush1.bf16.msra.mxu0 %v13305
  %13636 = vmatprep.subr.bf16.mxu0 0
  %13637 = vmatpush1.bf16.msra.mxu0 %v13306
  %13638 = vmatprep.subr.bf16.mxu0 0
  %13639 = vmatpush1.bf16.msra.mxu0 %v13307
  %13640 = vmatprep.subr.bf16.mxu0 0
  %13641 = vmatpush1.bf16.msra.mxu0 %v13308
  %13642 = vmatprep.subr.bf16.mxu0 0
  %13643 = vmatpush1.bf16.msra.mxu0 %v13309
  %13644 = vmatprep.subr.bf16.mxu0 0
  %13645 = vmatpush1.bf16.msra.mxu0 %v13310
  %13646 = vmatprep.subr.bf16.mxu0 0
  %13647 = vmatpush1.bf16.msra.mxu0 %v13311
  %13648 = vmatprep.subr.bf16.mxu0 0
  %13649 = vmatpush1.bf16.msra.mxu0 %v13312
  %13650 = vmatprep.subr.bf16.mxu0 0
  %13651 = vmatpush1.bf16.msra.mxu0 %v13313
  %13652 = vmatprep.subr.bf16.mxu0 0
  %13653 = vmatpush1.bf16.msra.mxu0 %v13314
  %13654 = vmatprep.mubr.bf16.mxu0 %v12610
  %13655 = vmatmul.mubr.bf16.gmra.mrb[0].mxu0 %v12606
  %v13656 = vpop.f32.mrb[0].mxu0
  %v13657 = vadd.f32 %v13617, %v13656
  %v13658 = vpop.f32.mrb[0].mxu0
  %v13659 = vpop.f32.mrb[0].mxu0
  %v13660 = vpop.f32.mrb[0].mxu0
  %13661 = vdwg.mxu0
  %13662 = vmatprep.subr.bf16.mxu0 0
  %13663 = vmatpush1.bf16.msra.mxu0 %v13315
  %13664 = vmatprep.subr.bf16.mxu0 0
  %13665 = vmatpush1.bf16.msra.mxu0 %v13316
  %13666 = vmatprep.subr.bf16.mxu0 0
  %13667 = vmatpush1.bf16.msra.mxu0 %v13317
  %13668 = vmatprep.subr.bf16.mxu0 0
  %13669 = vmatpush1.bf16.msra.mxu0 %v13318
  %13670 = vmatprep.subr.bf16.mxu0 0
  %13671 = vmatpush1.bf16.msra.mxu0 0
  %13672 = vmatprep.subr.bf16.mxu0 0
  %13673 = vmatpush1.bf16.msra.mxu0 0
  %13674 = vmatprep.subr.bf16.mxu0 0
  %13675 = vmatpush1.bf16.msra.mxu0 0
  %13676 = vmatprep.subr.bf16.mxu0 0
  %13677 = vmatpush1.bf16.msra.mxu0 0
  %13678 = vmatprep.subr.bf16.mxu0 0
  %13679 = vmatpush1.bf16.msra.mxu0 0
  %13680 = vmatprep.subr.bf16.mxu0 0
  %13681 = vmatpush1.bf16.msra.mxu0 0
  %13682 = vmatprep.subr.bf16.mxu0 0
  %13683 = vmatpush1.bf16.msra.mxu0 0
  %13684 = vmatprep.subr.bf16.mxu0 0
  %13685 = vmatpush1.bf16.msra.mxu0 0
  %13686 = vmatprep.subr.bf16.mxu0 0
  %13687 = vmatpush1.bf16.msra.mxu0 0
  %13688 = vmatprep.subr.bf16.mxu0 0
  %13689 = vmatpush1.bf16.msra.mxu0 0
  %13690 = vmatprep.subr.bf16.mxu0 0
  %13691 = vmatpush1.bf16.msra.mxu0 0
  %13692 = vmatprep.subr.bf16.mxu0 0
  %13693 = vmatpush1.bf16.msra.mxu0 0
  %13694 = vmatprep.mubr.bf16.mxu0 0
  %13695 = vmatmul.mubr.bf16.gmra.mrb[0].mxu0 %v13420
  %v13696 = vpop.f32.mrb[0].mxu0
  %v13697 = vadd.f32 %v13657, %v13696
  %v13698 = vpop.f32.mrb[0].mxu0
  %v13699 = vpop.f32.mrb[0].mxu0
  %v13700 = vpop.f32.mrb[0].mxu0
  %13701 = vdwg.mxu0
  %v13702 = vmax.f32 %v13697, 0.0
  %v13703 = vpack.c.bf16 %v13702, %v13702
  %v13704 = vld [vmem:[%s7] sm:$0xf]
  %v13705 = vld [vmem:[%s7 + $0x4] sm:$0xf]
  %v13706 = vld [vmem:[%s7 + $0x8] sm:$0xf]
  %v13707 = vld [vmem:[%s7 + $0xc] sm:$0xf]
  %v13708 = vld [vmem:[%s7 + $0x10] sm:$0xf]
  %v13709 = vld [vmem:[%s7 + $0x14] sm:$0xf]
  %v13710 = vld [vmem:[%s7 + $0x18] sm:$0xf]
  %v13711 = vld [vmem:[%s7 + $0x1c] sm:$0xf]
  %v13712 = vld [vmem:[%s7 + $0x20] sm:$0xf]
  %v13713 = vld [vmem:[%s7 + $0x24] sm:$0xf]
  %v13714 = vld [vmem:[%s7 + $0x28] sm:$0xf]
  %v13715 = vld [vmem:[%s7 + $0x2c] sm:$0xf]
  %v13716 = vld [vmem:[%s7 + $0x30] sm:$0xf]
  %v13717 = vld [vmem:[%s7 + $0x34] sm:$0xf]
  %v13718 = vld [vmem:[%s7 + $0x38] sm:$0xf]
  %v13719 = vld [vmem:[%s7 + $0x3c] sm:$0xf]
  %v13720 = vld [vmem:[%s8] sm:$0x1]
  %v13722 = vlaneseq
  %v13723 = vshrl.u32 %v13722, 7
  %v13724 = vsub.s32 0, %v13723
  %v13725 = vrot.slane %v13720, %v13724
  %v13743 = vunpack.c.l.b16 %v13704
  %v13744 = vunpack.c.l.b16 %v13705
  %v13745 = vunpack.c.l.b16 %v13706
  %v13746 = vunpack.c.l.b16 %v13707
  %v13747 = vunpack.c.l.b16 %v13708
  %v13748 = vunpack.c.l.b16 %v13709
  %v13749 = vunpack.c.l.b16 %v13710
  %v13750 = vunpack.c.l.b16 %v13711
  %v13751 = vunpack.c.l.b16 %v13712
  %v13752 = vunpack.c.l.b16 %v13713
  %v13753 = vunpack.c.l.b16 %v13714
  %v13754 = vunpack.c.l.b16 %v13715
  %v13755 = vunpack.c.l.b16 %v13716
  %v13756 = vunpack.c.l.b16 %v13717
  %v13757 = vunpack.c.l.b16 %v13718
  %v13758 = vunpack.c.l.b16 %v13719
  %v13759 = vpack.c.b16 %v13744, %v13743
  %v13760 = vpack.c.b16 %v13746, %v13745
  %v13761 = vpack.c.b16 %v13748, %v13747
  %v13762 = vpack.c.b16 %v13750, %v13749
  %v13763 = vpack.c.b16 %v13752, %v13751
  %v13764 = vpack.c.b16 %v13754, %v13753
  %v13765 = vpack.c.b16 %v13756, %v13755
  %v13766 = vpack.c.b16 %v13758, %v13757
  %13775 = vmatprep.subr.bf16.mxu0 0
  %13776 = vmatpush1.bf16.msra.mxu0 %v13759
  %13777 = vmatprep.subr.bf16.mxu0 0
  %13778 = vmatpush1.bf16.msra.mxu0 %v13760
  %13779 = vmatprep.subr.bf16.mxu0 0
  %13780 = vmatpush1.bf16.msra.mxu0 %v13761
  %13781 = vmatprep.subr.bf16.mxu0 0
  %13782 = vmatpush1.bf16.msra.mxu0 %v13762
  %13783 = vmatprep.subr.bf16.mxu0 0
  %13784 = vmatpush1.bf16.msra.mxu0 %v13763
  %13785 = vmatprep.subr.bf16.mxu0 0
  %13786 = vmatpush1.bf16.msra.mxu0 %v13764
  %13787 = vmatprep.subr.bf16.mxu0 0
  %13788 = vmatpush1.bf16.msra.mxu0 %v13765
  %13789 = vmatprep.subr.bf16.mxu0 0
  %13790 = vmatpush1.bf16.msra.mxu0 %v13766
  %13791 = vmatprep.subr.bf16.mxu0 0
  %13792 = vmatpush1.bf16.msra.mxu0 0
  %13793 = vmatprep.subr.bf16.mxu0 0
  %13794 = vmatpush1.bf16.msra.mxu0 0
  %13795 = vmatprep.subr.bf16.mxu0 0
  %13796 = vmatpush1.bf16.msra.mxu0 0
  %13797 = vmatprep.subr.bf16.mxu0 0
  %13798 = vmatpush1.bf16.msra.mxu0 0
  %13799 = vmatprep.subr.bf16.mxu0 0
  %13800 = vmatpush1.bf16.msra.mxu0 0
  %13801 = vmatprep.subr.bf16.mxu0 0
  %13802 = vmatpush1.bf16.msra.mxu0 0
  %13803 = vmatprep.subr.bf16.mxu0 0
  %13804 = vmatpush1.bf16.msra.mxu0 0
  %13805 = vmatprep.subr.bf16.mxu0 0
  %13806 = vmatpush1.bf16.msra.mxu0 0
  %13807 = vmatprep.mubr.bf16.mxu0 0
  %13808 = vmatmul.mubr.bf16.gmra.mrb[0].mxu0 %v13703
  %v13809 = vpop.f32.mrb[0].mxu0
  %v13810 = vadd.f32 %v13725, %v13809
  %v13811 = vpop.f32.mrb[0].mxu0
  %v13812 = vpop.f32.mrb[0].mxu0
  %v13813 = vpop.f32.mrb[0].mxu0
  %13814 = vdwg.mxu0
  %13815 = vst [vmem:[%s9] sm:$0xff] %v13810
  // Predicated region
  $region38: #{lenet_forward.1} parent=0 // pred_check
    _
  $region39: #{lenet_forward.1} parent=0 // pred_check_branch
    %13817 = sbr.rel (0) target = $region41
  $region40: #{lenet_forward.1} parent=0 // pred_region
    _
  $region41: #{lenet_forward.1} parent=0 // pred_fallthru
    _
  // Predicated region
  $region42: #{lenet_forward.1} parent=0 // pred_check
    _
  $region43: #{lenet_forward.1} parent=0 // pred_check_branch
    %13819 = sbr.rel (0) target = $region45
  $region44: #{lenet_forward.1} parent=0 // pred_region
    _
  $region45: #{lenet_forward.1} parent=0 // pred_fallthru
    _

</llo_original>
